<compile_context>
chip_gen: v7x
topology: tpu7x:2x2x1
jax: 0.10.0
libtpu: 0.0.40
codegen_flags: <defaults>
</compile_context>

<pallas_src>
import math
import functools

import jax
import jax.numpy as jnp
from jax.experimental import pallas as pl
from jax.experimental.pallas import tpu as pltpu

MAX_TILE_P = 2048  # lanes (spatial positions) per grid step; multiple of 128


def _round_up(n, m):
    return (n + m - 1) // m * m


def _choose_tile(P):
    # >=2 grid steps whenever P allows it (keeps both v7x TensorCores busy via
    # the "parallel" grid axis) while the double-buffered bf16 cols block stays
    # a few MiB, well inside even v5e's 16 MiB scoped-VMEM default.
    t = min(MAX_TILE_P, _round_up(max(P // 2, 1), 128))
    return max(t, 128)


# ----------------------------------------------------------------------------
# Pallas kernels
# ----------------------------------------------------------------------------
def _mm_kernel(w_ref, x_ref, b_ref, o_ref, *, act):
    """o[Co, Pt] = act(W[Co, K] @ x[K, Pt] + b[Co, 1])  (MXU, f32 accumulate)."""
    acc = jnp.dot(w_ref[...], x_ref[...].astype(jnp.bfloat16),
                  preferred_element_type=jnp.float32)
    acc = acc + b_ref[...]
    if act == "relu":
        acc = jnp.maximum(acc, 0.0)
    elif act == "leaky_relu":                 # nn.LeakyReLU default slope 0.01
        acc = jnp.where(acc >= 0.0, acc, 0.01 * acc)
    elif act == "heads_clamp":                # row 0: clamp(0,1), row 1: clamp(-1,1)
        row = jax.lax.broadcasted_iota(jnp.int32, acc.shape, 0)
        lo = jnp.where(row == 0, 0.0, -1.0)
        acc = jnp.clip(acc, lo, 1.0)
    o_ref[...] = acc


def matmul_bias_act(w, x, b, *, act="none"):
    """w: [Co, K] (bf16), x: [K, P], b: [Co] -> [Co, P] f32, lane-dense output."""
    Co, K = w.shape
    K2, P = x.shape
    assert K == K2
    tile = _choose_tile(P)
    Ppad = _round_up(P, tile)
    if Ppad != P:                             # only triggers on tiny arrays here
        x = jnp.pad(x, ((0, 0), (0, Ppad - P)))
    out = pl.pallas_call(
        functools.partial(_mm_kernel, act=act),
        out_shape=jax.ShapeDtypeStruct((Co, Ppad), jnp.float32),
        grid=(Ppad // tile,),
        in_specs=[
            pl.BlockSpec((Co, K), lambda i: (0, 0)),    # weights stay resident
            pl.BlockSpec((K, tile), lambda i: (0, i)),  # lane-dense cols tile
            pl.BlockSpec((Co, 1), lambda i: (0, 0)),    # bias
        ],
        out_specs=pl.BlockSpec((Co, tile), lambda i: (0, i)),
        compiler_params=pltpu.CompilerParams(dimension_semantics=("parallel",)),
    )(w, x, b.reshape(Co, 1))
    return out[:, :P]


def _pw_chain_kernel(x_ref, w1_ref, b1_ref, w2_ref, b2_ref, w3_ref, b3_ref,
                     o_ref, *, pre_abs, final_relu):
    """Three fused 1x1x1 convs: (|x|) -> relu(W1.+b1) -> relu(W2.+b2) -> W3.+b3."""
    h = x_ref[...]
    if pre_abs:                               # torch.abs(y) before h_a[0]
        h = jnp.abs(h)
    h = h.astype(jnp.bfloat16)
    h = jnp.dot(w1_ref[...], h, preferred_element_type=jnp.float32) + b1_ref[...]
    h = jnp.maximum(h, 0.0).astype(jnp.bfloat16)
    h = jnp.dot(w2_ref[...], h, preferred_element_type=jnp.float32) + b2_ref[...]
    h = jnp.maximum(h, 0.0).astype(jnp.bfloat16)
    h = jnp.dot(w3_ref[...], h, preferred_element_type=jnp.float32) + b3_ref[...]
    if final_relu:
        h = jnp.maximum(h, 0.0)
    o_ref[...] = h


def pw_chain(x, l1, l2, l3, *, pre_abs=False, final_relu=False):
    """Fused 1x1x1-conv chain. x: [Cin, B, D, H, W] -> [Cout3, B, D, H, W]."""
    C, B, D, H, W = x.shape
    P = B * D * H * W
    xm = x.reshape(C, P)
    (w1, b1), (w2, b2), (w3, b3) = l1, l2, l3
    wprep = lambda w: w.reshape(w.shape[0], w.shape[1]).astype(jnp.bfloat16)
    bprep = lambda b: b.reshape(-1, 1)
    Co1, Co2, Co3 = w1.shape[0], w2.shape[0], w3.shape[0]
    tile = _choose_tile(P)
    Ppad = _round_up(P, tile)
    if Ppad != P:
        xm = jnp.pad(xm, ((0, 0), (0, Ppad - P)))
    full = lambda s: pl.BlockSpec(s, lambda i: (0, 0))
    out = pl.pallas_call(
        functools.partial(_pw_chain_kernel, pre_abs=pre_abs, final_relu=final_relu),
        out_shape=jax.ShapeDtypeStruct((Co3, Ppad), jnp.float32),
        grid=(Ppad // tile,),
        in_specs=[
            pl.BlockSpec((C, tile), lambda i: (0, i)),
            full((Co1, C)), full((Co1, 1)),
            full((Co2, Co1)), full((Co2, 1)),
            full((Co3, Co2)), full((Co3, 1)),
        ],
        out_specs=pl.BlockSpec((Co3, tile), lambda i: (0, i)),
        compiler_params=pltpu.CompilerParams(dimension_semantics=("parallel",)),
    )(xm, wprep(w1), bprep(b1), wprep(w2), bprep(b2), wprep(w3), bprep(b3))
    return out[:, :P].reshape(Co3, B, D, H, W)


# ----------------------------------------------------------------------------
# Conv wrappers (im2col glue in channel-first layout; FLOPs live in Pallas)
# ----------------------------------------------------------------------------
# TODO(synk): a fully in-kernel direct conv (27-tap accumulation over halo'd
# input blocks, no HBM-materialized cols) would cut cols traffic further; the
# im2col stays bf16 and lane-dense here.
def _im2col_cf(x16, k, stride, pad):
    """x16: [C, B, D, H, W] -> cols [k^3*C, B*Do*Ho*Wo], K-order = (tap, cin)."""
    C, B, D, H, W = x16.shape
    xp = jnp.pad(x16, ((0, 0), (0, 0), (pad, pad), (pad, pad), (pad, pad)))
    Do = (D + 2 * pad - k) // stride + 1
    Ho = (H + 2 * pad - k) // stride + 1
    Wo = (W + 2 * pad - k) // stride + 1
    taps = []
    for kd in range(k):
        for kh in range(k):
            for kw in range(k):
                taps.append(xp[:, :,
                               kd:kd + Do * stride:stride,
                               kh:kh + Ho * stride:stride,
                               kw:kw + Wo * stride:stride])
    cols = jnp.stack(taps, axis=0).reshape(k ** 3 * C, -1)
    return cols, (B, Do, Ho, Wo)


def conv3d(x, w, b, *, stride, pad, act="none"):
    """x: [Cin, B, D, H, W]; w: [Cout, Cin, k, k, k] -> [Cout, B, Do, Ho, Wo]."""
    Cout, Cin, k = w.shape[0], w.shape[1], w.shape[2]
    cols, (B, Do, Ho, Wo) = _im2col_cf(x.astype(jnp.bfloat16), k, stride, pad)
    wmat = jnp.transpose(w, (0, 2, 3, 4, 1)).reshape(Cout, -1).astype(jnp.bfloat16)
    out = matmul_bias_act(wmat, cols, b, act=act)
    return out.reshape(Cout, B, Do, Ho, Wo)


def heads_conv(x_hat, head_sign, head_magn):
    """head_sign & head_magn fused into one Cout=2 conv (shared im2col read),
    per-row clamps ([0,1] / [-1,1]) fused in-kernel."""
    ws, bs = head_sign
    wm, bm = head_magn
    w = jnp.concatenate([ws, wm], axis=0)          # [2, M, 3, 3, 3]
    b = jnp.concatenate([bs, bm], axis=0)          # [2]
    return conv3d(x_hat, w, b, stride=1, pad=1, act="heads_clamp")


def _deconv_phase_weight(w):
    """w: [Cin, Cout, 3, 3, 3] -> W_eff [(pd,ph,pw,cout), (dd,dh,dw,cin)] for the
    stride-2 / pad-1 / output_padding-1 sub-pixel decomposition.
    Even output phase uses tap k=1 (offset 0); odd phase uses k=2 (offset 0)
    and k=0 (offset 1)."""
    Cin, Cout = w.shape[0], w.shape[1]

    def k_of(p, d):
        if p == 0:
            return 1 if d == 0 else None
        return 2 if d == 0 else 0

    W = jnp.zeros((2, 2, 2, Cout, 2, 2, 2, Cin), w.dtype)
    for pd in range(2):
        for ph in range(2):
            for pw in range(2):
                for dd in range(2):
                    for dh in range(2):
                        for dw in range(2):
                            kd, kh, kw = k_of(pd, dd), k_of(ph, dh), k_of(pw, dw)
                            if kd is None or kh is None or kw is None:
                                continue
                            W = W.at[pd, ph, pw, :, dd, dh, dw, :].set(
                                w[:, :, kd, kh, kw].T)
    return W.reshape(8 * Cout, 8 * Cin)


def conv_transpose3d(x, w, b, *, act="leaky_relu"):
    """ConvTranspose3d(k=3, s=2, p=1, output_padding=1) via 8-phase sub-pixel
    decomposition: one [8*Cout, 8*Cin] matmul on a 2x2x2 im2col of the ORIGINAL
    input (no zero-dilation).  x: [Cin,B,D,H,W]; w: [Cin,Cout,3,3,3]."""
    Cin, B, D, H, W = x.shape
    Cout = w.shape[1]
    x16 = x.astype(jnp.bfloat16)
    xp = jnp.pad(x16, ((0, 0), (0, 0), (0, 1), (0, 1), (0, 1)))
    taps = []
    for dd in range(2):
        for dh in range(2):
            for dw in range(2):
                taps.append(xp[:, :, dd:dd + D, dh:dh + H, dw:dw + W])
    cols = jnp.stack(taps, axis=0).reshape(8 * Cin, -1)        # [(delta,cin), P]
    w_eff = _deconv_phase_weight(w).astype(jnp.bfloat16)       # [(phase,cout), (delta,cin)]
    b_eff = jnp.tile(b, 8)
    out = matmul_bias_act(w_eff, cols, b_eff, act=act)         # [8*Cout, B*D*H*W]
    out = out.reshape(2, 2, 2, Cout, B, D, H, W)
    out = out.transpose(3, 4, 5, 0, 6, 1, 7, 2).reshape(Cout, B, 2 * D, 2 * H, 2 * W)
    return out


# ----------------------------------------------------------------------------
# Entropy models (training-mode semantics: additive uniform-noise quantization)
# ----------------------------------------------------------------------------
# TODO(synk): the EntropyBottleneck density chain and the erfc-based Gaussian
# CDF stay in plain JAX glue (negligible FLOPs; channel-first layout, no
# transposes until the final output).
def eb_likelihood(z_hat, eb):
    C = z_hat.shape[0]
    orig_shape = z_hat.shape
    x = z_hat.reshape(C, 1, -1)

    def logits_cumulative(v):
        logits = v
        for i in range(5):
            m = jax.nn.softplus(eb[f"matrix{i}"])                  # (C, fo, fi)
            logits = jnp.einsum("coi,cip->cop", m, logits) + eb[f"bias{i}"]
            if i < 4:
                f = jnp.tanh(eb[f"factor{i}"])
                logits = logits + f * jnp.tanh(logits)
        return logits

    lower = logits_cumulative(x - 0.5)
    upper = logits_cumulative(x + 0.5)
    sign = -jnp.sign(lower + upper)
    lk = jnp.abs(jax.nn.sigmoid(sign * upper) - jax.nn.sigmoid(sign * lower))
    lk = jnp.maximum(lk, 1e-9)                                     # LowerBound(1e-9)
    return lk.reshape(orig_shape)


def gaussian_likelihood(y_hat, scales_hat):
    scales = jnp.maximum(scales_hat, 0.11)                         # LowerBound(0.11)
    v = jnp.abs(y_hat)
    std_cdf = lambda t: 0.5 * jax.scipy.special.erfc(-(2 ** -0.5) * t)
    upper = std_cdf((0.5 - v) / scales)
    lower = std_cdf((-0.5 - v) / scales)
    return jnp.maximum(upper - lower, 1e-9)                        # LowerBound(1e-9)


# ----------------------------------------------------------------------------
# Parameter init (deterministic, synthetic)
# ----------------------------------------------------------------------------
def _conv_init(key, cout, cin, k):
    wk, bk = jax.random.split(key)
    std = 1.0 / math.sqrt(cin * k ** 3)
    return (std * jax.random.normal(wk, (cout, cin, k, k, k), jnp.float32),
            std * jax.random.normal(bk, (cout,), jnp.float32))


def _convT_init(key, cin, cout, k):
    wk, bk = jax.random.split(key)
    std = 1.0 / math.sqrt(cout * k ** 3)
    return (std * jax.random.normal(wk, (cin, cout, k, k, k), jnp.float32),
            std * jax.random.normal(bk, (cout,), jnp.float32))


def init_params(key, M, N):
    ks = jax.random.split(key, 16)
    p = {}
    p["ga1"] = _conv_init(ks[0], M, 1, 3)
    p["ga2"] = _conv_init(ks[1], M, M, 3)
    p["ga3"] = _conv_init(ks[2], M, M, 3)
    p["gs1"] = _convT_init(ks[3], M, M, 3)
    p["gs2"] = _convT_init(ks[4], M, M, 3)
    p["gs3"] = _convT_init(ks[5], M, M, 3)
    p["head_sign"] = _conv_init(ks[6], 1, M, 3)
    p["head_magn"] = _conv_init(ks[7], 1, M, 3)
    p["ha1"] = _conv_init(ks[8], M, M, 1)
    p["ha2"] = _conv_init(ks[9], M, M, 1)
    p["ha3"] = _conv_init(ks[10], N, M, 1)
    p["hs1"] = _conv_init(ks[11], M, N, 1)
    p["hs2"] = _conv_init(ks[12], M, M, 1)
    p["hs3"] = _conv_init(ks[13], M, M, 1)
    # EntropyBottleneck(N): filters=(3,3,3,3), init_scale=10
    filt = (1, 3, 3, 3, 3, 1)
    scale = 10.0 ** (1.0 / 5.0)
    eb = {}
    ek = jax.random.split(ks[14], 5)
    for i in range(5):
        init = math.log(math.expm1(1.0 / scale / filt[i + 1]))
        eb[f"matrix{i}"] = jnp.full((N, filt[i + 1], filt[i]), init, jnp.float32)
        eb[f"bias{i}"] = jax.random.uniform(ek[i], (N, filt[i + 1], 1),
                                            jnp.float32, -0.5, 0.5)
        if i < 4:
            eb[f"factor{i}"] = jnp.zeros((N, filt[i + 1], 1), jnp.float32)
    p["eb"] = eb
    return p


# ----------------------------------------------------------------------------
# ScaleHyperPriorModel.forward
# ----------------------------------------------------------------------------
def forward(x, params, noise_key):
    p = params
    kz, ky = jax.random.split(noise_key, 2)

    xc = jnp.transpose(x, (1, 0, 2, 3, 4))          # NCDHW -> [C, B, D, H, W]

    # g_a : Conv3d(s=2) + LeakyReLU, x2, then Conv3d(s=2)
    h = conv3d(xc, *p["ga1"], stride=2, pad=1, act="leaky_relu")
    h = conv3d(h, *p["ga2"], stride=2, pad=1, act="leaky_relu")
    y = conv3d(h, *p["ga3"], stride=2, pad=1)

    # h_a(|y|): one fused pallas_call (abs + conv + relu + conv + relu + conv)
    z = pw_chain(y, p["ha1"], p["ha2"], p["ha3"], pre_abs=True, final_relu=False)

    # EntropyBottleneck (training): additive U(-0.5, 0.5) noise + learned density
    z_hat = z + jax.random.uniform(kz, z.shape, jnp.float32, -0.5, 0.5)
    z_lk = eb_likelihood(z_hat, p["eb"])

    # h_s: one fused pallas_call, Sequential ends with ReLU
    scales_hat = pw_chain(z_hat, p["hs1"], p["hs2"], p["hs3"],
                          pre_abs=False, final_relu=True)

    # GaussianConditional (training): noise quantization + Gaussian likelihood
    y_hat = y + jax.random.uniform(ky, y.shape, jnp.float32, -0.5, 0.5)
    y_lk = gaussian_likelihood(y_hat, scales_hat)

    # g_s: phase-decomposed ConvTranspose3d(s=2) + fused LeakyReLU, x3
    g = conv_transpose3d(y_hat, *p["gs1"])
    g = conv_transpose3d(g, *p["gs2"])
    x_hat = conv_transpose3d(g, *p["gs3"])

    # heads fused into one Cout=2 conv with per-row clamps
    heads = heads_conv(x_hat, p["head_sign"], p["head_magn"])   # [2, B, D, H, W]

    sign = jnp.transpose(heads[0:1], (1, 0, 2, 3, 4))
    magn = jnp.transpose(heads[1:2], (1, 0, 2, 3, 4))
    y_likelihoods = jnp.transpose(y_lk, (1, 0, 2, 3, 4))
    z_likelihoods = jnp.transpose(z_lk, (1, 0, 2, 3, 4))
    return sign, magn, y_likelihoods, z_likelihoods


if __name__ == "__main__":
    M, N = 16, 8                      # small, model-consistent channel sizes
    B, D, H, W = 2, 16, 16, 16        # spatial divisible by 8 (3x stride-2)

    key = jax.random.PRNGKey(0)
    pkey, xkey, nkey = jax.random.split(key, 3)
    params = init_params(pkey, M, N)
    x = jax.random.normal(xkey, (B, 1, D, H, W), jnp.float32)

    outs = jax.jit(forward)(x, params, nkey)
    outs = jax.block_until_ready(outs)

    sign, magn, y_lk, z_lk = outs
    assert sign.shape == (B, 1, D, H, W)
    assert magn.shape == (B, 1, D, H, W)
    assert y_lk.shape == (B, M, D // 8, H // 8, W // 8)
    assert z_lk.shape == (B, N, D // 8, H // 8, W // 8)
    assert float(jnp.min(sign)) >= 0.0 and float(jnp.max(sign)) <= 1.0
    assert float(jnp.min(magn)) >= -1.0 and float(jnp.max(magn)) <= 1.0
    # Likelihoods are LowerBound(1e-9)-clamped in float32; float32(1e-9) is
    # slightly BELOW the double literal 1e-9, so check positivity/finiteness.
    for lk in (y_lk, z_lk):
        assert bool(jnp.all(jnp.isfinite(lk)))
        assert float(jnp.min(lk)) > 0.0
    print("KERNEL_OK")
</pallas_src>

<mosaic_0001>
module attributes {stable_mosaic.version = 11 : i64} {
  func.func @_mm_kernel(%arg0: i32, %arg1: memref<16x27xbf16, #tpu.memory_space<vmem>>, %arg2: memref<27x512xbf16, #tpu.memory_space<vmem>>, %arg3: memref<16x1xf32, #tpu.memory_space<vmem>>, %arg4: memref<16x512xf32, #tpu.memory_space<vmem>>) attributes {dimension_semantics = [#tpu.dimension_semantics<parallel>], iteration_bounds = array<i64: 2>, scalar_prefetch = 0 : i64, scratch_operands = 0 : i64, tpu.core_type = #tpu.core_type<tc>, window_params = [{pipeline_mode = #tpu.pipeline_mode<synchronous>, transform_indices = @transform_0, window_bounds = array<i64: 16, 27>}, {transform_indices = @transform_1, window_bounds = array<i64: 27, 512>}, {pipeline_mode = #tpu.pipeline_mode<synchronous>, transform_indices = @transform_2, window_bounds = array<i64: 16, 1>}, {transform_indices = @transform_3, window_bounds = array<i64: 16, 512>}]} {
    %c0 = arith.constant 0 : index
    %c0_0 = arith.constant 0 : index
    %0 = vector.load %arg1[%c0, %c0_0] : memref<16x27xbf16, #tpu.memory_space<vmem>>, vector<16x27xbf16>
    %c0_1 = arith.constant 0 : index
    %c0_2 = arith.constant 0 : index
    %1 = vector.load %arg2[%c0_1, %c0_2] : memref<27x512xbf16, #tpu.memory_space<vmem>>, vector<27x512xbf16>
    %cst = arith.constant dense<0.000000e+00> : vector<16x512xf32>
    %2 = tpu.matmul %0, %1, %cst {dimension_numbers = #tpu.dot_dimension_numbers<[1], [0], [0], [1], [0, 0, 1, 1], [], []>} : vector<16x27xbf16>, vector<27x512xbf16>, vector<16x512xf32> -> vector<16x512xf32>
    %c0_3 = arith.constant 0 : index
    %c0_4 = arith.constant 0 : index
    %3 = vector.load %arg3[%c0_3, %c0_4] : memref<16x1xf32, #tpu.memory_space<vmem>>, vector<16x1xf32>
    %4 = vector.broadcast %3 : vector<16x1xf32> to vector<16x512xf32>
    %5 = arith.addf %2, %4 : vector<16x512xf32>
    %cst_5 = arith.constant 0.000000e+00 : f32
    %6 = vector.broadcast %cst_5 : f32 to vector<16x512xf32>
    %7 = arith.cmpf oge, %5, %6 : vector<16x512xf32>
    %cst_6 = arith.constant 0.00999999977 : f32
    %8 = vector.broadcast %cst_6 : f32 to vector<16x512xf32>
    %9 = arith.mulf %8, %5 : vector<16x512xf32>
    %10 = arith.select %7, %5, %9 : vector<16x512xi1>, vector<16x512xf32>
    %c0_7 = arith.constant 0 : index
    %c0_8 = arith.constant 0 : index
    %11 = vector.load %arg4[%c0_7, %c0_8] : memref<16x512xf32, #tpu.memory_space<vmem>>, vector<16x512xf32>
    tpu.vector_store %arg4[%c0_7, %c0_8], %10 {strides = array<i32>} : memref<16x512xf32, #tpu.memory_space<vmem>>, vector<16x512xf32>,
    return
  }
  func.func @transform_0(%arg0: i32) -> (i32, i32) {
    %c0_i32 = arith.constant 0 : i32
    %c0_i32_0 = arith.constant 0 : i32
    %c0_i32_1 = arith.constant 0 : i32
    return %c0_i32, %c0_i32_0 : i32, i32
  }
  func.func @transform_1(%arg0: i32) -> (i32, i32) {
    %c0_i32 = arith.constant 0 : i32
    %c0_i32_0 = arith.constant 0 : i32
    return %c0_i32, %arg0 : i32, i32
  }
  func.func @transform_2(%arg0: i32) -> (i32, i32) {
    %c0_i32 = arith.constant 0 : i32
    %c0_i32_0 = arith.constant 0 : i32
    %c0_i32_1 = arith.constant 0 : i32
    return %c0_i32, %c0_i32_0 : i32, i32
  }
  func.func @transform_3(%arg0: i32) -> (i32, i32) {
    %c0_i32 = arith.constant 0 : i32
    %c0_i32_0 = arith.constant 0 : i32
    return %c0_i32, %arg0 : i32, i32
  }
}

module attributes {stable_mosaic.version = 11 : i64} {
  func.func @_mm_kernel(%arg0: i32, %arg1: memref<16x432xbf16, #tpu.memory_space<vmem>>, %arg2: memref<432x128xbf16, #tpu.memory_space<vmem>>, %arg3: memref<16x1xf32, #tpu.memory_space<vmem>>, %arg4: memref<16x128xf32, #tpu.memory_space<vmem>>) attributes {dimension_semantics = [#tpu.dimension_semantics<parallel>], iteration_bounds = array<i64: 1>, scalar_prefetch = 0 : i64, scratch_operands = 0 : i64, tpu.core_type = #tpu.core_type<tc>, window_params = [{pipeline_mode = #tpu.pipeline_mode<synchronous>, transform_indices = @transform_0, window_bounds = array<i64: 16, 432>}, {transform_indices = @transform_1, window_bounds = array<i64: 432, 128>}, {pipeline_mode = #tpu.pipeline_mode<synchronous>, transform_indices = @transform_2, window_bounds = array<i64: 16, 1>}, {transform_indices = @transform_3, window_bounds = array<i64: 16, 128>}]} {
    %c0 = arith.constant 0 : index
    %c0_0 = arith.constant 0 : index
    %0 = vector.load %arg1[%c0, %c0_0] : memref<16x432xbf16, #tpu.memory_space<vmem>>, vector<16x432xbf16>
    %c0_1 = arith.constant 0 : index
    %c0_2 = arith.constant 0 : index
    %1 = vector.load %arg2[%c0_1, %c0_2] : memref<432x128xbf16, #tpu.memory_space<vmem>>, vector<432x128xbf16>
    %cst = arith.constant dense<0.000000e+00> : vector<16x128xf32>
    %2 = tpu.matmul %0, %1, %cst {dimension_numbers = #tpu.dot_dimension_numbers<[1], [0], [0], [1], [0, 0, 1, 1], [], []>} : vector<16x432xbf16>, vector<432x128xbf16>, vector<16x128xf32> -> vector<16x128xf32>
    %c0_3 = arith.constant 0 : index
    %c0_4 = arith.constant 0 : index
    %3 = vector.load %arg3[%c0_3, %c0_4] : memref<16x1xf32, #tpu.memory_space<vmem>>, vector<16x1xf32>
    %4 = vector.broadcast %3 : vector<16x1xf32> to vector<16x128xf32>
    %5 = arith.addf %2, %4 : vector<16x128xf32>
    %cst_5 = arith.constant 0.000000e+00 : f32
    %6 = vector.broadcast %cst_5 : f32 to vector<16x128xf32>
    %7 = arith.cmpf oge, %5, %6 : vector<16x128xf32>
    %cst_6 = arith.constant 0.00999999977 : f32
    %8 = vector.broadcast %cst_6 : f32 to vector<16x128xf32>
    %9 = arith.mulf %8, %5 : vector<16x128xf32>
    %10 = arith.select %7, %5, %9 : vector<16x128xi1>, vector<16x128xf32>
    %c0_7 = arith.constant 0 : index
    %c0_8 = arith.constant 0 : index
    %11 = vector.load %arg4[%c0_7, %c0_8] : memref<16x128xf32, #tpu.memory_space<vmem>>, vector<16x128xf32>
    tpu.vector_store %arg4[%c0_7, %c0_8], %10 {strides = array<i32>} : memref<16x128xf32, #tpu.memory_space<vmem>>, vector<16x128xf32>,
    return
  }
  func.func @transform_0(%arg0: i32) -> (i32, i32) {
    %c0_i32 = arith.constant 0 : i32
    %c0_i32_0 = arith.constant 0 : i32
    %c0_i32_1 = arith.constant 0 : i32
    return %c0_i32, %c0_i32_0 : i32, i32
  }
  func.func @transform_1(%arg0: i32) -> (i32, i32) {
    %c0_i32 = arith.constant 0 : i32
    %c0_i32_0 = arith.constant 0 : i32
    return %c0_i32, %arg0 : i32, i32
  }
  func.func @transform_2(%arg0: i32) -> (i32, i32) {
    %c0_i32 = arith.constant 0 : i32
    %c0_i32_0 = arith.constant 0 : i32
    %c0_i32_1 = arith.constant 0 : i32
    return %c0_i32, %c0_i32_0 : i32, i32
  }
  func.func @transform_3(%arg0: i32) -> (i32, i32) {
    %c0_i32 = arith.constant 0 : i32
    %c0_i32_0 = arith.constant 0 : i32
    return %c0_i32, %arg0 : i32, i32
  }
}

module attributes {stable_mosaic.version = 11 : i64} {
  func.func @_mm_kernel(%arg0: i32, %arg1: memref<16x432xbf16, #tpu.memory_space<vmem>>, %arg2: memref<432x128xbf16, #tpu.memory_space<vmem>>, %arg3: memref<16x1xf32, #tpu.memory_space<vmem>>, %arg4: memref<16x128xf32, #tpu.memory_space<vmem>>) attributes {dimension_semantics = [#tpu.dimension_semantics<parallel>], iteration_bounds = array<i64: 1>, scalar_prefetch = 0 : i64, scratch_operands = 0 : i64, tpu.core_type = #tpu.core_type<tc>, window_params = [{pipeline_mode = #tpu.pipeline_mode<synchronous>, transform_indices = @transform_0, window_bounds = array<i64: 16, 432>}, {transform_indices = @transform_1, window_bounds = array<i64: 432, 128>}, {pipeline_mode = #tpu.pipeline_mode<synchronous>, transform_indices = @transform_2, window_bounds = array<i64: 16, 1>}, {transform_indices = @transform_3, window_bounds = array<i64: 16, 128>}]} {
    %c0 = arith.constant 0 : index
    %c0_0 = arith.constant 0 : index
    %0 = vector.load %arg1[%c0, %c0_0] : memref<16x432xbf16, #tpu.memory_space<vmem>>, vector<16x432xbf16>
    %c0_1 = arith.constant 0 : index
    %c0_2 = arith.constant 0 : index
    %1 = vector.load %arg2[%c0_1, %c0_2] : memref<432x128xbf16, #tpu.memory_space<vmem>>, vector<432x128xbf16>
    %cst = arith.constant dense<0.000000e+00> : vector<16x128xf32>
    %2 = tpu.matmul %0, %1, %cst {dimension_numbers = #tpu.dot_dimension_numbers<[1], [0], [0], [1], [0, 0, 1, 1], [], []>} : vector<16x432xbf16>, vector<432x128xbf16>, vector<16x128xf32> -> vector<16x128xf32>
    %c0_3 = arith.constant 0 : index
    %c0_4 = arith.constant 0 : index
    %3 = vector.load %arg3[%c0_3, %c0_4] : memref<16x1xf32, #tpu.memory_space<vmem>>, vector<16x1xf32>
    %4 = vector.broadcast %3 : vector<16x1xf32> to vector<16x128xf32>
    %5 = arith.addf %2, %4 : vector<16x128xf32>
    %c0_5 = arith.constant 0 : index
    %c0_6 = arith.constant 0 : index
    %6 = vector.load %arg4[%c0_5, %c0_6] : memref<16x128xf32, #tpu.memory_space<vmem>>, vector<16x128xf32>
    tpu.vector_store %arg4[%c0_5, %c0_6], %5 {strides = array<i32>} : memref<16x128xf32, #tpu.memory_space<vmem>>, vector<16x128xf32>,
    return
  }
  func.func @transform_0(%arg0: i32) -> (i32, i32) {
    %c0_i32 = arith.constant 0 : i32
    %c0_i32_0 = arith.constant 0 : i32
    %c0_i32_1 = arith.constant 0 : i32
    return %c0_i32, %c0_i32_0 : i32, i32
  }
  func.func @transform_1(%arg0: i32) -> (i32, i32) {
    %c0_i32 = arith.constant 0 : i32
    %c0_i32_0 = arith.constant 0 : i32
    return %c0_i32, %arg0 : i32, i32
  }
  func.func @transform_2(%arg0: i32) -> (i32, i32) {
    %c0_i32 = arith.constant 0 : i32
    %c0_i32_0 = arith.constant 0 : i32
    %c0_i32_1 = arith.constant 0 : i32
    return %c0_i32, %c0_i32_0 : i32, i32
  }
  func.func @transform_3(%arg0: i32) -> (i32, i32) {
    %c0_i32 = arith.constant 0 : i32
    %c0_i32_0 = arith.constant 0 : i32
    return %c0_i32, %arg0 : i32, i32
  }
}

module attributes {stable_mosaic.version = 11 : i64} {
  func.func @_pw_chain_kernel(%arg0: i32, %arg1: memref<16x128xf32, #tpu.memory_space<vmem>>, %arg2: memref<16x16xbf16, #tpu.memory_space<vmem>>, %arg3: memref<16x1xf32, #tpu.memory_space<vmem>>, %arg4: memref<16x16xbf16, #tpu.memory_space<vmem>>, %arg5: memref<16x1xf32, #tpu.memory_space<vmem>>, %arg6: memref<8x16xbf16, #tpu.memory_space<vmem>>, %arg7: memref<8x1xf32, #tpu.memory_space<vmem>>, %arg8: memref<8x128xf32, #tpu.memory_space<vmem>>) attributes {dimension_semantics = [#tpu.dimension_semantics<parallel>], iteration_bounds = array<i64: 1>, scalar_prefetch = 0 : i64, scratch_operands = 0 : i64, tpu.core_type = #tpu.core_type<tc>, window_params = [{transform_indices = @transform_0, window_bounds = array<i64: 16, 128>}, {pipeline_mode = #tpu.pipeline_mode<synchronous>, transform_indices = @transform_1, window_bounds = array<i64: 16, 16>}, {pipeline_mode = #tpu.pipeline_mode<synchronous>, transform_indices = @transform_2, window_bounds = array<i64: 16, 1>}, {pipeline_mode = #tpu.pipeline_mode<synchronous>, transform_indices = @transform_3, window_bounds = array<i64: 16, 16>}, {pipeline_mode = #tpu.pipeline_mode<synchronous>, transform_indices = @transform_4, window_bounds = array<i64: 16, 1>}, {pipeline_mode = #tpu.pipeline_mode<synchronous>, transform_indices = @transform_5, window_bounds = array<i64: 8, 16>}, {pipeline_mode = #tpu.pipeline_mode<synchronous>, transform_indices = @transform_6, window_bounds = array<i64: 8, 1>}, {transform_indices = @transform_7, window_bounds = array<i64: 8, 128>}]} {
    %c0 = arith.constant 0 : index
    %c0_0 = arith.constant 0 : index
    %0 = vector.load %arg1[%c0, %c0_0] : memref<16x128xf32, #tpu.memory_space<vmem>>, vector<16x128xf32>
    %1 = math.absf %0 : vector<16x128xf32>
    %2 = arith.truncf %1 : vector<16x128xf32> to vector<16x128xbf16>
    %c0_1 = arith.constant 0 : index
    %c0_2 = arith.constant 0 : index
    %3 = vector.load %arg2[%c0_1, %c0_2] : memref<16x16xbf16, #tpu.memory_space<vmem>>, vector<16x16xbf16>
    %cst = arith.constant dense<0.000000e+00> : vector<16x128xf32>
    %4 = tpu.matmul %3, %2, %cst {dimension_numbers = #tpu.dot_dimension_numbers<[1], [0], [0], [1], [0, 0, 1, 1], [], []>} : vector<16x16xbf16>, vector<16x128xbf16>, vector<16x128xf32> -> vector<16x128xf32>
    %c0_3 = arith.constant 0 : index
    %c0_4 = arith.constant 0 : index
    %5 = vector.load %arg3[%c0_3, %c0_4] : memref<16x1xf32, #tpu.memory_space<vmem>>, vector<16x1xf32>
    %6 = vector.broadcast %5 : vector<16x1xf32> to vector<16x128xf32>
    %7 = arith.addf %4, %6 : vector<16x128xf32>
    %cst_5 = arith.constant 0.000000e+00 : f32
    %8 = vector.broadcast %cst_5 : f32 to vector<16x128xf32>
    %9 = arith.maximumf %7, %8 : vector<16x128xf32>
    %10 = arith.truncf %9 : vector<16x128xf32> to vector<16x128xbf16>
    %c0_6 = arith.constant 0 : index
    %c0_7 = arith.constant 0 : index
    %11 = vector.load %arg4[%c0_6, %c0_7] : memref<16x16xbf16, #tpu.memory_space<vmem>>, vector<16x16xbf16>
    %cst_8 = arith.constant dense<0.000000e+00> : vector<16x128xf32>
    %12 = tpu.matmul %11, %10, %cst_8 {dimension_numbers = #tpu.dot_dimension_numbers<[1], [0], [0], [1], [0, 0, 1, 1], [], []>} : vector<16x16xbf16>, vector<16x128xbf16>, vector<16x128xf32> -> vector<16x128xf32>
    %c0_9 = arith.constant 0 : index
    %c0_10 = arith.constant 0 : index
    %13 = vector.load %arg5[%c0_9, %c0_10] : memref<16x1xf32, #tpu.memory_space<vmem>>, vector<16x1xf32>
    %14 = vector.broadcast %13 : vector<16x1xf32> to vector<16x128xf32>
    %15 = arith.addf %12, %14 : vector<16x128xf32>
    %cst_11 = arith.constant 0.000000e+00 : f32
    %16 = vector.broadcast %cst_11 : f32 to vector<16x128xf32>
    %17 = arith.maximumf %15, %16 : vector<16x128xf32>
    %18 = arith.truncf %17 : vector<16x128xf32> to vector<16x128xbf16>
    %c0_12 = arith.constant 0 : index
    %c0_13 = arith.constant 0 : index
    %19 = vector.load %arg6[%c0_12, %c0_13] : memref<8x16xbf16, #tpu.memory_space<vmem>>, vector<8x16xbf16>
    %cst_14 = arith.constant dense<0.000000e+00> : vector<8x128xf32>
    %20 = tpu.matmul %19, %18, %cst_14 {dimension_numbers = #tpu.dot_dimension_numbers<[1], [0], [0], [1], [0, 0, 1, 1], [], []>} : vector<8x16xbf16>, vector<16x128xbf16>, vector<8x128xf32> -> vector<8x128xf32>
    %c0_15 = arith.constant 0 : index
    %c0_16 = arith.constant 0 : index
    %21 = vector.load %arg7[%c0_15, %c0_16] : memref<8x1xf32, #tpu.memory_space<vmem>>, vector<8x1xf32>
    %22 = vector.broadcast %21 : vector<8x1xf32> to vector<8x128xf32>
    %23 = arith.addf %20, %22 : vector<8x128xf32>
    %c0_17 = arith.constant 0 : index
    %c0_18 = arith.constant 0 : index
    %24 = vector.load %arg8[%c0_17, %c0_18] : memref<8x128xf32, #tpu.memory_space<vmem>>, vector<8x128xf32>
    tpu.vector_store %arg8[%c0_17, %c0_18], %23 {strides = array<i32>} : memref<8x128xf32, #tpu.memory_space<vmem>>, vector<8x128xf32>,
    return
  }
  func.func @transform_0(%arg0: i32) -> (i32, i32) {
    %c0_i32 = arith.constant 0 : i32
    %c0_i32_0 = arith.constant 0 : i32
    return %c0_i32, %arg0 : i32, i32
  }
  func.func @transform_1(%arg0: i32) -> (i32, i32) {
    %c0_i32 = arith.constant 0 : i32
    %c0_i32_0 = arith.constant 0 : i32
    %c0_i32_1 = arith.constant 0 : i32
    return %c0_i32, %c0_i32_0 : i32, i32
  }
  func.func @transform_2(%arg0: i32) -> (i32, i32) {
    %c0_i32 = arith.constant 0 : i32
    %c0_i32_0 = arith.constant 0 : i32
    %c0_i32_1 = arith.constant 0 : i32
    return %c0_i32, %c0_i32_0 : i32, i32
  }
  func.func @transform_3(%arg0: i32) -> (i32, i32) {
    %c0_i32 = arith.constant 0 : i32
    %c0_i32_0 = arith.constant 0 : i32
    %c0_i32_1 = arith.constant 0 : i32
    return %c0_i32, %c0_i32_0 : i32, i32
  }
  func.func @transform_4(%arg0: i32) -> (i32, i32) {
    %c0_i32 = arith.constant 0 : i32
    %c0_i32_0 = arith.constant 0 : i32
    %c0_i32_1 = arith.constant 0 : i32
    return %c0_i32, %c0_i32_0 : i32, i32
  }
  func.func @transform_5(%arg0: i32) -> (i32, i32) {
    %c0_i32 = arith.constant 0 : i32
    %c0_i32_0 = arith.constant 0 : i32
    %c0_i32_1 = arith.constant 0 : i32
    return %c0_i32, %c0_i32_0 : i32, i32
  }
  func.func @transform_6(%arg0: i32) -> (i32, i32) {
    %c0_i32 = arith.constant 0 : i32
    %c0_i32_0 = arith.constant 0 : i32
    %c0_i32_1 = arith.constant 0 : i32
    return %c0_i32, %c0_i32_0 : i32, i32
  }
  func.func @transform_7(%arg0: i32) -> (i32, i32) {
    %c0_i32 = arith.constant 0 : i32
    %c0_i32_0 = arith.constant 0 : i32
    return %c0_i32, %arg0 : i32, i32
  }
}

module attributes {stable_mosaic.version = 11 : i64} {
  func.func @_pw_chain_kernel(%arg0: i32, %arg1: memref<8x128xf32, #tpu.memory_space<vmem>>, %arg2: memref<16x8xbf16, #tpu.memory_space<vmem>>, %arg3: memref<16x1xf32, #tpu.memory_space<vmem>>, %arg4: memref<16x16xbf16, #tpu.memory_space<vmem>>, %arg5: memref<16x1xf32, #tpu.memory_space<vmem>>, %arg6: memref<16x16xbf16, #tpu.memory_space<vmem>>, %arg7: memref<16x1xf32, #tpu.memory_space<vmem>>, %arg8: memref<16x128xf32, #tpu.memory_space<vmem>>) attributes {dimension_semantics = [#tpu.dimension_semantics<parallel>], iteration_bounds = array<i64: 1>, scalar_prefetch = 0 : i64, scratch_operands = 0 : i64, tpu.core_type = #tpu.core_type<tc>, window_params = [{transform_indices = @transform_0, window_bounds = array<i64: 8, 128>}, {pipeline_mode = #tpu.pipeline_mode<synchronous>, transform_indices = @transform_1, window_bounds = array<i64: 16, 8>}, {pipeline_mode = #tpu.pipeline_mode<synchronous>, transform_indices = @transform_2, window_bounds = array<i64: 16, 1>}, {pipeline_mode = #tpu.pipeline_mode<synchronous>, transform_indices = @transform_3, window_bounds = array<i64: 16, 16>}, {pipeline_mode = #tpu.pipeline_mode<synchronous>, transform_indices = @transform_4, window_bounds = array<i64: 16, 1>}, {pipeline_mode = #tpu.pipeline_mode<synchronous>, transform_indices = @transform_5, window_bounds = array<i64: 16, 16>}, {pipeline_mode = #tpu.pipeline_mode<synchronous>, transform_indices = @transform_6, window_bounds = array<i64: 16, 1>}, {transform_indices = @transform_7, window_bounds = array<i64: 16, 128>}]} {
    %c0 = arith.constant 0 : index
    %c0_0 = arith.constant 0 : index
    %0 = vector.load %arg1[%c0, %c0_0] : memref<8x128xf32, #tpu.memory_space<vmem>>, vector<8x128xf32>
    %1 = arith.truncf %0 : vector<8x128xf32> to vector<8x128xbf16>
    %c0_1 = arith.constant 0 : index
    %c0_2 = arith.constant 0 : index
    %2 = vector.load %arg2[%c0_1, %c0_2] : memref<16x8xbf16, #tpu.memory_space<vmem>>, vector<16x8xbf16>
    %cst = arith.constant dense<0.000000e+00> : vector<16x128xf32>
    %3 = tpu.matmul %2, %1, %cst {dimension_numbers = #tpu.dot_dimension_numbers<[1], [0], [0], [1], [0, 0, 1, 1], [], []>} : vector<16x8xbf16>, vector<8x128xbf16>, vector<16x128xf32> -> vector<16x128xf32>
    %c0_3 = arith.constant 0 : index
    %c0_4 = arith.constant 0 : index
    %4 = vector.load %arg3[%c0_3, %c0_4] : memref<16x1xf32, #tpu.memory_space<vmem>>, vector<16x1xf32>
    %5 = vector.broadcast %4 : vector<16x1xf32> to vector<16x128xf32>
    %6 = arith.addf %3, %5 : vector<16x128xf32>
    %cst_5 = arith.constant 0.000000e+00 : f32
    %7 = vector.broadcast %cst_5 : f32 to vector<16x128xf32>
    %8 = arith.maximumf %6, %7 : vector<16x128xf32>
    %9 = arith.truncf %8 : vector<16x128xf32> to vector<16x128xbf16>
    %c0_6 = arith.constant 0 : index
    %c0_7 = arith.constant 0 : index
    %10 = vector.load %arg4[%c0_6, %c0_7] : memref<16x16xbf16, #tpu.memory_space<vmem>>, vector<16x16xbf16>
    %cst_8 = arith.constant dense<0.000000e+00> : vector<16x128xf32>
    %11 = tpu.matmul %10, %9, %cst_8 {dimension_numbers = #tpu.dot_dimension_numbers<[1], [0], [0], [1], [0, 0, 1, 1], [], []>} : vector<16x16xbf16>, vector<16x128xbf16>, vector<16x128xf32> -> vector<16x128xf32>
    %c0_9 = arith.constant 0 : index
    %c0_10 = arith.constant 0 : index
    %12 = vector.load %arg5[%c0_9, %c0_10] : memref<16x1xf32, #tpu.memory_space<vmem>>, vector<16x1xf32>
    %13 = vector.broadcast %12 : vector<16x1xf32> to vector<16x128xf32>
    %14 = arith.addf %11, %13 : vector<16x128xf32>
    %cst_11 = arith.constant 0.000000e+00 : f32
    %15 = vector.broadcast %cst_11 : f32 to vector<16x128xf32>
    %16 = arith.maximumf %14, %15 : vector<16x128xf32>
    %17 = arith.truncf %16 : vector<16x128xf32> to vector<16x128xbf16>
    %c0_12 = arith.constant 0 : index
    %c0_13 = arith.constant 0 : index
    %18 = vector.load %arg6[%c0_12, %c0_13] : memref<16x16xbf16, #tpu.memory_space<vmem>>, vector<16x16xbf16>
    %cst_14 = arith.constant dense<0.000000e+00> : vector<16x128xf32>
    %19 = tpu.matmul %18, %17, %cst_14 {dimension_numbers = #tpu.dot_dimension_numbers<[1], [0], [0], [1], [0, 0, 1, 1], [], []>} : vector<16x16xbf16>, vector<16x128xbf16>, vector<16x128xf32> -> vector<16x128xf32>
    %c0_15 = arith.constant 0 : index
    %c0_16 = arith.constant 0 : index
    %20 = vector.load %arg7[%c0_15, %c0_16] : memref<16x1xf32, #tpu.memory_space<vmem>>, vector<16x1xf32>
    %21 = vector.broadcast %20 : vector<16x1xf32> to vector<16x128xf32>
    %22 = arith.addf %19, %21 : vector<16x128xf32>
    %cst_17 = arith.constant 0.000000e+00 : f32
    %23 = vector.broadcast %cst_17 : f32 to vector<16x128xf32>
    %24 = arith.maximumf %22, %23 : vector<16x128xf32>
    %c0_18 = arith.constant 0 : index
    %c0_19 = arith.constant 0 : index
    %25 = vector.load %arg8[%c0_18, %c0_19] : memref<16x128xf32, #tpu.memory_space<vmem>>, vector<16x128xf32>
    tpu.vector_store %arg8[%c0_18, %c0_19], %24 {strides = array<i32>} : memref<16x128xf32, #tpu.memory_space<vmem>>, vector<16x128xf32>,
    return
  }
  func.func @transform_0(%arg0: i32) -> (i32, i32) {
    %c0_i32 = arith.constant 0 : i32
    %c0_i32_0 = arith.constant 0 : i32
    return %c0_i32, %arg0 : i32, i32
  }
  func.func @transform_1(%arg0: i32) -> (i32, i32) {
    %c0_i32 = arith.constant 0 : i32
    %c0_i32_0 = arith.constant 0 : i32
    %c0_i32_1 = arith.constant 0 : i32
    return %c0_i32, %c0_i32_0 : i32, i32
  }
  func.func @transform_2(%arg0: i32) -> (i32, i32) {
    %c0_i32 = arith.constant 0 : i32
    %c0_i32_0 = arith.constant 0 : i32
    %c0_i32_1 = arith.constant 0 : i32
    return %c0_i32, %c0_i32_0 : i32, i32
  }
  func.func @transform_3(%arg0: i32) -> (i32, i32) {
    %c0_i32 = arith.constant 0 : i32
    %c0_i32_0 = arith.constant 0 : i32
    %c0_i32_1 = arith.constant 0 : i32
    return %c0_i32, %c0_i32_0 : i32, i32
  }
  func.func @transform_4(%arg0: i32) -> (i32, i32) {
    %c0_i32 = arith.constant 0 : i32
    %c0_i32_0 = arith.constant 0 : i32
    %c0_i32_1 = arith.constant 0 : i32
    return %c0_i32, %c0_i32_0 : i32, i32
  }
  func.func @transform_5(%arg0: i32) -> (i32, i32) {
    %c0_i32 = arith.constant 0 : i32
    %c0_i32_0 = arith.constant 0 : i32
    %c0_i32_1 = arith.constant 0 : i32
    return %c0_i32, %c0_i32_0 : i32, i32
  }
  func.func @transform_6(%arg0: i32) -> (i32, i32) {
    %c0_i32 = arith.constant 0 : i32
    %c0_i32_0 = arith.constant 0 : i32
    %c0_i32_1 = arith.constant 0 : i32
    return %c0_i32, %c0_i32_0 : i32, i32
  }
  func.func @transform_7(%arg0: i32) -> (i32, i32) {
    %c0_i32 = arith.constant 0 : i32
    %c0_i32_0 = arith.constant 0 : i32
    return %c0_i32, %arg0 : i32, i32
  }
}

module attributes {stable_mosaic.version = 11 : i64} {
  func.func @_mm_kernel(%arg0: i32, %arg1: memref<128x128xbf16, #tpu.memory_space<vmem>>, %arg2: memref<128x128xbf16, #tpu.memory_space<vmem>>, %arg3: memref<128x1xf32, #tpu.memory_space<vmem>>, %arg4: memref<128x128xf32, #tpu.memory_space<vmem>>) attributes {dimension_semantics = [#tpu.dimension_semantics<parallel>], iteration_bounds = array<i64: 1>, scalar_prefetch = 0 : i64, scratch_operands = 0 : i64, tpu.core_type = #tpu.core_type<tc>, window_params = [{pipeline_mode = #tpu.pipeline_mode<synchronous>, transform_indices = @transform_0, window_bounds = array<i64: 128, 128>}, {transform_indices = @transform_1, window_bounds = array<i64: 128, 128>}, {pipeline_mode = #tpu.pipeline_mode<synchronous>, transform_indices = @transform_2, window_bounds = array<i64: 128, 1>}, {transform_indices = @transform_3, window_bounds = array<i64: 128, 128>}]} {
    %c0 = arith.constant 0 : index
    %c0_0 = arith.constant 0 : index
    %0 = vector.load %arg1[%c0, %c0_0] : memref<128x128xbf16, #tpu.memory_space<vmem>>, vector<128x128xbf16>
    %c0_1 = arith.constant 0 : index
    %c0_2 = arith.constant 0 : index
    %1 = vector.load %arg2[%c0_1, %c0_2] : memref<128x128xbf16, #tpu.memory_space<vmem>>, vector<128x128xbf16>
    %cst = arith.constant dense<0.000000e+00> : vector<128x128xf32>
    %2 = tpu.matmul %0, %1, %cst {dimension_numbers = #tpu.dot_dimension_numbers<[1], [0], [0], [1], [0, 0, 1, 1], [], []>} : vector<128x128xbf16>, vector<128x128xbf16>, vector<128x128xf32> -> vector<128x128xf32>
    %c0_3 = arith.constant 0 : index
    %c0_4 = arith.constant 0 : index
    %3 = vector.load %arg3[%c0_3, %c0_4] : memref<128x1xf32, #tpu.memory_space<vmem>>, vector<128x1xf32>
    %4 = vector.broadcast %3 : vector<128x1xf32> to vector<128x128xf32>
    %5 = arith.addf %2, %4 : vector<128x128xf32>
    %cst_5 = arith.constant 0.000000e+00 : f32
    %6 = vector.broadcast %cst_5 : f32 to vector<128x128xf32>
    %7 = arith.cmpf oge, %5, %6 : vector<128x128xf32>
    %cst_6 = arith.constant 0.00999999977 : f32
    %8 = vector.broadcast %cst_6 : f32 to vector<128x128xf32>
    %9 = arith.mulf %8, %5 : vector<128x128xf32>
    %10 = arith.select %7, %5, %9 : vector<128x128xi1>, vector<128x128xf32>
    %c0_7 = arith.constant 0 : index
    %c0_8 = arith.constant 0 : index
    %11 = vector.load %arg4[%c0_7, %c0_8] : memref<128x128xf32, #tpu.memory_space<vmem>>, vector<128x128xf32>
    tpu.vector_store %arg4[%c0_7, %c0_8], %10 {strides = array<i32>} : memref<128x128xf32, #tpu.memory_space<vmem>>, vector<128x128xf32>,
    return
  }
  func.func @transform_0(%arg0: i32) -> (i32, i32) {
    %c0_i32 = arith.constant 0 : i32
    %c0_i32_0 = arith.constant 0 : i32
    %c0_i32_1 = arith.constant 0 : i32
    return %c0_i32, %c0_i32_0 : i32, i32
  }
  func.func @transform_1(%arg0: i32) -> (i32, i32) {
    %c0_i32 = arith.constant 0 : i32
    %c0_i32_0 = arith.constant 0 : i32
    return %c0_i32, %arg0 : i32, i32
  }
  func.func @transform_2(%arg0: i32) -> (i32, i32) {
    %c0_i32 = arith.constant 0 : i32
    %c0_i32_0 = arith.constant 0 : i32
    %c0_i32_1 = arith.constant 0 : i32
    return %c0_i32, %c0_i32_0 : i32, i32
  }
  func.func @transform_3(%arg0: i32) -> (i32, i32) {
    %c0_i32 = arith.constant 0 : i32
    %c0_i32_0 = arith.constant 0 : i32
    return %c0_i32, %arg0 : i32, i32
  }
}

module attributes {stable_mosaic.version = 11 : i64} {
  func.func @_mm_kernel(%arg0: i32, %arg1: memref<128x128xbf16, #tpu.memory_space<vmem>>, %arg2: memref<128x512xbf16, #tpu.memory_space<vmem>>, %arg3: memref<128x1xf32, #tpu.memory_space<vmem>>, %arg4: memref<128x512xf32, #tpu.memory_space<vmem>>) attributes {dimension_semantics = [#tpu.dimension_semantics<parallel>], iteration_bounds = array<i64: 2>, scalar_prefetch = 0 : i64, scratch_operands = 0 : i64, tpu.core_type = #tpu.core_type<tc>, window_params = [{pipeline_mode = #tpu.pipeline_mode<synchronous>, transform_indices = @transform_0, window_bounds = array<i64: 128, 128>}, {transform_indices = @transform_1, window_bounds = array<i64: 128, 512>}, {pipeline_mode = #tpu.pipeline_mode<synchronous>, transform_indices = @transform_2, window_bounds = array<i64: 128, 1>}, {transform_indices = @transform_3, window_bounds = array<i64: 128, 512>}]} {
    %c0 = arith.constant 0 : index
    %c0_0 = arith.constant 0 : index
    %0 = vector.load %arg1[%c0, %c0_0] : memref<128x128xbf16, #tpu.memory_space<vmem>>, vector<128x128xbf16>
    %c0_1 = arith.constant 0 : index
    %c0_2 = arith.constant 0 : index
    %1 = vector.load %arg2[%c0_1, %c0_2] : memref<128x512xbf16, #tpu.memory_space<vmem>>, vector<128x512xbf16>
    %cst = arith.constant dense<0.000000e+00> : vector<128x512xf32>
    %2 = tpu.matmul %0, %1, %cst {dimension_numbers = #tpu.dot_dimension_numbers<[1], [0], [0], [1], [0, 0, 1, 1], [], []>} : vector<128x128xbf16>, vector<128x512xbf16>, vector<128x512xf32> -> vector<128x512xf32>
    %c0_3 = arith.constant 0 : index
    %c0_4 = arith.constant 0 : index
    %3 = vector.load %arg3[%c0_3, %c0_4] : memref<128x1xf32, #tpu.memory_space<vmem>>, vector<128x1xf32>
    %4 = vector.broadcast %3 : vector<128x1xf32> to vector<128x512xf32>
    %5 = arith.addf %2, %4 : vector<128x512xf32>
    %cst_5 = arith.constant 0.000000e+00 : f32
    %6 = vector.broadcast %cst_5 : f32 to vector<128x512xf32>
    %7 = arith.cmpf oge, %5, %6 : vector<128x512xf32>
    %cst_6 = arith.constant 0.00999999977 : f32
    %8 = vector.broadcast %cst_6 : f32 to vector<128x512xf32>
    %9 = arith.mulf %8, %5 : vector<128x512xf32>
    %10 = arith.select %7, %5, %9 : vector<128x512xi1>, vector<128x512xf32>
    %c0_7 = arith.constant 0 : index
    %c0_8 = arith.constant 0 : index
    %11 = vector.load %arg4[%c0_7, %c0_8] : memref<128x512xf32, #tpu.memory_space<vmem>>, vector<128x512xf32>
    tpu.vector_store %arg4[%c0_7, %c0_8], %10 {strides = array<i32>} : memref<128x512xf32, #tpu.memory_space<vmem>>, vector<128x512xf32>,
    return
  }
  func.func @transform_0(%arg0: i32) -> (i32, i32) {
    %c0_i32 = arith.constant 0 : i32
    %c0_i32_0 = arith.constant 0 : i32
    %c0_i32_1 = arith.constant 0 : i32
    return %c0_i32, %c0_i32_0 : i32, i32
  }
  func.func @transform_1(%arg0: i32) -> (i32, i32) {
    %c0_i32 = arith.constant 0 : i32
    %c0_i32_0 = arith.constant 0 : i32
    return %c0_i32, %arg0 : i32, i32
  }
  func.func @transform_2(%arg0: i32) -> (i32, i32) {
    %c0_i32 = arith.constant 0 : i32
    %c0_i32_0 = arith.constant 0 : i32
    %c0_i32_1 = arith.constant 0 : i32
    return %c0_i32, %c0_i32_0 : i32, i32
  }
  func.func @transform_3(%arg0: i32) -> (i32, i32) {
    %c0_i32 = arith.constant 0 : i32
    %c0_i32_0 = arith.constant 0 : i32
    return %c0_i32, %arg0 : i32, i32
  }
}

module attributes {stable_mosaic.version = 11 : i64} {
  func.func @_mm_kernel(%arg0: i32, %arg1: memref<2x432xbf16, #tpu.memory_space<vmem>>, %arg2: memref<432x2048xbf16, #tpu.memory_space<vmem>>, %arg3: memref<2x1xf32, #tpu.memory_space<vmem>>, %arg4: memref<2x2048xf32, #tpu.memory_space<vmem>>) attributes {dimension_semantics = [#tpu.dimension_semantics<parallel>], iteration_bounds = array<i64: 4>, scalar_prefetch = 0 : i64, scratch_operands = 0 : i64, tpu.core_type = #tpu.core_type<tc>, window_params = [{pipeline_mode = #tpu.pipeline_mode<synchronous>, transform_indices = @transform_0, window_bounds = array<i64: 2, 432>}, {transform_indices = @transform_1, window_bounds = array<i64: 432, 2048>}, {pipeline_mode = #tpu.pipeline_mode<synchronous>, transform_indices = @transform_2, window_bounds = array<i64: 2, 1>}, {transform_indices = @transform_3, window_bounds = array<i64: 2, 2048>}]} {
    %c0 = arith.constant 0 : index
    %c0_0 = arith.constant 0 : index
    %0 = vector.load %arg1[%c0, %c0_0] : memref<2x432xbf16, #tpu.memory_space<vmem>>, vector<2x432xbf16>
    %c0_1 = arith.constant 0 : index
    %c0_2 = arith.constant 0 : index
    %1 = vector.load %arg2[%c0_1, %c0_2] : memref<432x2048xbf16, #tpu.memory_space<vmem>>, vector<432x2048xbf16>
    %cst = arith.constant dense<0.000000e+00> : vector<2x2048xf32>
    %2 = tpu.matmul %0, %1, %cst {dimension_numbers = #tpu.dot_dimension_numbers<[1], [0], [0], [1], [0, 0, 1, 1], [], []>} : vector<2x432xbf16>, vector<432x2048xbf16>, vector<2x2048xf32> -> vector<2x2048xf32>
    %c0_3 = arith.constant 0 : index
    %c0_4 = arith.constant 0 : index
    %3 = vector.load %arg3[%c0_3, %c0_4] : memref<2x1xf32, #tpu.memory_space<vmem>>, vector<2x1xf32>
    %4 = vector.broadcast %3 : vector<2x1xf32> to vector<2x2048xf32>
    %5 = arith.addf %2, %4 : vector<2x2048xf32>
    %6 = tpu.iota {dimensions = array<i32: 0>} : vector<2x2048xi32>
    %c0_i32 = arith.constant 0 : i32
    %7 = vector.broadcast %c0_i32 : i32 to vector<2x2048xi32>
    %8 = arith.cmpi eq, %6, %7 : vector<2x2048xi32>
    %cst_5 = arith.constant 0.000000e+00 : f32
    %cst_6 = arith.constant -1.000000e+00 : f32
    %9 = vector.broadcast %cst_5 : f32 to vector<2x2048xf32>
    %10 = vector.broadcast %cst_6 : f32 to vector<2x2048xf32>
    %11 = arith.select %8, %9, %10 : vector<2x2048xi1>, vector<2x2048xf32>
    %cst_7 = arith.constant 1.000000e+00 : f32
    %12 = arith.maximumf %11, %5 : vector<2x2048xf32>
    %13 = vector.broadcast %cst_7 : f32 to vector<2x2048xf32>
    %14 = arith.minimumf %13, %12 : vector<2x2048xf32>
    %c0_8 = arith.constant 0 : index
    %c0_9 = arith.constant 0 : index
    %15 = vector.load %arg4[%c0_8, %c0_9] : memref<2x2048xf32, #tpu.memory_space<vmem>>, vector<2x2048xf32>
    tpu.vector_store %arg4[%c0_8, %c0_9], %14 {strides = array<i32>} : memref<2x2048xf32, #tpu.memory_space<vmem>>, vector<2x2048xf32>,
    return
  }
  func.func @transform_0(%arg0: i32) -> (i32, i32) {
    %c0_i32 = arith.constant 0 : i32
    %c0_i32_0 = arith.constant 0 : i32
    %c0_i32_1 = arith.constant 0 : i32
    return %c0_i32, %c0_i32_0 : i32, i32
  }
  func.func @transform_1(%arg0: i32) -> (i32, i32) {
    %c0_i32 = arith.constant 0 : i32
    %c0_i32_0 = arith.constant 0 : i32
    return %c0_i32, %arg0 : i32, i32
  }
  func.func @transform_2(%arg0: i32) -> (i32, i32) {
    %c0_i32 = arith.constant 0 : i32
    %c0_i32_0 = arith.constant 0 : i32
    %c0_i32_1 = arith.constant 0 : i32
    return %c0_i32, %c0_i32_0 : i32, i32
  }
  func.func @transform_3(%arg0: i32) -> (i32, i32) {
    %c0_i32 = arith.constant 0 : i32
    %c0_i32_0 = arith.constant 0 : i32
    return %c0_i32, %arg0 : i32, i32
  }
}

</mosaic_0001>

<llo_original>
// kernel: forward.11
$region0: #{forward.11}
  #allocation0 [shape = 'u32[]', space=smem, size = 0x4, offset = 0x4, fixed_abs, tag = 'smem constant byte address 0x4 - core index']
  #allocation1 [shape = 'u32[144,128]{1,0:T(1,128)}', space=vmem, size = 0x12000, scoped, tag = 'internal scratch']
  %s0 = inlined_call_operand.vmem [shape: bf16[16,27], index: 0, kind: input, shape index: {}]
  %s1 = inlined_call_operand.vmem [shape: bf16[27,1024], index: 1, kind: input, shape index: {}]
  %s2 = inlined_call_operand.vmem [shape: f32[16,1], index: 2, kind: input, shape index: {}]
  %s3 = inlined_call_operand.vmem [shape: f32[16,1024], index: 3, kind: output, shape index: {}]
  %s4 = sld [smem:[#allocation0]]
  $region87: #{forward.11} parent=0
    _
  %s6 = ssub.s32 1, %s4
  %s7 = scalar_select 0, %s6, %s4
  $region1: #{forward.11} parent=0
    #allocation2 [shape = 'u8[65536]{0}', space=vmem, size = 0x10000, scoped, tag = 'input window, operand 1']
    #allocation3 [shape = 'u8[65536]{0}', space=vmem, size = 0x10000, scoped, tag = 'output window, operand 0']
    loop: start=0, step=1, limit=4
    $region2: #{forward.11} parent=1 // loop_pre_header
      _
    $region3: #{forward.11} parent=1 // loop_header
      %s9 = sphi 0, %s13
      %p10 = scmp.ge.s32.totalorder %s9, 4
      %s17 = sphi 0, %s17
      %s19 = sphi 0, %s17
      %s20 = sphi 0, %s19
      %s34 = sphi 0, %s20
      %s40 = sphi 0, %s42
      %s43 = sphi 0, %s40
      %s44 = sphi 0, %s43
      %s60 = sphi 0, %s44
      %s64 = sphi 0, %s64
      %s66 = sphi 0, %s64
      %s67 = sphi 0, %s66
      %s81 = sphi 0, %s67
      %s87 = sphi 0, %s89
      %s90 = sphi 0, %s87
      %s91 = sphi 0, %s90
      %s107 = sphi 0, %s91
    $region4: #{forward.11} parent=1 // loop_header_branch
      %12 = sbr.rel (%p10) target = $region8
    $region5: #{forward.11} parent=1 // loop_body
      %s14 = ssub.s32 %s9, 1
      %s15 = ssub.s32 %s9, 2
      %s16 = sadd.s32 %s9, 1
      %s18 = sadd.s32 %s17, 1
      %p21 = scmp.eq.s32.totalorder %s9, 1
      %p22 = scmp.ne.s32.totalorder %s17, %s19
      %p23 = scmp.eq.s32.totalorder %s9, 0
      %p24 = por %p22, %p23
      %p25 = scmp.ne.s32.totalorder %s17, %s19
      %p26 = scmp.eq.s32.totalorder %s14, 1
      %p27 = por %p25, %p26
      %p28 = scmp.ne.s32.totalorder %s19, %s20
      %p29 = scmp.eq.s32.totalorder %s14, 0
      %p30 = por %p28, %p29
      %p31 = scmp.ne.s32.totalorder %s19, %s20
      %p32 = scmp.eq.s32.totalorder %s15, 1
      %p33 = por %p31, %p32
      %p35 = scmp.ne.s32.totalorder %s20, %s34
      %p36 = scmp.eq.s32.totalorder %s15, 0
      %p37 = por %p35, %p36
      %s38 = ssub.s32 %s9, %s16
      %p39 = scmp.eq.s32.totalorder %s38, 0
      %s41 = sadd.s32 %s40, 1
      %s42 = scalar_select %p39, %s40, %s41
      %p45 = pneg %p39
      %p46 = scmp.eq.s32.totalorder %s9, 1
      %p47 = por %p45, %p46
      %p48 = scmp.ne.s32.totalorder %s40, %s43
      %p49 = scmp.eq.s32.totalorder %s9, 0
      %p50 = por %p48, %p49
      %p51 = scmp.ne.s32.totalorder %s40, %s43
      %p52 = scmp.eq.s32.totalorder %s14, 1
      %p53 = por %p51, %p52
      %p54 = scmp.ne.s32.totalorder %s43, %s44
      %p55 = scmp.eq.s32.totalorder %s14, 0
      %p56 = por %p54, %p55
      %p57 = scmp.ne.s32.totalorder %s43, %s44
      %p58 = scmp.eq.s32.totalorder %s15, 1
      %p59 = por %p57, %p58
      %p61 = scmp.ne.s32.totalorder %s44, %s60
      %p62 = scmp.eq.s32.totalorder %s15, 0
      %p63 = por %p61, %p62
      %s65 = sadd.s32 %s64, 1
      %p68 = scmp.eq.s32.totalorder %s9, 1
      %p69 = scmp.ne.s32.totalorder %s64, %s66
      %p70 = scmp.eq.s32.totalorder %s9, 0
      %p71 = por %p69, %p70
      %p72 = scmp.ne.s32.totalorder %s64, %s66
      %p73 = scmp.eq.s32.totalorder %s14, 1
      %p74 = por %p72, %p73
      %p75 = scmp.ne.s32.totalorder %s66, %s67
      %p76 = scmp.eq.s32.totalorder %s14, 0
      %p77 = por %p75, %p76
      %p78 = scmp.ne.s32.totalorder %s66, %s67
      %p79 = scmp.eq.s32.totalorder %s15, 1
      %p80 = por %p78, %p79
      %p82 = scmp.ne.s32.totalorder %s67, %s81
      %p83 = scmp.eq.s32.totalorder %s15, 0
      %p84 = por %p82, %p83
      %s85 = ssub.s32 %s9, %s16
      %p86 = scmp.eq.s32.totalorder %s85, 0
      %s88 = sadd.s32 %s87, 1
      %s89 = scalar_select %p86, %s87, %s88
      %p92 = pneg %p86
      %p93 = scmp.eq.s32.totalorder %s9, 1
      %p94 = por %p92, %p93
      %p95 = scmp.ne.s32.totalorder %s87, %s90
      %p96 = scmp.eq.s32.totalorder %s9, 0
      %p97 = por %p95, %p96
      %p98 = scmp.ne.s32.totalorder %s87, %s90
      %p99 = scmp.eq.s32.totalorder %s14, 1
      %p100 = por %p98, %p99
      %p101 = scmp.ne.s32.totalorder %s90, %s91
      %p102 = scmp.eq.s32.totalorder %s14, 0
      %p103 = por %p101, %p102
      %p104 = scmp.ne.s32.totalorder %s90, %s91
      %p105 = scmp.eq.s32.totalorder %s15, 1
      %p106 = por %p104, %p105
      %p108 = scmp.ne.s32.totalorder %s91, %s107
      %p109 = scmp.eq.s32.totalorder %s15, 0
      %p110 = por %p108, %p109
      %p111 = scmp.le.s32.totalorder 1, %s9
      %p112 = scmp.lt.s32.totalorder %s9, 3
      %p113 = pnand %p111, %p112
      %p114 = pneg %p113
      // Predicated region
      $region9: #{forward.11} parent=5 // pred_check
        _
      $region10: #{forward.11} parent=5 // pred_check_branch
        %116 = sbr.rel (%p113) target = $region12
      $region11: #{forward.11} parent=5 // pred_region
        %s117 = ssub.s32 %s9, 1
        // Predicated region
        $region13: #{forward.11} parent=11 // pred_check
          %p118 = pneg %p30
        $region14: #{forward.11} parent=11 // pred_check_branch
          %120 = sbr.rel (%p118) target = $region16
        $region15: #{forward.11} parent=11 // pred_region
          _
        $region16: #{forward.11} parent=11 // pred_fallthru
          _
        // Predicated region
        $region17: #{forward.11} parent=11 // pred_check
          %p121 = pneg %p77
        $region18: #{forward.11} parent=11 // pred_check_branch
          %123 = sbr.rel (%p121) target = $region20
        $region19: #{forward.11} parent=11 // pred_region
          _
        $region20: #{forward.11} parent=11 // pred_fallthru
          _
      $region12: #{forward.11} parent=5 // pred_fallthru
        _
      %p124 = scmp.lt.s32.totalorder %s9, 2
      // Predicated region
      $region21: #{forward.11} parent=5 // pred_check
        %p125 = pneg %p124
      $region22: #{forward.11} parent=5 // pred_check_branch
        %127 = sbr.rel (%p125) target = $region24
      $region23: #{forward.11} parent=5 // pred_region
        // Predicated region
        $region25: #{forward.11} parent=23 // pred_check
          %p128 = pneg %p50
        $region26: #{forward.11} parent=23 // pred_check_branch
          %130 = sbr.rel (%p128) target = $region28
        $region27: #{forward.11} parent=23 // pred_region
          %s131 = sand.u32 %s40, 1
          %s132 = sand.u32 %s40, 1
          %s133 = smul.addr %s132, 64
          %s134 = scalar_lea.vmem [#allocation2], %s133
          %s135 = smul.u32 4, %s9
          %s136 = smul.addr %s135, 4
          %s137 = scalar_lea.vmem %s1, %s136
          // Predicated region
          $region29: #{forward.11} parent=27 // pred_check
            _
          $region30: #{forward.11} parent=27 // pred_check_branch
            %139 = sbr.rel (0) target = $region32
          $region31: #{forward.11} parent=27 // pred_region
            // Predicated region
            $region33: #{forward.11} parent=31 // pred_check
              _
            $region34: #{forward.11} parent=31 // pred_check_branch
              %141 = sbr.rel (0) target = $region36
            $region35: #{forward.11} parent=31 // pred_region
              loop: start=0, step=1, limit=1
              $region37: #{forward.11} parent=35 // loop_pre_header
                _
              $region38: #{forward.11} parent=35 // loop_header
                %s143 = sphi 0, %s147
                %p144 = scmp.ge.s32.totalorder %s143, 1
                %s148 = sphi %s137, %s137
                %s149 = sphi %s134, %s134
              $region39: #{forward.11} parent=35 // loop_header_branch
                %146 = sbr.rel (%p144) target = $region43
              $region40: #{forward.11} parent=35 // loop_body
                %v150 = vld [vmem:[%s148] sm:$0xff]
                %151 = vst [vmem:[%s149] sm:$0xff] %v150
                %v152 = vld [vmem:[%s148 + $0x8] sm:$0xff]
                %153 = vst [vmem:[%s149 + $0x8] sm:$0xff] %v152
                %v154 = vld [vmem:[%s148 + $0x20] sm:$0xff]
                %155 = vst [vmem:[%s149 + $0x10] sm:$0xff] %v154
                %v156 = vld [vmem:[%s148 + $0x28] sm:$0xff]
                %157 = vst [vmem:[%s149 + $0x18] sm:$0xff] %v156
                %v158 = vld [vmem:[%s148 + $0x40] sm:$0xff]
                %159 = vst [vmem:[%s149 + $0x20] sm:$0xff] %v158
                %v160 = vld [vmem:[%s148 + $0x48] sm:$0xff]
                %161 = vst [vmem:[%s149 + $0x28] sm:$0xff] %v160
                %v162 = vld [vmem:[%s148 + $0x60] sm:$0xff]
                %163 = vst [vmem:[%s149 + $0x30] sm:$0xff] %v162
                %v164 = vld [vmem:[%s148 + $0x68] sm:$0xff]
                %165 = vst [vmem:[%s149 + $0x38] sm:$0xff] %v164
              $region41: #{forward.11} parent=35 // loop_footer
                %s147 = sadd.s32 1, %s143
              $region42: #{forward.11} parent=35 // loop_footer_branch
                %142 = sbr.rel target = $region38
              $region43: #{forward.11} parent=35 // loop_exit
                _
            $region36: #{forward.11} parent=31 // pred_fallthru
              _
            // Predicated region
            $region44: #{forward.11} parent=31 // pred_check
              _
            $region45: #{forward.11} parent=31 // pred_check_branch
              %167 = sbr.rel target = $region47
            $region46: #{forward.11} parent=31 // pred_region
              _
            $region47: #{forward.11} parent=31 // pred_fallthru
              _
          $region32: #{forward.11} parent=27 // pred_fallthru
            _
          %168 = vnop
        $region28: #{forward.11} parent=23 // pred_fallthru
          _
      $region24: #{forward.11} parent=5 // pred_fallthru
        _
      %p169 = scmp.le.s32.totalorder 1, %s9
      %p170 = scmp.lt.s32.totalorder %s9, 3
      %p171 = pnand %p169, %p170
      %p172 = pneg %p171
      // Predicated region
      $region48: #{forward.11} parent=5 // pred_check
        _
      $region49: #{forward.11} parent=5 // pred_check_branch
        %174 = sbr.rel (%p171) target = $region51
      $region50: #{forward.11} parent=5 // pred_region
        %s175 = ssub.s32 %s9, 1
        %s176 = sand.u32 %s43, 1
        %s177 = sand.u32 %s43, 1
        %s178 = smul.addr %s177, 64
        %s179 = scalar_lea.vmem [#allocation2], %s178
        // Predicated region
        $region52: #{forward.11} parent=50 // pred_check
          %p180 = pneg %p56
        $region53: #{forward.11} parent=50 // pred_check_branch
          %182 = sbr.rel (%p180) target = $region55
        $region54: #{forward.11} parent=50 // pred_region
          _
        $region55: #{forward.11} parent=50 // pred_fallthru
          _
        %p183 = pneg %p30
        %p184 = pneg %p27
        %s185 = sand.u32 %s43, 1
        %s186 = sand.u32 %s43, 1
        %s187 = smul.addr %s186, 64
        %s188 = scalar_lea.vmem [#allocation2], %s187
        %p189 = pneg %p56
        %p190 = pneg %p53
        %p191 = pneg %p77
        %p192 = pneg %p74
        %p193 = pneg %p103
        %p194 = pneg %p100
        %s195 = sand.u32 %s90, 1
        %s196 = sand.u32 %s90, 1
        %s197 = smul.addr %s196, 64
        %s198 = scalar_lea.vmem [#allocation3], %s197
        %s199 = smul.u32 4, %s14
        %s200 = smul.u32 4, %s14
        %v202 = vld [vmem:[%s0] sm:$0xf]
        %v203 = vld [vmem:[%s0 + $0x4] sm:$0xf]
        %v204 = vld [vmem:[%s179] sm:$0xff]
        %v205 = vld [vmem:[%s179 + $0x8] sm:$0xff]
        %v206 = vld [vmem:[%s179 + $0x10] sm:$0xff]
        %v207 = vld [vmem:[%s179 + $0x18] sm:$0xff]
        %v208 = vld [vmem:[%s179 + $0x20] sm:$0xff]
        %v209 = vld [vmem:[%s179 + $0x28] sm:$0xff]
        %v210 = vld [vmem:[%s179 + $0x30] sm:$0x33]
        %v211 = vld [vmem:[%s179 + $0x38] sm:$0x33]
        %v212 = vld [vmem:[%s2] sm:$0xff]
        %v213 = vld [vmem:[%s2 + $0x8] sm:$0xff]
        %215 = vset.pattern.permute.xlu0 0
        %216 = vperm.xlu0 %215, %v212
        %v217 = vpop.permute.xlu0 %216
        %220 = vset.pattern.permute.xlu0 0
        %221 = vperm.xlu0 %220, %v213
        %v222 = vpop.permute.xlu0 %221
        %v226 = vunpack.c.l.b16 %v202
        %v227 = vunpack.c.l.b16 %v203
        %v228 = vpack.c.b16 %v227, %v226
        %v237 = vunpack.c.l.b16 %v204
        %v238 = vunpack.c.h.b16 %v204
        %v239 = vunpack.c.l.b16 %v205
        %v240 = vunpack.c.h.b16 %v205
        %v241 = vunpack.c.l.b16 %v206
        %v242 = vunpack.c.h.b16 %v206
        %v243 = vunpack.c.l.b16 %v207
        %v244 = vunpack.c.h.b16 %v207
        %v245 = vunpack.c.l.b16 %v208
        %v246 = vunpack.c.h.b16 %v208
        %v247 = vunpack.c.l.b16 %v209
        %v248 = vunpack.c.h.b16 %v209
        %v249 = vunpack.c.l.b16 %v210
        %v250 = vunpack.c.h.b16 %v210
        %v251 = vunpack.c.l.b16 %v211
        %v252 = vunpack.c.h.b16 %v211
        %v253 = vpack.c.b16 %v241, %v237
        %v254 = vpack.c.b16 %v242, %v238
        %v255 = vpack.c.b16 %v243, %v239
        %v256 = vpack.c.b16 %v244, %v240
        %v257 = vpack.c.b16 %v249, %v245
        %v258 = vpack.c.b16 %v250, %v246
        %v259 = vpack.c.b16 %v251, %v247
        %v260 = vpack.c.b16 %v252, %v248
        %vm265 = vcmask 220160
        %v267 = vsel %vm265, %v228, 0
        %vm269 = vcmask 1044480
        %vm270 = vcmask 1045504
        %v271 = vsel %vm269, 4294967295, 65535
        %v272 = vsel %vm270, %v271, 0
        %v274 = vand.u32 %v257, %v272
        %v277 = vand.u32 %v258, %v272
        %v280 = vand.u32 %v259, %v272
        %v283 = vand.u32 %v260, %v272
        %285 = vmatprep.subr.bf16.mxu0 %v254
        %286 = vmatpush1.bf16.msra.mxu0 %v253
        %287 = vmatprep.subr.bf16.mxu0 %v277
        %288 = vmatpush1.bf16.msra.mxu0 %v274
        %289 = vmatprep.subr.bf16.mxu0 0
        %290 = vmatpush1.bf16.msra.mxu0 0
        %291 = vmatprep.subr.bf16.mxu0 0
        %292 = vmatpush1.bf16.msra.mxu0 0
        %293 = vmatprep.subr.bf16.mxu0 0
        %294 = vmatpush1.bf16.msra.mxu0 0
        %295 = vmatprep.subr.bf16.mxu0 0
        %296 = vmatpush1.bf16.msra.mxu0 0
        %297 = vmatprep.subr.bf16.mxu0 0
        %298 = vmatpush1.bf16.msra.mxu0 0
        %299 = vmatprep.subr.bf16.mxu0 0
        %300 = vmatpush1.bf16.msra.mxu0 0
        %301 = vmatprep.subr.bf16.mxu0 0
        %302 = vmatpush1.bf16.msra.mxu0 0
        %303 = vmatprep.subr.bf16.mxu0 0
        %304 = vmatpush1.bf16.msra.mxu0 0
        %305 = vmatprep.subr.bf16.mxu0 0
        %306 = vmatpush1.bf16.msra.mxu0 0
        %307 = vmatprep.subr.bf16.mxu0 0
        %308 = vmatpush1.bf16.msra.mxu0 0
        %309 = vmatprep.subr.bf16.mxu0 0
        %310 = vmatpush1.bf16.msra.mxu0 0
        %311 = vmatprep.subr.bf16.mxu0 0
        %312 = vmatpush1.bf16.msra.mxu0 0
        %313 = vmatprep.subr.bf16.mxu0 0
        %314 = vmatpush1.bf16.msra.mxu0 0
        %315 = vmatprep.subr.bf16.mxu0 0
        %316 = vmatpush1.bf16.msra.mxu0 0
        %317 = vmatprep.mubr.bf16.mxu0 0
        %318 = vmatmul.mubr.bf16.gmra.mrb[0].mxu0 %v267
        %v319 = vpop.f32.mrb[0].mxu0
        %v320 = vadd.f32 %v217, %v319
        %v321 = vpop.f32.mrb[0].mxu0
        %v322 = vadd.f32 %v217, %v321
        %v323 = vpop.f32.mrb[0].mxu0
        %v324 = vadd.f32 %v222, %v323
        %v325 = vpop.f32.mrb[0].mxu0
        %v326 = vadd.f32 %v222, %v325
        %327 = vdwg.mxu0
        %328 = vmatprep.subr.bf16.mxu0 %v256
        %329 = vmatpush1.bf16.msra.mxu0 %v255
        %330 = vmatprep.subr.bf16.mxu0 %v283
        %331 = vmatpush1.bf16.msra.mxu0 %v280
        %332 = vmatprep.subr.bf16.mxu0 0
        %333 = vmatpush1.bf16.msra.mxu0 0
        %334 = vmatprep.subr.bf16.mxu0 0
        %335 = vmatpush1.bf16.msra.mxu0 0
        %336 = vmatprep.subr.bf16.mxu0 0
        %337 = vmatpush1.bf16.msra.mxu0 0
        %338 = vmatprep.subr.bf16.mxu0 0
        %339 = vmatpush1.bf16.msra.mxu0 0
        %340 = vmatprep.subr.bf16.mxu0 0
        %341 = vmatpush1.bf16.msra.mxu0 0
        %342 = vmatprep.subr.bf16.mxu0 0
        %343 = vmatpush1.bf16.msra.mxu0 0
        %344 = vmatprep.subr.bf16.mxu0 0
        %345 = vmatpush1.bf16.msra.mxu0 0
        %346 = vmatprep.subr.bf16.mxu0 0
        %347 = vmatpush1.bf16.msra.mxu0 0
        %348 = vmatprep.subr.bf16.mxu0 0
        %349 = vmatpush1.bf16.msra.mxu0 0
        %350 = vmatprep.subr.bf16.mxu0 0
        %351 = vmatpush1.bf16.msra.mxu0 0
        %352 = vmatprep.subr.bf16.mxu0 0
        %353 = vmatpush1.bf16.msra.mxu0 0
        %354 = vmatprep.subr.bf16.mxu0 0
        %355 = vmatpush1.bf16.msra.mxu0 0
        %356 = vmatprep.subr.bf16.mxu0 0
        %357 = vmatpush1.bf16.msra.mxu0 0
        %358 = vmatprep.subr.bf16.mxu0 0
        %359 = vmatpush1.bf16.msra.mxu0 0
        %360 = vmatprep.mubr.bf16.mxu0 0
        %361 = vmatmul.mubr.bf16.gmra.mrb[0].mxu0 %v267
        %v362 = vpop.f32.mrb[0].mxu0
        %v363 = vadd.f32 %v217, %v362
        %v364 = vpop.f32.mrb[0].mxu0
        %v365 = vadd.f32 %v217, %v364
        %v366 = vpop.f32.mrb[0].mxu0
        %v367 = vadd.f32 %v222, %v366
        %v368 = vpop.f32.mrb[0].mxu0
        %v369 = vadd.f32 %v222, %v368
        %370 = vdwg.mxu0
        %vm371 = vcmp.ge.f32.partialorder %v320, 0.0
        %vm372 = vcmp.ge.f32.partialorder %v322, 0.0
        %vm373 = vcmp.ge.f32.partialorder %v363, 0.0
        %vm374 = vcmp.ge.f32.partialorder %v365, 0.0
        %vm375 = vcmp.ge.f32.partialorder %v324, 0.0
        %vm376 = vcmp.ge.f32.partialorder %v326, 0.0
        %vm377 = vcmp.ge.f32.partialorder %v367, 0.0
        %vm378 = vcmp.ge.f32.partialorder %v369, 0.0
        %v379 = vmul.f32 %v320, 0.01
        %v380 = vmul.f32 %v322, 0.01
        %v381 = vmul.f32 %v363, 0.01
        %v382 = vmul.f32 %v365, 0.01
        %v383 = vmul.f32 %v324, 0.01
        %v384 = vmul.f32 %v326, 0.01
        %v385 = vmul.f32 %v367, 0.01
        %v386 = vmul.f32 %v369, 0.01
        %v387 = vsel %vm371, %v320, %v379
        %v388 = vsel %vm372, %v322, %v380
        %v389 = vsel %vm373, %v363, %v381
        %v390 = vsel %vm374, %v365, %v382
        %v391 = vsel %vm375, %v324, %v383
        %v392 = vsel %vm376, %v326, %v384
        %v393 = vsel %vm377, %v367, %v385
        %v394 = vsel %vm378, %v369, %v386
        %395 = vst [vmem:[%s198] sm:$0xff] %v387
        %396 = vst [vmem:[%s198 + $0x8] sm:$0xff] %v388
        %397 = vst [vmem:[%s198 + $0x10] sm:$0xff] %v389
        %398 = vst [vmem:[%s198 + $0x18] sm:$0xff] %v390
        %399 = vst [vmem:[%s198 + $0x20] sm:$0xff] %v391
        %400 = vst [vmem:[%s198 + $0x28] sm:$0xff] %v392
        %401 = vst [vmem:[%s198 + $0x30] sm:$0xff] %v393
        %402 = vst [vmem:[%s198 + $0x38] sm:$0xff] %v394
        %s403 = sand.u32 %s90, 1
        %s404 = sand.u32 %s90, 1
        %s405 = smul.addr %s404, 64
        %s406 = scalar_lea.vmem [#allocation3], %s405
        // Predicated region
        $region56: #{forward.11} parent=50 // pred_check
          %p407 = pneg %p100
        $region57: #{forward.11} parent=50 // pred_check_branch
          %409 = sbr.rel (%p407) target = $region59
        $region58: #{forward.11} parent=50 // pred_region
          %s410 = smul.u32 4, %s14
          %s411 = smul.addr %s410, 8
          %s412 = scalar_lea.vmem %s3, %s411
          // Predicated region
          $region60: #{forward.11} parent=58 // pred_check
            _
          $region61: #{forward.11} parent=58 // pred_check_branch
            %414 = sbr.rel (0) target = $region63
          $region62: #{forward.11} parent=58 // pred_region
            // Predicated region
            $region64: #{forward.11} parent=62 // pred_check
              _
            $region65: #{forward.11} parent=62 // pred_check_branch
              %416 = sbr.rel (0) target = $region67
            $region66: #{forward.11} parent=62 // pred_region
              loop: start=0, step=1, limit=1
              $region68: #{forward.11} parent=66 // loop_pre_header
                _
              $region69: #{forward.11} parent=66 // loop_header
                %s418 = sphi 0, %s422
                %p419 = scmp.ge.s32.totalorder %s418, 1
                %s423 = sphi %s406, %s406
                %s424 = sphi %s412, %s412
              $region70: #{forward.11} parent=66 // loop_header_branch
                %421 = sbr.rel (%p419) target = $region74
              $region71: #{forward.11} parent=66 // loop_body
                %v425 = vld [vmem:[%s423] sm:$0xff]
                %426 = vst [vmem:[%s424] sm:$0xff] %v425
                %v427 = vld [vmem:[%s423 + $0x8] sm:$0xff]
                %428 = vst [vmem:[%s424 + $0x8] sm:$0xff] %v427
                %v429 = vld [vmem:[%s423 + $0x10] sm:$0xff]
                %430 = vst [vmem:[%s424 + $0x10] sm:$0xff] %v429
                %v431 = vld [vmem:[%s423 + $0x18] sm:$0xff]
                %432 = vst [vmem:[%s424 + $0x18] sm:$0xff] %v431
                %v433 = vld [vmem:[%s423 + $0x20] sm:$0xff]
                %434 = vst [vmem:[%s424 + $0x40] sm:$0xff] %v433
                %v435 = vld [vmem:[%s423 + $0x28] sm:$0xff]
                %436 = vst [vmem:[%s424 + $0x48] sm:$0xff] %v435
                %v437 = vld [vmem:[%s423 + $0x30] sm:$0xff]
                %438 = vst [vmem:[%s424 + $0x50] sm:$0xff] %v437
                %v439 = vld [vmem:[%s423 + $0x38] sm:$0xff]
                %440 = vst [vmem:[%s424 + $0x58] sm:$0xff] %v439
              $region72: #{forward.11} parent=66 // loop_footer
                %s422 = sadd.s32 1, %s418
              $region73: #{forward.11} parent=66 // loop_footer_branch
                %417 = sbr.rel target = $region69
              $region74: #{forward.11} parent=66 // loop_exit
                _
            $region67: #{forward.11} parent=62 // pred_fallthru
              _
            // Predicated region
            $region75: #{forward.11} parent=62 // pred_check
              _
            $region76: #{forward.11} parent=62 // pred_check_branch
              %442 = sbr.rel target = $region78
            $region77: #{forward.11} parent=62 // pred_region
              _
            $region78: #{forward.11} parent=62 // pred_fallthru
              _
          $region63: #{forward.11} parent=58 // pred_fallthru
            _
          %443 = vnop
        $region59: #{forward.11} parent=50 // pred_fallthru
          _
      $region51: #{forward.11} parent=5 // pred_fallthru
        _
      %p444 = scmp.le.s32.totalorder 2, %s9
      // Predicated region
      $region79: #{forward.11} parent=5 // pred_check
        %p445 = pneg %p444
      $region80: #{forward.11} parent=5 // pred_check_branch
        %447 = sbr.rel (%p445) target = $region82
      $region81: #{forward.11} parent=5 // pred_region
        %s448 = ssub.s32 %s9, 2
        // Predicated region
        $region83: #{forward.11} parent=81 // pred_check
          %p449 = pneg %p106
        $region84: #{forward.11} parent=81 // pred_check_branch
          %451 = sbr.rel (%p449) target = $region86
        $region85: #{forward.11} parent=81 // pred_region
          %s452 = sand.u32 %s91, 1
          %s453 = sand.u32 %s91, 1
          %s454 = smul.addr %s453, 64
          %s455 = scalar_lea.vmem [#allocation3], %s454
        $region86: #{forward.11} parent=81 // pred_fallthru
          _
      $region82: #{forward.11} parent=5 // pred_fallthru
        _
    $region6: #{forward.11} parent=1 // loop_footer
      %s13 = sadd.s32 1, %s9
    $region7: #{forward.11} parent=1 // loop_footer_branch
      %8 = sbr.rel target = $region3
    $region8: #{forward.11} parent=1 // loop_exit
      _

// kernel: forward.12
$region0: #{forward.12}
  #allocation0 [shape = 'u32[]', space=smem, size = 0x4, offset = 0x4, fixed_abs, tag = 'smem constant byte address 0x4 - core index']
  #allocation1 [shape = 'u32[144,128]{1,0:T(1,128)}', space=vmem, size = 0x12000, scoped, tag = 'internal scratch']
  %s0 = inlined_call_operand.vmem [shape: bf16[16,432], index: 0, kind: input, shape index: {}]
  %s1 = inlined_call_operand.vmem [shape: bf16[432,128], index: 1, kind: input, shape index: {}]
  %s2 = inlined_call_operand.vmem [shape: f32[16,1], index: 2, kind: input, shape index: {}]
  %s3 = inlined_call_operand.vmem [shape: f32[16,128], index: 3, kind: output, shape index: {}]
  %s4 = sld [smem:[#allocation0]]
  $region22: #{forward.12} parent=0
    _
  %s6 = ssub.s32 1, %s4
  %s7 = scalar_select 0, %s6, %s4
  // Predicated region
  $region2: #{forward.12} parent=0 // pred_check
    _
  $region3: #{forward.12} parent=0 // pred_check_branch
    %9 = sbr.rel (0) target = $region5
  $region4: #{forward.12} parent=0 // pred_region
    _
  $region5: #{forward.12} parent=0 // pred_fallthru
    _
  // Predicated region
  $region6: #{forward.12} parent=0 // pred_check
    _
  $region7: #{forward.12} parent=0 // pred_check_branch
    %11 = sbr.rel (0) target = $region9
  $region8: #{forward.12} parent=0 // pred_region
    _
  $region9: #{forward.12} parent=0 // pred_fallthru
    _
  // Predicated region
  $region10: #{forward.12} parent=0 // pred_check
    _
  $region11: #{forward.12} parent=0 // pred_check_branch
    %13 = sbr.rel (0) target = $region13
  $region12: #{forward.12} parent=0 // pred_region
    _
  $region13: #{forward.12} parent=0 // pred_fallthru
    _
  %v15 = vld [vmem:[%s0] sm:$0xff]
  %v16 = vld [vmem:[%s0 + $0x8] sm:$0xff]
  %v17 = vld [vmem:[%s0 + $0x10] sm:$0xff]
  %v18 = vld [vmem:[%s0 + $0x18] sm:$0xff]
  %v19 = vld [vmem:[%s1] sm:$0xf]
  %v20 = vld [vmem:[%s1 + $0x4] sm:$0xf]
  %v21 = vld [vmem:[%s1 + $0x8] sm:$0xf]
  %v22 = vld [vmem:[%s1 + $0xc] sm:$0xf]
  %v23 = vld [vmem:[%s1 + $0x10] sm:$0xf]
  %v24 = vld [vmem:[%s1 + $0x14] sm:$0xf]
  %v25 = vld [vmem:[%s1 + $0x18] sm:$0xf]
  %v26 = vld [vmem:[%s1 + $0x1c] sm:$0xf]
  %v27 = vld [vmem:[%s1 + $0x20] sm:$0xf]
  %v28 = vld [vmem:[%s1 + $0x24] sm:$0xf]
  %v29 = vld [vmem:[%s1 + $0x28] sm:$0xf]
  %v30 = vld [vmem:[%s1 + $0x2c] sm:$0xf]
  %v31 = vld [vmem:[%s1 + $0x30] sm:$0xf]
  %v32 = vld [vmem:[%s1 + $0x34] sm:$0xf]
  %v33 = vld [vmem:[%s1 + $0x38] sm:$0xf]
  %v34 = vld [vmem:[%s1 + $0x3c] sm:$0xf]
  %v35 = vld [vmem:[%s1 + $0x40] sm:$0xf]
  %v36 = vld [vmem:[%s1 + $0x44] sm:$0xf]
  %v37 = vld [vmem:[%s1 + $0x48] sm:$0xf]
  %v38 = vld [vmem:[%s1 + $0x4c] sm:$0xf]
  %v39 = vld [vmem:[%s1 + $0x50] sm:$0xf]
  %v40 = vld [vmem:[%s1 + $0x54] sm:$0xf]
  %v41 = vld [vmem:[%s1 + $0x58] sm:$0xf]
  %v42 = vld [vmem:[%s1 + $0x5c] sm:$0xf]
  %v43 = vld [vmem:[%s1 + $0x60] sm:$0xf]
  %v44 = vld [vmem:[%s1 + $0x64] sm:$0xf]
  %v45 = vld [vmem:[%s1 + $0x68] sm:$0xf]
  %v46 = vld [vmem:[%s1 + $0x6c] sm:$0xf]
  %v47 = vld [vmem:[%s1 + $0x70] sm:$0xf]
  %v48 = vld [vmem:[%s1 + $0x74] sm:$0xf]
  %v49 = vld [vmem:[%s1 + $0x78] sm:$0xf]
  %v50 = vld [vmem:[%s1 + $0x7c] sm:$0xf]
  %v51 = vld [vmem:[%s1 + $0x80] sm:$0xf]
  %v52 = vld [vmem:[%s1 + $0x84] sm:$0xf]
  %v53 = vld [vmem:[%s1 + $0x88] sm:$0xf]
  %v54 = vld [vmem:[%s1 + $0x8c] sm:$0xf]
  %v55 = vld [vmem:[%s1 + $0x90] sm:$0xf]
  %v56 = vld [vmem:[%s1 + $0x94] sm:$0xf]
  %v57 = vld [vmem:[%s1 + $0x98] sm:$0xf]
  %v58 = vld [vmem:[%s1 + $0x9c] sm:$0xf]
  %v59 = vld [vmem:[%s1 + $0xa0] sm:$0xf]
  %v60 = vld [vmem:[%s1 + $0xa4] sm:$0xf]
  %v61 = vld [vmem:[%s1 + $0xa8] sm:$0xf]
  %v62 = vld [vmem:[%s1 + $0xac] sm:$0xf]
  %v63 = vld [vmem:[%s1 + $0xb0] sm:$0xf]
  %v64 = vld [vmem:[%s1 + $0xb4] sm:$0xf]
  %v65 = vld [vmem:[%s1 + $0xb8] sm:$0xf]
  %v66 = vld [vmem:[%s1 + $0xbc] sm:$0xf]
  %v67 = vld [vmem:[%s1 + $0xc0] sm:$0xf]
  %v68 = vld [vmem:[%s1 + $0xc4] sm:$0xf]
  %v69 = vld [vmem:[%s1 + $0xc8] sm:$0xf]
  %v70 = vld [vmem:[%s1 + $0xcc] sm:$0xf]
  %v71 = vld [vmem:[%s1 + $0xd0] sm:$0xf]
  %v72 = vld [vmem:[%s1 + $0xd4] sm:$0xf]
  %v73 = vld [vmem:[%s2] sm:$0xff]
  %v74 = vld [vmem:[%s2 + $0x8] sm:$0xff]
  %76 = vset.pattern.permute.xlu0 0
  %77 = vperm.xlu0 %76, %v73
  %v78 = vpop.permute.xlu0 %77
  %81 = vset.pattern.permute.xlu0 0
  %82 = vperm.xlu0 %81, %v74
  %v83 = vpop.permute.xlu0 %82
  %v89 = vunpack.c.l.b16 %v15
  %v90 = vunpack.c.h.b16 %v15
  %v91 = vunpack.c.l.b16 %v16
  %v92 = vunpack.c.h.b16 %v16
  %v93 = vunpack.c.l.b16 %v17
  %v94 = vunpack.c.h.b16 %v17
  %v95 = vunpack.c.l.b16 %v18
  %v96 = vunpack.c.h.b16 %v18
  %v97 = vpack.c.b16 %v93, %v89
  %v98 = vpack.c.b16 %v94, %v90
  %v99 = vpack.c.b16 %v95, %v91
  %v100 = vpack.c.b16 %v96, %v92
  %v158 = vunpack.c.l.b16 %v19
  %v159 = vunpack.c.l.b16 %v20
  %v160 = vunpack.c.l.b16 %v21
  %v161 = vunpack.c.l.b16 %v22
  %v162 = vunpack.c.l.b16 %v23
  %v163 = vunpack.c.l.b16 %v24
  %v164 = vunpack.c.l.b16 %v25
  %v165 = vunpack.c.l.b16 %v26
  %v166 = vunpack.c.l.b16 %v27
  %v167 = vunpack.c.l.b16 %v28
  %v168 = vunpack.c.l.b16 %v29
  %v169 = vunpack.c.l.b16 %v30
  %v170 = vunpack.c.l.b16 %v31
  %v171 = vunpack.c.l.b16 %v32
  %v172 = vunpack.c.l.b16 %v33
  %v173 = vunpack.c.l.b16 %v34
  %v174 = vunpack.c.l.b16 %v35
  %v175 = vunpack.c.l.b16 %v36
  %v176 = vunpack.c.l.b16 %v37
  %v177 = vunpack.c.l.b16 %v38
  %v178 = vunpack.c.l.b16 %v39
  %v179 = vunpack.c.l.b16 %v40
  %v180 = vunpack.c.l.b16 %v41
  %v181 = vunpack.c.l.b16 %v42
  %v182 = vunpack.c.l.b16 %v43
  %v183 = vunpack.c.l.b16 %v44
  %v184 = vunpack.c.l.b16 %v45
  %v185 = vunpack.c.l.b16 %v46
  %v186 = vunpack.c.l.b16 %v47
  %v187 = vunpack.c.l.b16 %v48
  %v188 = vunpack.c.l.b16 %v49
  %v189 = vunpack.c.l.b16 %v50
  %v190 = vunpack.c.l.b16 %v51
  %v191 = vunpack.c.l.b16 %v52
  %v192 = vunpack.c.l.b16 %v53
  %v193 = vunpack.c.l.b16 %v54
  %v194 = vunpack.c.l.b16 %v55
  %v195 = vunpack.c.l.b16 %v56
  %v196 = vunpack.c.l.b16 %v57
  %v197 = vunpack.c.l.b16 %v58
  %v198 = vunpack.c.l.b16 %v59
  %v199 = vunpack.c.l.b16 %v60
  %v200 = vunpack.c.l.b16 %v61
  %v201 = vunpack.c.l.b16 %v62
  %v202 = vunpack.c.l.b16 %v63
  %v203 = vunpack.c.l.b16 %v64
  %v204 = vunpack.c.l.b16 %v65
  %v205 = vunpack.c.l.b16 %v66
  %v206 = vunpack.c.l.b16 %v67
  %v207 = vunpack.c.l.b16 %v68
  %v208 = vunpack.c.l.b16 %v69
  %v209 = vunpack.c.l.b16 %v70
  %v210 = vunpack.c.l.b16 %v71
  %v211 = vunpack.c.l.b16 %v72
  %v212 = vpack.c.b16 %v159, %v158
  %v213 = vpack.c.b16 %v161, %v160
  %v214 = vpack.c.b16 %v163, %v162
  %v215 = vpack.c.b16 %v165, %v164
  %v216 = vpack.c.b16 %v167, %v166
  %v217 = vpack.c.b16 %v169, %v168
  %v218 = vpack.c.b16 %v171, %v170
  %v219 = vpack.c.b16 %v173, %v172
  %v220 = vpack.c.b16 %v175, %v174
  %v221 = vpack.c.b16 %v177, %v176
  %v222 = vpack.c.b16 %v179, %v178
  %v223 = vpack.c.b16 %v181, %v180
  %v224 = vpack.c.b16 %v183, %v182
  %v225 = vpack.c.b16 %v185, %v184
  %v226 = vpack.c.b16 %v187, %v186
  %v227 = vpack.c.b16 %v189, %v188
  %v228 = vpack.c.b16 %v191, %v190
  %v229 = vpack.c.b16 %v193, %v192
  %v230 = vpack.c.b16 %v195, %v194
  %v231 = vpack.c.b16 %v197, %v196
  %v232 = vpack.c.b16 %v199, %v198
  %v233 = vpack.c.b16 %v201, %v200
  %v234 = vpack.c.b16 %v203, %v202
  %v235 = vpack.c.b16 %v205, %v204
  %v236 = vpack.c.b16 %v207, %v206
  %v237 = vpack.c.b16 %v209, %v208
  %v238 = vpack.c.b16 %v211, %v210
  %vm266 = vcmask 392192
  %v268 = vsel %vm266, %v100, 0
  %270 = vmatprep.subr.bf16.mxu0 0
  %271 = vmatpush1.bf16.msra.mxu0 %v212
  %272 = vmatprep.subr.bf16.mxu0 0
  %273 = vmatpush1.bf16.msra.mxu0 %v213
  %274 = vmatprep.subr.bf16.mxu0 0
  %275 = vmatpush1.bf16.msra.mxu0 %v214
  %276 = vmatprep.subr.bf16.mxu0 0
  %277 = vmatpush1.bf16.msra.mxu0 %v215
  %278 = vmatprep.subr.bf16.mxu0 0
  %279 = vmatpush1.bf16.msra.mxu0 %v216
  %280 = vmatprep.subr.bf16.mxu0 0
  %281 = vmatpush1.bf16.msra.mxu0 %v217
  %282 = vmatprep.subr.bf16.mxu0 0
  %283 = vmatpush1.bf16.msra.mxu0 %v218
  %284 = vmatprep.subr.bf16.mxu0 0
  %285 = vmatpush1.bf16.msra.mxu0 %v219
  %286 = vmatprep.subr.bf16.mxu0 0
  %287 = vmatpush1.bf16.msra.mxu0 %v220
  %288 = vmatprep.subr.bf16.mxu0 0
  %289 = vmatpush1.bf16.msra.mxu0 %v221
  %290 = vmatprep.subr.bf16.mxu0 0
  %291 = vmatpush1.bf16.msra.mxu0 %v222
  %292 = vmatprep.subr.bf16.mxu0 0
  %293 = vmatpush1.bf16.msra.mxu0 %v223
  %294 = vmatprep.subr.bf16.mxu0 0
  %295 = vmatpush1.bf16.msra.mxu0 %v224
  %296 = vmatprep.subr.bf16.mxu0 0
  %297 = vmatpush1.bf16.msra.mxu0 %v225
  %298 = vmatprep.subr.bf16.mxu0 0
  %299 = vmatpush1.bf16.msra.mxu0 %v226
  %300 = vmatprep.subr.bf16.mxu0 0
  %301 = vmatpush1.bf16.msra.mxu0 %v227
  %302 = vmatprep.mubr.bf16.mxu0 %v98
  %303 = vmatmul.mubr.bf16.gmra.mrb[0].mxu0 %v97
  %v304 = vpop.f32.mrb[0].mxu0
  %v305 = vadd.f32 %v78, %v304
  %v306 = vpop.f32.mrb[0].mxu0
  %v307 = vpop.f32.mrb[0].mxu0
  %v308 = vadd.f32 %v83, %v307
  %v309 = vpop.f32.mrb[0].mxu0
  %310 = vdwg.mxu0
  %311 = vmatprep.subr.bf16.mxu0 0
  %312 = vmatpush1.bf16.msra.mxu0 %v228
  %313 = vmatprep.subr.bf16.mxu0 0
  %314 = vmatpush1.bf16.msra.mxu0 %v229
  %315 = vmatprep.subr.bf16.mxu0 0
  %316 = vmatpush1.bf16.msra.mxu0 %v230
  %317 = vmatprep.subr.bf16.mxu0 0
  %318 = vmatpush1.bf16.msra.mxu0 %v231
  %319 = vmatprep.subr.bf16.mxu0 0
  %320 = vmatpush1.bf16.msra.mxu0 %v232
  %321 = vmatprep.subr.bf16.mxu0 0
  %322 = vmatpush1.bf16.msra.mxu0 %v233
  %323 = vmatprep.subr.bf16.mxu0 0
  %324 = vmatpush1.bf16.msra.mxu0 %v234
  %325 = vmatprep.subr.bf16.mxu0 0
  %326 = vmatpush1.bf16.msra.mxu0 %v235
  %327 = vmatprep.subr.bf16.mxu0 0
  %328 = vmatpush1.bf16.msra.mxu0 %v236
  %329 = vmatprep.subr.bf16.mxu0 0
  %330 = vmatpush1.bf16.msra.mxu0 %v237
  %331 = vmatprep.subr.bf16.mxu0 0
  %332 = vmatpush1.bf16.msra.mxu0 %v238
  %333 = vmatprep.subr.bf16.mxu0 0
  %334 = vmatpush1.bf16.msra.mxu0 0
  %335 = vmatprep.subr.bf16.mxu0 0
  %336 = vmatpush1.bf16.msra.mxu0 0
  %337 = vmatprep.subr.bf16.mxu0 0
  %338 = vmatpush1.bf16.msra.mxu0 0
  %339 = vmatprep.subr.bf16.mxu0 0
  %340 = vmatpush1.bf16.msra.mxu0 0
  %341 = vmatprep.subr.bf16.mxu0 0
  %342 = vmatpush1.bf16.msra.mxu0 0
  %343 = vmatprep.mubr.bf16.mxu0 %v268
  %344 = vmatmul.mubr.bf16.gmra.mrb[0].mxu0 %v99
  %v345 = vpop.f32.mrb[0].mxu0
  %v346 = vadd.f32 %v305, %v345
  %v347 = vpop.f32.mrb[0].mxu0
  %v348 = vpop.f32.mrb[0].mxu0
  %v349 = vadd.f32 %v308, %v348
  %v350 = vpop.f32.mrb[0].mxu0
  %351 = vdwg.mxu0
  %vm352 = vcmp.ge.f32.partialorder %v346, 0.0
  %vm353 = vcmp.ge.f32.partialorder %v349, 0.0
  %v354 = vmul.f32 %v346, 0.01
  %v355 = vmul.f32 %v349, 0.01
  %v356 = vsel %vm352, %v346, %v354
  %v357 = vsel %vm353, %v349, %v355
  %358 = vst [vmem:[%s3] sm:$0xff] %v356
  %359 = vst [vmem:[%s3 + $0x8] sm:$0xff] %v357
  // Predicated region
  $region14: #{forward.12} parent=0 // pred_check
    _
  $region15: #{forward.12} parent=0 // pred_check_branch
    %361 = sbr.rel (0) target = $region17
  $region16: #{forward.12} parent=0 // pred_region
    _
  $region17: #{forward.12} parent=0 // pred_fallthru
    _
  // Predicated region
  $region18: #{forward.12} parent=0 // pred_check
    _
  $region19: #{forward.12} parent=0 // pred_check_branch
    %363 = sbr.rel (0) target = $region21
  $region20: #{forward.12} parent=0 // pred_region
    _
  $region21: #{forward.12} parent=0 // pred_fallthru
    _

// kernel: forward.13
$region0: #{forward.13}
  #allocation0 [shape = 'u32[]', space=smem, size = 0x4, offset = 0x4, fixed_abs, tag = 'smem constant byte address 0x4 - core index']
  #allocation1 [shape = 'u32[144,128]{1,0:T(1,128)}', space=vmem, size = 0x12000, scoped, tag = 'internal scratch']
  %s0 = inlined_call_operand.vmem [shape: bf16[16,432], index: 0, kind: input, shape index: {}]
  %s1 = inlined_call_operand.vmem [shape: bf16[432,128], index: 1, kind: input, shape index: {}]
  %s2 = inlined_call_operand.vmem [shape: f32[16,1], index: 2, kind: input, shape index: {}]
  %s3 = inlined_call_operand.vmem [shape: f32[16,128], index: 3, kind: output, shape index: {}]
  %s4 = sld [smem:[#allocation0]]
  $region22: #{forward.13} parent=0
    _
  %s6 = ssub.s32 1, %s4
  %s7 = scalar_select 0, %s6, %s4
  // Predicated region
  $region2: #{forward.13} parent=0 // pred_check
    _
  $region3: #{forward.13} parent=0 // pred_check_branch
    %9 = sbr.rel (0) target = $region5
  $region4: #{forward.13} parent=0 // pred_region
    _
  $region5: #{forward.13} parent=0 // pred_fallthru
    _
  // Predicated region
  $region6: #{forward.13} parent=0 // pred_check
    _
  $region7: #{forward.13} parent=0 // pred_check_branch
    %11 = sbr.rel (0) target = $region9
  $region8: #{forward.13} parent=0 // pred_region
    _
  $region9: #{forward.13} parent=0 // pred_fallthru
    _
  // Predicated region
  $region10: #{forward.13} parent=0 // pred_check
    _
  $region11: #{forward.13} parent=0 // pred_check_branch
    %13 = sbr.rel (0) target = $region13
  $region12: #{forward.13} parent=0 // pred_region
    _
  $region13: #{forward.13} parent=0 // pred_fallthru
    _
  %v15 = vld [vmem:[%s0] sm:$0xff]
  %v16 = vld [vmem:[%s0 + $0x8] sm:$0xff]
  %v17 = vld [vmem:[%s0 + $0x10] sm:$0xff]
  %v18 = vld [vmem:[%s0 + $0x18] sm:$0xff]
  %v19 = vld [vmem:[%s1] sm:$0xf]
  %v20 = vld [vmem:[%s1 + $0x4] sm:$0xf]
  %v21 = vld [vmem:[%s1 + $0x8] sm:$0xf]
  %v22 = vld [vmem:[%s1 + $0xc] sm:$0xf]
  %v23 = vld [vmem:[%s1 + $0x10] sm:$0xf]
  %v24 = vld [vmem:[%s1 + $0x14] sm:$0xf]
  %v25 = vld [vmem:[%s1 + $0x18] sm:$0xf]
  %v26 = vld [vmem:[%s1 + $0x1c] sm:$0xf]
  %v27 = vld [vmem:[%s1 + $0x20] sm:$0xf]
  %v28 = vld [vmem:[%s1 + $0x24] sm:$0xf]
  %v29 = vld [vmem:[%s1 + $0x28] sm:$0xf]
  %v30 = vld [vmem:[%s1 + $0x2c] sm:$0xf]
  %v31 = vld [vmem:[%s1 + $0x30] sm:$0xf]
  %v32 = vld [vmem:[%s1 + $0x34] sm:$0xf]
  %v33 = vld [vmem:[%s1 + $0x38] sm:$0xf]
  %v34 = vld [vmem:[%s1 + $0x3c] sm:$0xf]
  %v35 = vld [vmem:[%s1 + $0x40] sm:$0xf]
  %v36 = vld [vmem:[%s1 + $0x44] sm:$0xf]
  %v37 = vld [vmem:[%s1 + $0x48] sm:$0xf]
  %v38 = vld [vmem:[%s1 + $0x4c] sm:$0xf]
  %v39 = vld [vmem:[%s1 + $0x50] sm:$0xf]
  %v40 = vld [vmem:[%s1 + $0x54] sm:$0xf]
  %v41 = vld [vmem:[%s1 + $0x58] sm:$0xf]
  %v42 = vld [vmem:[%s1 + $0x5c] sm:$0xf]
  %v43 = vld [vmem:[%s1 + $0x60] sm:$0xf]
  %v44 = vld [vmem:[%s1 + $0x64] sm:$0xf]
  %v45 = vld [vmem:[%s1 + $0x68] sm:$0xf]
  %v46 = vld [vmem:[%s1 + $0x6c] sm:$0xf]
  %v47 = vld [vmem:[%s1 + $0x70] sm:$0xf]
  %v48 = vld [vmem:[%s1 + $0x74] sm:$0xf]
  %v49 = vld [vmem:[%s1 + $0x78] sm:$0xf]
  %v50 = vld [vmem:[%s1 + $0x7c] sm:$0xf]
  %v51 = vld [vmem:[%s1 + $0x80] sm:$0xf]
  %v52 = vld [vmem:[%s1 + $0x84] sm:$0xf]
  %v53 = vld [vmem:[%s1 + $0x88] sm:$0xf]
  %v54 = vld [vmem:[%s1 + $0x8c] sm:$0xf]
  %v55 = vld [vmem:[%s1 + $0x90] sm:$0xf]
  %v56 = vld [vmem:[%s1 + $0x94] sm:$0xf]
  %v57 = vld [vmem:[%s1 + $0x98] sm:$0xf]
  %v58 = vld [vmem:[%s1 + $0x9c] sm:$0xf]
  %v59 = vld [vmem:[%s1 + $0xa0] sm:$0xf]
  %v60 = vld [vmem:[%s1 + $0xa4] sm:$0xf]
  %v61 = vld [vmem:[%s1 + $0xa8] sm:$0xf]
  %v62 = vld [vmem:[%s1 + $0xac] sm:$0xf]
  %v63 = vld [vmem:[%s1 + $0xb0] sm:$0xf]
  %v64 = vld [vmem:[%s1 + $0xb4] sm:$0xf]
  %v65 = vld [vmem:[%s1 + $0xb8] sm:$0xf]
  %v66 = vld [vmem:[%s1 + $0xbc] sm:$0xf]
  %v67 = vld [vmem:[%s1 + $0xc0] sm:$0xf]
  %v68 = vld [vmem:[%s1 + $0xc4] sm:$0xf]
  %v69 = vld [vmem:[%s1 + $0xc8] sm:$0xf]
  %v70 = vld [vmem:[%s1 + $0xcc] sm:$0xf]
  %v71 = vld [vmem:[%s1 + $0xd0] sm:$0xf]
  %v72 = vld [vmem:[%s1 + $0xd4] sm:$0xf]
  %v73 = vld [vmem:[%s2] sm:$0xff]
  %v74 = vld [vmem:[%s2 + $0x8] sm:$0xff]
  %76 = vset.pattern.permute.xlu0 0
  %77 = vperm.xlu0 %76, %v73
  %v78 = vpop.permute.xlu0 %77
  %81 = vset.pattern.permute.xlu0 0
  %82 = vperm.xlu0 %81, %v74
  %v83 = vpop.permute.xlu0 %82
  %v89 = vunpack.c.l.b16 %v15
  %v90 = vunpack.c.h.b16 %v15
  %v91 = vunpack.c.l.b16 %v16
  %v92 = vunpack.c.h.b16 %v16
  %v93 = vunpack.c.l.b16 %v17
  %v94 = vunpack.c.h.b16 %v17
  %v95 = vunpack.c.l.b16 %v18
  %v96 = vunpack.c.h.b16 %v18
  %v97 = vpack.c.b16 %v93, %v89
  %v98 = vpack.c.b16 %v94, %v90
  %v99 = vpack.c.b16 %v95, %v91
  %v100 = vpack.c.b16 %v96, %v92
  %v158 = vunpack.c.l.b16 %v19
  %v159 = vunpack.c.l.b16 %v20
  %v160 = vunpack.c.l.b16 %v21
  %v161 = vunpack.c.l.b16 %v22
  %v162 = vunpack.c.l.b16 %v23
  %v163 = vunpack.c.l.b16 %v24
  %v164 = vunpack.c.l.b16 %v25
  %v165 = vunpack.c.l.b16 %v26
  %v166 = vunpack.c.l.b16 %v27
  %v167 = vunpack.c.l.b16 %v28
  %v168 = vunpack.c.l.b16 %v29
  %v169 = vunpack.c.l.b16 %v30
  %v170 = vunpack.c.l.b16 %v31
  %v171 = vunpack.c.l.b16 %v32
  %v172 = vunpack.c.l.b16 %v33
  %v173 = vunpack.c.l.b16 %v34
  %v174 = vunpack.c.l.b16 %v35
  %v175 = vunpack.c.l.b16 %v36
  %v176 = vunpack.c.l.b16 %v37
  %v177 = vunpack.c.l.b16 %v38
  %v178 = vunpack.c.l.b16 %v39
  %v179 = vunpack.c.l.b16 %v40
  %v180 = vunpack.c.l.b16 %v41
  %v181 = vunpack.c.l.b16 %v42
  %v182 = vunpack.c.l.b16 %v43
  %v183 = vunpack.c.l.b16 %v44
  %v184 = vunpack.c.l.b16 %v45
  %v185 = vunpack.c.l.b16 %v46
  %v186 = vunpack.c.l.b16 %v47
  %v187 = vunpack.c.l.b16 %v48
  %v188 = vunpack.c.l.b16 %v49
  %v189 = vunpack.c.l.b16 %v50
  %v190 = vunpack.c.l.b16 %v51
  %v191 = vunpack.c.l.b16 %v52
  %v192 = vunpack.c.l.b16 %v53
  %v193 = vunpack.c.l.b16 %v54
  %v194 = vunpack.c.l.b16 %v55
  %v195 = vunpack.c.l.b16 %v56
  %v196 = vunpack.c.l.b16 %v57
  %v197 = vunpack.c.l.b16 %v58
  %v198 = vunpack.c.l.b16 %v59
  %v199 = vunpack.c.l.b16 %v60
  %v200 = vunpack.c.l.b16 %v61
  %v201 = vunpack.c.l.b16 %v62
  %v202 = vunpack.c.l.b16 %v63
  %v203 = vunpack.c.l.b16 %v64
  %v204 = vunpack.c.l.b16 %v65
  %v205 = vunpack.c.l.b16 %v66
  %v206 = vunpack.c.l.b16 %v67
  %v207 = vunpack.c.l.b16 %v68
  %v208 = vunpack.c.l.b16 %v69
  %v209 = vunpack.c.l.b16 %v70
  %v210 = vunpack.c.l.b16 %v71
  %v211 = vunpack.c.l.b16 %v72
  %v212 = vpack.c.b16 %v159, %v158
  %v213 = vpack.c.b16 %v161, %v160
  %v214 = vpack.c.b16 %v163, %v162
  %v215 = vpack.c.b16 %v165, %v164
  %v216 = vpack.c.b16 %v167, %v166
  %v217 = vpack.c.b16 %v169, %v168
  %v218 = vpack.c.b16 %v171, %v170
  %v219 = vpack.c.b16 %v173, %v172
  %v220 = vpack.c.b16 %v175, %v174
  %v221 = vpack.c.b16 %v177, %v176
  %v222 = vpack.c.b16 %v179, %v178
  %v223 = vpack.c.b16 %v181, %v180
  %v224 = vpack.c.b16 %v183, %v182
  %v225 = vpack.c.b16 %v185, %v184
  %v226 = vpack.c.b16 %v187, %v186
  %v227 = vpack.c.b16 %v189, %v188
  %v228 = vpack.c.b16 %v191, %v190
  %v229 = vpack.c.b16 %v193, %v192
  %v230 = vpack.c.b16 %v195, %v194
  %v231 = vpack.c.b16 %v197, %v196
  %v232 = vpack.c.b16 %v199, %v198
  %v233 = vpack.c.b16 %v201, %v200
  %v234 = vpack.c.b16 %v203, %v202
  %v235 = vpack.c.b16 %v205, %v204
  %v236 = vpack.c.b16 %v207, %v206
  %v237 = vpack.c.b16 %v209, %v208
  %v238 = vpack.c.b16 %v211, %v210
  %vm266 = vcmask 392192
  %v268 = vsel %vm266, %v100, 0
  %270 = vmatprep.subr.bf16.mxu0 0
  %271 = vmatpush1.bf16.msra.mxu0 %v212
  %272 = vmatprep.subr.bf16.mxu0 0
  %273 = vmatpush1.bf16.msra.mxu0 %v213
  %274 = vmatprep.subr.bf16.mxu0 0
  %275 = vmatpush1.bf16.msra.mxu0 %v214
  %276 = vmatprep.subr.bf16.mxu0 0
  %277 = vmatpush1.bf16.msra.mxu0 %v215
  %278 = vmatprep.subr.bf16.mxu0 0
  %279 = vmatpush1.bf16.msra.mxu0 %v216
  %280 = vmatprep.subr.bf16.mxu0 0
  %281 = vmatpush1.bf16.msra.mxu0 %v217
  %282 = vmatprep.subr.bf16.mxu0 0
  %283 = vmatpush1.bf16.msra.mxu0 %v218
  %284 = vmatprep.subr.bf16.mxu0 0
  %285 = vmatpush1.bf16.msra.mxu0 %v219
  %286 = vmatprep.subr.bf16.mxu0 0
  %287 = vmatpush1.bf16.msra.mxu0 %v220
  %288 = vmatprep.subr.bf16.mxu0 0
  %289 = vmatpush1.bf16.msra.mxu0 %v221
  %290 = vmatprep.subr.bf16.mxu0 0
  %291 = vmatpush1.bf16.msra.mxu0 %v222
  %292 = vmatprep.subr.bf16.mxu0 0
  %293 = vmatpush1.bf16.msra.mxu0 %v223
  %294 = vmatprep.subr.bf16.mxu0 0
  %295 = vmatpush1.bf16.msra.mxu0 %v224
  %296 = vmatprep.subr.bf16.mxu0 0
  %297 = vmatpush1.bf16.msra.mxu0 %v225
  %298 = vmatprep.subr.bf16.mxu0 0
  %299 = vmatpush1.bf16.msra.mxu0 %v226
  %300 = vmatprep.subr.bf16.mxu0 0
  %301 = vmatpush1.bf16.msra.mxu0 %v227
  %302 = vmatprep.mubr.bf16.mxu0 %v98
  %303 = vmatmul.mubr.bf16.gmra.mrb[0].mxu0 %v97
  %v304 = vpop.f32.mrb[0].mxu0
  %v305 = vadd.f32 %v78, %v304
  %v306 = vpop.f32.mrb[0].mxu0
  %v307 = vpop.f32.mrb[0].mxu0
  %v308 = vadd.f32 %v83, %v307
  %v309 = vpop.f32.mrb[0].mxu0
  %310 = vdwg.mxu0
  %311 = vmatprep.subr.bf16.mxu0 0
  %312 = vmatpush1.bf16.msra.mxu0 %v228
  %313 = vmatprep.subr.bf16.mxu0 0
  %314 = vmatpush1.bf16.msra.mxu0 %v229
  %315 = vmatprep.subr.bf16.mxu0 0
  %316 = vmatpush1.bf16.msra.mxu0 %v230
  %317 = vmatprep.subr.bf16.mxu0 0
  %318 = vmatpush1.bf16.msra.mxu0 %v231
  %319 = vmatprep.subr.bf16.mxu0 0
  %320 = vmatpush1.bf16.msra.mxu0 %v232
  %321 = vmatprep.subr.bf16.mxu0 0
  %322 = vmatpush1.bf16.msra.mxu0 %v233
  %323 = vmatprep.subr.bf16.mxu0 0
  %324 = vmatpush1.bf16.msra.mxu0 %v234
  %325 = vmatprep.subr.bf16.mxu0 0
  %326 = vmatpush1.bf16.msra.mxu0 %v235
  %327 = vmatprep.subr.bf16.mxu0 0
  %328 = vmatpush1.bf16.msra.mxu0 %v236
  %329 = vmatprep.subr.bf16.mxu0 0
  %330 = vmatpush1.bf16.msra.mxu0 %v237
  %331 = vmatprep.subr.bf16.mxu0 0
  %332 = vmatpush1.bf16.msra.mxu0 %v238
  %333 = vmatprep.subr.bf16.mxu0 0
  %334 = vmatpush1.bf16.msra.mxu0 0
  %335 = vmatprep.subr.bf16.mxu0 0
  %336 = vmatpush1.bf16.msra.mxu0 0
  %337 = vmatprep.subr.bf16.mxu0 0
  %338 = vmatpush1.bf16.msra.mxu0 0
  %339 = vmatprep.subr.bf16.mxu0 0
  %340 = vmatpush1.bf16.msra.mxu0 0
  %341 = vmatprep.subr.bf16.mxu0 0
  %342 = vmatpush1.bf16.msra.mxu0 0
  %343 = vmatprep.mubr.bf16.mxu0 %v268
  %344 = vmatmul.mubr.bf16.gmra.mrb[0].mxu0 %v99
  %v345 = vpop.f32.mrb[0].mxu0
  %v346 = vadd.f32 %v305, %v345
  %v347 = vpop.f32.mrb[0].mxu0
  %v348 = vpop.f32.mrb[0].mxu0
  %v349 = vadd.f32 %v308, %v348
  %v350 = vpop.f32.mrb[0].mxu0
  %351 = vdwg.mxu0
  %352 = vst [vmem:[%s3] sm:$0xff] %v346
  %353 = vst [vmem:[%s3 + $0x8] sm:$0xff] %v349
  // Predicated region
  $region14: #{forward.13} parent=0 // pred_check
    _
  $region15: #{forward.13} parent=0 // pred_check_branch
    %355 = sbr.rel (0) target = $region17
  $region16: #{forward.13} parent=0 // pred_region
    _
  $region17: #{forward.13} parent=0 // pred_fallthru
    _
  // Predicated region
  $region18: #{forward.13} parent=0 // pred_check
    _
  $region19: #{forward.13} parent=0 // pred_check_branch
    %357 = sbr.rel (0) target = $region21
  $region20: #{forward.13} parent=0 // pred_region
    _
  $region21: #{forward.13} parent=0 // pred_fallthru
    _

// kernel: forward.18
$region0: #{forward.18}
  #allocation0 [shape = 'u32[]', space=smem, size = 0x4, offset = 0x4, fixed_abs, tag = 'smem constant byte address 0x4 - core index']
  #allocation1 [shape = 'u32[144,128]{1,0:T(1,128)}', space=vmem, size = 0x12000, scoped, tag = 'internal scratch']
  %s0 = inlined_call_operand.vmem [shape: f32[16,128], index: 0, kind: input, shape index: {}]
  %s1 = inlined_call_operand.vmem [shape: bf16[16,16], index: 1, kind: input, shape index: {}]
  %s2 = inlined_call_operand.vmem [shape: f32[16,1], index: 2, kind: input, shape index: {}]
  %s3 = inlined_call_operand.vmem [shape: bf16[16,16], index: 3, kind: input, shape index: {}]
  %s4 = inlined_call_operand.vmem [shape: f32[16,1], index: 4, kind: input, shape index: {}]
  %s5 = inlined_call_operand.vmem [shape: bf16[8,16], index: 5, kind: input, shape index: {}]
  %s6 = inlined_call_operand.vmem [shape: f32[8,1], index: 6, kind: input, shape index: {}]
  %s7 = inlined_call_operand.vmem [shape: f32[8,128], index: 7, kind: output, shape index: {}]
  %s8 = sld [smem:[#allocation0]]
  $region38: #{forward.18} parent=0
    _
  %s10 = ssub.s32 1, %s8
  %s11 = scalar_select 0, %s10, %s8
  // Predicated region
  $region2: #{forward.18} parent=0 // pred_check
    _
  $region3: #{forward.18} parent=0 // pred_check_branch
    %13 = sbr.rel (0) target = $region5
  $region4: #{forward.18} parent=0 // pred_region
    _
  $region5: #{forward.18} parent=0 // pred_fallthru
    _
  // Predicated region
  $region6: #{forward.18} parent=0 // pred_check
    _
  $region7: #{forward.18} parent=0 // pred_check_branch
    %15 = sbr.rel (0) target = $region9
  $region8: #{forward.18} parent=0 // pred_region
    _
  $region9: #{forward.18} parent=0 // pred_fallthru
    _
  // Predicated region
  $region10: #{forward.18} parent=0 // pred_check
    _
  $region11: #{forward.18} parent=0 // pred_check_branch
    %17 = sbr.rel (0) target = $region13
  $region12: #{forward.18} parent=0 // pred_region
    _
  $region13: #{forward.18} parent=0 // pred_fallthru
    _
  // Predicated region
  $region14: #{forward.18} parent=0 // pred_check
    _
  $region15: #{forward.18} parent=0 // pred_check_branch
    %19 = sbr.rel (0) target = $region17
  $region16: #{forward.18} parent=0 // pred_region
    _
  $region17: #{forward.18} parent=0 // pred_fallthru
    _
  // Predicated region
  $region18: #{forward.18} parent=0 // pred_check
    _
  $region19: #{forward.18} parent=0 // pred_check_branch
    %21 = sbr.rel (0) target = $region21
  $region20: #{forward.18} parent=0 // pred_region
    _
  $region21: #{forward.18} parent=0 // pred_fallthru
    _
  // Predicated region
  $region22: #{forward.18} parent=0 // pred_check
    _
  $region23: #{forward.18} parent=0 // pred_check_branch
    %23 = sbr.rel (0) target = $region25
  $region24: #{forward.18} parent=0 // pred_region
    _
  $region25: #{forward.18} parent=0 // pred_fallthru
    _
  // Predicated region
  $region26: #{forward.18} parent=0 // pred_check
    _
  $region27: #{forward.18} parent=0 // pred_check_branch
    %25 = sbr.rel (0) target = $region29
  $region28: #{forward.18} parent=0 // pred_region
    _
  $region29: #{forward.18} parent=0 // pred_fallthru
    _
  %v27 = vld [vmem:[%s0] sm:$0xff]
  %v28 = vld [vmem:[%s0 + $0x8] sm:$0xff]
  %v29 = vand.u32 2147483647, %v27
  %v30 = vand.u32 2147483647, %v28
  %v31 = vpack.c.bf16 %v30, %v29
  %v32 = vld [vmem:[%s1] sm:$0xf]
  %v33 = vld [vmem:[%s1 + $0x4] sm:$0xf]
  %v34 = vld [vmem:[%s2] sm:$0xff]
  %v35 = vld [vmem:[%s2 + $0x8] sm:$0xff]
  %37 = vset.pattern.permute.xlu0 0
  %38 = vperm.xlu0 %37, %v34
  %v39 = vpop.permute.xlu0 %38
  %42 = vset.pattern.permute.xlu0 0
  %43 = vperm.xlu0 %42, %v35
  %v44 = vpop.permute.xlu0 %43
  %v48 = vunpack.c.l.b16 %v32
  %v49 = vunpack.c.l.b16 %v33
  %v50 = vpack.c.b16 %v49, %v48
  %vm51 = vcmask 130048
  %v53 = vsel %vm51, %v50, 0
  %55 = vmatprep.subr.bf16.mxu0 0
  %56 = vmatpush1.bf16.msra.mxu0 %v31
  %57 = vmatprep.subr.bf16.mxu0 0
  %58 = vmatpush1.bf16.msra.mxu0 0
  %59 = vmatprep.subr.bf16.mxu0 0
  %60 = vmatpush1.bf16.msra.mxu0 0
  %61 = vmatprep.subr.bf16.mxu0 0
  %62 = vmatpush1.bf16.msra.mxu0 0
  %63 = vmatprep.subr.bf16.mxu0 0
  %64 = vmatpush1.bf16.msra.mxu0 0
  %65 = vmatprep.subr.bf16.mxu0 0
  %66 = vmatpush1.bf16.msra.mxu0 0
  %67 = vmatprep.subr.bf16.mxu0 0
  %68 = vmatpush1.bf16.msra.mxu0 0
  %69 = vmatprep.subr.bf16.mxu0 0
  %70 = vmatpush1.bf16.msra.mxu0 0
  %71 = vmatprep.subr.bf16.mxu0 0
  %72 = vmatpush1.bf16.msra.mxu0 0
  %73 = vmatprep.subr.bf16.mxu0 0
  %74 = vmatpush1.bf16.msra.mxu0 0
  %75 = vmatprep.subr.bf16.mxu0 0
  %76 = vmatpush1.bf16.msra.mxu0 0
  %77 = vmatprep.subr.bf16.mxu0 0
  %78 = vmatpush1.bf16.msra.mxu0 0
  %79 = vmatprep.subr.bf16.mxu0 0
  %80 = vmatpush1.bf16.msra.mxu0 0
  %81 = vmatprep.subr.bf16.mxu0 0
  %82 = vmatpush1.bf16.msra.mxu0 0
  %83 = vmatprep.subr.bf16.mxu0 0
  %84 = vmatpush1.bf16.msra.mxu0 0
  %85 = vmatprep.subr.bf16.mxu0 0
  %86 = vmatpush1.bf16.msra.mxu0 0
  %87 = vmatprep.mubr.bf16.mxu0 0
  %88 = vmatmul.mubr.bf16.gmra.mrb[0].mxu0 %v53
  %v89 = vpop.f32.mrb[0].mxu0
  %v90 = vadd.f32 %v39, %v89
  %v91 = vpop.f32.mrb[0].mxu0
  %v92 = vpop.f32.mrb[0].mxu0
  %v93 = vadd.f32 %v44, %v92
  %v94 = vpop.f32.mrb[0].mxu0
  %95 = vdwg.mxu0
  %v96 = vmax.f32 %v90, 0.0
  %v97 = vmax.f32 %v93, 0.0
  %v98 = vpack.c.bf16 %v97, %v96
  %v99 = vld [vmem:[%s3] sm:$0xf]
  %v100 = vld [vmem:[%s3 + $0x4] sm:$0xf]
  %v101 = vld [vmem:[%s4] sm:$0xff]
  %v102 = vld [vmem:[%s4 + $0x8] sm:$0xff]
  %104 = vset.pattern.permute.xlu0 0
  %105 = vperm.xlu0 %104, %v101
  %v106 = vpop.permute.xlu0 %105
  %109 = vset.pattern.permute.xlu0 0
  %110 = vperm.xlu0 %109, %v102
  %v111 = vpop.permute.xlu0 %110
  %v115 = vunpack.c.l.b16 %v99
  %v116 = vunpack.c.l.b16 %v100
  %v117 = vpack.c.b16 %v116, %v115
  %v119 = vsel %vm51, %v117, 0
  %121 = vmatprep.subr.bf16.mxu0 0
  %122 = vmatpush1.bf16.msra.mxu0 %v98
  %123 = vmatprep.subr.bf16.mxu0 0
  %124 = vmatpush1.bf16.msra.mxu0 0
  %125 = vmatprep.subr.bf16.mxu0 0
  %126 = vmatpush1.bf16.msra.mxu0 0
  %127 = vmatprep.subr.bf16.mxu0 0
  %128 = vmatpush1.bf16.msra.mxu0 0
  %129 = vmatprep.subr.bf16.mxu0 0
  %130 = vmatpush1.bf16.msra.mxu0 0
  %131 = vmatprep.subr.bf16.mxu0 0
  %132 = vmatpush1.bf16.msra.mxu0 0
  %133 = vmatprep.subr.bf16.mxu0 0
  %134 = vmatpush1.bf16.msra.mxu0 0
  %135 = vmatprep.subr.bf16.mxu0 0
  %136 = vmatpush1.bf16.msra.mxu0 0
  %137 = vmatprep.subr.bf16.mxu0 0
  %138 = vmatpush1.bf16.msra.mxu0 0
  %139 = vmatprep.subr.bf16.mxu0 0
  %140 = vmatpush1.bf16.msra.mxu0 0
  %141 = vmatprep.subr.bf16.mxu0 0
  %142 = vmatpush1.bf16.msra.mxu0 0
  %143 = vmatprep.subr.bf16.mxu0 0
  %144 = vmatpush1.bf16.msra.mxu0 0
  %145 = vmatprep.subr.bf16.mxu0 0
  %146 = vmatpush1.bf16.msra.mxu0 0
  %147 = vmatprep.subr.bf16.mxu0 0
  %148 = vmatpush1.bf16.msra.mxu0 0
  %149 = vmatprep.subr.bf16.mxu0 0
  %150 = vmatpush1.bf16.msra.mxu0 0
  %151 = vmatprep.subr.bf16.mxu0 0
  %152 = vmatpush1.bf16.msra.mxu0 0
  %153 = vmatprep.mubr.bf16.mxu0 0
  %154 = vmatmul.mubr.bf16.gmra.mrb[0].mxu0 %v119
  %v155 = vpop.f32.mrb[0].mxu0
  %v156 = vadd.f32 %v106, %v155
  %v157 = vpop.f32.mrb[0].mxu0
  %v158 = vpop.f32.mrb[0].mxu0
  %v159 = vadd.f32 %v111, %v158
  %v160 = vpop.f32.mrb[0].mxu0
  %161 = vdwg.mxu0
  %v162 = vmax.f32 %v156, 0.0
  %v163 = vmax.f32 %v159, 0.0
  %v164 = vpack.c.bf16 %v163, %v162
  %v165 = vld [vmem:[%s5] sm:$0xf]
  %v166 = vld [vmem:[%s6] sm:$0xff]
  %168 = vset.pattern.permute.xlu0 0
  %169 = vperm.xlu0 %168, %v166
  %v170 = vpop.permute.xlu0 %169
  %v173 = vsel %vm51, %v165, 0
  %175 = vmatprep.subr.bf16.mxu0 0
  %176 = vmatpush1.bf16.msra.mxu0 %v164
  %177 = vmatprep.subr.bf16.mxu0 0
  %178 = vmatpush1.bf16.msra.mxu0 0
  %179 = vmatprep.subr.bf16.mxu0 0
  %180 = vmatpush1.bf16.msra.mxu0 0
  %181 = vmatprep.subr.bf16.mxu0 0
  %182 = vmatpush1.bf16.msra.mxu0 0
  %183 = vmatprep.subr.bf16.mxu0 0
  %184 = vmatpush1.bf16.msra.mxu0 0
  %185 = vmatprep.subr.bf16.mxu0 0
  %186 = vmatpush1.bf16.msra.mxu0 0
  %187 = vmatprep.subr.bf16.mxu0 0
  %188 = vmatpush1.bf16.msra.mxu0 0
  %189 = vmatprep.subr.bf16.mxu0 0
  %190 = vmatpush1.bf16.msra.mxu0 0
  %191 = vmatprep.subr.bf16.mxu0 0
  %192 = vmatpush1.bf16.msra.mxu0 0
  %193 = vmatprep.subr.bf16.mxu0 0
  %194 = vmatpush1.bf16.msra.mxu0 0
  %195 = vmatprep.subr.bf16.mxu0 0
  %196 = vmatpush1.bf16.msra.mxu0 0
  %197 = vmatprep.subr.bf16.mxu0 0
  %198 = vmatpush1.bf16.msra.mxu0 0
  %199 = vmatprep.subr.bf16.mxu0 0
  %200 = vmatpush1.bf16.msra.mxu0 0
  %201 = vmatprep.subr.bf16.mxu0 0
  %202 = vmatpush1.bf16.msra.mxu0 0
  %203 = vmatprep.subr.bf16.mxu0 0
  %204 = vmatpush1.bf16.msra.mxu0 0
  %205 = vmatprep.subr.bf16.mxu0 0
  %206 = vmatpush1.bf16.msra.mxu0 0
  %207 = vmatprep.mubr.bf16.mxu0 0
  %208 = vmatmul.mubr.bf16.gmra.mrb[0].mxu0 %v173
  %v209 = vpop.f32.mrb[0].mxu0
  %v210 = vadd.f32 %v170, %v209
  %v211 = vpop.f32.mrb[0].mxu0
  %v212 = vpop.f32.mrb[0].mxu0
  %v213 = vpop.f32.mrb[0].mxu0
  %214 = vdwg.mxu0
  %215 = vst [vmem:[%s7] sm:$0xff] %v210
  // Predicated region
  $region30: #{forward.18} parent=0 // pred_check
    _
  $region31: #{forward.18} parent=0 // pred_check_branch
    %217 = sbr.rel (0) target = $region33
  $region32: #{forward.18} parent=0 // pred_region
    _
  $region33: #{forward.18} parent=0 // pred_fallthru
    _
  // Predicated region
  $region34: #{forward.18} parent=0 // pred_check
    _
  $region35: #{forward.18} parent=0 // pred_check_branch
    %219 = sbr.rel (0) target = $region37
  $region36: #{forward.18} parent=0 // pred_region
    _
  $region37: #{forward.18} parent=0 // pred_fallthru
    _

// kernel: forward.19
$region0: #{forward.19}
  #allocation0 [shape = 'u32[]', space=smem, size = 0x4, offset = 0x4, fixed_abs, tag = 'smem constant byte address 0x4 - core index']
  #allocation1 [shape = 'u32[144,128]{1,0:T(1,128)}', space=vmem, size = 0x12000, scoped, tag = 'internal scratch']
  %s0 = inlined_call_operand.vmem [shape: f32[8,128], index: 0, kind: input, shape index: {}]
  %s1 = inlined_call_operand.vmem [shape: bf16[16,8], index: 1, kind: input, shape index: {}]
  %s2 = inlined_call_operand.vmem [shape: f32[16,1], index: 2, kind: input, shape index: {}]
  %s3 = inlined_call_operand.vmem [shape: bf16[16,16], index: 3, kind: input, shape index: {}]
  %s4 = inlined_call_operand.vmem [shape: f32[16,1], index: 4, kind: input, shape index: {}]
  %s5 = inlined_call_operand.vmem [shape: bf16[16,16], index: 5, kind: input, shape index: {}]
  %s6 = inlined_call_operand.vmem [shape: f32[16,1], index: 6, kind: input, shape index: {}]
  %s7 = inlined_call_operand.vmem [shape: f32[16,128], index: 7, kind: output, shape index: {}]
  %s8 = sld [smem:[#allocation0]]
  $region38: #{forward.19} parent=0
    _
  %s10 = ssub.s32 1, %s8
  %s11 = scalar_select 0, %s10, %s8
  // Predicated region
  $region2: #{forward.19} parent=0 // pred_check
    _
  $region3: #{forward.19} parent=0 // pred_check_branch
    %13 = sbr.rel (0) target = $region5
  $region4: #{forward.19} parent=0 // pred_region
    _
  $region5: #{forward.19} parent=0 // pred_fallthru
    _
  // Predicated region
  $region6: #{forward.19} parent=0 // pred_check
    _
  $region7: #{forward.19} parent=0 // pred_check_branch
    %15 = sbr.rel (0) target = $region9
  $region8: #{forward.19} parent=0 // pred_region
    _
  $region9: #{forward.19} parent=0 // pred_fallthru
    _
  // Predicated region
  $region10: #{forward.19} parent=0 // pred_check
    _
  $region11: #{forward.19} parent=0 // pred_check_branch
    %17 = sbr.rel (0) target = $region13
  $region12: #{forward.19} parent=0 // pred_region
    _
  $region13: #{forward.19} parent=0 // pred_fallthru
    _
  // Predicated region
  $region14: #{forward.19} parent=0 // pred_check
    _
  $region15: #{forward.19} parent=0 // pred_check_branch
    %19 = sbr.rel (0) target = $region17
  $region16: #{forward.19} parent=0 // pred_region
    _
  $region17: #{forward.19} parent=0 // pred_fallthru
    _
  // Predicated region
  $region18: #{forward.19} parent=0 // pred_check
    _
  $region19: #{forward.19} parent=0 // pred_check_branch
    %21 = sbr.rel (0) target = $region21
  $region20: #{forward.19} parent=0 // pred_region
    _
  $region21: #{forward.19} parent=0 // pred_fallthru
    _
  // Predicated region
  $region22: #{forward.19} parent=0 // pred_check
    _
  $region23: #{forward.19} parent=0 // pred_check_branch
    %23 = sbr.rel (0) target = $region25
  $region24: #{forward.19} parent=0 // pred_region
    _
  $region25: #{forward.19} parent=0 // pred_fallthru
    _
  // Predicated region
  $region26: #{forward.19} parent=0 // pred_check
    _
  $region27: #{forward.19} parent=0 // pred_check_branch
    %25 = sbr.rel (0) target = $region29
  $region28: #{forward.19} parent=0 // pred_region
    _
  $region29: #{forward.19} parent=0 // pred_fallthru
    _
  %v27 = vld [vmem:[%s0] sm:$0xff]
  %v28 = vpack.c.bf16 %v27, %v27
  %v29 = vld [vmem:[%s1] sm:$0xf]
  %v30 = vld [vmem:[%s1 + $0x4] sm:$0xf]
  %v31 = vld [vmem:[%s2] sm:$0xff]
  %v32 = vld [vmem:[%s2 + $0x8] sm:$0xff]
  %34 = vset.pattern.permute.xlu0 0
  %35 = vperm.xlu0 %34, %v31
  %v36 = vpop.permute.xlu0 %35
  %39 = vset.pattern.permute.xlu0 0
  %40 = vperm.xlu0 %39, %v32
  %v41 = vpop.permute.xlu0 %40
  %v45 = vunpack.c.l.b16 %v29
  %v46 = vunpack.c.l.b16 %v30
  %v47 = vpack.c.b16 %v46, %v45
  %vm48 = vcmask 64512
  %v50 = vsel %vm48, %v47, 0
  %vm52 = vcmask 1043456
  %v54 = vsel %vm52, %v28, 0
  %56 = vmatprep.subr.bf16.mxu0 0
  %57 = vmatpush1.bf16.msra.mxu0 %v54
  %58 = vmatprep.subr.bf16.mxu0 0
  %59 = vmatpush1.bf16.msra.mxu0 0
  %60 = vmatprep.subr.bf16.mxu0 0
  %61 = vmatpush1.bf16.msra.mxu0 0
  %62 = vmatprep.subr.bf16.mxu0 0
  %63 = vmatpush1.bf16.msra.mxu0 0
  %64 = vmatprep.subr.bf16.mxu0 0
  %65 = vmatpush1.bf16.msra.mxu0 0
  %66 = vmatprep.subr.bf16.mxu0 0
  %67 = vmatpush1.bf16.msra.mxu0 0
  %68 = vmatprep.subr.bf16.mxu0 0
  %69 = vmatpush1.bf16.msra.mxu0 0
  %70 = vmatprep.subr.bf16.mxu0 0
  %71 = vmatpush1.bf16.msra.mxu0 0
  %72 = vmatprep.subr.bf16.mxu0 0
  %73 = vmatpush1.bf16.msra.mxu0 0
  %74 = vmatprep.subr.bf16.mxu0 0
  %75 = vmatpush1.bf16.msra.mxu0 0
  %76 = vmatprep.subr.bf16.mxu0 0
  %77 = vmatpush1.bf16.msra.mxu0 0
  %78 = vmatprep.subr.bf16.mxu0 0
  %79 = vmatpush1.bf16.msra.mxu0 0
  %80 = vmatprep.subr.bf16.mxu0 0
  %81 = vmatpush1.bf16.msra.mxu0 0
  %82 = vmatprep.subr.bf16.mxu0 0
  %83 = vmatpush1.bf16.msra.mxu0 0
  %84 = vmatprep.subr.bf16.mxu0 0
  %85 = vmatpush1.bf16.msra.mxu0 0
  %86 = vmatprep.subr.bf16.mxu0 0
  %87 = vmatpush1.bf16.msra.mxu0 0
  %88 = vmatprep.mubr.bf16.mxu0 0
  %89 = vmatmul.mubr.bf16.gmra.mrb[0].mxu0 %v50
  %v90 = vpop.f32.mrb[0].mxu0
  %v91 = vadd.f32 %v36, %v90
  %v92 = vpop.f32.mrb[0].mxu0
  %v93 = vpop.f32.mrb[0].mxu0
  %v94 = vadd.f32 %v41, %v93
  %v95 = vpop.f32.mrb[0].mxu0
  %96 = vdwg.mxu0
  %v97 = vmax.f32 %v91, 0.0
  %v98 = vmax.f32 %v94, 0.0
  %v99 = vpack.c.bf16 %v98, %v97
  %v100 = vld [vmem:[%s3] sm:$0xf]
  %v101 = vld [vmem:[%s3 + $0x4] sm:$0xf]
  %v102 = vld [vmem:[%s4] sm:$0xff]
  %v103 = vld [vmem:[%s4 + $0x8] sm:$0xff]
  %105 = vset.pattern.permute.xlu0 0
  %106 = vperm.xlu0 %105, %v102
  %v107 = vpop.permute.xlu0 %106
  %110 = vset.pattern.permute.xlu0 0
  %111 = vperm.xlu0 %110, %v103
  %v112 = vpop.permute.xlu0 %111
  %v116 = vunpack.c.l.b16 %v100
  %v117 = vunpack.c.l.b16 %v101
  %v118 = vpack.c.b16 %v117, %v116
  %vm119 = vcmask 130048
  %v121 = vsel %vm119, %v118, 0
  %123 = vmatprep.subr.bf16.mxu0 0
  %124 = vmatpush1.bf16.msra.mxu0 %v99
  %125 = vmatprep.subr.bf16.mxu0 0
  %126 = vmatpush1.bf16.msra.mxu0 0
  %127 = vmatprep.subr.bf16.mxu0 0
  %128 = vmatpush1.bf16.msra.mxu0 0
  %129 = vmatprep.subr.bf16.mxu0 0
  %130 = vmatpush1.bf16.msra.mxu0 0
  %131 = vmatprep.subr.bf16.mxu0 0
  %132 = vmatpush1.bf16.msra.mxu0 0
  %133 = vmatprep.subr.bf16.mxu0 0
  %134 = vmatpush1.bf16.msra.mxu0 0
  %135 = vmatprep.subr.bf16.mxu0 0
  %136 = vmatpush1.bf16.msra.mxu0 0
  %137 = vmatprep.subr.bf16.mxu0 0
  %138 = vmatpush1.bf16.msra.mxu0 0
  %139 = vmatprep.subr.bf16.mxu0 0
  %140 = vmatpush1.bf16.msra.mxu0 0
  %141 = vmatprep.subr.bf16.mxu0 0
  %142 = vmatpush1.bf16.msra.mxu0 0
  %143 = vmatprep.subr.bf16.mxu0 0
  %144 = vmatpush1.bf16.msra.mxu0 0
  %145 = vmatprep.subr.bf16.mxu0 0
  %146 = vmatpush1.bf16.msra.mxu0 0
  %147 = vmatprep.subr.bf16.mxu0 0
  %148 = vmatpush1.bf16.msra.mxu0 0
  %149 = vmatprep.subr.bf16.mxu0 0
  %150 = vmatpush1.bf16.msra.mxu0 0
  %151 = vmatprep.subr.bf16.mxu0 0
  %152 = vmatpush1.bf16.msra.mxu0 0
  %153 = vmatprep.subr.bf16.mxu0 0
  %154 = vmatpush1.bf16.msra.mxu0 0
  %155 = vmatprep.mubr.bf16.mxu0 0
  %156 = vmatmul.mubr.bf16.gmra.mrb[0].mxu0 %v121
  %v157 = vpop.f32.mrb[0].mxu0
  %v158 = vadd.f32 %v107, %v157
  %v159 = vpop.f32.mrb[0].mxu0
  %v160 = vpop.f32.mrb[0].mxu0
  %v161 = vadd.f32 %v112, %v160
  %v162 = vpop.f32.mrb[0].mxu0
  %163 = vdwg.mxu0
  %v164 = vmax.f32 %v158, 0.0
  %v165 = vmax.f32 %v161, 0.0
  %v166 = vpack.c.bf16 %v165, %v164
  %v167 = vld [vmem:[%s5] sm:$0xf]
  %v168 = vld [vmem:[%s5 + $0x4] sm:$0xf]
  %v169 = vld [vmem:[%s6] sm:$0xff]
  %v170 = vld [vmem:[%s6 + $0x8] sm:$0xff]
  %172 = vset.pattern.permute.xlu0 0
  %173 = vperm.xlu0 %172, %v169
  %v174 = vpop.permute.xlu0 %173
  %177 = vset.pattern.permute.xlu0 0
  %178 = vperm.xlu0 %177, %v170
  %v179 = vpop.permute.xlu0 %178
  %v183 = vunpack.c.l.b16 %v167
  %v184 = vunpack.c.l.b16 %v168
  %v185 = vpack.c.b16 %v184, %v183
  %v187 = vsel %vm119, %v185, 0
  %189 = vmatprep.subr.bf16.mxu0 0
  %190 = vmatpush1.bf16.msra.mxu0 %v166
  %191 = vmatprep.subr.bf16.mxu0 0
  %192 = vmatpush1.bf16.msra.mxu0 0
  %193 = vmatprep.subr.bf16.mxu0 0
  %194 = vmatpush1.bf16.msra.mxu0 0
  %195 = vmatprep.subr.bf16.mxu0 0
  %196 = vmatpush1.bf16.msra.mxu0 0
  %197 = vmatprep.subr.bf16.mxu0 0
  %198 = vmatpush1.bf16.msra.mxu0 0
  %199 = vmatprep.subr.bf16.mxu0 0
  %200 = vmatpush1.bf16.msra.mxu0 0
  %201 = vmatprep.subr.bf16.mxu0 0
  %202 = vmatpush1.bf16.msra.mxu0 0
  %203 = vmatprep.subr.bf16.mxu0 0
  %204 = vmatpush1.bf16.msra.mxu0 0
  %205 = vmatprep.subr.bf16.mxu0 0
  %206 = vmatpush1.bf16.msra.mxu0 0
  %207 = vmatprep.subr.bf16.mxu0 0
  %208 = vmatpush1.bf16.msra.mxu0 0
  %209 = vmatprep.subr.bf16.mxu0 0
  %210 = vmatpush1.bf16.msra.mxu0 0
  %211 = vmatprep.subr.bf16.mxu0 0
  %212 = vmatpush1.bf16.msra.mxu0 0
  %213 = vmatprep.subr.bf16.mxu0 0
  %214 = vmatpush1.bf16.msra.mxu0 0
  %215 = vmatprep.subr.bf16.mxu0 0
  %216 = vmatpush1.bf16.msra.mxu0 0
  %217 = vmatprep.subr.bf16.mxu0 0
  %218 = vmatpush1.bf16.msra.mxu0 0
  %219 = vmatprep.subr.bf16.mxu0 0
  %220 = vmatpush1.bf16.msra.mxu0 0
  %221 = vmatprep.mubr.bf16.mxu0 0
  %222 = vmatmul.mubr.bf16.gmra.mrb[0].mxu0 %v187
  %v223 = vpop.f32.mrb[0].mxu0
  %v224 = vadd.f32 %v174, %v223
  %v225 = vpop.f32.mrb[0].mxu0
  %v226 = vpop.f32.mrb[0].mxu0
  %v227 = vadd.f32 %v179, %v226
  %v228 = vpop.f32.mrb[0].mxu0
  %229 = vdwg.mxu0
  %v230 = vmax.f32 %v224, 0.0
  %v231 = vmax.f32 %v227, 0.0
  %232 = vst [vmem:[%s7] sm:$0xff] %v230
  %233 = vst [vmem:[%s7 + $0x8] sm:$0xff] %v231
  // Predicated region
  $region30: #{forward.19} parent=0 // pred_check
    _
  $region31: #{forward.19} parent=0 // pred_check_branch
    %235 = sbr.rel (0) target = $region33
  $region32: #{forward.19} parent=0 // pred_region
    _
  $region33: #{forward.19} parent=0 // pred_fallthru
    _
  // Predicated region
  $region34: #{forward.19} parent=0 // pred_check
    _
  $region35: #{forward.19} parent=0 // pred_check_branch
    %237 = sbr.rel (0) target = $region37
  $region36: #{forward.19} parent=0 // pred_region
    _
  $region37: #{forward.19} parent=0 // pred_fallthru
    _

// kernel: tile.18
$region0: #{tile.18}
  #allocation0 [shape = 's32[1]{0}', space=sflag, size = 0x4, scoped, tag = 'scoped memory for tile.18']
  %s0 = inlined_call_operand.vmem [shape: f32[16], index: 0, kind: input, shape index: {}]
  %s1 = inlined_call_operand.vmem [shape: f32[8,16], index: 1, kind: output, shape index: {}]
  // Predicated region
  $region2: #{tile.18} parent=0 // pred_check
    _
  $region3: #{tile.18} parent=0 // pred_check_branch
    %3 = sbr.rel (0) target = $region5
  $region4: #{tile.18} parent=0 // pred_region
    _
  $region5: #{tile.18} parent=0 // pred_fallthru
    _
  %v4 = vld [vmem:[%s0] ss:$0 sm:$0xff]
  %5 = vst [vmem:[%s1] sm:$0xff] %v4

// kernel: tile.0
$region0: #{tile.0}
  %s0 = inlined_call_operand.vmem [shape: f32[8,16], index: 0, kind: input, shape index: {}]
  %s1 = inlined_call_operand.vmem [shape: f32[128,1], index: 1, kind: output, shape index: {}]
  %v2 = vld [vmem:[%s0] sm:$0xff]
  %vm3 = vcmask 7168
  %4 = vst.msk [vmem:[%s1] ss:$16 sm:$0x3] %vm3, %v2
  %5 = vst.msk [vmem:[%s1] ss:$16 sm:$0xc] %vm3, %v2
  %6 = vst.msk [vmem:[%s1] ss:$16 sm:$0x30] %vm3, %v2
  %7 = vst.msk [vmem:[%s1] ss:$16 sm:$0xc0] %vm3, %v2
  %v8 = vld [vmem:[%s0] sm:$0xff]
  %9 = vrot.lane.b32.xlu0 %v8, 127
  %v10 = vpop.permute.xlu0 %9
  %vm11 = vcmask 7168
  %s12 = scalar_lea.vmem %s1, 1
  %13 = vst.msk [vmem:[%s12] ss:$16 sm:$0x3] %vm11, %v10
  %s14 = scalar_lea.vmem %s1, 1
  %15 = vst.msk [vmem:[%s14] ss:$16 sm:$0xc] %vm11, %v10
  %s16 = scalar_lea.vmem %s1, 1
  %17 = vst.msk [vmem:[%s16] ss:$16 sm:$0x30] %vm11, %v10
  %s18 = scalar_lea.vmem %s1, 1
  %19 = vst.msk [vmem:[%s18] ss:$16 sm:$0xc0] %vm11, %v10
  %v20 = vld [vmem:[%s0] sm:$0xff]
  %21 = vrot.lane.b32.xlu0 %v20, 126
  %v22 = vpop.permute.xlu0 %21
  %vm23 = vcmask 7168
  %s24 = scalar_lea.vmem %s1, 2
  %25 = vst.msk [vmem:[%s24] ss:$16 sm:$0x3] %vm23, %v22
  %s26 = scalar_lea.vmem %s1, 2
  %27 = vst.msk [vmem:[%s26] ss:$16 sm:$0xc] %vm23, %v22
  %s28 = scalar_lea.vmem %s1, 2
  %29 = vst.msk [vmem:[%s28] ss:$16 sm:$0x30] %vm23, %v22
  %s30 = scalar_lea.vmem %s1, 2
  %31 = vst.msk [vmem:[%s30] ss:$16 sm:$0xc0] %vm23, %v22
  %v32 = vld [vmem:[%s0] sm:$0xff]
  %33 = vrot.lane.b32.xlu0 %v32, 125
  %v34 = vpop.permute.xlu0 %33
  %vm35 = vcmask 7168
  %s36 = scalar_lea.vmem %s1, 3
  %37 = vst.msk [vmem:[%s36] ss:$16 sm:$0x3] %vm35, %v34
  %s38 = scalar_lea.vmem %s1, 3
  %39 = vst.msk [vmem:[%s38] ss:$16 sm:$0xc] %vm35, %v34
  %s40 = scalar_lea.vmem %s1, 3
  %41 = vst.msk [vmem:[%s40] ss:$16 sm:$0x30] %vm35, %v34
  %s42 = scalar_lea.vmem %s1, 3
  %43 = vst.msk [vmem:[%s42] ss:$16 sm:$0xc0] %vm35, %v34
  %v44 = vld [vmem:[%s0] sm:$0xff]
  %45 = vrot.lane.b32.xlu0 %v44, 124
  %v46 = vpop.permute.xlu0 %45
  %vm47 = vcmask 7168
  %s48 = scalar_lea.vmem %s1, 4
  %49 = vst.msk [vmem:[%s48] ss:$16 sm:$0x3] %vm47, %v46
  %s50 = scalar_lea.vmem %s1, 4
  %51 = vst.msk [vmem:[%s50] ss:$16 sm:$0xc] %vm47, %v46
  %s52 = scalar_lea.vmem %s1, 4
  %53 = vst.msk [vmem:[%s52] ss:$16 sm:$0x30] %vm47, %v46
  %s54 = scalar_lea.vmem %s1, 4
  %55 = vst.msk [vmem:[%s54] ss:$16 sm:$0xc0] %vm47, %v46
  %v56 = vld [vmem:[%s0] sm:$0xff]
  %57 = vrot.lane.b32.xlu0 %v56, 123
  %v58 = vpop.permute.xlu0 %57
  %vm59 = vcmask 7168
  %s60 = scalar_lea.vmem %s1, 5
  %61 = vst.msk [vmem:[%s60] ss:$16 sm:$0x3] %vm59, %v58
  %s62 = scalar_lea.vmem %s1, 5
  %63 = vst.msk [vmem:[%s62] ss:$16 sm:$0xc] %vm59, %v58
  %s64 = scalar_lea.vmem %s1, 5
  %65 = vst.msk [vmem:[%s64] ss:$16 sm:$0x30] %vm59, %v58
  %s66 = scalar_lea.vmem %s1, 5
  %67 = vst.msk [vmem:[%s66] ss:$16 sm:$0xc0] %vm59, %v58
  %v68 = vld [vmem:[%s0] sm:$0xff]
  %69 = vrot.lane.b32.xlu0 %v68, 122
  %v70 = vpop.permute.xlu0 %69
  %vm71 = vcmask 7168
  %s72 = scalar_lea.vmem %s1, 6
  %73 = vst.msk [vmem:[%s72] ss:$16 sm:$0x3] %vm71, %v70
  %s74 = scalar_lea.vmem %s1, 6
  %75 = vst.msk [vmem:[%s74] ss:$16 sm:$0xc] %vm71, %v70
  %s76 = scalar_lea.vmem %s1, 6
  %77 = vst.msk [vmem:[%s76] ss:$16 sm:$0x30] %vm71, %v70
  %s78 = scalar_lea.vmem %s1, 6
  %79 = vst.msk [vmem:[%s78] ss:$16 sm:$0xc0] %vm71, %v70
  %v80 = vld [vmem:[%s0] sm:$0xff]
  %81 = vrot.lane.b32.xlu0 %v80, 121
  %v82 = vpop.permute.xlu0 %81
  %vm83 = vcmask 7168
  %s84 = scalar_lea.vmem %s1, 7
  %85 = vst.msk [vmem:[%s84] ss:$16 sm:$0x3] %vm83, %v82
  %s86 = scalar_lea.vmem %s1, 7
  %87 = vst.msk [vmem:[%s86] ss:$16 sm:$0xc] %vm83, %v82
  %s88 = scalar_lea.vmem %s1, 7
  %89 = vst.msk [vmem:[%s88] ss:$16 sm:$0x30] %vm83, %v82
  %s90 = scalar_lea.vmem %s1, 7
  %91 = vst.msk [vmem:[%s90] ss:$16 sm:$0xc0] %vm83, %v82
  %v92 = vld [vmem:[%s0] sm:$0xff]
  %93 = vrot.lane.b32.xlu0 %v92, 120
  %v94 = vpop.permute.xlu0 %93
  %vm95 = vcmask 7168
  %s96 = scalar_lea.vmem %s1, 8
  %97 = vst.msk [vmem:[%s96] ss:$16 sm:$0x3] %vm95, %v94
  %s98 = scalar_lea.vmem %s1, 8
  %99 = vst.msk [vmem:[%s98] ss:$16 sm:$0xc] %vm95, %v94
  %s100 = scalar_lea.vmem %s1, 8
  %101 = vst.msk [vmem:[%s100] ss:$16 sm:$0x30] %vm95, %v94
  %s102 = scalar_lea.vmem %s1, 8
  %103 = vst.msk [vmem:[%s102] ss:$16 sm:$0xc0] %vm95, %v94
  %v104 = vld [vmem:[%s0] sm:$0xff]
  %105 = vrot.lane.b32.xlu0 %v104, 119
  %v106 = vpop.permute.xlu0 %105
  %vm107 = vcmask 7168
  %s108 = scalar_lea.vmem %s1, 9
  %109 = vst.msk [vmem:[%s108] ss:$16 sm:$0x3] %vm107, %v106
  %s110 = scalar_lea.vmem %s1, 9
  %111 = vst.msk [vmem:[%s110] ss:$16 sm:$0xc] %vm107, %v106
  %s112 = scalar_lea.vmem %s1, 9
  %113 = vst.msk [vmem:[%s112] ss:$16 sm:$0x30] %vm107, %v106
  %s114 = scalar_lea.vmem %s1, 9
  %115 = vst.msk [vmem:[%s114] ss:$16 sm:$0xc0] %vm107, %v106
  %v116 = vld [vmem:[%s0] sm:$0xff]
  %117 = vrot.lane.b32.xlu0 %v116, 118
  %v118 = vpop.permute.xlu0 %117
  %vm119 = vcmask 7168
  %s120 = scalar_lea.vmem %s1, 10
  %121 = vst.msk [vmem:[%s120] ss:$16 sm:$0x3] %vm119, %v118
  %s122 = scalar_lea.vmem %s1, 10
  %123 = vst.msk [vmem:[%s122] ss:$16 sm:$0xc] %vm119, %v118
  %s124 = scalar_lea.vmem %s1, 10
  %125 = vst.msk [vmem:[%s124] ss:$16 sm:$0x30] %vm119, %v118
  %s126 = scalar_lea.vmem %s1, 10
  %127 = vst.msk [vmem:[%s126] ss:$16 sm:$0xc0] %vm119, %v118
  %v128 = vld [vmem:[%s0] sm:$0xff]
  %129 = vrot.lane.b32.xlu0 %v128, 117
  %v130 = vpop.permute.xlu0 %129
  %vm131 = vcmask 7168
  %s132 = scalar_lea.vmem %s1, 11
  %133 = vst.msk [vmem:[%s132] ss:$16 sm:$0x3] %vm131, %v130
  %s134 = scalar_lea.vmem %s1, 11
  %135 = vst.msk [vmem:[%s134] ss:$16 sm:$0xc] %vm131, %v130
  %s136 = scalar_lea.vmem %s1, 11
  %137 = vst.msk [vmem:[%s136] ss:$16 sm:$0x30] %vm131, %v130
  %s138 = scalar_lea.vmem %s1, 11
  %139 = vst.msk [vmem:[%s138] ss:$16 sm:$0xc0] %vm131, %v130
  %v140 = vld [vmem:[%s0] sm:$0xff]
  %141 = vrot.lane.b32.xlu0 %v140, 116
  %v142 = vpop.permute.xlu0 %141
  %vm143 = vcmask 7168
  %s144 = scalar_lea.vmem %s1, 12
  %145 = vst.msk [vmem:[%s144] ss:$16 sm:$0x3] %vm143, %v142
  %s146 = scalar_lea.vmem %s1, 12
  %147 = vst.msk [vmem:[%s146] ss:$16 sm:$0xc] %vm143, %v142
  %s148 = scalar_lea.vmem %s1, 12
  %149 = vst.msk [vmem:[%s148] ss:$16 sm:$0x30] %vm143, %v142
  %s150 = scalar_lea.vmem %s1, 12
  %151 = vst.msk [vmem:[%s150] ss:$16 sm:$0xc0] %vm143, %v142
  %v152 = vld [vmem:[%s0] sm:$0xff]
  %153 = vrot.lane.b32.xlu0 %v152, 115
  %v154 = vpop.permute.xlu0 %153
  %vm155 = vcmask 7168
  %s156 = scalar_lea.vmem %s1, 13
  %157 = vst.msk [vmem:[%s156] ss:$16 sm:$0x3] %vm155, %v154
  %s158 = scalar_lea.vmem %s1, 13
  %159 = vst.msk [vmem:[%s158] ss:$16 sm:$0xc] %vm155, %v154
  %s160 = scalar_lea.vmem %s1, 13
  %161 = vst.msk [vmem:[%s160] ss:$16 sm:$0x30] %vm155, %v154
  %s162 = scalar_lea.vmem %s1, 13
  %163 = vst.msk [vmem:[%s162] ss:$16 sm:$0xc0] %vm155, %v154
  %v164 = vld [vmem:[%s0] sm:$0xff]
  %165 = vrot.lane.b32.xlu0 %v164, 114
  %v166 = vpop.permute.xlu0 %165
  %vm167 = vcmask 7168
  %s168 = scalar_lea.vmem %s1, 14
  %169 = vst.msk [vmem:[%s168] ss:$16 sm:$0x3] %vm167, %v166
  %s170 = scalar_lea.vmem %s1, 14
  %171 = vst.msk [vmem:[%s170] ss:$16 sm:$0xc] %vm167, %v166
  %s172 = scalar_lea.vmem %s1, 14
  %173 = vst.msk [vmem:[%s172] ss:$16 sm:$0x30] %vm167, %v166
  %s174 = scalar_lea.vmem %s1, 14
  %175 = vst.msk [vmem:[%s174] ss:$16 sm:$0xc0] %vm167, %v166
  %v176 = vld [vmem:[%s0] sm:$0xff]
  %177 = vrot.lane.b32.xlu0 %v176, 113
  %v178 = vpop.permute.xlu0 %177
  %vm179 = vcmask 7168
  %s180 = scalar_lea.vmem %s1, 15
  %181 = vst.msk [vmem:[%s180] ss:$16 sm:$0x3] %vm179, %v178
  %s182 = scalar_lea.vmem %s1, 15
  %183 = vst.msk [vmem:[%s182] ss:$16 sm:$0xc] %vm179, %v178
  %s184 = scalar_lea.vmem %s1, 15
  %185 = vst.msk [vmem:[%s184] ss:$16 sm:$0x30] %vm179, %v178
  %s186 = scalar_lea.vmem %s1, 15
  %187 = vst.msk [vmem:[%s186] ss:$16 sm:$0xc0] %vm179, %v178

// kernel: forward.14
$region0: #{forward.14}
  #allocation0 [shape = 'u32[]', space=smem, size = 0x4, offset = 0x4, fixed_abs, tag = 'smem constant byte address 0x4 - core index']
  #allocation1 [shape = 'u32[144,128]{1,0:T(1,128)}', space=vmem, size = 0x12000, scoped, tag = 'internal scratch']
  %s0 = inlined_call_operand.vmem [shape: bf16[128,128], index: 0, kind: input, shape index: {}]
  %s1 = inlined_call_operand.vmem [shape: bf16[128,128], index: 1, kind: input, shape index: {}]
  %s2 = inlined_call_operand.vmem [shape: f32[128,1], index: 2, kind: input, shape index: {}]
  %s3 = inlined_call_operand.vmem [shape: f32[128,128], index: 3, kind: output, shape index: {}]
  %s4 = sld [smem:[#allocation0]]
  $region22: #{forward.14} parent=0
    _
  %s6 = ssub.s32 1, %s4
  %s7 = scalar_select 0, %s6, %s4
  // Predicated region
  $region2: #{forward.14} parent=0 // pred_check
    _
  $region3: #{forward.14} parent=0 // pred_check_branch
    %9 = sbr.rel (0) target = $region5
  $region4: #{forward.14} parent=0 // pred_region
    _
  $region5: #{forward.14} parent=0 // pred_fallthru
    _
  // Predicated region
  $region6: #{forward.14} parent=0 // pred_check
    _
  $region7: #{forward.14} parent=0 // pred_check_branch
    %11 = sbr.rel (0) target = $region9
  $region8: #{forward.14} parent=0 // pred_region
    _
  $region9: #{forward.14} parent=0 // pred_fallthru
    _
  // Predicated region
  $region10: #{forward.14} parent=0 // pred_check
    _
  $region11: #{forward.14} parent=0 // pred_check_branch
    %13 = sbr.rel (0) target = $region13
  $region12: #{forward.14} parent=0 // pred_region
    _
  $region13: #{forward.14} parent=0 // pred_fallthru
    _
  %v15 = vld [vmem:[%s0] sm:$0xf]
  %v16 = vld [vmem:[%s0 + $0x4] sm:$0xf]
  %v17 = vld [vmem:[%s0 + $0x8] sm:$0xf]
  %v18 = vld [vmem:[%s0 + $0xc] sm:$0xf]
  %v19 = vld [vmem:[%s0 + $0x10] sm:$0xf]
  %v20 = vld [vmem:[%s0 + $0x14] sm:$0xf]
  %v21 = vld [vmem:[%s0 + $0x18] sm:$0xf]
  %v22 = vld [vmem:[%s0 + $0x1c] sm:$0xf]
  %v23 = vld [vmem:[%s0 + $0x20] sm:$0xf]
  %v24 = vld [vmem:[%s0 + $0x24] sm:$0xf]
  %v25 = vld [vmem:[%s0 + $0x28] sm:$0xf]
  %v26 = vld [vmem:[%s0 + $0x2c] sm:$0xf]
  %v27 = vld [vmem:[%s0 + $0x30] sm:$0xf]
  %v28 = vld [vmem:[%s0 + $0x34] sm:$0xf]
  %v29 = vld [vmem:[%s0 + $0x38] sm:$0xf]
  %v30 = vld [vmem:[%s0 + $0x3c] sm:$0xf]
  %v31 = vld [vmem:[%s1] sm:$0xf]
  %v32 = vld [vmem:[%s1 + $0x4] sm:$0xf]
  %v33 = vld [vmem:[%s1 + $0x8] sm:$0xf]
  %v34 = vld [vmem:[%s1 + $0xc] sm:$0xf]
  %v35 = vld [vmem:[%s1 + $0x10] sm:$0xf]
  %v36 = vld [vmem:[%s1 + $0x14] sm:$0xf]
  %v37 = vld [vmem:[%s1 + $0x18] sm:$0xf]
  %v38 = vld [vmem:[%s1 + $0x1c] sm:$0xf]
  %v39 = vld [vmem:[%s1 + $0x20] sm:$0xf]
  %v40 = vld [vmem:[%s1 + $0x24] sm:$0xf]
  %v41 = vld [vmem:[%s1 + $0x28] sm:$0xf]
  %v42 = vld [vmem:[%s1 + $0x2c] sm:$0xf]
  %v43 = vld [vmem:[%s1 + $0x30] sm:$0xf]
  %v44 = vld [vmem:[%s1 + $0x34] sm:$0xf]
  %v45 = vld [vmem:[%s1 + $0x38] sm:$0xf]
  %v46 = vld [vmem:[%s1 + $0x3c] sm:$0xf]
  %v47 = vld [vmem:[%s2] sm:$0xff]
  %v48 = vld [vmem:[%s2 + $0x8] sm:$0xff]
  %v49 = vld [vmem:[%s2 + $0x10] sm:$0xff]
  %v50 = vld [vmem:[%s2 + $0x18] sm:$0xff]
  %v51 = vld [vmem:[%s2 + $0x20] sm:$0xff]
  %v52 = vld [vmem:[%s2 + $0x28] sm:$0xff]
  %v53 = vld [vmem:[%s2 + $0x30] sm:$0xff]
  %v54 = vld [vmem:[%s2 + $0x38] sm:$0xff]
  %v55 = vld [vmem:[%s2 + $0x40] sm:$0xff]
  %v56 = vld [vmem:[%s2 + $0x48] sm:$0xff]
  %v57 = vld [vmem:[%s2 + $0x50] sm:$0xff]
  %v58 = vld [vmem:[%s2 + $0x58] sm:$0xff]
  %v59 = vld [vmem:[%s2 + $0x60] sm:$0xff]
  %v60 = vld [vmem:[%s2 + $0x68] sm:$0xff]
  %v61 = vld [vmem:[%s2 + $0x70] sm:$0xff]
  %v62 = vld [vmem:[%s2 + $0x78] sm:$0xff]
  %64 = vset.pattern.permute.xlu0 0
  %65 = vperm.xlu0 %64, %v47
  %v66 = vpop.permute.xlu0 %65
  %69 = vset.pattern.permute.xlu0 0
  %70 = vperm.xlu0 %69, %v48
  %v71 = vpop.permute.xlu0 %70
  %74 = vset.pattern.permute.xlu0 0
  %75 = vperm.xlu0 %74, %v49
  %v76 = vpop.permute.xlu0 %75
  %79 = vset.pattern.permute.xlu0 0
  %80 = vperm.xlu0 %79, %v50
  %v81 = vpop.permute.xlu0 %80
  %84 = vset.pattern.permute.xlu0 0
  %85 = vperm.xlu0 %84, %v51
  %v86 = vpop.permute.xlu0 %85
  %89 = vset.pattern.permute.xlu0 0
  %90 = vperm.xlu0 %89, %v52
  %v91 = vpop.permute.xlu0 %90
  %94 = vset.pattern.permute.xlu0 0
  %95 = vperm.xlu0 %94, %v53
  %v96 = vpop.permute.xlu0 %95
  %99 = vset.pattern.permute.xlu0 0
  %100 = vperm.xlu0 %99, %v54
  %v101 = vpop.permute.xlu0 %100
  %104 = vset.pattern.permute.xlu0 0
  %105 = vperm.xlu0 %104, %v55
  %v106 = vpop.permute.xlu0 %105
  %109 = vset.pattern.permute.xlu0 0
  %110 = vperm.xlu0 %109, %v56
  %v111 = vpop.permute.xlu0 %110
  %114 = vset.pattern.permute.xlu0 0
  %115 = vperm.xlu0 %114, %v57
  %v116 = vpop.permute.xlu0 %115
  %119 = vset.pattern.permute.xlu0 0
  %120 = vperm.xlu0 %119, %v58
  %v121 = vpop.permute.xlu0 %120
  %124 = vset.pattern.permute.xlu0 0
  %125 = vperm.xlu0 %124, %v59
  %v126 = vpop.permute.xlu0 %125
  %129 = vset.pattern.permute.xlu0 0
  %130 = vperm.xlu0 %129, %v60
  %v131 = vpop.permute.xlu0 %130
  %134 = vset.pattern.permute.xlu0 0
  %135 = vperm.xlu0 %134, %v61
  %v136 = vpop.permute.xlu0 %135
  %139 = vset.pattern.permute.xlu0 0
  %140 = vperm.xlu0 %139, %v62
  %v141 = vpop.permute.xlu0 %140
  %v159 = vunpack.c.l.b16 %v15
  %v160 = vunpack.c.l.b16 %v16
  %v161 = vunpack.c.l.b16 %v17
  %v162 = vunpack.c.l.b16 %v18
  %v163 = vunpack.c.l.b16 %v19
  %v164 = vunpack.c.l.b16 %v20
  %v165 = vunpack.c.l.b16 %v21
  %v166 = vunpack.c.l.b16 %v22
  %v167 = vunpack.c.l.b16 %v23
  %v168 = vunpack.c.l.b16 %v24
  %v169 = vunpack.c.l.b16 %v25
  %v170 = vunpack.c.l.b16 %v26
  %v171 = vunpack.c.l.b16 %v27
  %v172 = vunpack.c.l.b16 %v28
  %v173 = vunpack.c.l.b16 %v29
  %v174 = vunpack.c.l.b16 %v30
  %v175 = vpack.c.b16 %v160, %v159
  %v176 = vpack.c.b16 %v162, %v161
  %v177 = vpack.c.b16 %v164, %v163
  %v178 = vpack.c.b16 %v166, %v165
  %v179 = vpack.c.b16 %v168, %v167
  %v180 = vpack.c.b16 %v170, %v169
  %v181 = vpack.c.b16 %v172, %v171
  %v182 = vpack.c.b16 %v174, %v173
  %v207 = vunpack.c.l.b16 %v31
  %v208 = vunpack.c.l.b16 %v32
  %v209 = vunpack.c.l.b16 %v33
  %v210 = vunpack.c.l.b16 %v34
  %v211 = vunpack.c.l.b16 %v35
  %v212 = vunpack.c.l.b16 %v36
  %v213 = vunpack.c.l.b16 %v37
  %v214 = vunpack.c.l.b16 %v38
  %v215 = vunpack.c.l.b16 %v39
  %v216 = vunpack.c.l.b16 %v40
  %v217 = vunpack.c.l.b16 %v41
  %v218 = vunpack.c.l.b16 %v42
  %v219 = vunpack.c.l.b16 %v43
  %v220 = vunpack.c.l.b16 %v44
  %v221 = vunpack.c.l.b16 %v45
  %v222 = vunpack.c.l.b16 %v46
  %v223 = vpack.c.b16 %v208, %v207
  %v224 = vpack.c.b16 %v210, %v209
  %v225 = vpack.c.b16 %v212, %v211
  %v226 = vpack.c.b16 %v214, %v213
  %v227 = vpack.c.b16 %v216, %v215
  %v228 = vpack.c.b16 %v218, %v217
  %v229 = vpack.c.b16 %v220, %v219
  %v230 = vpack.c.b16 %v222, %v221
  %239 = vmatprep.subr.bf16.mxu0 0
  %240 = vmatpush1.bf16.msra.mxu0 %v223
  %241 = vmatprep.subr.bf16.mxu0 0
  %242 = vmatpush1.bf16.msra.mxu0 %v224
  %243 = vmatprep.subr.bf16.mxu0 0
  %244 = vmatpush1.bf16.msra.mxu0 %v225
  %245 = vmatprep.subr.bf16.mxu0 0
  %246 = vmatpush1.bf16.msra.mxu0 %v226
  %247 = vmatprep.subr.bf16.mxu0 0
  %248 = vmatpush1.bf16.msra.mxu0 %v227
  %249 = vmatprep.subr.bf16.mxu0 0
  %250 = vmatpush1.bf16.msra.mxu0 %v228
  %251 = vmatprep.subr.bf16.mxu0 0
  %252 = vmatpush1.bf16.msra.mxu0 %v229
  %253 = vmatprep.subr.bf16.mxu0 0
  %254 = vmatpush1.bf16.msra.mxu0 %v230
  %255 = vmatprep.subr.bf16.mxu0 0
  %256 = vmatpush1.bf16.msra.mxu0 0
  %257 = vmatprep.subr.bf16.mxu0 0
  %258 = vmatpush1.bf16.msra.mxu0 0
  %259 = vmatprep.subr.bf16.mxu0 0
  %260 = vmatpush1.bf16.msra.mxu0 0
  %261 = vmatprep.subr.bf16.mxu0 0
  %262 = vmatpush1.bf16.msra.mxu0 0
  %263 = vmatprep.subr.bf16.mxu0 0
  %264 = vmatpush1.bf16.msra.mxu0 0
  %265 = vmatprep.subr.bf16.mxu0 0
  %266 = vmatpush1.bf16.msra.mxu0 0
  %267 = vmatprep.subr.bf16.mxu0 0
  %268 = vmatpush1.bf16.msra.mxu0 0
  %269 = vmatprep.subr.bf16.mxu0 0
  %270 = vmatpush1.bf16.msra.mxu0 0
  %271 = vmatprep.mubr.bf16.mxu0 0
  %272 = vmatmul.mubr.bf16.gmra.mrb[0].mxu0 %v175
  %v273 = vpop.f32.mrb[0].mxu0
  %v274 = vadd.f32 %v66, %v273
  %v275 = vpop.f32.mrb[0].mxu0
  %v276 = vpop.f32.mrb[0].mxu0
  %v277 = vadd.f32 %v71, %v276
  %v278 = vpop.f32.mrb[0].mxu0
  %279 = vmatprep.mubr.bf16.mxu0 0
  %280 = vmatmul.mubr.bf16.gmra.mrb[0].mxu0 %v176
  %v281 = vpop.f32.mrb[0].mxu0
  %v282 = vadd.f32 %v76, %v281
  %v283 = vpop.f32.mrb[0].mxu0
  %v284 = vpop.f32.mrb[0].mxu0
  %v285 = vadd.f32 %v81, %v284
  %v286 = vpop.f32.mrb[0].mxu0
  %287 = vmatprep.mubr.bf16.mxu0 0
  %288 = vmatmul.mubr.bf16.gmra.mrb[0].mxu0 %v177
  %v289 = vpop.f32.mrb[0].mxu0
  %v290 = vadd.f32 %v86, %v289
  %v291 = vpop.f32.mrb[0].mxu0
  %v292 = vpop.f32.mrb[0].mxu0
  %v293 = vadd.f32 %v91, %v292
  %v294 = vpop.f32.mrb[0].mxu0
  %295 = vmatprep.mubr.bf16.mxu0 0
  %296 = vmatmul.mubr.bf16.gmra.mrb[0].mxu0 %v178
  %v297 = vpop.f32.mrb[0].mxu0
  %v298 = vadd.f32 %v96, %v297
  %v299 = vpop.f32.mrb[0].mxu0
  %v300 = vpop.f32.mrb[0].mxu0
  %v301 = vadd.f32 %v101, %v300
  %v302 = vpop.f32.mrb[0].mxu0
  %303 = vmatprep.mubr.bf16.mxu0 0
  %304 = vmatmul.mubr.bf16.gmra.mrb[0].mxu0 %v179
  %v305 = vpop.f32.mrb[0].mxu0
  %v306 = vadd.f32 %v106, %v305
  %v307 = vpop.f32.mrb[0].mxu0
  %v308 = vpop.f32.mrb[0].mxu0
  %v309 = vadd.f32 %v111, %v308
  %v310 = vpop.f32.mrb[0].mxu0
  %311 = vmatprep.mubr.bf16.mxu0 0
  %312 = vmatmul.mubr.bf16.gmra.mrb[0].mxu0 %v180
  %v313 = vpop.f32.mrb[0].mxu0
  %v314 = vadd.f32 %v116, %v313
  %v315 = vpop.f32.mrb[0].mxu0
  %v316 = vpop.f32.mrb[0].mxu0
  %v317 = vadd.f32 %v121, %v316
  %v318 = vpop.f32.mrb[0].mxu0
  %319 = vmatprep.mubr.bf16.mxu0 0
  %320 = vmatmul.mubr.bf16.gmra.mrb[0].mxu0 %v181
  %v321 = vpop.f32.mrb[0].mxu0
  %v322 = vadd.f32 %v126, %v321
  %v323 = vpop.f32.mrb[0].mxu0
  %v324 = vpop.f32.mrb[0].mxu0
  %v325 = vadd.f32 %v131, %v324
  %v326 = vpop.f32.mrb[0].mxu0
  %327 = vmatprep.mubr.bf16.mxu0 0
  %328 = vmatmul.mubr.bf16.gmra.mrb[0].mxu0 %v182
  %v329 = vpop.f32.mrb[0].mxu0
  %v330 = vadd.f32 %v136, %v329
  %v331 = vpop.f32.mrb[0].mxu0
  %v332 = vpop.f32.mrb[0].mxu0
  %v333 = vadd.f32 %v141, %v332
  %v334 = vpop.f32.mrb[0].mxu0
  %335 = vdwg.mxu0
  %vm336 = vcmp.ge.f32.partialorder %v274, 0.0
  %vm337 = vcmp.ge.f32.partialorder %v277, 0.0
  %vm338 = vcmp.ge.f32.partialorder %v282, 0.0
  %vm339 = vcmp.ge.f32.partialorder %v285, 0.0
  %vm340 = vcmp.ge.f32.partialorder %v290, 0.0
  %vm341 = vcmp.ge.f32.partialorder %v293, 0.0
  %vm342 = vcmp.ge.f32.partialorder %v298, 0.0
  %vm343 = vcmp.ge.f32.partialorder %v301, 0.0
  %vm344 = vcmp.ge.f32.partialorder %v306, 0.0
  %vm345 = vcmp.ge.f32.partialorder %v309, 0.0
  %vm346 = vcmp.ge.f32.partialorder %v314, 0.0
  %vm347 = vcmp.ge.f32.partialorder %v317, 0.0
  %vm348 = vcmp.ge.f32.partialorder %v322, 0.0
  %vm349 = vcmp.ge.f32.partialorder %v325, 0.0
  %vm350 = vcmp.ge.f32.partialorder %v330, 0.0
  %vm351 = vcmp.ge.f32.partialorder %v333, 0.0
  %v352 = vmul.f32 %v274, 0.01
  %v353 = vmul.f32 %v277, 0.01
  %v354 = vmul.f32 %v282, 0.01
  %v355 = vmul.f32 %v285, 0.01
  %v356 = vmul.f32 %v290, 0.01
  %v357 = vmul.f32 %v293, 0.01
  %v358 = vmul.f32 %v298, 0.01
  %v359 = vmul.f32 %v301, 0.01
  %v360 = vmul.f32 %v306, 0.01
  %v361 = vmul.f32 %v309, 0.01
  %v362 = vmul.f32 %v314, 0.01
  %v363 = vmul.f32 %v317, 0.01
  %v364 = vmul.f32 %v322, 0.01
  %v365 = vmul.f32 %v325, 0.01
  %v366 = vmul.f32 %v330, 0.01
  %v367 = vmul.f32 %v333, 0.01
  %v368 = vsel %vm336, %v274, %v352
  %v369 = vsel %vm337, %v277, %v353
  %v370 = vsel %vm338, %v282, %v354
  %v371 = vsel %vm339, %v285, %v355
  %v372 = vsel %vm340, %v290, %v356
  %v373 = vsel %vm341, %v293, %v357
  %v374 = vsel %vm342, %v298, %v358
  %v375 = vsel %vm343, %v301, %v359
  %v376 = vsel %vm344, %v306, %v360
  %v377 = vsel %vm345, %v309, %v361
  %v378 = vsel %vm346, %v314, %v362
  %v379 = vsel %vm347, %v317, %v363
  %v380 = vsel %vm348, %v322, %v364
  %v381 = vsel %vm349, %v325, %v365
  %v382 = vsel %vm350, %v330, %v366
  %v383 = vsel %vm351, %v333, %v367
  %384 = vst [vmem:[%s3] sm:$0xff] %v368
  %385 = vst [vmem:[%s3 + $0x8] sm:$0xff] %v369
  %386 = vst [vmem:[%s3 + $0x10] sm:$0xff] %v370
  %387 = vst [vmem:[%s3 + $0x18] sm:$0xff] %v371
  %388 = vst [vmem:[%s3 + $0x20] sm:$0xff] %v372
  %389 = vst [vmem:[%s3 + $0x28] sm:$0xff] %v373
  %390 = vst [vmem:[%s3 + $0x30] sm:$0xff] %v374
  %391 = vst [vmem:[%s3 + $0x38] sm:$0xff] %v375
  %392 = vst [vmem:[%s3 + $0x40] sm:$0xff] %v376
  %393 = vst [vmem:[%s3 + $0x48] sm:$0xff] %v377
  %394 = vst [vmem:[%s3 + $0x50] sm:$0xff] %v378
  %395 = vst [vmem:[%s3 + $0x58] sm:$0xff] %v379
  %396 = vst [vmem:[%s3 + $0x60] sm:$0xff] %v380
  %397 = vst [vmem:[%s3 + $0x68] sm:$0xff] %v381
  %398 = vst [vmem:[%s3 + $0x70] sm:$0xff] %v382
  %399 = vst [vmem:[%s3 + $0x78] sm:$0xff] %v383
  // Predicated region
  $region14: #{forward.14} parent=0 // pred_check
    _
  $region15: #{forward.14} parent=0 // pred_check_branch
    %401 = sbr.rel (0) target = $region17
  $region16: #{forward.14} parent=0 // pred_region
    _
  $region17: #{forward.14} parent=0 // pred_fallthru
    _
  // Predicated region
  $region18: #{forward.14} parent=0 // pred_check
    _
  $region19: #{forward.14} parent=0 // pred_check_branch
    %403 = sbr.rel (0) target = $region21
  $region20: #{forward.14} parent=0 // pred_region
    _
  $region21: #{forward.14} parent=0 // pred_fallthru
    _

// kernel: forward.16
$region0: #{forward.16}
  #allocation0 [shape = 'u32[]', space=smem, size = 0x4, offset = 0x4, fixed_abs, tag = 'smem constant byte address 0x4 - core index']
  #allocation1 [shape = 'u32[144,128]{1,0:T(1,128)}', space=vmem, size = 0x12000, scoped, tag = 'internal scratch']
  %s0 = inlined_call_operand.vmem [shape: bf16[128,128], index: 0, kind: input, shape index: {}]
  %s1 = inlined_call_operand.vmem [shape: bf16[128,1024], index: 1, kind: input, shape index: {}]
  %s2 = inlined_call_operand.vmem [shape: f32[128,1], index: 2, kind: input, shape index: {}]
  %s3 = inlined_call_operand.vmem [shape: f32[128,1024], index: 3, kind: output, shape index: {}]
  %s4 = sld [smem:[#allocation0]]
  $region87: #{forward.16} parent=0
    _
  %s6 = ssub.s32 1, %s4
  %s7 = scalar_select 0, %s6, %s4
  $region1: #{forward.16} parent=0
    #allocation2 [shape = 'u8[262144]{0}', space=vmem, size = 0x40000, scoped, tag = 'input window, operand 1']
    #allocation3 [shape = 'u8[524288]{0}', space=vmem, size = 0x80000, scoped, tag = 'output window, operand 0']
    loop: start=0, step=1, limit=4
    $region2: #{forward.16} parent=1 // loop_pre_header
      _
    $region3: #{forward.16} parent=1 // loop_header
      %s9 = sphi 0, %s13
      %p10 = scmp.ge.s32.totalorder %s9, 4
      %s17 = sphi 0, %s17
      %s19 = sphi 0, %s17
      %s20 = sphi 0, %s19
      %s34 = sphi 0, %s20
      %s40 = sphi 0, %s42
      %s43 = sphi 0, %s40
      %s44 = sphi 0, %s43
      %s60 = sphi 0, %s44
      %s64 = sphi 0, %s64
      %s66 = sphi 0, %s64
      %s67 = sphi 0, %s66
      %s81 = sphi 0, %s67
      %s87 = sphi 0, %s89
      %s90 = sphi 0, %s87
      %s91 = sphi 0, %s90
      %s107 = sphi 0, %s91
    $region4: #{forward.16} parent=1 // loop_header_branch
      %12 = sbr.rel (%p10) target = $region8
    $region5: #{forward.16} parent=1 // loop_body
      %s14 = ssub.s32 %s9, 1
      %s15 = ssub.s32 %s9, 2
      %s16 = sadd.s32 %s9, 1
      %s18 = sadd.s32 %s17, 1
      %p21 = scmp.eq.s32.totalorder %s9, 1
      %p22 = scmp.ne.s32.totalorder %s17, %s19
      %p23 = scmp.eq.s32.totalorder %s9, 0
      %p24 = por %p22, %p23
      %p25 = scmp.ne.s32.totalorder %s17, %s19
      %p26 = scmp.eq.s32.totalorder %s14, 1
      %p27 = por %p25, %p26
      %p28 = scmp.ne.s32.totalorder %s19, %s20
      %p29 = scmp.eq.s32.totalorder %s14, 0
      %p30 = por %p28, %p29
      %p31 = scmp.ne.s32.totalorder %s19, %s20
      %p32 = scmp.eq.s32.totalorder %s15, 1
      %p33 = por %p31, %p32
      %p35 = scmp.ne.s32.totalorder %s20, %s34
      %p36 = scmp.eq.s32.totalorder %s15, 0
      %p37 = por %p35, %p36
      %s38 = ssub.s32 %s9, %s16
      %p39 = scmp.eq.s32.totalorder %s38, 0
      %s41 = sadd.s32 %s40, 1
      %s42 = scalar_select %p39, %s40, %s41
      %p45 = pneg %p39
      %p46 = scmp.eq.s32.totalorder %s9, 1
      %p47 = por %p45, %p46
      %p48 = scmp.ne.s32.totalorder %s40, %s43
      %p49 = scmp.eq.s32.totalorder %s9, 0
      %p50 = por %p48, %p49
      %p51 = scmp.ne.s32.totalorder %s40, %s43
      %p52 = scmp.eq.s32.totalorder %s14, 1
      %p53 = por %p51, %p52
      %p54 = scmp.ne.s32.totalorder %s43, %s44
      %p55 = scmp.eq.s32.totalorder %s14, 0
      %p56 = por %p54, %p55
      %p57 = scmp.ne.s32.totalorder %s43, %s44
      %p58 = scmp.eq.s32.totalorder %s15, 1
      %p59 = por %p57, %p58
      %p61 = scmp.ne.s32.totalorder %s44, %s60
      %p62 = scmp.eq.s32.totalorder %s15, 0
      %p63 = por %p61, %p62
      %s65 = sadd.s32 %s64, 1
      %p68 = scmp.eq.s32.totalorder %s9, 1
      %p69 = scmp.ne.s32.totalorder %s64, %s66
      %p70 = scmp.eq.s32.totalorder %s9, 0
      %p71 = por %p69, %p70
      %p72 = scmp.ne.s32.totalorder %s64, %s66
      %p73 = scmp.eq.s32.totalorder %s14, 1
      %p74 = por %p72, %p73
      %p75 = scmp.ne.s32.totalorder %s66, %s67
      %p76 = scmp.eq.s32.totalorder %s14, 0
      %p77 = por %p75, %p76
      %p78 = scmp.ne.s32.totalorder %s66, %s67
      %p79 = scmp.eq.s32.totalorder %s15, 1
      %p80 = por %p78, %p79
      %p82 = scmp.ne.s32.totalorder %s67, %s81
      %p83 = scmp.eq.s32.totalorder %s15, 0
      %p84 = por %p82, %p83
      %s85 = ssub.s32 %s9, %s16
      %p86 = scmp.eq.s32.totalorder %s85, 0
      %s88 = sadd.s32 %s87, 1
      %s89 = scalar_select %p86, %s87, %s88
      %p92 = pneg %p86
      %p93 = scmp.eq.s32.totalorder %s9, 1
      %p94 = por %p92, %p93
      %p95 = scmp.ne.s32.totalorder %s87, %s90
      %p96 = scmp.eq.s32.totalorder %s9, 0
      %p97 = por %p95, %p96
      %p98 = scmp.ne.s32.totalorder %s87, %s90
      %p99 = scmp.eq.s32.totalorder %s14, 1
      %p100 = por %p98, %p99
      %p101 = scmp.ne.s32.totalorder %s90, %s91
      %p102 = scmp.eq.s32.totalorder %s14, 0
      %p103 = por %p101, %p102
      %p104 = scmp.ne.s32.totalorder %s90, %s91
      %p105 = scmp.eq.s32.totalorder %s15, 1
      %p106 = por %p104, %p105
      %p108 = scmp.ne.s32.totalorder %s91, %s107
      %p109 = scmp.eq.s32.totalorder %s15, 0
      %p110 = por %p108, %p109
      %p111 = scmp.le.s32.totalorder 1, %s9
      %p112 = scmp.lt.s32.totalorder %s9, 3
      %p113 = pnand %p111, %p112
      %p114 = pneg %p113
      // Predicated region
      $region9: #{forward.16} parent=5 // pred_check
        _
      $region10: #{forward.16} parent=5 // pred_check_branch
        %116 = sbr.rel (%p113) target = $region12
      $region11: #{forward.16} parent=5 // pred_region
        %s117 = ssub.s32 %s9, 1
        // Predicated region
        $region13: #{forward.16} parent=11 // pred_check
          %p118 = pneg %p30
        $region14: #{forward.16} parent=11 // pred_check_branch
          %120 = sbr.rel (%p118) target = $region16
        $region15: #{forward.16} parent=11 // pred_region
          _
        $region16: #{forward.16} parent=11 // pred_fallthru
          _
        // Predicated region
        $region17: #{forward.16} parent=11 // pred_check
          %p121 = pneg %p77
        $region18: #{forward.16} parent=11 // pred_check_branch
          %123 = sbr.rel (%p121) target = $region20
        $region19: #{forward.16} parent=11 // pred_region
          _
        $region20: #{forward.16} parent=11 // pred_fallthru
          _
      $region12: #{forward.16} parent=5 // pred_fallthru
        _
      %p124 = scmp.lt.s32.totalorder %s9, 2
      // Predicated region
      $region21: #{forward.16} parent=5 // pred_check
        %p125 = pneg %p124
      $region22: #{forward.16} parent=5 // pred_check_branch
        %127 = sbr.rel (%p125) target = $region24
      $region23: #{forward.16} parent=5 // pred_region
        // Predicated region
        $region25: #{forward.16} parent=23 // pred_check
          %p128 = pneg %p50
        $region26: #{forward.16} parent=23 // pred_check_branch
          %130 = sbr.rel (%p128) target = $region28
        $region27: #{forward.16} parent=23 // pred_region
          %s131 = sand.u32 %s40, 1
          %s132 = sand.u32 %s40, 1
          %s133 = smul.addr %s132, 256
          %s134 = scalar_lea.vmem [#allocation2], %s133
          %s135 = smul.u32 4, %s9
          %s136 = smul.addr %s135, 4
          %s137 = scalar_lea.vmem %s1, %s136
          // Predicated region
          $region29: #{forward.16} parent=27 // pred_check
            _
          $region30: #{forward.16} parent=27 // pred_check_branch
            %139 = sbr.rel (0) target = $region32
          $region31: #{forward.16} parent=27 // pred_region
            // Predicated region
            $region33: #{forward.16} parent=31 // pred_check
              _
            $region34: #{forward.16} parent=31 // pred_check_branch
              %141 = sbr.rel (0) target = $region36
            $region35: #{forward.16} parent=31 // pred_region
              loop: start=0, step=1, limit=1
              $region37: #{forward.16} parent=35 // loop_pre_header
                _
              $region38: #{forward.16} parent=35 // loop_header
                %s143 = sphi 0, %s147
                %p144 = scmp.ge.s32.totalorder %s143, 1
                %s148 = sphi %s137, %s137
                %s149 = sphi %s134, %s134
              $region39: #{forward.16} parent=35 // loop_header_branch
                %146 = sbr.rel (%p144) target = $region43
              $region40: #{forward.16} parent=35 // loop_body
                %v150 = vld [vmem:[%s148] sm:$0xff]
                %151 = vst [vmem:[%s149] sm:$0xff] %v150
                %v152 = vld [vmem:[%s148 + $0x8] sm:$0xff]
                %153 = vst [vmem:[%s149 + $0x8] sm:$0xff] %v152
                %v154 = vld [vmem:[%s148 + $0x20] sm:$0xff]
                %155 = vst [vmem:[%s149 + $0x10] sm:$0xff] %v154
                %v156 = vld [vmem:[%s148 + $0x28] sm:$0xff]
                %157 = vst [vmem:[%s149 + $0x18] sm:$0xff] %v156
                %v158 = vld [vmem:[%s148 + $0x40] sm:$0xff]
                %159 = vst [vmem:[%s149 + $0x20] sm:$0xff] %v158
                %v160 = vld [vmem:[%s148 + $0x48] sm:$0xff]
                %161 = vst [vmem:[%s149 + $0x28] sm:$0xff] %v160
                %v162 = vld [vmem:[%s148 + $0x60] sm:$0xff]
                %163 = vst [vmem:[%s149 + $0x30] sm:$0xff] %v162
                %v164 = vld [vmem:[%s148 + $0x68] sm:$0xff]
                %165 = vst [vmem:[%s149 + $0x38] sm:$0xff] %v164
                %v166 = vld [vmem:[%s148 + $0x80] sm:$0xff]
                %167 = vst [vmem:[%s149 + $0x40] sm:$0xff] %v166
                %v168 = vld [vmem:[%s148 + $0x88] sm:$0xff]
                %169 = vst [vmem:[%s149 + $0x48] sm:$0xff] %v168
                %v170 = vld [vmem:[%s148 + $0xa0] sm:$0xff]
                %171 = vst [vmem:[%s149 + $0x50] sm:$0xff] %v170
                %v172 = vld [vmem:[%s148 + $0xa8] sm:$0xff]
                %173 = vst [vmem:[%s149 + $0x58] sm:$0xff] %v172
                %v174 = vld [vmem:[%s148 + $0xc0] sm:$0xff]
                %175 = vst [vmem:[%s149 + $0x60] sm:$0xff] %v174
                %v176 = vld [vmem:[%s148 + $0xc8] sm:$0xff]
                %177 = vst [vmem:[%s149 + $0x68] sm:$0xff] %v176
                %v178 = vld [vmem:[%s148 + $0xe0] sm:$0xff]
                %179 = vst [vmem:[%s149 + $0x70] sm:$0xff] %v178
                %v180 = vld [vmem:[%s148 + $0xe8] sm:$0xff]
                %181 = vst [vmem:[%s149 + $0x78] sm:$0xff] %v180
                %v182 = vld [vmem:[%s148 + $0x100] sm:$0xff]
                %183 = vst [vmem:[%s149 + $0x80] sm:$0xff] %v182
                %v184 = vld [vmem:[%s148 + $0x108] sm:$0xff]
                %185 = vst [vmem:[%s149 + $0x88] sm:$0xff] %v184
                %v186 = vld [vmem:[%s148 + $0x120] sm:$0xff]
                %187 = vst [vmem:[%s149 + $0x90] sm:$0xff] %v186
                %v188 = vld [vmem:[%s148 + $0x128] sm:$0xff]
                %189 = vst [vmem:[%s149 + $0x98] sm:$0xff] %v188
                %v190 = vld [vmem:[%s148 + $0x140] sm:$0xff]
                %191 = vst [vmem:[%s149 + $0xa0] sm:$0xff] %v190
                %v192 = vld [vmem:[%s148 + $0x148] sm:$0xff]
                %193 = vst [vmem:[%s149 + $0xa8] sm:$0xff] %v192
                %v194 = vld [vmem:[%s148 + $0x160] sm:$0xff]
                %195 = vst [vmem:[%s149 + $0xb0] sm:$0xff] %v194
                %v196 = vld [vmem:[%s148 + $0x168] sm:$0xff]
                %197 = vst [vmem:[%s149 + $0xb8] sm:$0xff] %v196
                %v198 = vld [vmem:[%s148 + $0x180] sm:$0xff]
                %199 = vst [vmem:[%s149 + $0xc0] sm:$0xff] %v198
                %v200 = vld [vmem:[%s148 + $0x188] sm:$0xff]
                %201 = vst [vmem:[%s149 + $0xc8] sm:$0xff] %v200
                %v202 = vld [vmem:[%s148 + $0x1a0] sm:$0xff]
                %203 = vst [vmem:[%s149 + $0xd0] sm:$0xff] %v202
                %v204 = vld [vmem:[%s148 + $0x1a8] sm:$0xff]
                %205 = vst [vmem:[%s149 + $0xd8] sm:$0xff] %v204
                %v206 = vld [vmem:[%s148 + $0x1c0] sm:$0xff]
                %207 = vst [vmem:[%s149 + $0xe0] sm:$0xff] %v206
                %v208 = vld [vmem:[%s148 + $0x1c8] sm:$0xff]
                %209 = vst [vmem:[%s149 + $0xe8] sm:$0xff] %v208
                %v210 = vld [vmem:[%s148 + $0x1e0] sm:$0xff]
                %211 = vst [vmem:[%s149 + $0xf0] sm:$0xff] %v210
                %v212 = vld [vmem:[%s148 + $0x1e8] sm:$0xff]
                %213 = vst [vmem:[%s149 + $0xf8] sm:$0xff] %v212
              $region41: #{forward.16} parent=35 // loop_footer
                %s147 = sadd.s32 1, %s143
              $region42: #{forward.16} parent=35 // loop_footer_branch
                %142 = sbr.rel target = $region38
              $region43: #{forward.16} parent=35 // loop_exit
                _
            $region36: #{forward.16} parent=31 // pred_fallthru
              _
            // Predicated region
            $region44: #{forward.16} parent=31 // pred_check
              _
            $region45: #{forward.16} parent=31 // pred_check_branch
              %215 = sbr.rel target = $region47
            $region46: #{forward.16} parent=31 // pred_region
              _
            $region47: #{forward.16} parent=31 // pred_fallthru
              _
          $region32: #{forward.16} parent=27 // pred_fallthru
            _
          %216 = vnop
        $region28: #{forward.16} parent=23 // pred_fallthru
          _
      $region24: #{forward.16} parent=5 // pred_fallthru
        _
      %p217 = scmp.le.s32.totalorder 1, %s9
      %p218 = scmp.lt.s32.totalorder %s9, 3
      %p219 = pnand %p217, %p218
      %p220 = pneg %p219
      // Predicated region
      $region48: #{forward.16} parent=5 // pred_check
        _
      $region49: #{forward.16} parent=5 // pred_check_branch
        %222 = sbr.rel (%p219) target = $region51
      $region50: #{forward.16} parent=5 // pred_region
        %s223 = ssub.s32 %s9, 1
        %s224 = sand.u32 %s43, 1
        %s225 = sand.u32 %s43, 1
        %s226 = smul.addr %s225, 256
        %s227 = scalar_lea.vmem [#allocation2], %s226
        // Predicated region
        $region52: #{forward.16} parent=50 // pred_check
          %p228 = pneg %p56
        $region53: #{forward.16} parent=50 // pred_check_branch
          %230 = sbr.rel (%p228) target = $region55
        $region54: #{forward.16} parent=50 // pred_region
          _
        $region55: #{forward.16} parent=50 // pred_fallthru
          _
        %p231 = pneg %p30
        %p232 = pneg %p27
        %s233 = sand.u32 %s43, 1
        %s234 = sand.u32 %s43, 1
        %s235 = smul.addr %s234, 256
        %s236 = scalar_lea.vmem [#allocation2], %s235
        %p237 = pneg %p56
        %p238 = pneg %p53
        %p239 = pneg %p77
        %p240 = pneg %p74
        %p241 = pneg %p103
        %p242 = pneg %p100
        %s243 = sand.u32 %s90, 1
        %s244 = sand.u32 %s90, 1
        %s245 = smul.addr %s244, 512
        %s246 = scalar_lea.vmem [#allocation3], %s245
        %s247 = smul.u32 4, %s14
        %s248 = smul.u32 4, %s14
        %v250 = vld [vmem:[%s0] sm:$0xf]
        %v251 = vld [vmem:[%s0 + $0x4] sm:$0xf]
        %v252 = vld [vmem:[%s0 + $0x8] sm:$0xf]
        %v253 = vld [vmem:[%s0 + $0xc] sm:$0xf]
        %v254 = vld [vmem:[%s0 + $0x10] sm:$0xf]
        %v255 = vld [vmem:[%s0 + $0x14] sm:$0xf]
        %v256 = vld [vmem:[%s0 + $0x18] sm:$0xf]
        %v257 = vld [vmem:[%s0 + $0x1c] sm:$0xf]
        %v258 = vld [vmem:[%s0 + $0x20] sm:$0xf]
        %v259 = vld [vmem:[%s0 + $0x24] sm:$0xf]
        %v260 = vld [vmem:[%s0 + $0x28] sm:$0xf]
        %v261 = vld [vmem:[%s0 + $0x2c] sm:$0xf]
        %v262 = vld [vmem:[%s0 + $0x30] sm:$0xf]
        %v263 = vld [vmem:[%s0 + $0x34] sm:$0xf]
        %v264 = vld [vmem:[%s0 + $0x38] sm:$0xf]
        %v265 = vld [vmem:[%s0 + $0x3c] sm:$0xf]
        %v266 = vld [vmem:[%s227] sm:$0xff]
        %v267 = vld [vmem:[%s227 + $0x8] sm:$0xff]
        %v268 = vld [vmem:[%s227 + $0x10] sm:$0xff]
        %v269 = vld [vmem:[%s227 + $0x18] sm:$0xff]
        %v270 = vld [vmem:[%s227 + $0x20] sm:$0xff]
        %v271 = vld [vmem:[%s227 + $0x28] sm:$0xff]
        %v272 = vld [vmem:[%s227 + $0x30] sm:$0xff]
        %v273 = vld [vmem:[%s227 + $0x38] sm:$0xff]
        %v274 = vld [vmem:[%s227 + $0x40] sm:$0xff]
        %v275 = vld [vmem:[%s227 + $0x48] sm:$0xff]
        %v276 = vld [vmem:[%s227 + $0x50] sm:$0xff]
        %v277 = vld [vmem:[%s227 + $0x58] sm:$0xff]
        %v278 = vld [vmem:[%s227 + $0x60] sm:$0xff]
        %v279 = vld [vmem:[%s227 + $0x68] sm:$0xff]
        %v280 = vld [vmem:[%s227 + $0x70] sm:$0xff]
        %v281 = vld [vmem:[%s227 + $0x78] sm:$0xff]
        %v282 = vld [vmem:[%s227 + $0x80] sm:$0xff]
        %v283 = vld [vmem:[%s227 + $0x88] sm:$0xff]
        %v284 = vld [vmem:[%s227 + $0x90] sm:$0xff]
        %v285 = vld [vmem:[%s227 + $0x98] sm:$0xff]
        %v286 = vld [vmem:[%s227 + $0xa0] sm:$0xff]
        %v287 = vld [vmem:[%s227 + $0xa8] sm:$0xff]
        %v288 = vld [vmem:[%s227 + $0xb0] sm:$0xff]
        %v289 = vld [vmem:[%s227 + $0xb8] sm:$0xff]
        %v290 = vld [vmem:[%s227 + $0xc0] sm:$0xff]
        %v291 = vld [vmem:[%s227 + $0xc8] sm:$0xff]
        %v292 = vld [vmem:[%s227 + $0xd0] sm:$0xff]
        %v293 = vld [vmem:[%s227 + $0xd8] sm:$0xff]
        %v294 = vld [vmem:[%s227 + $0xe0] sm:$0xff]
        %v295 = vld [vmem:[%s227 + $0xe8] sm:$0xff]
        %v296 = vld [vmem:[%s227 + $0xf0] sm:$0xff]
        %v297 = vld [vmem:[%s227 + $0xf8] sm:$0xff]
        %v298 = vld [vmem:[%s2] sm:$0xff]
        %v299 = vld [vmem:[%s2 + $0x8] sm:$0xff]
        %v300 = vld [vmem:[%s2 + $0x10] sm:$0xff]
        %v301 = vld [vmem:[%s2 + $0x18] sm:$0xff]
        %v302 = vld [vmem:[%s2 + $0x20] sm:$0xff]
        %v303 = vld [vmem:[%s2 + $0x28] sm:$0xff]
        %v304 = vld [vmem:[%s2 + $0x30] sm:$0xff]
        %v305 = vld [vmem:[%s2 + $0x38] sm:$0xff]
        %v306 = vld [vmem:[%s2 + $0x40] sm:$0xff]
        %v307 = vld [vmem:[%s2 + $0x48] sm:$0xff]
        %v308 = vld [vmem:[%s2 + $0x50] sm:$0xff]
        %v309 = vld [vmem:[%s2 + $0x58] sm:$0xff]
        %v310 = vld [vmem:[%s2 + $0x60] sm:$0xff]
        %v311 = vld [vmem:[%s2 + $0x68] sm:$0xff]
        %v312 = vld [vmem:[%s2 + $0x70] sm:$0xff]
        %v313 = vld [vmem:[%s2 + $0x78] sm:$0xff]
        %315 = vset.pattern.permute.xlu0 0
        %316 = vperm.xlu0 %315, %v298
        %v317 = vpop.permute.xlu0 %316
        %320 = vset.pattern.permute.xlu0 0
        %321 = vperm.xlu0 %320, %v299
        %v322 = vpop.permute.xlu0 %321
        %325 = vset.pattern.permute.xlu0 0
        %326 = vperm.xlu0 %325, %v300
        %v327 = vpop.permute.xlu0 %326
        %330 = vset.pattern.permute.xlu0 0
        %331 = vperm.xlu0 %330, %v301
        %v332 = vpop.permute.xlu0 %331
        %335 = vset.pattern.permute.xlu0 0
        %336 = vperm.xlu0 %335, %v302
        %v337 = vpop.permute.xlu0 %336
        %340 = vset.pattern.permute.xlu0 0
        %341 = vperm.xlu0 %340, %v303
        %v342 = vpop.permute.xlu0 %341
        %345 = vset.pattern.permute.xlu0 0
        %346 = vperm.xlu0 %345, %v304
        %v347 = vpop.permute.xlu0 %346
        %350 = vset.pattern.permute.xlu0 0
        %351 = vperm.xlu0 %350, %v305
        %v352 = vpop.permute.xlu0 %351
        %355 = vset.pattern.permute.xlu0 0
        %356 = vperm.xlu0 %355, %v306
        %v357 = vpop.permute.xlu0 %356
        %360 = vset.pattern.permute.xlu0 0
        %361 = vperm.xlu0 %360, %v307
        %v362 = vpop.permute.xlu0 %361
        %365 = vset.pattern.permute.xlu0 0
        %366 = vperm.xlu0 %365, %v308
        %v367 = vpop.permute.xlu0 %366
        %370 = vset.pattern.permute.xlu0 0
        %371 = vperm.xlu0 %370, %v309
        %v372 = vpop.permute.xlu0 %371
        %375 = vset.pattern.permute.xlu0 0
        %376 = vperm.xlu0 %375, %v310
        %v377 = vpop.permute.xlu0 %376
        %380 = vset.pattern.permute.xlu0 0
        %381 = vperm.xlu0 %380, %v311
        %v382 = vpop.permute.xlu0 %381
        %385 = vset.pattern.permute.xlu0 0
        %386 = vperm.xlu0 %385, %v312
        %v387 = vpop.permute.xlu0 %386
        %390 = vset.pattern.permute.xlu0 0
        %391 = vperm.xlu0 %390, %v313
        %v392 = vpop.permute.xlu0 %391
        %v410 = vunpack.c.l.b16 %v250
        %v411 = vunpack.c.l.b16 %v251
        %v412 = vunpack.c.l.b16 %v252
        %v413 = vunpack.c.l.b16 %v253
        %v414 = vunpack.c.l.b16 %v254
        %v415 = vunpack.c.l.b16 %v255
        %v416 = vunpack.c.l.b16 %v256
        %v417 = vunpack.c.l.b16 %v257
        %v418 = vunpack.c.l.b16 %v258
        %v419 = vunpack.c.l.b16 %v259
        %v420 = vunpack.c.l.b16 %v260
        %v421 = vunpack.c.l.b16 %v261
        %v422 = vunpack.c.l.b16 %v262
        %v423 = vunpack.c.l.b16 %v263
        %v424 = vunpack.c.l.b16 %v264
        %v425 = vunpack.c.l.b16 %v265
        %v426 = vpack.c.b16 %v411, %v410
        %v427 = vpack.c.b16 %v413, %v412
        %v428 = vpack.c.b16 %v415, %v414
        %v429 = vpack.c.b16 %v417, %v416
        %v430 = vpack.c.b16 %v419, %v418
        %v431 = vpack.c.b16 %v421, %v420
        %v432 = vpack.c.b16 %v423, %v422
        %v433 = vpack.c.b16 %v425, %v424
        %v474 = vunpack.c.l.b16 %v266
        %v475 = vunpack.c.h.b16 %v266
        %v476 = vunpack.c.l.b16 %v267
        %v477 = vunpack.c.h.b16 %v267
        %v478 = vunpack.c.l.b16 %v268
        %v479 = vunpack.c.h.b16 %v268
        %v480 = vunpack.c.l.b16 %v269
        %v481 = vunpack.c.h.b16 %v269
        %v482 = vunpack.c.l.b16 %v270
        %v483 = vunpack.c.h.b16 %v270
        %v484 = vunpack.c.l.b16 %v271
        %v485 = vunpack.c.h.b16 %v271
        %v486 = vunpack.c.l.b16 %v272
        %v487 = vunpack.c.h.b16 %v272
        %v488 = vunpack.c.l.b16 %v273
        %v489 = vunpack.c.h.b16 %v273
        %v490 = vunpack.c.l.b16 %v274
        %v491 = vunpack.c.h.b16 %v274
        %v492 = vunpack.c.l.b16 %v275
        %v493 = vunpack.c.h.b16 %v275
        %v494 = vunpack.c.l.b16 %v276
        %v495 = vunpack.c.h.b16 %v276
        %v496 = vunpack.c.l.b16 %v277
        %v497 = vunpack.c.h.b16 %v277
        %v498 = vunpack.c.l.b16 %v278
        %v499 = vunpack.c.h.b16 %v278
        %v500 = vunpack.c.l.b16 %v279
        %v501 = vunpack.c.h.b16 %v279
        %v502 = vunpack.c.l.b16 %v280
        %v503 = vunpack.c.h.b16 %v280
        %v504 = vunpack.c.l.b16 %v281
        %v505 = vunpack.c.h.b16 %v281
        %v506 = vunpack.c.l.b16 %v282
        %v507 = vunpack.c.h.b16 %v282
        %v508 = vunpack.c.l.b16 %v283
        %v509 = vunpack.c.h.b16 %v283
        %v510 = vunpack.c.l.b16 %v284
        %v511 = vunpack.c.h.b16 %v284
        %v512 = vunpack.c.l.b16 %v285
        %v513 = vunpack.c.h.b16 %v285
        %v514 = vunpack.c.l.b16 %v286
        %v515 = vunpack.c.h.b16 %v286
        %v516 = vunpack.c.l.b16 %v287
        %v517 = vunpack.c.h.b16 %v287
        %v518 = vunpack.c.l.b16 %v288
        %v519 = vunpack.c.h.b16 %v288
        %v520 = vunpack.c.l.b16 %v289
        %v521 = vunpack.c.h.b16 %v289
        %v522 = vunpack.c.l.b16 %v290
        %v523 = vunpack.c.h.b16 %v290
        %v524 = vunpack.c.l.b16 %v291
        %v525 = vunpack.c.h.b16 %v291
        %v526 = vunpack.c.l.b16 %v292
        %v527 = vunpack.c.h.b16 %v292
        %v528 = vunpack.c.l.b16 %v293
        %v529 = vunpack.c.h.b16 %v293
        %v530 = vunpack.c.l.b16 %v294
        %v531 = vunpack.c.h.b16 %v294
        %v532 = vunpack.c.l.b16 %v295
        %v533 = vunpack.c.h.b16 %v295
        %v534 = vunpack.c.l.b16 %v296
        %v535 = vunpack.c.h.b16 %v296
        %v536 = vunpack.c.l.b16 %v297
        %v537 = vunpack.c.h.b16 %v297
        %v538 = vpack.c.b16 %v478, %v474
        %v539 = vpack.c.b16 %v479, %v475
        %v540 = vpack.c.b16 %v480, %v476
        %v541 = vpack.c.b16 %v481, %v477
        %v542 = vpack.c.b16 %v486, %v482
        %v543 = vpack.c.b16 %v487, %v483
        %v544 = vpack.c.b16 %v488, %v484
        %v545 = vpack.c.b16 %v489, %v485
        %v546 = vpack.c.b16 %v494, %v490
        %v547 = vpack.c.b16 %v495, %v491
        %v548 = vpack.c.b16 %v496, %v492
        %v549 = vpack.c.b16 %v497, %v493
        %v550 = vpack.c.b16 %v502, %v498
        %v551 = vpack.c.b16 %v503, %v499
        %v552 = vpack.c.b16 %v504, %v500
        %v553 = vpack.c.b16 %v505, %v501
        %v554 = vpack.c.b16 %v510, %v506
        %v555 = vpack.c.b16 %v511, %v507
        %v556 = vpack.c.b16 %v512, %v508
        %v557 = vpack.c.b16 %v513, %v509
        %v558 = vpack.c.b16 %v518, %v514
        %v559 = vpack.c.b16 %v519, %v515
        %v560 = vpack.c.b16 %v520, %v516
        %v561 = vpack.c.b16 %v521, %v517
        %v562 = vpack.c.b16 %v526, %v522
        %v563 = vpack.c.b16 %v527, %v523
        %v564 = vpack.c.b16 %v528, %v524
        %v565 = vpack.c.b16 %v529, %v525
        %v566 = vpack.c.b16 %v534, %v530
        %v567 = vpack.c.b16 %v535, %v531
        %v568 = vpack.c.b16 %v536, %v532
        %v569 = vpack.c.b16 %v537, %v533
        %602 = vmatprep.subr.bf16.mxu0 %v539
        %603 = vmatpush1.bf16.msra.mxu0 %v538
        %604 = vmatprep.subr.bf16.mxu0 %v543
        %605 = vmatpush1.bf16.msra.mxu0 %v542
        %606 = vmatprep.subr.bf16.mxu0 %v547
        %607 = vmatpush1.bf16.msra.mxu0 %v546
        %608 = vmatprep.subr.bf16.mxu0 %v551
        %609 = vmatpush1.bf16.msra.mxu0 %v550
        %610 = vmatprep.subr.bf16.mxu0 %v555
        %611 = vmatpush1.bf16.msra.mxu0 %v554
        %612 = vmatprep.subr.bf16.mxu0 %v559
        %613 = vmatpush1.bf16.msra.mxu0 %v558
        %614 = vmatprep.subr.bf16.mxu0 %v563
        %615 = vmatpush1.bf16.msra.mxu0 %v562
        %616 = vmatprep.subr.bf16.mxu0 %v567
        %617 = vmatpush1.bf16.msra.mxu0 %v566
        %618 = vmatprep.subr.bf16.mxu0 0
        %619 = vmatpush1.bf16.msra.mxu0 0
        %620 = vmatprep.subr.bf16.mxu0 0
        %621 = vmatpush1.bf16.msra.mxu0 0
        %622 = vmatprep.subr.bf16.mxu0 0
        %623 = vmatpush1.bf16.msra.mxu0 0
        %624 = vmatprep.subr.bf16.mxu0 0
        %625 = vmatpush1.bf16.msra.mxu0 0
        %626 = vmatprep.subr.bf16.mxu0 0
        %627 = vmatpush1.bf16.msra.mxu0 0
        %628 = vmatprep.subr.bf16.mxu0 0
        %629 = vmatpush1.bf16.msra.mxu0 0
        %630 = vmatprep.subr.bf16.mxu0 0
        %631 = vmatpush1.bf16.msra.mxu0 0
        %632 = vmatprep.subr.bf16.mxu0 0
        %633 = vmatpush1.bf16.msra.mxu0 0
        %634 = vmatprep.mubr.bf16.mxu0 0
        %635 = vmatmul.mubr.bf16.gmra.mrb[0].mxu0 %v426
        %v636 = vpop.f32.mrb[0].mxu0
        %v637 = vadd.f32 %v317, %v636
        %v638 = vpop.f32.mrb[0].mxu0
        %v639 = vadd.f32 %v317, %v638
        %v640 = vpop.f32.mrb[0].mxu0
        %v641 = vadd.f32 %v322, %v640
        %v642 = vpop.f32.mrb[0].mxu0
        %v643 = vadd.f32 %v322, %v642
        %644 = vmatprep.mubr.bf16.mxu0 0
        %645 = vmatmul.mubr.bf16.gmra.mrb[0].mxu0 %v427
        %v646 = vpop.f32.mrb[0].mxu0
        %v647 = vadd.f32 %v327, %v646
        %v648 = vpop.f32.mrb[0].mxu0
        %v649 = vadd.f32 %v327, %v648
        %v650 = vpop.f32.mrb[0].mxu0
        %v651 = vadd.f32 %v332, %v650
        %v652 = vpop.f32.mrb[0].mxu0
        %v653 = vadd.f32 %v332, %v652
        %654 = vmatprep.mubr.bf16.mxu0 0
        %655 = vmatmul.mubr.bf16.gmra.mrb[0].mxu0 %v428
        %v656 = vpop.f32.mrb[0].mxu0
        %v657 = vadd.f32 %v337, %v656
        %v658 = vpop.f32.mrb[0].mxu0
        %v659 = vadd.f32 %v337, %v658
        %v660 = vpop.f32.mrb[0].mxu0
        %v661 = vadd.f32 %v342, %v660
        %v662 = vpop.f32.mrb[0].mxu0
        %v663 = vadd.f32 %v342, %v662
        %664 = vmatprep.mubr.bf16.mxu0 0
        %665 = vmatmul.mubr.bf16.gmra.mrb[0].mxu0 %v429
        %v666 = vpop.f32.mrb[0].mxu0
        %v667 = vadd.f32 %v347, %v666
        %v668 = vpop.f32.mrb[0].mxu0
        %v669 = vadd.f32 %v347, %v668
        %v670 = vpop.f32.mrb[0].mxu0
        %v671 = vadd.f32 %v352, %v670
        %v672 = vpop.f32.mrb[0].mxu0
        %v673 = vadd.f32 %v352, %v672
        %674 = vmatprep.mubr.bf16.mxu0 0
        %675 = vmatmul.mubr.bf16.gmra.mrb[0].mxu0 %v430
        %v676 = vpop.f32.mrb[0].mxu0
        %v677 = vadd.f32 %v357, %v676
        %v678 = vpop.f32.mrb[0].mxu0
        %v679 = vadd.f32 %v357, %v678
        %v680 = vpop.f32.mrb[0].mxu0
        %v681 = vadd.f32 %v362, %v680
        %v682 = vpop.f32.mrb[0].mxu0
        %v683 = vadd.f32 %v362, %v682
        %684 = vmatprep.mubr.bf16.mxu0 0
        %685 = vmatmul.mubr.bf16.gmra.mrb[0].mxu0 %v431
        %v686 = vpop.f32.mrb[0].mxu0
        %v687 = vadd.f32 %v367, %v686
        %v688 = vpop.f32.mrb[0].mxu0
        %v689 = vadd.f32 %v367, %v688
        %v690 = vpop.f32.mrb[0].mxu0
        %v691 = vadd.f32 %v372, %v690
        %v692 = vpop.f32.mrb[0].mxu0
        %v693 = vadd.f32 %v372, %v692
        %694 = vmatprep.mubr.bf16.mxu0 0
        %695 = vmatmul.mubr.bf16.gmra.mrb[0].mxu0 %v432
        %v696 = vpop.f32.mrb[0].mxu0
        %v697 = vadd.f32 %v377, %v696
        %v698 = vpop.f32.mrb[0].mxu0
        %v699 = vadd.f32 %v377, %v698
        %v700 = vpop.f32.mrb[0].mxu0
        %v701 = vadd.f32 %v382, %v700
        %v702 = vpop.f32.mrb[0].mxu0
        %v703 = vadd.f32 %v382, %v702
        %704 = vmatprep.mubr.bf16.mxu0 0
        %705 = vmatmul.mubr.bf16.gmra.mrb[0].mxu0 %v433
        %v706 = vpop.f32.mrb[0].mxu0
        %v707 = vadd.f32 %v387, %v706
        %v708 = vpop.f32.mrb[0].mxu0
        %v709 = vadd.f32 %v387, %v708
        %v710 = vpop.f32.mrb[0].mxu0
        %v711 = vadd.f32 %v392, %v710
        %v712 = vpop.f32.mrb[0].mxu0
        %v713 = vadd.f32 %v392, %v712
        %714 = vdwg.mxu0
        %715 = vmatprep.subr.bf16.mxu0 %v541
        %716 = vmatpush1.bf16.msra.mxu0 %v540
        %717 = vmatprep.subr.bf16.mxu0 %v545
        %718 = vmatpush1.bf16.msra.mxu0 %v544
        %719 = vmatprep.subr.bf16.mxu0 %v549
        %720 = vmatpush1.bf16.msra.mxu0 %v548
        %721 = vmatprep.subr.bf16.mxu0 %v553
        %722 = vmatpush1.bf16.msra.mxu0 %v552
        %723 = vmatprep.subr.bf16.mxu0 %v557
        %724 = vmatpush1.bf16.msra.mxu0 %v556
        %725 = vmatprep.subr.bf16.mxu0 %v561
        %726 = vmatpush1.bf16.msra.mxu0 %v560
        %727 = vmatprep.subr.bf16.mxu0 %v565
        %728 = vmatpush1.bf16.msra.mxu0 %v564
        %729 = vmatprep.subr.bf16.mxu0 %v569
        %730 = vmatpush1.bf16.msra.mxu0 %v568
        %731 = vmatprep.subr.bf16.mxu0 0
        %732 = vmatpush1.bf16.msra.mxu0 0
        %733 = vmatprep.subr.bf16.mxu0 0
        %734 = vmatpush1.bf16.msra.mxu0 0
        %735 = vmatprep.subr.bf16.mxu0 0
        %736 = vmatpush1.bf16.msra.mxu0 0
        %737 = vmatprep.subr.bf16.mxu0 0
        %738 = vmatpush1.bf16.msra.mxu0 0
        %739 = vmatprep.subr.bf16.mxu0 0
        %740 = vmatpush1.bf16.msra.mxu0 0
        %741 = vmatprep.subr.bf16.mxu0 0
        %742 = vmatpush1.bf16.msra.mxu0 0
        %743 = vmatprep.subr.bf16.mxu0 0
        %744 = vmatpush1.bf16.msra.mxu0 0
        %745 = vmatprep.subr.bf16.mxu0 0
        %746 = vmatpush1.bf16.msra.mxu0 0
        %747 = vmatprep.mubr.bf16.mxu0 0
        %748 = vmatmul.mubr.bf16.gmra.mrb[0].mxu0 %v426
        %v749 = vpop.f32.mrb[0].mxu0
        %v750 = vadd.f32 %v317, %v749
        %v751 = vpop.f32.mrb[0].mxu0
        %v752 = vadd.f32 %v317, %v751
        %v753 = vpop.f32.mrb[0].mxu0
        %v754 = vadd.f32 %v322, %v753
        %v755 = vpop.f32.mrb[0].mxu0
        %v756 = vadd.f32 %v322, %v755
        %757 = vmatprep.mubr.bf16.mxu0 0
        %758 = vmatmul.mubr.bf16.gmra.mrb[0].mxu0 %v427
        %v759 = vpop.f32.mrb[0].mxu0
        %v760 = vadd.f32 %v327, %v759
        %v761 = vpop.f32.mrb[0].mxu0
        %v762 = vadd.f32 %v327, %v761
        %v763 = vpop.f32.mrb[0].mxu0
        %v764 = vadd.f32 %v332, %v763
        %v765 = vpop.f32.mrb[0].mxu0
        %v766 = vadd.f32 %v332, %v765
        %767 = vmatprep.mubr.bf16.mxu0 0
        %768 = vmatmul.mubr.bf16.gmra.mrb[0].mxu0 %v428
        %v769 = vpop.f32.mrb[0].mxu0
        %v770 = vadd.f32 %v337, %v769
        %v771 = vpop.f32.mrb[0].mxu0
        %v772 = vadd.f32 %v337, %v771
        %v773 = vpop.f32.mrb[0].mxu0
        %v774 = vadd.f32 %v342, %v773
        %v775 = vpop.f32.mrb[0].mxu0
        %v776 = vadd.f32 %v342, %v775
        %777 = vmatprep.mubr.bf16.mxu0 0
        %778 = vmatmul.mubr.bf16.gmra.mrb[0].mxu0 %v429
        %v779 = vpop.f32.mrb[0].mxu0
        %v780 = vadd.f32 %v347, %v779
        %v781 = vpop.f32.mrb[0].mxu0
        %v782 = vadd.f32 %v347, %v781
        %v783 = vpop.f32.mrb[0].mxu0
        %v784 = vadd.f32 %v352, %v783
        %v785 = vpop.f32.mrb[0].mxu0
        %v786 = vadd.f32 %v352, %v785
        %787 = vmatprep.mubr.bf16.mxu0 0
        %788 = vmatmul.mubr.bf16.gmra.mrb[0].mxu0 %v430
        %v789 = vpop.f32.mrb[0].mxu0
        %v790 = vadd.f32 %v357, %v789
        %v791 = vpop.f32.mrb[0].mxu0
        %v792 = vadd.f32 %v357, %v791
        %v793 = vpop.f32.mrb[0].mxu0
        %v794 = vadd.f32 %v362, %v793
        %v795 = vpop.f32.mrb[0].mxu0
        %v796 = vadd.f32 %v362, %v795
        %797 = vmatprep.mubr.bf16.mxu0 0
        %798 = vmatmul.mubr.bf16.gmra.mrb[0].mxu0 %v431
        %v799 = vpop.f32.mrb[0].mxu0
        %v800 = vadd.f32 %v367, %v799
        %v801 = vpop.f32.mrb[0].mxu0
        %v802 = vadd.f32 %v367, %v801
        %v803 = vpop.f32.mrb[0].mxu0
        %v804 = vadd.f32 %v372, %v803
        %v805 = vpop.f32.mrb[0].mxu0
        %v806 = vadd.f32 %v372, %v805
        %807 = vmatprep.mubr.bf16.mxu0 0
        %808 = vmatmul.mubr.bf16.gmra.mrb[0].mxu0 %v432
        %v809 = vpop.f32.mrb[0].mxu0
        %v810 = vadd.f32 %v377, %v809
        %v811 = vpop.f32.mrb[0].mxu0
        %v812 = vadd.f32 %v377, %v811
        %v813 = vpop.f32.mrb[0].mxu0
        %v814 = vadd.f32 %v382, %v813
        %v815 = vpop.f32.mrb[0].mxu0
        %v816 = vadd.f32 %v382, %v815
        %817 = vmatprep.mubr.bf16.mxu0 0
        %818 = vmatmul.mubr.bf16.gmra.mrb[0].mxu0 %v433
        %v819 = vpop.f32.mrb[0].mxu0
        %v820 = vadd.f32 %v387, %v819
        %v821 = vpop.f32.mrb[0].mxu0
        %v822 = vadd.f32 %v387, %v821
        %v823 = vpop.f32.mrb[0].mxu0
        %v824 = vadd.f32 %v392, %v823
        %v825 = vpop.f32.mrb[0].mxu0
        %v826 = vadd.f32 %v392, %v825
        %827 = vdwg.mxu0
        %vm828 = vcmp.ge.f32.partialorder %v637, 0.0
        %vm829 = vcmp.ge.f32.partialorder %v639, 0.0
        %vm830 = vcmp.ge.f32.partialorder %v750, 0.0
        %vm831 = vcmp.ge.f32.partialorder %v752, 0.0
        %vm832 = vcmp.ge.f32.partialorder %v641, 0.0
        %vm833 = vcmp.ge.f32.partialorder %v643, 0.0
        %vm834 = vcmp.ge.f32.partialorder %v754, 0.0
        %vm835 = vcmp.ge.f32.partialorder %v756, 0.0
        %vm836 = vcmp.ge.f32.partialorder %v647, 0.0
        %vm837 = vcmp.ge.f32.partialorder %v649, 0.0
        %vm838 = vcmp.ge.f32.partialorder %v760, 0.0
        %vm839 = vcmp.ge.f32.partialorder %v762, 0.0
        %vm840 = vcmp.ge.f32.partialorder %v651, 0.0
        %vm841 = vcmp.ge.f32.partialorder %v653, 0.0
        %vm842 = vcmp.ge.f32.partialorder %v764, 0.0
        %vm843 = vcmp.ge.f32.partialorder %v766, 0.0
        %vm844 = vcmp.ge.f32.partialorder %v657, 0.0
        %vm845 = vcmp.ge.f32.partialorder %v659, 0.0
        %vm846 = vcmp.ge.f32.partialorder %v770, 0.0
        %vm847 = vcmp.ge.f32.partialorder %v772, 0.0
        %vm848 = vcmp.ge.f32.partialorder %v661, 0.0
        %vm849 = vcmp.ge.f32.partialorder %v663, 0.0
        %vm850 = vcmp.ge.f32.partialorder %v774, 0.0
        %vm851 = vcmp.ge.f32.partialorder %v776, 0.0
        %vm852 = vcmp.ge.f32.partialorder %v667, 0.0
        %vm853 = vcmp.ge.f32.partialorder %v669, 0.0
        %vm854 = vcmp.ge.f32.partialorder %v780, 0.0
        %vm855 = vcmp.ge.f32.partialorder %v782, 0.0
        %vm856 = vcmp.ge.f32.partialorder %v671, 0.0
        %vm857 = vcmp.ge.f32.partialorder %v673, 0.0
        %vm858 = vcmp.ge.f32.partialorder %v784, 0.0
        %vm859 = vcmp.ge.f32.partialorder %v786, 0.0
        %vm860 = vcmp.ge.f32.partialorder %v677, 0.0
        %vm861 = vcmp.ge.f32.partialorder %v679, 0.0
        %vm862 = vcmp.ge.f32.partialorder %v790, 0.0
        %vm863 = vcmp.ge.f32.partialorder %v792, 0.0
        %vm864 = vcmp.ge.f32.partialorder %v681, 0.0
        %vm865 = vcmp.ge.f32.partialorder %v683, 0.0
        %vm866 = vcmp.ge.f32.partialorder %v794, 0.0
        %vm867 = vcmp.ge.f32.partialorder %v796, 0.0
        %vm868 = vcmp.ge.f32.partialorder %v687, 0.0
        %vm869 = vcmp.ge.f32.partialorder %v689, 0.0
        %vm870 = vcmp.ge.f32.partialorder %v800, 0.0
        %vm871 = vcmp.ge.f32.partialorder %v802, 0.0
        %vm872 = vcmp.ge.f32.partialorder %v691, 0.0
        %vm873 = vcmp.ge.f32.partialorder %v693, 0.0
        %vm874 = vcmp.ge.f32.partialorder %v804, 0.0
        %vm875 = vcmp.ge.f32.partialorder %v806, 0.0
        %vm876 = vcmp.ge.f32.partialorder %v697, 0.0
        %vm877 = vcmp.ge.f32.partialorder %v699, 0.0
        %vm878 = vcmp.ge.f32.partialorder %v810, 0.0
        %vm879 = vcmp.ge.f32.partialorder %v812, 0.0
        %vm880 = vcmp.ge.f32.partialorder %v701, 0.0
        %vm881 = vcmp.ge.f32.partialorder %v703, 0.0
        %vm882 = vcmp.ge.f32.partialorder %v814, 0.0
        %vm883 = vcmp.ge.f32.partialorder %v816, 0.0
        %vm884 = vcmp.ge.f32.partialorder %v707, 0.0
        %vm885 = vcmp.ge.f32.partialorder %v709, 0.0
        %vm886 = vcmp.ge.f32.partialorder %v820, 0.0
        %vm887 = vcmp.ge.f32.partialorder %v822, 0.0
        %vm888 = vcmp.ge.f32.partialorder %v711, 0.0
        %vm889 = vcmp.ge.f32.partialorder %v713, 0.0
        %vm890 = vcmp.ge.f32.partialorder %v824, 0.0
        %vm891 = vcmp.ge.f32.partialorder %v826, 0.0
        %v892 = vmul.f32 %v637, 0.01
        %v893 = vmul.f32 %v639, 0.01
        %v894 = vmul.f32 %v750, 0.01
        %v895 = vmul.f32 %v752, 0.01
        %v896 = vmul.f32 %v641, 0.01
        %v897 = vmul.f32 %v643, 0.01
        %v898 = vmul.f32 %v754, 0.01
        %v899 = vmul.f32 %v756, 0.01
        %v900 = vmul.f32 %v647, 0.01
        %v901 = vmul.f32 %v649, 0.01
        %v902 = vmul.f32 %v760, 0.01
        %v903 = vmul.f32 %v762, 0.01
        %v904 = vmul.f32 %v651, 0.01
        %v905 = vmul.f32 %v653, 0.01
        %v906 = vmul.f32 %v764, 0.01
        %v907 = vmul.f32 %v766, 0.01
        %v908 = vmul.f32 %v657, 0.01
        %v909 = vmul.f32 %v659, 0.01
        %v910 = vmul.f32 %v770, 0.01
        %v911 = vmul.f32 %v772, 0.01
        %v912 = vmul.f32 %v661, 0.01
        %v913 = vmul.f32 %v663, 0.01
        %v914 = vmul.f32 %v774, 0.01
        %v915 = vmul.f32 %v776, 0.01
        %v916 = vmul.f32 %v667, 0.01
        %v917 = vmul.f32 %v669, 0.01
        %v918 = vmul.f32 %v780, 0.01
        %v919 = vmul.f32 %v782, 0.01
        %v920 = vmul.f32 %v671, 0.01
        %v921 = vmul.f32 %v673, 0.01
        %v922 = vmul.f32 %v784, 0.01
        %v923 = vmul.f32 %v786, 0.01
        %v924 = vmul.f32 %v677, 0.01
        %v925 = vmul.f32 %v679, 0.01
        %v926 = vmul.f32 %v790, 0.01
        %v927 = vmul.f32 %v792, 0.01
        %v928 = vmul.f32 %v681, 0.01
        %v929 = vmul.f32 %v683, 0.01
        %v930 = vmul.f32 %v794, 0.01
        %v931 = vmul.f32 %v796, 0.01
        %v932 = vmul.f32 %v687, 0.01
        %v933 = vmul.f32 %v689, 0.01
        %v934 = vmul.f32 %v800, 0.01
        %v935 = vmul.f32 %v802, 0.01
        %v936 = vmul.f32 %v691, 0.01
        %v937 = vmul.f32 %v693, 0.01
        %v938 = vmul.f32 %v804, 0.01
        %v939 = vmul.f32 %v806, 0.01
        %v940 = vmul.f32 %v697, 0.01
        %v941 = vmul.f32 %v699, 0.01
        %v942 = vmul.f32 %v810, 0.01
        %v943 = vmul.f32 %v812, 0.01
        %v944 = vmul.f32 %v701, 0.01
        %v945 = vmul.f32 %v703, 0.01
        %v946 = vmul.f32 %v814, 0.01
        %v947 = vmul.f32 %v816, 0.01
        %v948 = vmul.f32 %v707, 0.01
        %v949 = vmul.f32 %v709, 0.01
        %v950 = vmul.f32 %v820, 0.01
        %v951 = vmul.f32 %v822, 0.01
        %v952 = vmul.f32 %v711, 0.01
        %v953 = vmul.f32 %v713, 0.01
        %v954 = vmul.f32 %v824, 0.01
        %v955 = vmul.f32 %v826, 0.01
        %v956 = vsel %vm828, %v637, %v892
        %v957 = vsel %vm829, %v639, %v893
        %v958 = vsel %vm830, %v750, %v894
        %v959 = vsel %vm831, %v752, %v895
        %v960 = vsel %vm832, %v641, %v896
        %v961 = vsel %vm833, %v643, %v897
        %v962 = vsel %vm834, %v754, %v898
        %v963 = vsel %vm835, %v756, %v899
        %v964 = vsel %vm836, %v647, %v900
        %v965 = vsel %vm837, %v649, %v901
        %v966 = vsel %vm838, %v760, %v902
        %v967 = vsel %vm839, %v762, %v903
        %v968 = vsel %vm840, %v651, %v904
        %v969 = vsel %vm841, %v653, %v905
        %v970 = vsel %vm842, %v764, %v906
        %v971 = vsel %vm843, %v766, %v907
        %v972 = vsel %vm844, %v657, %v908
        %v973 = vsel %vm845, %v659, %v909
        %v974 = vsel %vm846, %v770, %v910
        %v975 = vsel %vm847, %v772, %v911
        %v976 = vsel %vm848, %v661, %v912
        %v977 = vsel %vm849, %v663, %v913
        %v978 = vsel %vm850, %v774, %v914
        %v979 = vsel %vm851, %v776, %v915
        %v980 = vsel %vm852, %v667, %v916
        %v981 = vsel %vm853, %v669, %v917
        %v982 = vsel %vm854, %v780, %v918
        %v983 = vsel %vm855, %v782, %v919
        %v984 = vsel %vm856, %v671, %v920
        %v985 = vsel %vm857, %v673, %v921
        %v986 = vsel %vm858, %v784, %v922
        %v987 = vsel %vm859, %v786, %v923
        %v988 = vsel %vm860, %v677, %v924
        %v989 = vsel %vm861, %v679, %v925
        %v990 = vsel %vm862, %v790, %v926
        %v991 = vsel %vm863, %v792, %v927
        %v992 = vsel %vm864, %v681, %v928
        %v993 = vsel %vm865, %v683, %v929
        %v994 = vsel %vm866, %v794, %v930
        %v995 = vsel %vm867, %v796, %v931
        %v996 = vsel %vm868, %v687, %v932
        %v997 = vsel %vm869, %v689, %v933
        %v998 = vsel %vm870, %v800, %v934
        %v999 = vsel %vm871, %v802, %v935
        %v1000 = vsel %vm872, %v691, %v936
        %v1001 = vsel %vm873, %v693, %v937
        %v1002 = vsel %vm874, %v804, %v938
        %v1003 = vsel %vm875, %v806, %v939
        %v1004 = vsel %vm876, %v697, %v940
        %v1005 = vsel %vm877, %v699, %v941
        %v1006 = vsel %vm878, %v810, %v942
        %v1007 = vsel %vm879, %v812, %v943
        %v1008 = vsel %vm880, %v701, %v944
        %v1009 = vsel %vm881, %v703, %v945
        %v1010 = vsel %vm882, %v814, %v946
        %v1011 = vsel %vm883, %v816, %v947
        %v1012 = vsel %vm884, %v707, %v948
        %v1013 = vsel %vm885, %v709, %v949
        %v1014 = vsel %vm886, %v820, %v950
        %v1015 = vsel %vm887, %v822, %v951
        %v1016 = vsel %vm888, %v711, %v952
        %v1017 = vsel %vm889, %v713, %v953
        %v1018 = vsel %vm890, %v824, %v954
        %v1019 = vsel %vm891, %v826, %v955
        %1020 = vst [vmem:[%s246] sm:$0xff] %v956
        %1021 = vst [vmem:[%s246 + $0x8] sm:$0xff] %v957
        %1022 = vst [vmem:[%s246 + $0x10] sm:$0xff] %v958
        %1023 = vst [vmem:[%s246 + $0x18] sm:$0xff] %v959
        %1024 = vst [vmem:[%s246 + $0x20] sm:$0xff] %v960
        %1025 = vst [vmem:[%s246 + $0x28] sm:$0xff] %v961
        %1026 = vst [vmem:[%s246 + $0x30] sm:$0xff] %v962
        %1027 = vst [vmem:[%s246 + $0x38] sm:$0xff] %v963
        %1028 = vst [vmem:[%s246 + $0x40] sm:$0xff] %v964
        %1029 = vst [vmem:[%s246 + $0x48] sm:$0xff] %v965
        %1030 = vst [vmem:[%s246 + $0x50] sm:$0xff] %v966
        %1031 = vst [vmem:[%s246 + $0x58] sm:$0xff] %v967
        %1032 = vst [vmem:[%s246 + $0x60] sm:$0xff] %v968
        %1033 = vst [vmem:[%s246 + $0x68] sm:$0xff] %v969
        %1034 = vst [vmem:[%s246 + $0x70] sm:$0xff] %v970
        %1035 = vst [vmem:[%s246 + $0x78] sm:$0xff] %v971
        %1036 = vst [vmem:[%s246 + $0x80] sm:$0xff] %v972
        %1037 = vst [vmem:[%s246 + $0x88] sm:$0xff] %v973
        %1038 = vst [vmem:[%s246 + $0x90] sm:$0xff] %v974
        %1039 = vst [vmem:[%s246 + $0x98] sm:$0xff] %v975
        %1040 = vst [vmem:[%s246 + $0xa0] sm:$0xff] %v976
        %1041 = vst [vmem:[%s246 + $0xa8] sm:$0xff] %v977
        %1042 = vst [vmem:[%s246 + $0xb0] sm:$0xff] %v978
        %1043 = vst [vmem:[%s246 + $0xb8] sm:$0xff] %v979
        %1044 = vst [vmem:[%s246 + $0xc0] sm:$0xff] %v980
        %1045 = vst [vmem:[%s246 + $0xc8] sm:$0xff] %v981
        %1046 = vst [vmem:[%s246 + $0xd0] sm:$0xff] %v982
        %1047 = vst [vmem:[%s246 + $0xd8] sm:$0xff] %v983
        %1048 = vst [vmem:[%s246 + $0xe0] sm:$0xff] %v984
        %1049 = vst [vmem:[%s246 + $0xe8] sm:$0xff] %v985
        %1050 = vst [vmem:[%s246 + $0xf0] sm:$0xff] %v986
        %1051 = vst [vmem:[%s246 + $0xf8] sm:$0xff] %v987
        %1052 = vst [vmem:[%s246 + $0x100] sm:$0xff] %v988
        %1053 = vst [vmem:[%s246 + $0x108] sm:$0xff] %v989
        %1054 = vst [vmem:[%s246 + $0x110] sm:$0xff] %v990
        %1055 = vst [vmem:[%s246 + $0x118] sm:$0xff] %v991
        %1056 = vst [vmem:[%s246 + $0x120] sm:$0xff] %v992
        %1057 = vst [vmem:[%s246 + $0x128] sm:$0xff] %v993
        %1058 = vst [vmem:[%s246 + $0x130] sm:$0xff] %v994
        %1059 = vst [vmem:[%s246 + $0x138] sm:$0xff] %v995
        %1060 = vst [vmem:[%s246 + $0x140] sm:$0xff] %v996
        %1061 = vst [vmem:[%s246 + $0x148] sm:$0xff] %v997
        %1062 = vst [vmem:[%s246 + $0x150] sm:$0xff] %v998
        %1063 = vst [vmem:[%s246 + $0x158] sm:$0xff] %v999
        %1064 = vst [vmem:[%s246 + $0x160] sm:$0xff] %v1000
        %1065 = vst [vmem:[%s246 + $0x168] sm:$0xff] %v1001
        %1066 = vst [vmem:[%s246 + $0x170] sm:$0xff] %v1002
        %1067 = vst [vmem:[%s246 + $0x178] sm:$0xff] %v1003
        %1068 = vst [vmem:[%s246 + $0x180] sm:$0xff] %v1004
        %1069 = vst [vmem:[%s246 + $0x188] sm:$0xff] %v1005
        %1070 = vst [vmem:[%s246 + $0x190] sm:$0xff] %v1006
        %1071 = vst [vmem:[%s246 + $0x198] sm:$0xff] %v1007
        %1072 = vst [vmem:[%s246 + $0x1a0] sm:$0xff] %v1008
        %1073 = vst [vmem:[%s246 + $0x1a8] sm:$0xff] %v1009
        %1074 = vst [vmem:[%s246 + $0x1b0] sm:$0xff] %v1010
        %1075 = vst [vmem:[%s246 + $0x1b8] sm:$0xff] %v1011
        %1076 = vst [vmem:[%s246 + $0x1c0] sm:$0xff] %v1012
        %1077 = vst [vmem:[%s246 + $0x1c8] sm:$0xff] %v1013
        %1078 = vst [vmem:[%s246 + $0x1d0] sm:$0xff] %v1014
        %1079 = vst [vmem:[%s246 + $0x1d8] sm:$0xff] %v1015
        %1080 = vst [vmem:[%s246 + $0x1e0] sm:$0xff] %v1016
        %1081 = vst [vmem:[%s246 + $0x1e8] sm:$0xff] %v1017
        %1082 = vst [vmem:[%s246 + $0x1f0] sm:$0xff] %v1018
        %1083 = vst [vmem:[%s246 + $0x1f8] sm:$0xff] %v1019
        %s1084 = sand.u32 %s90, 1
        %s1085 = sand.u32 %s90, 1
        %s1086 = smul.addr %s1085, 512
        %s1087 = scalar_lea.vmem [#allocation3], %s1086
        // Predicated region
        $region56: #{forward.16} parent=50 // pred_check
          %p1088 = pneg %p100
        $region57: #{forward.16} parent=50 // pred_check_branch
          %1090 = sbr.rel (%p1088) target = $region59
        $region58: #{forward.16} parent=50 // pred_region
          %s1091 = smul.u32 4, %s14
          %s1092 = smul.addr %s1091, 8
          %s1093 = scalar_lea.vmem %s3, %s1092
          // Predicated region
          $region60: #{forward.16} parent=58 // pred_check
            _
          $region61: #{forward.16} parent=58 // pred_check_branch
            %1095 = sbr.rel (0) target = $region63
          $region62: #{forward.16} parent=58 // pred_region
            // Predicated region
            $region64: #{forward.16} parent=62 // pred_check
              _
            $region65: #{forward.16} parent=62 // pred_check_branch
              %1097 = sbr.rel (0) target = $region67
            $region66: #{forward.16} parent=62 // pred_region
              loop: start=0, step=1, limit=1
              $region68: #{forward.16} parent=66 // loop_pre_header
                _
              $region69: #{forward.16} parent=66 // loop_header
                %s1099 = sphi 0, %s1103
                %p1100 = scmp.ge.s32.totalorder %s1099, 1
                %s1104 = sphi %s1087, %s1087
                %s1105 = sphi %s1093, %s1093
              $region70: #{forward.16} parent=66 // loop_header_branch
                %1102 = sbr.rel (%p1100) target = $region74
              $region71: #{forward.16} parent=66 // loop_body
                %v1106 = vld [vmem:[%s1104] sm:$0xff]
                %1107 = vst [vmem:[%s1105] sm:$0xff] %v1106
                %v1108 = vld [vmem:[%s1104 + $0x8] sm:$0xff]
                %1109 = vst [vmem:[%s1105 + $0x8] sm:$0xff] %v1108
                %v1110 = vld [vmem:[%s1104 + $0x10] sm:$0xff]
                %1111 = vst [vmem:[%s1105 + $0x10] sm:$0xff] %v1110
                %v1112 = vld [vmem:[%s1104 + $0x18] sm:$0xff]
                %1113 = vst [vmem:[%s1105 + $0x18] sm:$0xff] %v1112
                %v1114 = vld [vmem:[%s1104 + $0x20] sm:$0xff]
                %1115 = vst [vmem:[%s1105 + $0x40] sm:$0xff] %v1114
                %v1116 = vld [vmem:[%s1104 + $0x28] sm:$0xff]
                %1117 = vst [vmem:[%s1105 + $0x48] sm:$0xff] %v1116
                %v1118 = vld [vmem:[%s1104 + $0x30] sm:$0xff]
                %1119 = vst [vmem:[%s1105 + $0x50] sm:$0xff] %v1118
                %v1120 = vld [vmem:[%s1104 + $0x38] sm:$0xff]
                %1121 = vst [vmem:[%s1105 + $0x58] sm:$0xff] %v1120
                %v1122 = vld [vmem:[%s1104 + $0x40] sm:$0xff]
                %1123 = vst [vmem:[%s1105 + $0x80] sm:$0xff] %v1122
                %v1124 = vld [vmem:[%s1104 + $0x48] sm:$0xff]
                %1125 = vst [vmem:[%s1105 + $0x88] sm:$0xff] %v1124
                %v1126 = vld [vmem:[%s1104 + $0x50] sm:$0xff]
                %1127 = vst [vmem:[%s1105 + $0x90] sm:$0xff] %v1126
                %v1128 = vld [vmem:[%s1104 + $0x58] sm:$0xff]
                %1129 = vst [vmem:[%s1105 + $0x98] sm:$0xff] %v1128
                %v1130 = vld [vmem:[%s1104 + $0x60] sm:$0xff]
                %1131 = vst [vmem:[%s1105 + $0xc0] sm:$0xff] %v1130
                %v1132 = vld [vmem:[%s1104 + $0x68] sm:$0xff]
                %1133 = vst [vmem:[%s1105 + $0xc8] sm:$0xff] %v1132
                %v1134 = vld [vmem:[%s1104 + $0x70] sm:$0xff]
                %1135 = vst [vmem:[%s1105 + $0xd0] sm:$0xff] %v1134
                %v1136 = vld [vmem:[%s1104 + $0x78] sm:$0xff]
                %1137 = vst [vmem:[%s1105 + $0xd8] sm:$0xff] %v1136
                %v1138 = vld [vmem:[%s1104 + $0x80] sm:$0xff]
                %1139 = vst [vmem:[%s1105 + $0x100] sm:$0xff] %v1138
                %v1140 = vld [vmem:[%s1104 + $0x88] sm:$0xff]
                %1141 = vst [vmem:[%s1105 + $0x108] sm:$0xff] %v1140
                %v1142 = vld [vmem:[%s1104 + $0x90] sm:$0xff]
                %1143 = vst [vmem:[%s1105 + $0x110] sm:$0xff] %v1142
                %v1144 = vld [vmem:[%s1104 + $0x98] sm:$0xff]
                %1145 = vst [vmem:[%s1105 + $0x118] sm:$0xff] %v1144
                %v1146 = vld [vmem:[%s1104 + $0xa0] sm:$0xff]
                %1147 = vst [vmem:[%s1105 + $0x140] sm:$0xff] %v1146
                %v1148 = vld [vmem:[%s1104 + $0xa8] sm:$0xff]
                %1149 = vst [vmem:[%s1105 + $0x148] sm:$0xff] %v1148
                %v1150 = vld [vmem:[%s1104 + $0xb0] sm:$0xff]
                %1151 = vst [vmem:[%s1105 + $0x150] sm:$0xff] %v1150
                %v1152 = vld [vmem:[%s1104 + $0xb8] sm:$0xff]
                %1153 = vst [vmem:[%s1105 + $0x158] sm:$0xff] %v1152
                %v1154 = vld [vmem:[%s1104 + $0xc0] sm:$0xff]
                %1155 = vst [vmem:[%s1105 + $0x180] sm:$0xff] %v1154
                %v1156 = vld [vmem:[%s1104 + $0xc8] sm:$0xff]
                %1157 = vst [vmem:[%s1105 + $0x188] sm:$0xff] %v1156
                %v1158 = vld [vmem:[%s1104 + $0xd0] sm:$0xff]
                %1159 = vst [vmem:[%s1105 + $0x190] sm:$0xff] %v1158
                %v1160 = vld [vmem:[%s1104 + $0xd8] sm:$0xff]
                %1161 = vst [vmem:[%s1105 + $0x198] sm:$0xff] %v1160
                %v1162 = vld [vmem:[%s1104 + $0xe0] sm:$0xff]
                %1163 = vst [vmem:[%s1105 + $0x1c0] sm:$0xff] %v1162
                %v1164 = vld [vmem:[%s1104 + $0xe8] sm:$0xff]
                %1165 = vst [vmem:[%s1105 + $0x1c8] sm:$0xff] %v1164
                %v1166 = vld [vmem:[%s1104 + $0xf0] sm:$0xff]
                %1167 = vst [vmem:[%s1105 + $0x1d0] sm:$0xff] %v1166
                %v1168 = vld [vmem:[%s1104 + $0xf8] sm:$0xff]
                %1169 = vst [vmem:[%s1105 + $0x1d8] sm:$0xff] %v1168
                %v1170 = vld [vmem:[%s1104 + $0x100] sm:$0xff]
                %1171 = vst [vmem:[%s1105 + $0x200] sm:$0xff] %v1170
                %v1172 = vld [vmem:[%s1104 + $0x108] sm:$0xff]
                %1173 = vst [vmem:[%s1105 + $0x208] sm:$0xff] %v1172
                %v1174 = vld [vmem:[%s1104 + $0x110] sm:$0xff]
                %1175 = vst [vmem:[%s1105 + $0x210] sm:$0xff] %v1174
                %v1176 = vld [vmem:[%s1104 + $0x118] sm:$0xff]
                %1177 = vst [vmem:[%s1105 + $0x218] sm:$0xff] %v1176
                %v1178 = vld [vmem:[%s1104 + $0x120] sm:$0xff]
                %1179 = vst [vmem:[%s1105 + $0x240] sm:$0xff] %v1178
                %v1180 = vld [vmem:[%s1104 + $0x128] sm:$0xff]
                %1181 = vst [vmem:[%s1105 + $0x248] sm:$0xff] %v1180
                %v1182 = vld [vmem:[%s1104 + $0x130] sm:$0xff]
                %1183 = vst [vmem:[%s1105 + $0x250] sm:$0xff] %v1182
                %v1184 = vld [vmem:[%s1104 + $0x138] sm:$0xff]
                %1185 = vst [vmem:[%s1105 + $0x258] sm:$0xff] %v1184
                %v1186 = vld [vmem:[%s1104 + $0x140] sm:$0xff]
                %1187 = vst [vmem:[%s1105 + $0x280] sm:$0xff] %v1186
                %v1188 = vld [vmem:[%s1104 + $0x148] sm:$0xff]
                %1189 = vst [vmem:[%s1105 + $0x288] sm:$0xff] %v1188
                %v1190 = vld [vmem:[%s1104 + $0x150] sm:$0xff]
                %1191 = vst [vmem:[%s1105 + $0x290] sm:$0xff] %v1190
                %v1192 = vld [vmem:[%s1104 + $0x158] sm:$0xff]
                %1193 = vst [vmem:[%s1105 + $0x298] sm:$0xff] %v1192
                %v1194 = vld [vmem:[%s1104 + $0x160] sm:$0xff]
                %1195 = vst [vmem:[%s1105 + $0x2c0] sm:$0xff] %v1194
                %v1196 = vld [vmem:[%s1104 + $0x168] sm:$0xff]
                %1197 = vst [vmem:[%s1105 + $0x2c8] sm:$0xff] %v1196
                %v1198 = vld [vmem:[%s1104 + $0x170] sm:$0xff]
                %1199 = vst [vmem:[%s1105 + $0x2d0] sm:$0xff] %v1198
                %v1200 = vld [vmem:[%s1104 + $0x178] sm:$0xff]
                %1201 = vst [vmem:[%s1105 + $0x2d8] sm:$0xff] %v1200
                %v1202 = vld [vmem:[%s1104 + $0x180] sm:$0xff]
                %1203 = vst [vmem:[%s1105 + $0x300] sm:$0xff] %v1202
                %v1204 = vld [vmem:[%s1104 + $0x188] sm:$0xff]
                %1205 = vst [vmem:[%s1105 + $0x308] sm:$0xff] %v1204
                %v1206 = vld [vmem:[%s1104 + $0x190] sm:$0xff]
                %1207 = vst [vmem:[%s1105 + $0x310] sm:$0xff] %v1206
                %v1208 = vld [vmem:[%s1104 + $0x198] sm:$0xff]
                %1209 = vst [vmem:[%s1105 + $0x318] sm:$0xff] %v1208
                %v1210 = vld [vmem:[%s1104 + $0x1a0] sm:$0xff]
                %1211 = vst [vmem:[%s1105 + $0x340] sm:$0xff] %v1210
                %v1212 = vld [vmem:[%s1104 + $0x1a8] sm:$0xff]
                %1213 = vst [vmem:[%s1105 + $0x348] sm:$0xff] %v1212
                %v1214 = vld [vmem:[%s1104 + $0x1b0] sm:$0xff]
                %1215 = vst [vmem:[%s1105 + $0x350] sm:$0xff] %v1214
                %v1216 = vld [vmem:[%s1104 + $0x1b8] sm:$0xff]
                %1217 = vst [vmem:[%s1105 + $0x358] sm:$0xff] %v1216
                %v1218 = vld [vmem:[%s1104 + $0x1c0] sm:$0xff]
                %1219 = vst [vmem:[%s1105 + $0x380] sm:$0xff] %v1218
                %v1220 = vld [vmem:[%s1104 + $0x1c8] sm:$0xff]
                %1221 = vst [vmem:[%s1105 + $0x388] sm:$0xff] %v1220
                %v1222 = vld [vmem:[%s1104 + $0x1d0] sm:$0xff]
                %1223 = vst [vmem:[%s1105 + $0x390] sm:$0xff] %v1222
                %v1224 = vld [vmem:[%s1104 + $0x1d8] sm:$0xff]
                %1225 = vst [vmem:[%s1105 + $0x398] sm:$0xff] %v1224
                %v1226 = vld [vmem:[%s1104 + $0x1e0] sm:$0xff]
                %1227 = vst [vmem:[%s1105 + $0x3c0] sm:$0xff] %v1226
                %v1228 = vld [vmem:[%s1104 + $0x1e8] sm:$0xff]
                %1229 = vst [vmem:[%s1105 + $0x3c8] sm:$0xff] %v1228
                %v1230 = vld [vmem:[%s1104 + $0x1f0] sm:$0xff]
                %1231 = vst [vmem:[%s1105 + $0x3d0] sm:$0xff] %v1230
                %v1232 = vld [vmem:[%s1104 + $0x1f8] sm:$0xff]
                %1233 = vst [vmem:[%s1105 + $0x3d8] sm:$0xff] %v1232
              $region72: #{forward.16} parent=66 // loop_footer
                %s1103 = sadd.s32 1, %s1099
              $region73: #{forward.16} parent=66 // loop_footer_branch
                %1098 = sbr.rel target = $region69
              $region74: #{forward.16} parent=66 // loop_exit
                _
            $region67: #{forward.16} parent=62 // pred_fallthru
              _
            // Predicated region
            $region75: #{forward.16} parent=62 // pred_check
              _
            $region76: #{forward.16} parent=62 // pred_check_branch
              %1235 = sbr.rel target = $region78
            $region77: #{forward.16} parent=62 // pred_region
              _
            $region78: #{forward.16} parent=62 // pred_fallthru
              _
          $region63: #{forward.16} parent=58 // pred_fallthru
            _
          %1236 = vnop
        $region59: #{forward.16} parent=50 // pred_fallthru
          _
      $region51: #{forward.16} parent=5 // pred_fallthru
        _
      %p1237 = scmp.le.s32.totalorder 2, %s9
      // Predicated region
      $region79: #{forward.16} parent=5 // pred_check
        %p1238 = pneg %p1237
      $region80: #{forward.16} parent=5 // pred_check_branch
        %1240 = sbr.rel (%p1238) target = $region82
      $region81: #{forward.16} parent=5 // pred_region
        %s1241 = ssub.s32 %s9, 2
        // Predicated region
        $region83: #{forward.16} parent=81 // pred_check
          %p1242 = pneg %p106
        $region84: #{forward.16} parent=81 // pred_check_branch
          %1244 = sbr.rel (%p1242) target = $region86
        $region85: #{forward.16} parent=81 // pred_region
          %s1245 = sand.u32 %s91, 1
          %s1246 = sand.u32 %s91, 1
          %s1247 = smul.addr %s1246, 512
          %s1248 = scalar_lea.vmem [#allocation3], %s1247
        $region86: #{forward.16} parent=81 // pred_fallthru
          _
      $region82: #{forward.16} parent=5 // pred_fallthru
        _
    $region6: #{forward.16} parent=1 // loop_footer
      %s13 = sadd.s32 1, %s9
    $region7: #{forward.16} parent=1 // loop_footer_branch
      %8 = sbr.rel target = $region3
    $region8: #{forward.16} parent=1 // loop_exit
      _

// kernel: forward.17
$region0: #{forward.17}
  #allocation0 [shape = 'u32[]', space=smem, size = 0x4, offset = 0x4, fixed_abs, tag = 'smem constant byte address 0x4 - core index']
  #allocation1 [shape = 'u32[144,128]{1,0:T(1,128)}', space=vmem, size = 0x12000, scoped, tag = 'internal scratch']
  %s0 = inlined_call_operand.vmem [shape: bf16[2,432], index: 0, kind: input, shape index: {}]
  %s1 = inlined_call_operand.vmem [shape: bf16[432,8192], index: 1, kind: input, shape index: {}]
  %s2 = inlined_call_operand.vmem [shape: f32[2,1], index: 2, kind: input, shape index: {}]
  %s3 = inlined_call_operand.vmem [shape: f32[2,8192], index: 3, kind: output, shape index: {}]
  %s4 = sld [smem:[#allocation0]]
  $region68: #{forward.17} parent=0
    _
  %s6 = ssub.s32 1, %s4
  %s7 = scalar_select 0, %s6, %s4
  $region1: #{forward.17} parent=0
    #allocation2 [shape = 'u8[3538944]{0}', space=vmem, size = 0x360000, scoped, tag = 'input window, operand 1']
    loop: start=0, step=1, limit=6
    $region2: #{forward.17} parent=1 // loop_pre_header
      _
    $region3: #{forward.17} parent=1 // loop_header
      %s9 = sphi 0, %s13
      %p10 = scmp.ge.s32.totalorder %s9, 6
      %s17 = sphi 0, %s17
      %s19 = sphi 0, %s17
      %s20 = sphi 0, %s19
      %s34 = sphi 0, %s20
      %s40 = sphi 0, %s42
      %s43 = sphi 0, %s40
      %s44 = sphi 0, %s43
      %s60 = sphi 0, %s44
      %s64 = sphi 0, %s64
      %s66 = sphi 0, %s64
      %s67 = sphi 0, %s66
      %s81 = sphi 0, %s67
      %s87 = sphi 0, %s89
      %s90 = sphi 0, %s87
      %s91 = sphi 0, %s90
      %s107 = sphi 0, %s91
    $region4: #{forward.17} parent=1 // loop_header_branch
      %12 = sbr.rel (%p10) target = $region8
    $region5: #{forward.17} parent=1 // loop_body
      %s14 = ssub.s32 %s9, 1
      %s15 = ssub.s32 %s9, 2
      %s16 = sadd.s32 %s9, 1
      %s18 = sadd.s32 %s17, 1
      %p21 = scmp.eq.s32.totalorder %s9, 3
      %p22 = scmp.ne.s32.totalorder %s17, %s19
      %p23 = scmp.eq.s32.totalorder %s9, 0
      %p24 = por %p22, %p23
      %p25 = scmp.ne.s32.totalorder %s17, %s19
      %p26 = scmp.eq.s32.totalorder %s14, 3
      %p27 = por %p25, %p26
      %p28 = scmp.ne.s32.totalorder %s19, %s20
      %p29 = scmp.eq.s32.totalorder %s14, 0
      %p30 = por %p28, %p29
      %p31 = scmp.ne.s32.totalorder %s19, %s20
      %p32 = scmp.eq.s32.totalorder %s15, 3
      %p33 = por %p31, %p32
      %p35 = scmp.ne.s32.totalorder %s20, %s34
      %p36 = scmp.eq.s32.totalorder %s15, 0
      %p37 = por %p35, %p36
      %s38 = ssub.s32 %s9, %s16
      %p39 = scmp.eq.s32.totalorder %s38, 0
      %s41 = sadd.s32 %s40, 1
      %s42 = scalar_select %p39, %s40, %s41
      %p45 = pneg %p39
      %p46 = scmp.eq.s32.totalorder %s9, 3
      %p47 = por %p45, %p46
      %p48 = scmp.ne.s32.totalorder %s40, %s43
      %p49 = scmp.eq.s32.totalorder %s9, 0
      %p50 = por %p48, %p49
      %p51 = scmp.ne.s32.totalorder %s40, %s43
      %p52 = scmp.eq.s32.totalorder %s14, 3
      %p53 = por %p51, %p52
      %p54 = scmp.ne.s32.totalorder %s43, %s44
      %p55 = scmp.eq.s32.totalorder %s14, 0
      %p56 = por %p54, %p55
      %p57 = scmp.ne.s32.totalorder %s43, %s44
      %p58 = scmp.eq.s32.totalorder %s15, 3
      %p59 = por %p57, %p58
      %p61 = scmp.ne.s32.totalorder %s44, %s60
      %p62 = scmp.eq.s32.totalorder %s15, 0
      %p63 = por %p61, %p62
      %s65 = sadd.s32 %s64, 1
      %p68 = scmp.eq.s32.totalorder %s9, 3
      %p69 = scmp.ne.s32.totalorder %s64, %s66
      %p70 = scmp.eq.s32.totalorder %s9, 0
      %p71 = por %p69, %p70
      %p72 = scmp.ne.s32.totalorder %s64, %s66
      %p73 = scmp.eq.s32.totalorder %s14, 3
      %p74 = por %p72, %p73
      %p75 = scmp.ne.s32.totalorder %s66, %s67
      %p76 = scmp.eq.s32.totalorder %s14, 0
      %p77 = por %p75, %p76
      %p78 = scmp.ne.s32.totalorder %s66, %s67
      %p79 = scmp.eq.s32.totalorder %s15, 3
      %p80 = por %p78, %p79
      %p82 = scmp.ne.s32.totalorder %s67, %s81
      %p83 = scmp.eq.s32.totalorder %s15, 0
      %p84 = por %p82, %p83
      %s85 = ssub.s32 %s9, %s16
      %p86 = scmp.eq.s32.totalorder %s85, 0
      %s88 = sadd.s32 %s87, 1
      %s89 = scalar_select %p86, %s87, %s88
      %p92 = pneg %p86
      %p93 = scmp.eq.s32.totalorder %s9, 3
      %p94 = por %p92, %p93
      %p95 = scmp.ne.s32.totalorder %s87, %s90
      %p96 = scmp.eq.s32.totalorder %s9, 0
      %p97 = por %p95, %p96
      %p98 = scmp.ne.s32.totalorder %s87, %s90
      %p99 = scmp.eq.s32.totalorder %s14, 3
      %p100 = por %p98, %p99
      %p101 = scmp.ne.s32.totalorder %s90, %s91
      %p102 = scmp.eq.s32.totalorder %s14, 0
      %p103 = por %p101, %p102
      %p104 = scmp.ne.s32.totalorder %s90, %s91
      %p105 = scmp.eq.s32.totalorder %s15, 3
      %p106 = por %p104, %p105
      %p108 = scmp.ne.s32.totalorder %s91, %s107
      %p109 = scmp.eq.s32.totalorder %s15, 0
      %p110 = por %p108, %p109
      %p111 = scmp.le.s32.totalorder 1, %s9
      %p112 = scmp.lt.s32.totalorder %s9, 5
      %p113 = pnand %p111, %p112
      %p114 = pneg %p113
      // Predicated region
      $region9: #{forward.17} parent=5 // pred_check
        _
      $region10: #{forward.17} parent=5 // pred_check_branch
        %116 = sbr.rel (%p113) target = $region12
      $region11: #{forward.17} parent=5 // pred_region
        %s117 = ssub.s32 %s9, 1
        // Predicated region
        $region13: #{forward.17} parent=11 // pred_check
          %p118 = pneg %p30
        $region14: #{forward.17} parent=11 // pred_check_branch
          %120 = sbr.rel (%p118) target = $region16
        $region15: #{forward.17} parent=11 // pred_region
          _
        $region16: #{forward.17} parent=11 // pred_fallthru
          _
        // Predicated region
        $region17: #{forward.17} parent=11 // pred_check
          %p121 = pneg %p77
        $region18: #{forward.17} parent=11 // pred_check_branch
          %123 = sbr.rel (%p121) target = $region20
        $region19: #{forward.17} parent=11 // pred_region
          _
        $region20: #{forward.17} parent=11 // pred_fallthru
          _
      $region12: #{forward.17} parent=5 // pred_fallthru
        _
      %p124 = scmp.lt.s32.totalorder %s9, 4
      // Predicated region
      $region21: #{forward.17} parent=5 // pred_check
        %p125 = pneg %p124
      $region22: #{forward.17} parent=5 // pred_check_branch
        %127 = sbr.rel (%p125) target = $region24
      $region23: #{forward.17} parent=5 // pred_region
        // Predicated region
        $region25: #{forward.17} parent=23 // pred_check
          %p128 = pneg %p50
        $region26: #{forward.17} parent=23 // pred_check_branch
          %130 = sbr.rel (%p128) target = $region28
        $region27: #{forward.17} parent=23 // pred_region
          %s131 = sand.u32 %s40, 1
          %s132 = sand.u32 %s40, 1
          %s133 = smul.addr %s132, 3456
          %s134 = scalar_lea.vmem [#allocation2], %s133
          %s135 = smul.u32 16, %s9
          %s136 = smul.addr %s135, 4
          %s137 = scalar_lea.vmem %s1, %s136
          // Predicated region
          $region29: #{forward.17} parent=27 // pred_check
            _
          $region30: #{forward.17} parent=27 // pred_check_branch
            %139 = sbr.rel (0) target = $region32
          $region31: #{forward.17} parent=27 // pred_region
            // Predicated region
            $region33: #{forward.17} parent=31 // pred_check
              _
            $region34: #{forward.17} parent=31 // pred_check_branch
              %141 = sbr.rel (0) target = $region36
            $region35: #{forward.17} parent=31 // pred_region
              loop: start=0, step=1, limit=1
              $region37: #{forward.17} parent=35 // loop_pre_header
                _
              $region38: #{forward.17} parent=35 // loop_header
                %s143 = sphi 0, %s147
                %p144 = scmp.ge.s32.totalorder %s143, 1
                %s148 = sphi %s137, %s137
                %s149 = sphi %s134, %s134
              $region39: #{forward.17} parent=35 // loop_header_branch
                %146 = sbr.rel (%p144) target = $region43
              $region40: #{forward.17} parent=35 // loop_body
                %v150 = vld [vmem:[%s148] sm:$0xff]
                %151 = vst [vmem:[%s149] sm:$0xff] %v150
                %v152 = vld [vmem:[%s148 + $0x8] sm:$0xff]
                %153 = vst [vmem:[%s149 + $0x8] sm:$0xff] %v152
                %v154 = vld [vmem:[%s148 + $0x10] sm:$0xff]
                %155 = vst [vmem:[%s149 + $0x10] sm:$0xff] %v154
                %v156 = vld [vmem:[%s148 + $0x18] sm:$0xff]
                %157 = vst [vmem:[%s149 + $0x18] sm:$0xff] %v156
                %v158 = vld [vmem:[%s148 + $0x20] sm:$0xff]
                %159 = vst [vmem:[%s149 + $0x20] sm:$0xff] %v158
                %v160 = vld [vmem:[%s148 + $0x28] sm:$0xff]
                %161 = vst [vmem:[%s149 + $0x28] sm:$0xff] %v160
                %v162 = vld [vmem:[%s148 + $0x30] sm:$0xff]
                %163 = vst [vmem:[%s149 + $0x30] sm:$0xff] %v162
                %v164 = vld [vmem:[%s148 + $0x38] sm:$0xff]
                %165 = vst [vmem:[%s149 + $0x38] sm:$0xff] %v164
                %v166 = vld [vmem:[%s148 + $0x100] sm:$0xff]
                %167 = vst [vmem:[%s149 + $0x40] sm:$0xff] %v166
                %v168 = vld [vmem:[%s148 + $0x108] sm:$0xff]
                %169 = vst [vmem:[%s149 + $0x48] sm:$0xff] %v168
                %v170 = vld [vmem:[%s148 + $0x110] sm:$0xff]
                %171 = vst [vmem:[%s149 + $0x50] sm:$0xff] %v170
                %v172 = vld [vmem:[%s148 + $0x118] sm:$0xff]
                %173 = vst [vmem:[%s149 + $0x58] sm:$0xff] %v172
                %v174 = vld [vmem:[%s148 + $0x120] sm:$0xff]
                %175 = vst [vmem:[%s149 + $0x60] sm:$0xff] %v174
                %v176 = vld [vmem:[%s148 + $0x128] sm:$0xff]
                %177 = vst [vmem:[%s149 + $0x68] sm:$0xff] %v176
                %v178 = vld [vmem:[%s148 + $0x130] sm:$0xff]
                %179 = vst [vmem:[%s149 + $0x70] sm:$0xff] %v178
                %v180 = vld [vmem:[%s148 + $0x138] sm:$0xff]
                %181 = vst [vmem:[%s149 + $0x78] sm:$0xff] %v180
                %v182 = vld [vmem:[%s148 + $0x200] sm:$0xff]
                %183 = vst [vmem:[%s149 + $0x80] sm:$0xff] %v182
                %v184 = vld [vmem:[%s148 + $0x208] sm:$0xff]
                %185 = vst [vmem:[%s149 + $0x88] sm:$0xff] %v184
                %v186 = vld [vmem:[%s148 + $0x210] sm:$0xff]
                %187 = vst [vmem:[%s149 + $0x90] sm:$0xff] %v186
                %v188 = vld [vmem:[%s148 + $0x218] sm:$0xff]
                %189 = vst [vmem:[%s149 + $0x98] sm:$0xff] %v188
                %v190 = vld [vmem:[%s148 + $0x220] sm:$0xff]
                %191 = vst [vmem:[%s149 + $0xa0] sm:$0xff] %v190
                %v192 = vld [vmem:[%s148 + $0x228] sm:$0xff]
                %193 = vst [vmem:[%s149 + $0xa8] sm:$0xff] %v192
                %v194 = vld [vmem:[%s148 + $0x230] sm:$0xff]
                %195 = vst [vmem:[%s149 + $0xb0] sm:$0xff] %v194
                %v196 = vld [vmem:[%s148 + $0x238] sm:$0xff]
                %197 = vst [vmem:[%s149 + $0xb8] sm:$0xff] %v196
                %v198 = vld [vmem:[%s148 + $0x300] sm:$0xff]
                %199 = vst [vmem:[%s149 + $0xc0] sm:$0xff] %v198
                %v200 = vld [vmem:[%s148 + $0x308] sm:$0xff]
                %201 = vst [vmem:[%s149 + $0xc8] sm:$0xff] %v200
                %v202 = vld [vmem:[%s148 + $0x310] sm:$0xff]
                %203 = vst [vmem:[%s149 + $0xd0] sm:$0xff] %v202
                %v204 = vld [vmem:[%s148 + $0x318] sm:$0xff]
                %205 = vst [vmem:[%s149 + $0xd8] sm:$0xff] %v204
                %v206 = vld [vmem:[%s148 + $0x320] sm:$0xff]
                %207 = vst [vmem:[%s149 + $0xe0] sm:$0xff] %v206
                %v208 = vld [vmem:[%s148 + $0x328] sm:$0xff]
                %209 = vst [vmem:[%s149 + $0xe8] sm:$0xff] %v208
                %v210 = vld [vmem:[%s148 + $0x330] sm:$0xff]
                %211 = vst [vmem:[%s149 + $0xf0] sm:$0xff] %v210
                %v212 = vld [vmem:[%s148 + $0x338] sm:$0xff]
                %213 = vst [vmem:[%s149 + $0xf8] sm:$0xff] %v212
                %v214 = vld [vmem:[%s148 + $0x400] sm:$0xff]
                %215 = vst [vmem:[%s149 + $0x100] sm:$0xff] %v214
                %v216 = vld [vmem:[%s148 + $0x408] sm:$0xff]
                %217 = vst [vmem:[%s149 + $0x108] sm:$0xff] %v216
                %v218 = vld [vmem:[%s148 + $0x410] sm:$0xff]
                %219 = vst [vmem:[%s149 + $0x110] sm:$0xff] %v218
                %v220 = vld [vmem:[%s148 + $0x418] sm:$0xff]
                %221 = vst [vmem:[%s149 + $0x118] sm:$0xff] %v220
                %v222 = vld [vmem:[%s148 + $0x420] sm:$0xff]
                %223 = vst [vmem:[%s149 + $0x120] sm:$0xff] %v222
                %v224 = vld [vmem:[%s148 + $0x428] sm:$0xff]
                %225 = vst [vmem:[%s149 + $0x128] sm:$0xff] %v224
                %v226 = vld [vmem:[%s148 + $0x430] sm:$0xff]
                %227 = vst [vmem:[%s149 + $0x130] sm:$0xff] %v226
                %v228 = vld [vmem:[%s148 + $0x438] sm:$0xff]
                %229 = vst [vmem:[%s149 + $0x138] sm:$0xff] %v228
                %v230 = vld [vmem:[%s148 + $0x500] sm:$0xff]
                %231 = vst [vmem:[%s149 + $0x140] sm:$0xff] %v230
                %v232 = vld [vmem:[%s148 + $0x508] sm:$0xff]
                %233 = vst [vmem:[%s149 + $0x148] sm:$0xff] %v232
                %v234 = vld [vmem:[%s148 + $0x510] sm:$0xff]
                %235 = vst [vmem:[%s149 + $0x150] sm:$0xff] %v234
                %v236 = vld [vmem:[%s148 + $0x518] sm:$0xff]
                %237 = vst [vmem:[%s149 + $0x158] sm:$0xff] %v236
                %v238 = vld [vmem:[%s148 + $0x520] sm:$0xff]
                %239 = vst [vmem:[%s149 + $0x160] sm:$0xff] %v238
                %v240 = vld [vmem:[%s148 + $0x528] sm:$0xff]
                %241 = vst [vmem:[%s149 + $0x168] sm:$0xff] %v240
                %v242 = vld [vmem:[%s148 + $0x530] sm:$0xff]
                %243 = vst [vmem:[%s149 + $0x170] sm:$0xff] %v242
                %v244 = vld [vmem:[%s148 + $0x538] sm:$0xff]
                %245 = vst [vmem:[%s149 + $0x178] sm:$0xff] %v244
                %v246 = vld [vmem:[%s148 + $0x600] sm:$0xff]
                %247 = vst [vmem:[%s149 + $0x180] sm:$0xff] %v246
                %v248 = vld [vmem:[%s148 + $0x608] sm:$0xff]
                %249 = vst [vmem:[%s149 + $0x188] sm:$0xff] %v248
                %v250 = vld [vmem:[%s148 + $0x610] sm:$0xff]
                %251 = vst [vmem:[%s149 + $0x190] sm:$0xff] %v250
                %v252 = vld [vmem:[%s148 + $0x618] sm:$0xff]
                %253 = vst [vmem:[%s149 + $0x198] sm:$0xff] %v252
                %v254 = vld [vmem:[%s148 + $0x620] sm:$0xff]
                %255 = vst [vmem:[%s149 + $0x1a0] sm:$0xff] %v254
                %v256 = vld [vmem:[%s148 + $0x628] sm:$0xff]
                %257 = vst [vmem:[%s149 + $0x1a8] sm:$0xff] %v256
                %v258 = vld [vmem:[%s148 + $0x630] sm:$0xff]
                %259 = vst [vmem:[%s149 + $0x1b0] sm:$0xff] %v258
                %v260 = vld [vmem:[%s148 + $0x638] sm:$0xff]
                %261 = vst [vmem:[%s149 + $0x1b8] sm:$0xff] %v260
                %v262 = vld [vmem:[%s148 + $0x700] sm:$0xff]
                %263 = vst [vmem:[%s149 + $0x1c0] sm:$0xff] %v262
                %v264 = vld [vmem:[%s148 + $0x708] sm:$0xff]
                %265 = vst [vmem:[%s149 + $0x1c8] sm:$0xff] %v264
                %v266 = vld [vmem:[%s148 + $0x710] sm:$0xff]
                %267 = vst [vmem:[%s149 + $0x1d0] sm:$0xff] %v266
                %v268 = vld [vmem:[%s148 + $0x718] sm:$0xff]
                %269 = vst [vmem:[%s149 + $0x1d8] sm:$0xff] %v268
                %v270 = vld [vmem:[%s148 + $0x720] sm:$0xff]
                %271 = vst [vmem:[%s149 + $0x1e0] sm:$0xff] %v270
                %v272 = vld [vmem:[%s148 + $0x728] sm:$0xff]
                %273 = vst [vmem:[%s149 + $0x1e8] sm:$0xff] %v272
                %v274 = vld [vmem:[%s148 + $0x730] sm:$0xff]
                %275 = vst [vmem:[%s149 + $0x1f0] sm:$0xff] %v274
                %v276 = vld [vmem:[%s148 + $0x738] sm:$0xff]
                %277 = vst [vmem:[%s149 + $0x1f8] sm:$0xff] %v276
                %v278 = vld [vmem:[%s148 + $0x800] sm:$0xff]
                %279 = vst [vmem:[%s149 + $0x200] sm:$0xff] %v278
                %v280 = vld [vmem:[%s148 + $0x808] sm:$0xff]
                %281 = vst [vmem:[%s149 + $0x208] sm:$0xff] %v280
                %v282 = vld [vmem:[%s148 + $0x810] sm:$0xff]
                %283 = vst [vmem:[%s149 + $0x210] sm:$0xff] %v282
                %v284 = vld [vmem:[%s148 + $0x818] sm:$0xff]
                %285 = vst [vmem:[%s149 + $0x218] sm:$0xff] %v284
                %v286 = vld [vmem:[%s148 + $0x820] sm:$0xff]
                %287 = vst [vmem:[%s149 + $0x220] sm:$0xff] %v286
                %v288 = vld [vmem:[%s148 + $0x828] sm:$0xff]
                %289 = vst [vmem:[%s149 + $0x228] sm:$0xff] %v288
                %v290 = vld [vmem:[%s148 + $0x830] sm:$0xff]
                %291 = vst [vmem:[%s149 + $0x230] sm:$0xff] %v290
                %v292 = vld [vmem:[%s148 + $0x838] sm:$0xff]
                %293 = vst [vmem:[%s149 + $0x238] sm:$0xff] %v292
                %v294 = vld [vmem:[%s148 + $0x900] sm:$0xff]
                %295 = vst [vmem:[%s149 + $0x240] sm:$0xff] %v294
                %v296 = vld [vmem:[%s148 + $0x908] sm:$0xff]
                %297 = vst [vmem:[%s149 + $0x248] sm:$0xff] %v296
                %v298 = vld [vmem:[%s148 + $0x910] sm:$0xff]
                %299 = vst [vmem:[%s149 + $0x250] sm:$0xff] %v298
                %v300 = vld [vmem:[%s148 + $0x918] sm:$0xff]
                %301 = vst [vmem:[%s149 + $0x258] sm:$0xff] %v300
                %v302 = vld [vmem:[%s148 + $0x920] sm:$0xff]
                %303 = vst [vmem:[%s149 + $0x260] sm:$0xff] %v302
                %v304 = vld [vmem:[%s148 + $0x928] sm:$0xff]
                %305 = vst [vmem:[%s149 + $0x268] sm:$0xff] %v304
                %v306 = vld [vmem:[%s148 + $0x930] sm:$0xff]
                %307 = vst [vmem:[%s149 + $0x270] sm:$0xff] %v306
                %v308 = vld [vmem:[%s148 + $0x938] sm:$0xff]
                %309 = vst [vmem:[%s149 + $0x278] sm:$0xff] %v308
                %v310 = vld [vmem:[%s148 + $0xa00] sm:$0xff]
                %311 = vst [vmem:[%s149 + $0x280] sm:$0xff] %v310
                %v312 = vld [vmem:[%s148 + $0xa08] sm:$0xff]
                %313 = vst [vmem:[%s149 + $0x288] sm:$0xff] %v312
                %v314 = vld [vmem:[%s148 + $0xa10] sm:$0xff]
                %315 = vst [vmem:[%s149 + $0x290] sm:$0xff] %v314
                %v316 = vld [vmem:[%s148 + $0xa18] sm:$0xff]
                %317 = vst [vmem:[%s149 + $0x298] sm:$0xff] %v316
                %v318 = vld [vmem:[%s148 + $0xa20] sm:$0xff]
                %319 = vst [vmem:[%s149 + $0x2a0] sm:$0xff] %v318
                %v320 = vld [vmem:[%s148 + $0xa28] sm:$0xff]
                %321 = vst [vmem:[%s149 + $0x2a8] sm:$0xff] %v320
                %v322 = vld [vmem:[%s148 + $0xa30] sm:$0xff]
                %323 = vst [vmem:[%s149 + $0x2b0] sm:$0xff] %v322
                %v324 = vld [vmem:[%s148 + $0xa38] sm:$0xff]
                %325 = vst [vmem:[%s149 + $0x2b8] sm:$0xff] %v324
                %v326 = vld [vmem:[%s148 + $0xb00] sm:$0xff]
                %327 = vst [vmem:[%s149 + $0x2c0] sm:$0xff] %v326
                %v328 = vld [vmem:[%s148 + $0xb08] sm:$0xff]
                %329 = vst [vmem:[%s149 + $0x2c8] sm:$0xff] %v328
                %v330 = vld [vmem:[%s148 + $0xb10] sm:$0xff]
                %331 = vst [vmem:[%s149 + $0x2d0] sm:$0xff] %v330
                %v332 = vld [vmem:[%s148 + $0xb18] sm:$0xff]
                %333 = vst [vmem:[%s149 + $0x2d8] sm:$0xff] %v332
                %v334 = vld [vmem:[%s148 + $0xb20] sm:$0xff]
                %335 = vst [vmem:[%s149 + $0x2e0] sm:$0xff] %v334
                %v336 = vld [vmem:[%s148 + $0xb28] sm:$0xff]
                %337 = vst [vmem:[%s149 + $0x2e8] sm:$0xff] %v336
                %v338 = vld [vmem:[%s148 + $0xb30] sm:$0xff]
                %339 = vst [vmem:[%s149 + $0x2f0] sm:$0xff] %v338
                %v340 = vld [vmem:[%s148 + $0xb38] sm:$0xff]
                %341 = vst [vmem:[%s149 + $0x2f8] sm:$0xff] %v340
                %v342 = vld [vmem:[%s148 + $0xc00] sm:$0xff]
                %343 = vst [vmem:[%s149 + $0x300] sm:$0xff] %v342
                %v344 = vld [vmem:[%s148 + $0xc08] sm:$0xff]
                %345 = vst [vmem:[%s149 + $0x308] sm:$0xff] %v344
                %v346 = vld [vmem:[%s148 + $0xc10] sm:$0xff]
                %347 = vst [vmem:[%s149 + $0x310] sm:$0xff] %v346
                %v348 = vld [vmem:[%s148 + $0xc18] sm:$0xff]
                %349 = vst [vmem:[%s149 + $0x318] sm:$0xff] %v348
                %v350 = vld [vmem:[%s148 + $0xc20] sm:$0xff]
                %351 = vst [vmem:[%s149 + $0x320] sm:$0xff] %v350
                %v352 = vld [vmem:[%s148 + $0xc28] sm:$0xff]
                %353 = vst [vmem:[%s149 + $0x328] sm:$0xff] %v352
                %v354 = vld [vmem:[%s148 + $0xc30] sm:$0xff]
                %355 = vst [vmem:[%s149 + $0x330] sm:$0xff] %v354
                %v356 = vld [vmem:[%s148 + $0xc38] sm:$0xff]
                %357 = vst [vmem:[%s149 + $0x338] sm:$0xff] %v356
                %v358 = vld [vmem:[%s148 + $0xd00] sm:$0xff]
                %359 = vst [vmem:[%s149 + $0x340] sm:$0xff] %v358
                %v360 = vld [vmem:[%s148 + $0xd08] sm:$0xff]
                %361 = vst [vmem:[%s149 + $0x348] sm:$0xff] %v360
                %v362 = vld [vmem:[%s148 + $0xd10] sm:$0xff]
                %363 = vst [vmem:[%s149 + $0x350] sm:$0xff] %v362
                %v364 = vld [vmem:[%s148 + $0xd18] sm:$0xff]
                %365 = vst [vmem:[%s149 + $0x358] sm:$0xff] %v364
                %v366 = vld [vmem:[%s148 + $0xd20] sm:$0xff]
                %367 = vst [vmem:[%s149 + $0x360] sm:$0xff] %v366
                %v368 = vld [vmem:[%s148 + $0xd28] sm:$0xff]
                %369 = vst [vmem:[%s149 + $0x368] sm:$0xff] %v368
                %v370 = vld [vmem:[%s148 + $0xd30] sm:$0xff]
                %371 = vst [vmem:[%s149 + $0x370] sm:$0xff] %v370
                %v372 = vld [vmem:[%s148 + $0xd38] sm:$0xff]
                %373 = vst [vmem:[%s149 + $0x378] sm:$0xff] %v372
                %v374 = vld [vmem:[%s148 + $0xe00] sm:$0xff]
                %375 = vst [vmem:[%s149 + $0x380] sm:$0xff] %v374
                %v376 = vld [vmem:[%s148 + $0xe08] sm:$0xff]
                %377 = vst [vmem:[%s149 + $0x388] sm:$0xff] %v376
                %v378 = vld [vmem:[%s148 + $0xe10] sm:$0xff]
                %379 = vst [vmem:[%s149 + $0x390] sm:$0xff] %v378
                %v380 = vld [vmem:[%s148 + $0xe18] sm:$0xff]
                %381 = vst [vmem:[%s149 + $0x398] sm:$0xff] %v380
                %v382 = vld [vmem:[%s148 + $0xe20] sm:$0xff]
                %383 = vst [vmem:[%s149 + $0x3a0] sm:$0xff] %v382
                %v384 = vld [vmem:[%s148 + $0xe28] sm:$0xff]
                %385 = vst [vmem:[%s149 + $0x3a8] sm:$0xff] %v384
                %v386 = vld [vmem:[%s148 + $0xe30] sm:$0xff]
                %387 = vst [vmem:[%s149 + $0x3b0] sm:$0xff] %v386
                %v388 = vld [vmem:[%s148 + $0xe38] sm:$0xff]
                %389 = vst [vmem:[%s149 + $0x3b8] sm:$0xff] %v388
                %v390 = vld [vmem:[%s148 + $0xf00] sm:$0xff]
                %391 = vst [vmem:[%s149 + $0x3c0] sm:$0xff] %v390
                %v392 = vld [vmem:[%s148 + $0xf08] sm:$0xff]
                %393 = vst [vmem:[%s149 + $0x3c8] sm:$0xff] %v392
                %v394 = vld [vmem:[%s148 + $0xf10] sm:$0xff]
                %395 = vst [vmem:[%s149 + $0x3d0] sm:$0xff] %v394
                %v396 = vld [vmem:[%s148 + $0xf18] sm:$0xff]
                %397 = vst [vmem:[%s149 + $0x3d8] sm:$0xff] %v396
                %v398 = vld [vmem:[%s148 + $0xf20] sm:$0xff]
                %399 = vst [vmem:[%s149 + $0x3e0] sm:$0xff] %v398
                %v400 = vld [vmem:[%s148 + $0xf28] sm:$0xff]
                %401 = vst [vmem:[%s149 + $0x3e8] sm:$0xff] %v400
                %v402 = vld [vmem:[%s148 + $0xf30] sm:$0xff]
                %403 = vst [vmem:[%s149 + $0x3f0] sm:$0xff] %v402
                %v404 = vld [vmem:[%s148 + $0xf38] sm:$0xff]
                %405 = vst [vmem:[%s149 + $0x3f8] sm:$0xff] %v404
                %v406 = vld [vmem:[%s148 + $0x1000] sm:$0xff]
                %407 = vst [vmem:[%s149 + $0x400] sm:$0xff] %v406
                %v408 = vld [vmem:[%s148 + $0x1008] sm:$0xff]
                %409 = vst [vmem:[%s149 + $0x408] sm:$0xff] %v408
                %v410 = vld [vmem:[%s148 + $0x1010] sm:$0xff]
                %411 = vst [vmem:[%s149 + $0x410] sm:$0xff] %v410
                %v412 = vld [vmem:[%s148 + $0x1018] sm:$0xff]
                %413 = vst [vmem:[%s149 + $0x418] sm:$0xff] %v412
                %v414 = vld [vmem:[%s148 + $0x1020] sm:$0xff]
                %415 = vst [vmem:[%s149 + $0x420] sm:$0xff] %v414
                %v416 = vld [vmem:[%s148 + $0x1028] sm:$0xff]
                %417 = vst [vmem:[%s149 + $0x428] sm:$0xff] %v416
                %v418 = vld [vmem:[%s148 + $0x1030] sm:$0xff]
                %419 = vst [vmem:[%s149 + $0x430] sm:$0xff] %v418
                %v420 = vld [vmem:[%s148 + $0x1038] sm:$0xff]
                %421 = vst [vmem:[%s149 + $0x438] sm:$0xff] %v420
                %v422 = vld [vmem:[%s148 + $0x1100] sm:$0xff]
                %423 = vst [vmem:[%s149 + $0x440] sm:$0xff] %v422
                %v424 = vld [vmem:[%s148 + $0x1108] sm:$0xff]
                %425 = vst [vmem:[%s149 + $0x448] sm:$0xff] %v424
                %v426 = vld [vmem:[%s148 + $0x1110] sm:$0xff]
                %427 = vst [vmem:[%s149 + $0x450] sm:$0xff] %v426
                %v428 = vld [vmem:[%s148 + $0x1118] sm:$0xff]
                %429 = vst [vmem:[%s149 + $0x458] sm:$0xff] %v428
                %v430 = vld [vmem:[%s148 + $0x1120] sm:$0xff]
                %431 = vst [vmem:[%s149 + $0x460] sm:$0xff] %v430
                %v432 = vld [vmem:[%s148 + $0x1128] sm:$0xff]
                %433 = vst [vmem:[%s149 + $0x468] sm:$0xff] %v432
                %v434 = vld [vmem:[%s148 + $0x1130] sm:$0xff]
                %435 = vst [vmem:[%s149 + $0x470] sm:$0xff] %v434
                %v436 = vld [vmem:[%s148 + $0x1138] sm:$0xff]
                %437 = vst [vmem:[%s149 + $0x478] sm:$0xff] %v436
                %v438 = vld [vmem:[%s148 + $0x1200] sm:$0xff]
                %439 = vst [vmem:[%s149 + $0x480] sm:$0xff] %v438
                %v440 = vld [vmem:[%s148 + $0x1208] sm:$0xff]
                %441 = vst [vmem:[%s149 + $0x488] sm:$0xff] %v440
                %v442 = vld [vmem:[%s148 + $0x1210] sm:$0xff]
                %443 = vst [vmem:[%s149 + $0x490] sm:$0xff] %v442
                %v444 = vld [vmem:[%s148 + $0x1218] sm:$0xff]
                %445 = vst [vmem:[%s149 + $0x498] sm:$0xff] %v444
                %v446 = vld [vmem:[%s148 + $0x1220] sm:$0xff]
                %447 = vst [vmem:[%s149 + $0x4a0] sm:$0xff] %v446
                %v448 = vld [vmem:[%s148 + $0x1228] sm:$0xff]
                %449 = vst [vmem:[%s149 + $0x4a8] sm:$0xff] %v448
                %v450 = vld [vmem:[%s148 + $0x1230] sm:$0xff]
                %451 = vst [vmem:[%s149 + $0x4b0] sm:$0xff] %v450
                %v452 = vld [vmem:[%s148 + $0x1238] sm:$0xff]
                %453 = vst [vmem:[%s149 + $0x4b8] sm:$0xff] %v452
                %v454 = vld [vmem:[%s148 + $0x1300] sm:$0xff]
                %455 = vst [vmem:[%s149 + $0x4c0] sm:$0xff] %v454
                %v456 = vld [vmem:[%s148 + $0x1308] sm:$0xff]
                %457 = vst [vmem:[%s149 + $0x4c8] sm:$0xff] %v456
                %v458 = vld [vmem:[%s148 + $0x1310] sm:$0xff]
                %459 = vst [vmem:[%s149 + $0x4d0] sm:$0xff] %v458
                %v460 = vld [vmem:[%s148 + $0x1318] sm:$0xff]
                %461 = vst [vmem:[%s149 + $0x4d8] sm:$0xff] %v460
                %v462 = vld [vmem:[%s148 + $0x1320] sm:$0xff]
                %463 = vst [vmem:[%s149 + $0x4e0] sm:$0xff] %v462
                %v464 = vld [vmem:[%s148 + $0x1328] sm:$0xff]
                %465 = vst [vmem:[%s149 + $0x4e8] sm:$0xff] %v464
                %v466 = vld [vmem:[%s148 + $0x1330] sm:$0xff]
                %467 = vst [vmem:[%s149 + $0x4f0] sm:$0xff] %v466
                %v468 = vld [vmem:[%s148 + $0x1338] sm:$0xff]
                %469 = vst [vmem:[%s149 + $0x4f8] sm:$0xff] %v468
                %v470 = vld [vmem:[%s148 + $0x1400] sm:$0xff]
                %471 = vst [vmem:[%s149 + $0x500] sm:$0xff] %v470
                %v472 = vld [vmem:[%s148 + $0x1408] sm:$0xff]
                %473 = vst [vmem:[%s149 + $0x508] sm:$0xff] %v472
                %v474 = vld [vmem:[%s148 + $0x1410] sm:$0xff]
                %475 = vst [vmem:[%s149 + $0x510] sm:$0xff] %v474
                %v476 = vld [vmem:[%s148 + $0x1418] sm:$0xff]
                %477 = vst [vmem:[%s149 + $0x518] sm:$0xff] %v476
                %v478 = vld [vmem:[%s148 + $0x1420] sm:$0xff]
                %479 = vst [vmem:[%s149 + $0x520] sm:$0xff] %v478
                %v480 = vld [vmem:[%s148 + $0x1428] sm:$0xff]
                %481 = vst [vmem:[%s149 + $0x528] sm:$0xff] %v480
                %v482 = vld [vmem:[%s148 + $0x1430] sm:$0xff]
                %483 = vst [vmem:[%s149 + $0x530] sm:$0xff] %v482
                %v484 = vld [vmem:[%s148 + $0x1438] sm:$0xff]
                %485 = vst [vmem:[%s149 + $0x538] sm:$0xff] %v484
                %v486 = vld [vmem:[%s148 + $0x1500] sm:$0xff]
                %487 = vst [vmem:[%s149 + $0x540] sm:$0xff] %v486
                %v488 = vld [vmem:[%s148 + $0x1508] sm:$0xff]
                %489 = vst [vmem:[%s149 + $0x548] sm:$0xff] %v488
                %v490 = vld [vmem:[%s148 + $0x1510] sm:$0xff]
                %491 = vst [vmem:[%s149 + $0x550] sm:$0xff] %v490
                %v492 = vld [vmem:[%s148 + $0x1518] sm:$0xff]
                %493 = vst [vmem:[%s149 + $0x558] sm:$0xff] %v492
                %v494 = vld [vmem:[%s148 + $0x1520] sm:$0xff]
                %495 = vst [vmem:[%s149 + $0x560] sm:$0xff] %v494
                %v496 = vld [vmem:[%s148 + $0x1528] sm:$0xff]
                %497 = vst [vmem:[%s149 + $0x568] sm:$0xff] %v496
                %v498 = vld [vmem:[%s148 + $0x1530] sm:$0xff]
                %499 = vst [vmem:[%s149 + $0x570] sm:$0xff] %v498
                %v500 = vld [vmem:[%s148 + $0x1538] sm:$0xff]
                %501 = vst [vmem:[%s149 + $0x578] sm:$0xff] %v500
                %v502 = vld [vmem:[%s148 + $0x1600] sm:$0xff]
                %503 = vst [vmem:[%s149 + $0x580] sm:$0xff] %v502
                %v504 = vld [vmem:[%s148 + $0x1608] sm:$0xff]
                %505 = vst [vmem:[%s149 + $0x588] sm:$0xff] %v504
                %v506 = vld [vmem:[%s148 + $0x1610] sm:$0xff]
                %507 = vst [vmem:[%s149 + $0x590] sm:$0xff] %v506
                %v508 = vld [vmem:[%s148 + $0x1618] sm:$0xff]
                %509 = vst [vmem:[%s149 + $0x598] sm:$0xff] %v508
                %v510 = vld [vmem:[%s148 + $0x1620] sm:$0xff]
                %511 = vst [vmem:[%s149 + $0x5a0] sm:$0xff] %v510
                %v512 = vld [vmem:[%s148 + $0x1628] sm:$0xff]
                %513 = vst [vmem:[%s149 + $0x5a8] sm:$0xff] %v512
                %v514 = vld [vmem:[%s148 + $0x1630] sm:$0xff]
                %515 = vst [vmem:[%s149 + $0x5b0] sm:$0xff] %v514
                %v516 = vld [vmem:[%s148 + $0x1638] sm:$0xff]
                %517 = vst [vmem:[%s149 + $0x5b8] sm:$0xff] %v516
                %v518 = vld [vmem:[%s148 + $0x1700] sm:$0xff]
                %519 = vst [vmem:[%s149 + $0x5c0] sm:$0xff] %v518
                %v520 = vld [vmem:[%s148 + $0x1708] sm:$0xff]
                %521 = vst [vmem:[%s149 + $0x5c8] sm:$0xff] %v520
                %v522 = vld [vmem:[%s148 + $0x1710] sm:$0xff]
                %523 = vst [vmem:[%s149 + $0x5d0] sm:$0xff] %v522
                %v524 = vld [vmem:[%s148 + $0x1718] sm:$0xff]
                %525 = vst [vmem:[%s149 + $0x5d8] sm:$0xff] %v524
                %v526 = vld [vmem:[%s148 + $0x1720] sm:$0xff]
                %527 = vst [vmem:[%s149 + $0x5e0] sm:$0xff] %v526
                %v528 = vld [vmem:[%s148 + $0x1728] sm:$0xff]
                %529 = vst [vmem:[%s149 + $0x5e8] sm:$0xff] %v528
                %v530 = vld [vmem:[%s148 + $0x1730] sm:$0xff]
                %531 = vst [vmem:[%s149 + $0x5f0] sm:$0xff] %v530
                %v532 = vld [vmem:[%s148 + $0x1738] sm:$0xff]
                %533 = vst [vmem:[%s149 + $0x5f8] sm:$0xff] %v532
                %v534 = vld [vmem:[%s148 + $0x1800] sm:$0xff]
                %535 = vst [vmem:[%s149 + $0x600] sm:$0xff] %v534
                %v536 = vld [vmem:[%s148 + $0x1808] sm:$0xff]
                %537 = vst [vmem:[%s149 + $0x608] sm:$0xff] %v536
                %v538 = vld [vmem:[%s148 + $0x1810] sm:$0xff]
                %539 = vst [vmem:[%s149 + $0x610] sm:$0xff] %v538
                %v540 = vld [vmem:[%s148 + $0x1818] sm:$0xff]
                %541 = vst [vmem:[%s149 + $0x618] sm:$0xff] %v540
                %v542 = vld [vmem:[%s148 + $0x1820] sm:$0xff]
                %543 = vst [vmem:[%s149 + $0x620] sm:$0xff] %v542
                %v544 = vld [vmem:[%s148 + $0x1828] sm:$0xff]
                %545 = vst [vmem:[%s149 + $0x628] sm:$0xff] %v544
                %v546 = vld [vmem:[%s148 + $0x1830] sm:$0xff]
                %547 = vst [vmem:[%s149 + $0x630] sm:$0xff] %v546
                %v548 = vld [vmem:[%s148 + $0x1838] sm:$0xff]
                %549 = vst [vmem:[%s149 + $0x638] sm:$0xff] %v548
                %v550 = vld [vmem:[%s148 + $0x1900] sm:$0xff]
                %551 = vst [vmem:[%s149 + $0x640] sm:$0xff] %v550
                %v552 = vld [vmem:[%s148 + $0x1908] sm:$0xff]
                %553 = vst [vmem:[%s149 + $0x648] sm:$0xff] %v552
                %v554 = vld [vmem:[%s148 + $0x1910] sm:$0xff]
                %555 = vst [vmem:[%s149 + $0x650] sm:$0xff] %v554
                %v556 = vld [vmem:[%s148 + $0x1918] sm:$0xff]
                %557 = vst [vmem:[%s149 + $0x658] sm:$0xff] %v556
                %v558 = vld [vmem:[%s148 + $0x1920] sm:$0xff]
                %559 = vst [vmem:[%s149 + $0x660] sm:$0xff] %v558
                %v560 = vld [vmem:[%s148 + $0x1928] sm:$0xff]
                %561 = vst [vmem:[%s149 + $0x668] sm:$0xff] %v560
                %v562 = vld [vmem:[%s148 + $0x1930] sm:$0xff]
                %563 = vst [vmem:[%s149 + $0x670] sm:$0xff] %v562
                %v564 = vld [vmem:[%s148 + $0x1938] sm:$0xff]
                %565 = vst [vmem:[%s149 + $0x678] sm:$0xff] %v564
                %v566 = vld [vmem:[%s148 + $0x1a00] sm:$0xff]
                %567 = vst [vmem:[%s149 + $0x680] sm:$0xff] %v566
                %v568 = vld [vmem:[%s148 + $0x1a08] sm:$0xff]
                %569 = vst [vmem:[%s149 + $0x688] sm:$0xff] %v568
                %v570 = vld [vmem:[%s148 + $0x1a10] sm:$0xff]
                %571 = vst [vmem:[%s149 + $0x690] sm:$0xff] %v570
                %v572 = vld [vmem:[%s148 + $0x1a18] sm:$0xff]
                %573 = vst [vmem:[%s149 + $0x698] sm:$0xff] %v572
                %v574 = vld [vmem:[%s148 + $0x1a20] sm:$0xff]
                %575 = vst [vmem:[%s149 + $0x6a0] sm:$0xff] %v574
                %v576 = vld [vmem:[%s148 + $0x1a28] sm:$0xff]
                %577 = vst [vmem:[%s149 + $0x6a8] sm:$0xff] %v576
                %v578 = vld [vmem:[%s148 + $0x1a30] sm:$0xff]
                %579 = vst [vmem:[%s149 + $0x6b0] sm:$0xff] %v578
                %v580 = vld [vmem:[%s148 + $0x1a38] sm:$0xff]
                %581 = vst [vmem:[%s149 + $0x6b8] sm:$0xff] %v580
                %v582 = vld [vmem:[%s148 + $0x1b00] sm:$0xff]
                %583 = vst [vmem:[%s149 + $0x6c0] sm:$0xff] %v582
                %v584 = vld [vmem:[%s148 + $0x1b08] sm:$0xff]
                %585 = vst [vmem:[%s149 + $0x6c8] sm:$0xff] %v584
                %v586 = vld [vmem:[%s148 + $0x1b10] sm:$0xff]
                %587 = vst [vmem:[%s149 + $0x6d0] sm:$0xff] %v586
                %v588 = vld [vmem:[%s148 + $0x1b18] sm:$0xff]
                %589 = vst [vmem:[%s149 + $0x6d8] sm:$0xff] %v588
                %v590 = vld [vmem:[%s148 + $0x1b20] sm:$0xff]
                %591 = vst [vmem:[%s149 + $0x6e0] sm:$0xff] %v590
                %v592 = vld [vmem:[%s148 + $0x1b28] sm:$0xff]
                %593 = vst [vmem:[%s149 + $0x6e8] sm:$0xff] %v592
                %v594 = vld [vmem:[%s148 + $0x1b30] sm:$0xff]
                %595 = vst [vmem:[%s149 + $0x6f0] sm:$0xff] %v594
                %v596 = vld [vmem:[%s148 + $0x1b38] sm:$0xff]
                %597 = vst [vmem:[%s149 + $0x6f8] sm:$0xff] %v596
                %v598 = vld [vmem:[%s148 + $0x1c00] sm:$0xff]
                %599 = vst [vmem:[%s149 + $0x700] sm:$0xff] %v598
                %v600 = vld [vmem:[%s148 + $0x1c08] sm:$0xff]
                %601 = vst [vmem:[%s149 + $0x708] sm:$0xff] %v600
                %v602 = vld [vmem:[%s148 + $0x1c10] sm:$0xff]
                %603 = vst [vmem:[%s149 + $0x710] sm:$0xff] %v602
                %v604 = vld [vmem:[%s148 + $0x1c18] sm:$0xff]
                %605 = vst [vmem:[%s149 + $0x718] sm:$0xff] %v604
                %v606 = vld [vmem:[%s148 + $0x1c20] sm:$0xff]
                %607 = vst [vmem:[%s149 + $0x720] sm:$0xff] %v606
                %v608 = vld [vmem:[%s148 + $0x1c28] sm:$0xff]
                %609 = vst [vmem:[%s149 + $0x728] sm:$0xff] %v608
                %v610 = vld [vmem:[%s148 + $0x1c30] sm:$0xff]
                %611 = vst [vmem:[%s149 + $0x730] sm:$0xff] %v610
                %v612 = vld [vmem:[%s148 + $0x1c38] sm:$0xff]
                %613 = vst [vmem:[%s149 + $0x738] sm:$0xff] %v612
                %v614 = vld [vmem:[%s148 + $0x1d00] sm:$0xff]
                %615 = vst [vmem:[%s149 + $0x740] sm:$0xff] %v614
                %v616 = vld [vmem:[%s148 + $0x1d08] sm:$0xff]
                %617 = vst [vmem:[%s149 + $0x748] sm:$0xff] %v616
                %v618 = vld [vmem:[%s148 + $0x1d10] sm:$0xff]
                %619 = vst [vmem:[%s149 + $0x750] sm:$0xff] %v618
                %v620 = vld [vmem:[%s148 + $0x1d18] sm:$0xff]
                %621 = vst [vmem:[%s149 + $0x758] sm:$0xff] %v620
                %v622 = vld [vmem:[%s148 + $0x1d20] sm:$0xff]
                %623 = vst [vmem:[%s149 + $0x760] sm:$0xff] %v622
                %v624 = vld [vmem:[%s148 + $0x1d28] sm:$0xff]
                %625 = vst [vmem:[%s149 + $0x768] sm:$0xff] %v624
                %v626 = vld [vmem:[%s148 + $0x1d30] sm:$0xff]
                %627 = vst [vmem:[%s149 + $0x770] sm:$0xff] %v626
                %v628 = vld [vmem:[%s148 + $0x1d38] sm:$0xff]
                %629 = vst [vmem:[%s149 + $0x778] sm:$0xff] %v628
                %v630 = vld [vmem:[%s148 + $0x1e00] sm:$0xff]
                %631 = vst [vmem:[%s149 + $0x780] sm:$0xff] %v630
                %v632 = vld [vmem:[%s148 + $0x1e08] sm:$0xff]
                %633 = vst [vmem:[%s149 + $0x788] sm:$0xff] %v632
                %v634 = vld [vmem:[%s148 + $0x1e10] sm:$0xff]
                %635 = vst [vmem:[%s149 + $0x790] sm:$0xff] %v634
                %v636 = vld [vmem:[%s148 + $0x1e18] sm:$0xff]
                %637 = vst [vmem:[%s149 + $0x798] sm:$0xff] %v636
                %v638 = vld [vmem:[%s148 + $0x1e20] sm:$0xff]
                %639 = vst [vmem:[%s149 + $0x7a0] sm:$0xff] %v638
                %v640 = vld [vmem:[%s148 + $0x1e28] sm:$0xff]
                %641 = vst [vmem:[%s149 + $0x7a8] sm:$0xff] %v640
                %v642 = vld [vmem:[%s148 + $0x1e30] sm:$0xff]
                %643 = vst [vmem:[%s149 + $0x7b0] sm:$0xff] %v642
                %v644 = vld [vmem:[%s148 + $0x1e38] sm:$0xff]
                %645 = vst [vmem:[%s149 + $0x7b8] sm:$0xff] %v644
                %v646 = vld [vmem:[%s148 + $0x1f00] sm:$0xff]
                %647 = vst [vmem:[%s149 + $0x7c0] sm:$0xff] %v646
                %v648 = vld [vmem:[%s148 + $0x1f08] sm:$0xff]
                %649 = vst [vmem:[%s149 + $0x7c8] sm:$0xff] %v648
                %v650 = vld [vmem:[%s148 + $0x1f10] sm:$0xff]
                %651 = vst [vmem:[%s149 + $0x7d0] sm:$0xff] %v650
                %v652 = vld [vmem:[%s148 + $0x1f18] sm:$0xff]
                %653 = vst [vmem:[%s149 + $0x7d8] sm:$0xff] %v652
                %v654 = vld [vmem:[%s148 + $0x1f20] sm:$0xff]
                %655 = vst [vmem:[%s149 + $0x7e0] sm:$0xff] %v654
                %v656 = vld [vmem:[%s148 + $0x1f28] sm:$0xff]
                %657 = vst [vmem:[%s149 + $0x7e8] sm:$0xff] %v656
                %v658 = vld [vmem:[%s148 + $0x1f30] sm:$0xff]
                %659 = vst [vmem:[%s149 + $0x7f0] sm:$0xff] %v658
                %v660 = vld [vmem:[%s148 + $0x1f38] sm:$0xff]
                %661 = vst [vmem:[%s149 + $0x7f8] sm:$0xff] %v660
                %v662 = vld [vmem:[%s148 + $0x2000] sm:$0xff]
                %663 = vst [vmem:[%s149 + $0x800] sm:$0xff] %v662
                %v664 = vld [vmem:[%s148 + $0x2008] sm:$0xff]
                %665 = vst [vmem:[%s149 + $0x808] sm:$0xff] %v664
                %v666 = vld [vmem:[%s148 + $0x2010] sm:$0xff]
                %667 = vst [vmem:[%s149 + $0x810] sm:$0xff] %v666
                %v668 = vld [vmem:[%s148 + $0x2018] sm:$0xff]
                %669 = vst [vmem:[%s149 + $0x818] sm:$0xff] %v668
                %v670 = vld [vmem:[%s148 + $0x2020] sm:$0xff]
                %671 = vst [vmem:[%s149 + $0x820] sm:$0xff] %v670
                %v672 = vld [vmem:[%s148 + $0x2028] sm:$0xff]
                %673 = vst [vmem:[%s149 + $0x828] sm:$0xff] %v672
                %v674 = vld [vmem:[%s148 + $0x2030] sm:$0xff]
                %675 = vst [vmem:[%s149 + $0x830] sm:$0xff] %v674
                %v676 = vld [vmem:[%s148 + $0x2038] sm:$0xff]
                %677 = vst [vmem:[%s149 + $0x838] sm:$0xff] %v676
                %v678 = vld [vmem:[%s148 + $0x2100] sm:$0xff]
                %679 = vst [vmem:[%s149 + $0x840] sm:$0xff] %v678
                %v680 = vld [vmem:[%s148 + $0x2108] sm:$0xff]
                %681 = vst [vmem:[%s149 + $0x848] sm:$0xff] %v680
                %v682 = vld [vmem:[%s148 + $0x2110] sm:$0xff]
                %683 = vst [vmem:[%s149 + $0x850] sm:$0xff] %v682
                %v684 = vld [vmem:[%s148 + $0x2118] sm:$0xff]
                %685 = vst [vmem:[%s149 + $0x858] sm:$0xff] %v684
                %v686 = vld [vmem:[%s148 + $0x2120] sm:$0xff]
                %687 = vst [vmem:[%s149 + $0x860] sm:$0xff] %v686
                %v688 = vld [vmem:[%s148 + $0x2128] sm:$0xff]
                %689 = vst [vmem:[%s149 + $0x868] sm:$0xff] %v688
                %v690 = vld [vmem:[%s148 + $0x2130] sm:$0xff]
                %691 = vst [vmem:[%s149 + $0x870] sm:$0xff] %v690
                %v692 = vld [vmem:[%s148 + $0x2138] sm:$0xff]
                %693 = vst [vmem:[%s149 + $0x878] sm:$0xff] %v692
                %v694 = vld [vmem:[%s148 + $0x2200] sm:$0xff]
                %695 = vst [vmem:[%s149 + $0x880] sm:$0xff] %v694
                %v696 = vld [vmem:[%s148 + $0x2208] sm:$0xff]
                %697 = vst [vmem:[%s149 + $0x888] sm:$0xff] %v696
                %v698 = vld [vmem:[%s148 + $0x2210] sm:$0xff]
                %699 = vst [vmem:[%s149 + $0x890] sm:$0xff] %v698
                %v700 = vld [vmem:[%s148 + $0x2218] sm:$0xff]
                %701 = vst [vmem:[%s149 + $0x898] sm:$0xff] %v700
                %v702 = vld [vmem:[%s148 + $0x2220] sm:$0xff]
                %703 = vst [vmem:[%s149 + $0x8a0] sm:$0xff] %v702
                %v704 = vld [vmem:[%s148 + $0x2228] sm:$0xff]
                %705 = vst [vmem:[%s149 + $0x8a8] sm:$0xff] %v704
                %v706 = vld [vmem:[%s148 + $0x2230] sm:$0xff]
                %707 = vst [vmem:[%s149 + $0x8b0] sm:$0xff] %v706
                %v708 = vld [vmem:[%s148 + $0x2238] sm:$0xff]
                %709 = vst [vmem:[%s149 + $0x8b8] sm:$0xff] %v708
                %v710 = vld [vmem:[%s148 + $0x2300] sm:$0xff]
                %711 = vst [vmem:[%s149 + $0x8c0] sm:$0xff] %v710
                %v712 = vld [vmem:[%s148 + $0x2308] sm:$0xff]
                %713 = vst [vmem:[%s149 + $0x8c8] sm:$0xff] %v712
                %v714 = vld [vmem:[%s148 + $0x2310] sm:$0xff]
                %715 = vst [vmem:[%s149 + $0x8d0] sm:$0xff] %v714
                %v716 = vld [vmem:[%s148 + $0x2318] sm:$0xff]
                %717 = vst [vmem:[%s149 + $0x8d8] sm:$0xff] %v716
                %v718 = vld [vmem:[%s148 + $0x2320] sm:$0xff]
                %719 = vst [vmem:[%s149 + $0x8e0] sm:$0xff] %v718
                %v720 = vld [vmem:[%s148 + $0x2328] sm:$0xff]
                %721 = vst [vmem:[%s149 + $0x8e8] sm:$0xff] %v720
                %v722 = vld [vmem:[%s148 + $0x2330] sm:$0xff]
                %723 = vst [vmem:[%s149 + $0x8f0] sm:$0xff] %v722
                %v724 = vld [vmem:[%s148 + $0x2338] sm:$0xff]
                %725 = vst [vmem:[%s149 + $0x8f8] sm:$0xff] %v724
                %v726 = vld [vmem:[%s148 + $0x2400] sm:$0xff]
                %727 = vst [vmem:[%s149 + $0x900] sm:$0xff] %v726
                %v728 = vld [vmem:[%s148 + $0x2408] sm:$0xff]
                %729 = vst [vmem:[%s149 + $0x908] sm:$0xff] %v728
                %v730 = vld [vmem:[%s148 + $0x2410] sm:$0xff]
                %731 = vst [vmem:[%s149 + $0x910] sm:$0xff] %v730
                %v732 = vld [vmem:[%s148 + $0x2418] sm:$0xff]
                %733 = vst [vmem:[%s149 + $0x918] sm:$0xff] %v732
                %v734 = vld [vmem:[%s148 + $0x2420] sm:$0xff]
                %735 = vst [vmem:[%s149 + $0x920] sm:$0xff] %v734
                %v736 = vld [vmem:[%s148 + $0x2428] sm:$0xff]
                %737 = vst [vmem:[%s149 + $0x928] sm:$0xff] %v736
                %v738 = vld [vmem:[%s148 + $0x2430] sm:$0xff]
                %739 = vst [vmem:[%s149 + $0x930] sm:$0xff] %v738
                %v740 = vld [vmem:[%s148 + $0x2438] sm:$0xff]
                %741 = vst [vmem:[%s149 + $0x938] sm:$0xff] %v740
                %v742 = vld [vmem:[%s148 + $0x2500] sm:$0xff]
                %743 = vst [vmem:[%s149 + $0x940] sm:$0xff] %v742
                %v744 = vld [vmem:[%s148 + $0x2508] sm:$0xff]
                %745 = vst [vmem:[%s149 + $0x948] sm:$0xff] %v744
                %v746 = vld [vmem:[%s148 + $0x2510] sm:$0xff]
                %747 = vst [vmem:[%s149 + $0x950] sm:$0xff] %v746
                %v748 = vld [vmem:[%s148 + $0x2518] sm:$0xff]
                %749 = vst [vmem:[%s149 + $0x958] sm:$0xff] %v748
                %v750 = vld [vmem:[%s148 + $0x2520] sm:$0xff]
                %751 = vst [vmem:[%s149 + $0x960] sm:$0xff] %v750
                %v752 = vld [vmem:[%s148 + $0x2528] sm:$0xff]
                %753 = vst [vmem:[%s149 + $0x968] sm:$0xff] %v752
                %v754 = vld [vmem:[%s148 + $0x2530] sm:$0xff]
                %755 = vst [vmem:[%s149 + $0x970] sm:$0xff] %v754
                %v756 = vld [vmem:[%s148 + $0x2538] sm:$0xff]
                %757 = vst [vmem:[%s149 + $0x978] sm:$0xff] %v756
                %v758 = vld [vmem:[%s148 + $0x2600] sm:$0xff]
                %759 = vst [vmem:[%s149 + $0x980] sm:$0xff] %v758
                %v760 = vld [vmem:[%s148 + $0x2608] sm:$0xff]
                %761 = vst [vmem:[%s149 + $0x988] sm:$0xff] %v760
                %v762 = vld [vmem:[%s148 + $0x2610] sm:$0xff]
                %763 = vst [vmem:[%s149 + $0x990] sm:$0xff] %v762
                %v764 = vld [vmem:[%s148 + $0x2618] sm:$0xff]
                %765 = vst [vmem:[%s149 + $0x998] sm:$0xff] %v764
                %v766 = vld [vmem:[%s148 + $0x2620] sm:$0xff]
                %767 = vst [vmem:[%s149 + $0x9a0] sm:$0xff] %v766
                %v768 = vld [vmem:[%s148 + $0x2628] sm:$0xff]
                %769 = vst [vmem:[%s149 + $0x9a8] sm:$0xff] %v768
                %v770 = vld [vmem:[%s148 + $0x2630] sm:$0xff]
                %771 = vst [vmem:[%s149 + $0x9b0] sm:$0xff] %v770
                %v772 = vld [vmem:[%s148 + $0x2638] sm:$0xff]
                %773 = vst [vmem:[%s149 + $0x9b8] sm:$0xff] %v772
                %v774 = vld [vmem:[%s148 + $0x2700] sm:$0xff]
                %775 = vst [vmem:[%s149 + $0x9c0] sm:$0xff] %v774
                %v776 = vld [vmem:[%s148 + $0x2708] sm:$0xff]
                %777 = vst [vmem:[%s149 + $0x9c8] sm:$0xff] %v776
                %v778 = vld [vmem:[%s148 + $0x2710] sm:$0xff]
                %779 = vst [vmem:[%s149 + $0x9d0] sm:$0xff] %v778
                %v780 = vld [vmem:[%s148 + $0x2718] sm:$0xff]
                %781 = vst [vmem:[%s149 + $0x9d8] sm:$0xff] %v780
                %v782 = vld [vmem:[%s148 + $0x2720] sm:$0xff]
                %783 = vst [vmem:[%s149 + $0x9e0] sm:$0xff] %v782
                %v784 = vld [vmem:[%s148 + $0x2728] sm:$0xff]
                %785 = vst [vmem:[%s149 + $0x9e8] sm:$0xff] %v784
                %v786 = vld [vmem:[%s148 + $0x2730] sm:$0xff]
                %787 = vst [vmem:[%s149 + $0x9f0] sm:$0xff] %v786
                %v788 = vld [vmem:[%s148 + $0x2738] sm:$0xff]
                %789 = vst [vmem:[%s149 + $0x9f8] sm:$0xff] %v788
                %v790 = vld [vmem:[%s148 + $0x2800] sm:$0xff]
                %791 = vst [vmem:[%s149 + $0xa00] sm:$0xff] %v790
                %v792 = vld [vmem:[%s148 + $0x2808] sm:$0xff]
                %793 = vst [vmem:[%s149 + $0xa08] sm:$0xff] %v792
                %v794 = vld [vmem:[%s148 + $0x2810] sm:$0xff]
                %795 = vst [vmem:[%s149 + $0xa10] sm:$0xff] %v794
                %v796 = vld [vmem:[%s148 + $0x2818] sm:$0xff]
                %797 = vst [vmem:[%s149 + $0xa18] sm:$0xff] %v796
                %v798 = vld [vmem:[%s148 + $0x2820] sm:$0xff]
                %799 = vst [vmem:[%s149 + $0xa20] sm:$0xff] %v798
                %v800 = vld [vmem:[%s148 + $0x2828] sm:$0xff]
                %801 = vst [vmem:[%s149 + $0xa28] sm:$0xff] %v800
                %v802 = vld [vmem:[%s148 + $0x2830] sm:$0xff]
                %803 = vst [vmem:[%s149 + $0xa30] sm:$0xff] %v802
                %v804 = vld [vmem:[%s148 + $0x2838] sm:$0xff]
                %805 = vst [vmem:[%s149 + $0xa38] sm:$0xff] %v804
                %v806 = vld [vmem:[%s148 + $0x2900] sm:$0xff]
                %807 = vst [vmem:[%s149 + $0xa40] sm:$0xff] %v806
                %v808 = vld [vmem:[%s148 + $0x2908] sm:$0xff]
                %809 = vst [vmem:[%s149 + $0xa48] sm:$0xff] %v808
                %v810 = vld [vmem:[%s148 + $0x2910] sm:$0xff]
                %811 = vst [vmem:[%s149 + $0xa50] sm:$0xff] %v810
                %v812 = vld [vmem:[%s148 + $0x2918] sm:$0xff]
                %813 = vst [vmem:[%s149 + $0xa58] sm:$0xff] %v812
                %v814 = vld [vmem:[%s148 + $0x2920] sm:$0xff]
                %815 = vst [vmem:[%s149 + $0xa60] sm:$0xff] %v814
                %v816 = vld [vmem:[%s148 + $0x2928] sm:$0xff]
                %817 = vst [vmem:[%s149 + $0xa68] sm:$0xff] %v816
                %v818 = vld [vmem:[%s148 + $0x2930] sm:$0xff]
                %819 = vst [vmem:[%s149 + $0xa70] sm:$0xff] %v818
                %v820 = vld [vmem:[%s148 + $0x2938] sm:$0xff]
                %821 = vst [vmem:[%s149 + $0xa78] sm:$0xff] %v820
                %v822 = vld [vmem:[%s148 + $0x2a00] sm:$0xff]
                %823 = vst [vmem:[%s149 + $0xa80] sm:$0xff] %v822
                %v824 = vld [vmem:[%s148 + $0x2a08] sm:$0xff]
                %825 = vst [vmem:[%s149 + $0xa88] sm:$0xff] %v824
                %v826 = vld [vmem:[%s148 + $0x2a10] sm:$0xff]
                %827 = vst [vmem:[%s149 + $0xa90] sm:$0xff] %v826
                %v828 = vld [vmem:[%s148 + $0x2a18] sm:$0xff]
                %829 = vst [vmem:[%s149 + $0xa98] sm:$0xff] %v828
                %v830 = vld [vmem:[%s148 + $0x2a20] sm:$0xff]
                %831 = vst [vmem:[%s149 + $0xaa0] sm:$0xff] %v830
                %v832 = vld [vmem:[%s148 + $0x2a28] sm:$0xff]
                %833 = vst [vmem:[%s149 + $0xaa8] sm:$0xff] %v832
                %v834 = vld [vmem:[%s148 + $0x2a30] sm:$0xff]
                %835 = vst [vmem:[%s149 + $0xab0] sm:$0xff] %v834
                %v836 = vld [vmem:[%s148 + $0x2a38] sm:$0xff]
                %837 = vst [vmem:[%s149 + $0xab8] sm:$0xff] %v836
                %v838 = vld [vmem:[%s148 + $0x2b00] sm:$0xff]
                %839 = vst [vmem:[%s149 + $0xac0] sm:$0xff] %v838
                %v840 = vld [vmem:[%s148 + $0x2b08] sm:$0xff]
                %841 = vst [vmem:[%s149 + $0xac8] sm:$0xff] %v840
                %v842 = vld [vmem:[%s148 + $0x2b10] sm:$0xff]
                %843 = vst [vmem:[%s149 + $0xad0] sm:$0xff] %v842
                %v844 = vld [vmem:[%s148 + $0x2b18] sm:$0xff]
                %845 = vst [vmem:[%s149 + $0xad8] sm:$0xff] %v844
                %v846 = vld [vmem:[%s148 + $0x2b20] sm:$0xff]
                %847 = vst [vmem:[%s149 + $0xae0] sm:$0xff] %v846
                %v848 = vld [vmem:[%s148 + $0x2b28] sm:$0xff]
                %849 = vst [vmem:[%s149 + $0xae8] sm:$0xff] %v848
                %v850 = vld [vmem:[%s148 + $0x2b30] sm:$0xff]
                %851 = vst [vmem:[%s149 + $0xaf0] sm:$0xff] %v850
                %v852 = vld [vmem:[%s148 + $0x2b38] sm:$0xff]
                %853 = vst [vmem:[%s149 + $0xaf8] sm:$0xff] %v852
                %v854 = vld [vmem:[%s148 + $0x2c00] sm:$0xff]
                %855 = vst [vmem:[%s149 + $0xb00] sm:$0xff] %v854
                %v856 = vld [vmem:[%s148 + $0x2c08] sm:$0xff]
                %857 = vst [vmem:[%s149 + $0xb08] sm:$0xff] %v856
                %v858 = vld [vmem:[%s148 + $0x2c10] sm:$0xff]
                %859 = vst [vmem:[%s149 + $0xb10] sm:$0xff] %v858
                %v860 = vld [vmem:[%s148 + $0x2c18] sm:$0xff]
                %861 = vst [vmem:[%s149 + $0xb18] sm:$0xff] %v860
                %v862 = vld [vmem:[%s148 + $0x2c20] sm:$0xff]
                %863 = vst [vmem:[%s149 + $0xb20] sm:$0xff] %v862
                %v864 = vld [vmem:[%s148 + $0x2c28] sm:$0xff]
                %865 = vst [vmem:[%s149 + $0xb28] sm:$0xff] %v864
                %v866 = vld [vmem:[%s148 + $0x2c30] sm:$0xff]
                %867 = vst [vmem:[%s149 + $0xb30] sm:$0xff] %v866
                %v868 = vld [vmem:[%s148 + $0x2c38] sm:$0xff]
                %869 = vst [vmem:[%s149 + $0xb38] sm:$0xff] %v868
                %v870 = vld [vmem:[%s148 + $0x2d00] sm:$0xff]
                %871 = vst [vmem:[%s149 + $0xb40] sm:$0xff] %v870
                %v872 = vld [vmem:[%s148 + $0x2d08] sm:$0xff]
                %873 = vst [vmem:[%s149 + $0xb48] sm:$0xff] %v872
                %v874 = vld [vmem:[%s148 + $0x2d10] sm:$0xff]
                %875 = vst [vmem:[%s149 + $0xb50] sm:$0xff] %v874
                %v876 = vld [vmem:[%s148 + $0x2d18] sm:$0xff]
                %877 = vst [vmem:[%s149 + $0xb58] sm:$0xff] %v876
                %v878 = vld [vmem:[%s148 + $0x2d20] sm:$0xff]
                %879 = vst [vmem:[%s149 + $0xb60] sm:$0xff] %v878
                %v880 = vld [vmem:[%s148 + $0x2d28] sm:$0xff]
                %881 = vst [vmem:[%s149 + $0xb68] sm:$0xff] %v880
                %v882 = vld [vmem:[%s148 + $0x2d30] sm:$0xff]
                %883 = vst [vmem:[%s149 + $0xb70] sm:$0xff] %v882
                %v884 = vld [vmem:[%s148 + $0x2d38] sm:$0xff]
                %885 = vst [vmem:[%s149 + $0xb78] sm:$0xff] %v884
                %v886 = vld [vmem:[%s148 + $0x2e00] sm:$0xff]
                %887 = vst [vmem:[%s149 + $0xb80] sm:$0xff] %v886
                %v888 = vld [vmem:[%s148 + $0x2e08] sm:$0xff]
                %889 = vst [vmem:[%s149 + $0xb88] sm:$0xff] %v888
                %v890 = vld [vmem:[%s148 + $0x2e10] sm:$0xff]
                %891 = vst [vmem:[%s149 + $0xb90] sm:$0xff] %v890
                %v892 = vld [vmem:[%s148 + $0x2e18] sm:$0xff]
                %893 = vst [vmem:[%s149 + $0xb98] sm:$0xff] %v892
                %v894 = vld [vmem:[%s148 + $0x2e20] sm:$0xff]
                %895 = vst [vmem:[%s149 + $0xba0] sm:$0xff] %v894
                %v896 = vld [vmem:[%s148 + $0x2e28] sm:$0xff]
                %897 = vst [vmem:[%s149 + $0xba8] sm:$0xff] %v896
                %v898 = vld [vmem:[%s148 + $0x2e30] sm:$0xff]
                %899 = vst [vmem:[%s149 + $0xbb0] sm:$0xff] %v898
                %v900 = vld [vmem:[%s148 + $0x2e38] sm:$0xff]
                %901 = vst [vmem:[%s149 + $0xbb8] sm:$0xff] %v900
                %v902 = vld [vmem:[%s148 + $0x2f00] sm:$0xff]
                %903 = vst [vmem:[%s149 + $0xbc0] sm:$0xff] %v902
                %v904 = vld [vmem:[%s148 + $0x2f08] sm:$0xff]
                %905 = vst [vmem:[%s149 + $0xbc8] sm:$0xff] %v904
                %v906 = vld [vmem:[%s148 + $0x2f10] sm:$0xff]
                %907 = vst [vmem:[%s149 + $0xbd0] sm:$0xff] %v906
                %v908 = vld [vmem:[%s148 + $0x2f18] sm:$0xff]
                %909 = vst [vmem:[%s149 + $0xbd8] sm:$0xff] %v908
                %v910 = vld [vmem:[%s148 + $0x2f20] sm:$0xff]
                %911 = vst [vmem:[%s149 + $0xbe0] sm:$0xff] %v910
                %v912 = vld [vmem:[%s148 + $0x2f28] sm:$0xff]
                %913 = vst [vmem:[%s149 + $0xbe8] sm:$0xff] %v912
                %v914 = vld [vmem:[%s148 + $0x2f30] sm:$0xff]
                %915 = vst [vmem:[%s149 + $0xbf0] sm:$0xff] %v914
                %v916 = vld [vmem:[%s148 + $0x2f38] sm:$0xff]
                %917 = vst [vmem:[%s149 + $0xbf8] sm:$0xff] %v916
                %v918 = vld [vmem:[%s148 + $0x3000] sm:$0xff]
                %919 = vst [vmem:[%s149 + $0xc00] sm:$0xff] %v918
                %v920 = vld [vmem:[%s148 + $0x3008] sm:$0xff]
                %921 = vst [vmem:[%s149 + $0xc08] sm:$0xff] %v920
                %v922 = vld [vmem:[%s148 + $0x3010] sm:$0xff]
                %923 = vst [vmem:[%s149 + $0xc10] sm:$0xff] %v922
                %v924 = vld [vmem:[%s148 + $0x3018] sm:$0xff]
                %925 = vst [vmem:[%s149 + $0xc18] sm:$0xff] %v924
                %v926 = vld [vmem:[%s148 + $0x3020] sm:$0xff]
                %927 = vst [vmem:[%s149 + $0xc20] sm:$0xff] %v926
                %v928 = vld [vmem:[%s148 + $0x3028] sm:$0xff]
                %929 = vst [vmem:[%s149 + $0xc28] sm:$0xff] %v928
                %v930 = vld [vmem:[%s148 + $0x3030] sm:$0xff]
                %931 = vst [vmem:[%s149 + $0xc30] sm:$0xff] %v930
                %v932 = vld [vmem:[%s148 + $0x3038] sm:$0xff]
                %933 = vst [vmem:[%s149 + $0xc38] sm:$0xff] %v932
                %v934 = vld [vmem:[%s148 + $0x3100] sm:$0xff]
                %935 = vst [vmem:[%s149 + $0xc40] sm:$0xff] %v934
                %v936 = vld [vmem:[%s148 + $0x3108] sm:$0xff]
                %937 = vst [vmem:[%s149 + $0xc48] sm:$0xff] %v936
                %v938 = vld [vmem:[%s148 + $0x3110] sm:$0xff]
                %939 = vst [vmem:[%s149 + $0xc50] sm:$0xff] %v938
                %v940 = vld [vmem:[%s148 + $0x3118] sm:$0xff]
                %941 = vst [vmem:[%s149 + $0xc58] sm:$0xff] %v940
                %v942 = vld [vmem:[%s148 + $0x3120] sm:$0xff]
                %943 = vst [vmem:[%s149 + $0xc60] sm:$0xff] %v942
                %v944 = vld [vmem:[%s148 + $0x3128] sm:$0xff]
                %945 = vst [vmem:[%s149 + $0xc68] sm:$0xff] %v944
                %v946 = vld [vmem:[%s148 + $0x3130] sm:$0xff]
                %947 = vst [vmem:[%s149 + $0xc70] sm:$0xff] %v946
                %v948 = vld [vmem:[%s148 + $0x3138] sm:$0xff]
                %949 = vst [vmem:[%s149 + $0xc78] sm:$0xff] %v948
                %v950 = vld [vmem:[%s148 + $0x3200] sm:$0xff]
                %951 = vst [vmem:[%s149 + $0xc80] sm:$0xff] %v950
                %v952 = vld [vmem:[%s148 + $0x3208] sm:$0xff]
                %953 = vst [vmem:[%s149 + $0xc88] sm:$0xff] %v952
                %v954 = vld [vmem:[%s148 + $0x3210] sm:$0xff]
                %955 = vst [vmem:[%s149 + $0xc90] sm:$0xff] %v954
                %v956 = vld [vmem:[%s148 + $0x3218] sm:$0xff]
                %957 = vst [vmem:[%s149 + $0xc98] sm:$0xff] %v956
                %v958 = vld [vmem:[%s148 + $0x3220] sm:$0xff]
                %959 = vst [vmem:[%s149 + $0xca0] sm:$0xff] %v958
                %v960 = vld [vmem:[%s148 + $0x3228] sm:$0xff]
                %961 = vst [vmem:[%s149 + $0xca8] sm:$0xff] %v960
                %v962 = vld [vmem:[%s148 + $0x3230] sm:$0xff]
                %963 = vst [vmem:[%s149 + $0xcb0] sm:$0xff] %v962
                %v964 = vld [vmem:[%s148 + $0x3238] sm:$0xff]
                %965 = vst [vmem:[%s149 + $0xcb8] sm:$0xff] %v964
                %v966 = vld [vmem:[%s148 + $0x3300] sm:$0xff]
                %967 = vst [vmem:[%s149 + $0xcc0] sm:$0xff] %v966
                %v968 = vld [vmem:[%s148 + $0x3308] sm:$0xff]
                %969 = vst [vmem:[%s149 + $0xcc8] sm:$0xff] %v968
                %v970 = vld [vmem:[%s148 + $0x3310] sm:$0xff]
                %971 = vst [vmem:[%s149 + $0xcd0] sm:$0xff] %v970
                %v972 = vld [vmem:[%s148 + $0x3318] sm:$0xff]
                %973 = vst [vmem:[%s149 + $0xcd8] sm:$0xff] %v972
                %v974 = vld [vmem:[%s148 + $0x3320] sm:$0xff]
                %975 = vst [vmem:[%s149 + $0xce0] sm:$0xff] %v974
                %v976 = vld [vmem:[%s148 + $0x3328] sm:$0xff]
                %977 = vst [vmem:[%s149 + $0xce8] sm:$0xff] %v976
                %v978 = vld [vmem:[%s148 + $0x3330] sm:$0xff]
                %979 = vst [vmem:[%s149 + $0xcf0] sm:$0xff] %v978
                %v980 = vld [vmem:[%s148 + $0x3338] sm:$0xff]
                %981 = vst [vmem:[%s149 + $0xcf8] sm:$0xff] %v980
                %v982 = vld [vmem:[%s148 + $0x3400] sm:$0xff]
                %983 = vst [vmem:[%s149 + $0xd00] sm:$0xff] %v982
                %v984 = vld [vmem:[%s148 + $0x3408] sm:$0xff]
                %985 = vst [vmem:[%s149 + $0xd08] sm:$0xff] %v984
                %v986 = vld [vmem:[%s148 + $0x3410] sm:$0xff]
                %987 = vst [vmem:[%s149 + $0xd10] sm:$0xff] %v986
                %v988 = vld [vmem:[%s148 + $0x3418] sm:$0xff]
                %989 = vst [vmem:[%s149 + $0xd18] sm:$0xff] %v988
                %v990 = vld [vmem:[%s148 + $0x3420] sm:$0xff]
                %991 = vst [vmem:[%s149 + $0xd20] sm:$0xff] %v990
                %v992 = vld [vmem:[%s148 + $0x3428] sm:$0xff]
                %993 = vst [vmem:[%s149 + $0xd28] sm:$0xff] %v992
                %v994 = vld [vmem:[%s148 + $0x3430] sm:$0xff]
                %995 = vst [vmem:[%s149 + $0xd30] sm:$0xff] %v994
                %v996 = vld [vmem:[%s148 + $0x3438] sm:$0xff]
                %997 = vst [vmem:[%s149 + $0xd38] sm:$0xff] %v996
                %v998 = vld [vmem:[%s148 + $0x3500] sm:$0xff]
                %999 = vst [vmem:[%s149 + $0xd40] sm:$0xff] %v998
                %v1000 = vld [vmem:[%s148 + $0x3508] sm:$0xff]
                %1001 = vst [vmem:[%s149 + $0xd48] sm:$0xff] %v1000
                %v1002 = vld [vmem:[%s148 + $0x3510] sm:$0xff]
                %1003 = vst [vmem:[%s149 + $0xd50] sm:$0xff] %v1002
                %v1004 = vld [vmem:[%s148 + $0x3518] sm:$0xff]
                %1005 = vst [vmem:[%s149 + $0xd58] sm:$0xff] %v1004
                %v1006 = vld [vmem:[%s148 + $0x3520] sm:$0xff]
                %1007 = vst [vmem:[%s149 + $0xd60] sm:$0xff] %v1006
                %v1008 = vld [vmem:[%s148 + $0x3528] sm:$0xff]
                %1009 = vst [vmem:[%s149 + $0xd68] sm:$0xff] %v1008
                %v1010 = vld [vmem:[%s148 + $0x3530] sm:$0xff]
                %1011 = vst [vmem:[%s149 + $0xd70] sm:$0xff] %v1010
                %v1012 = vld [vmem:[%s148 + $0x3538] sm:$0xff]
                %1013 = vst [vmem:[%s149 + $0xd78] sm:$0xff] %v1012
              $region41: #{forward.17} parent=35 // loop_footer
                %s147 = sadd.s32 1, %s143
              $region42: #{forward.17} parent=35 // loop_footer_branch
                %142 = sbr.rel target = $region38
              $region43: #{forward.17} parent=35 // loop_exit
                _
            $region36: #{forward.17} parent=31 // pred_fallthru
              _
            // Predicated region
            $region44: #{forward.17} parent=31 // pred_check
              _
            $region45: #{forward.17} parent=31 // pred_check_branch
              %1015 = sbr.rel target = $region47
            $region46: #{forward.17} parent=31 // pred_region
              _
            $region47: #{forward.17} parent=31 // pred_fallthru
              _
          $region32: #{forward.17} parent=27 // pred_fallthru
            _
          %1016 = vnop
        $region28: #{forward.17} parent=23 // pred_fallthru
          _
      $region24: #{forward.17} parent=5 // pred_fallthru
        _
      %p1017 = scmp.le.s32.totalorder 1, %s9
      %p1018 = scmp.lt.s32.totalorder %s9, 5
      %p1019 = pnand %p1017, %p1018
      %p1020 = pneg %p1019
      // Predicated region
      $region48: #{forward.17} parent=5 // pred_check
        _
      $region49: #{forward.17} parent=5 // pred_check_branch
        %1022 = sbr.rel (%p1019) target = $region51
      $region50: #{forward.17} parent=5 // pred_region
        %s1023 = ssub.s32 %s9, 1
        %s1024 = sand.u32 %s43, 1
        %s1025 = sand.u32 %s43, 1
        %s1026 = smul.addr %s1025, 3456
        %s1027 = scalar_lea.vmem [#allocation2], %s1026
        // Predicated region
        $region52: #{forward.17} parent=50 // pred_check
          %p1028 = pneg %p56
        $region53: #{forward.17} parent=50 // pred_check_branch
          %1030 = sbr.rel (%p1028) target = $region55
        $region54: #{forward.17} parent=50 // pred_region
          _
        $region55: #{forward.17} parent=50 // pred_fallthru
          _
        %p1031 = pneg %p30
        %p1032 = pneg %p27
        %s1033 = sand.u32 %s43, 1
        %s1034 = sand.u32 %s43, 1
        %s1035 = smul.addr %s1034, 3456
        %s1036 = scalar_lea.vmem [#allocation2], %s1035
        %p1037 = pneg %p56
        %p1038 = pneg %p53
        %p1039 = pneg %p77
        %p1040 = pneg %p74
        %p1041 = pneg %p103
        %p1042 = pneg %p100
        %s1043 = smul.u32 16, %s14
        %p1044 = scmp.lt.s32.totalorder %s1043, 63
        %s1045 = scalar_select %p1044, %s1043, 63
        %s1046 = smul.addr %s1045, 2
        %s1047 = scalar_lea.vmem %s3, %s1046
        %s1048 = smul.u32 16, %s14
        %s1049 = smul.u32 16, %s14
        %p1050 = scmp.lt.s32.totalorder %s1049, 63
        %s1051 = scalar_select %p1050, %s1049, 63
        %s1052 = smul.addr %s1051, 2
        %s1053 = scalar_lea.vmem %s3, %s1052
        %s1054 = smul.u32 16, %s14
        %v1056 = vld [vmem:[%s0] sm:$0xf]
        %v1057 = vld [vmem:[%s1027] sm:$0xff]
        %v1058 = vld [vmem:[%s1027 + $0x8] sm:$0xff]
        %v1059 = vld [vmem:[%s1027 + $0x10] sm:$0xff]
        %v1060 = vld [vmem:[%s1027 + $0x18] sm:$0xff]
        %v1061 = vld [vmem:[%s1027 + $0x20] sm:$0xff]
        %v1062 = vld [vmem:[%s1027 + $0x28] sm:$0xff]
        %v1063 = vld [vmem:[%s1027 + $0x30] sm:$0xff]
        %v1064 = vld [vmem:[%s1027 + $0x38] sm:$0xff]
        %v1065 = vld [vmem:[%s1027 + $0x40] sm:$0xff]
        %v1066 = vld [vmem:[%s1027 + $0x48] sm:$0xff]
        %v1067 = vld [vmem:[%s1027 + $0x50] sm:$0xff]
        %v1068 = vld [vmem:[%s1027 + $0x58] sm:$0xff]
        %v1069 = vld [vmem:[%s1027 + $0x60] sm:$0xff]
        %v1070 = vld [vmem:[%s1027 + $0x68] sm:$0xff]
        %v1071 = vld [vmem:[%s1027 + $0x70] sm:$0xff]
        %v1072 = vld [vmem:[%s1027 + $0x78] sm:$0xff]
        %v1073 = vld [vmem:[%s1027 + $0x80] sm:$0xff]
        %v1074 = vld [vmem:[%s1027 + $0x88] sm:$0xff]
        %v1075 = vld [vmem:[%s1027 + $0x90] sm:$0xff]
        %v1076 = vld [vmem:[%s1027 + $0x98] sm:$0xff]
        %v1077 = vld [vmem:[%s1027 + $0xa0] sm:$0xff]
        %v1078 = vld [vmem:[%s1027 + $0xa8] sm:$0xff]
        %v1079 = vld [vmem:[%s1027 + $0xb0] sm:$0xff]
        %v1080 = vld [vmem:[%s1027 + $0xb8] sm:$0xff]
        %v1081 = vld [vmem:[%s1027 + $0xc0] sm:$0xff]
        %v1082 = vld [vmem:[%s1027 + $0xc8] sm:$0xff]
        %v1083 = vld [vmem:[%s1027 + $0xd0] sm:$0xff]
        %v1084 = vld [vmem:[%s1027 + $0xd8] sm:$0xff]
        %v1085 = vld [vmem:[%s1027 + $0xe0] sm:$0xff]
        %v1086 = vld [vmem:[%s1027 + $0xe8] sm:$0xff]
        %v1087 = vld [vmem:[%s1027 + $0xf0] sm:$0xff]
        %v1088 = vld [vmem:[%s1027 + $0xf8] sm:$0xff]
        %v1089 = vld [vmem:[%s1027 + $0x100] sm:$0xff]
        %v1090 = vld [vmem:[%s1027 + $0x108] sm:$0xff]
        %v1091 = vld [vmem:[%s1027 + $0x110] sm:$0xff]
        %v1092 = vld [vmem:[%s1027 + $0x118] sm:$0xff]
        %v1093 = vld [vmem:[%s1027 + $0x120] sm:$0xff]
        %v1094 = vld [vmem:[%s1027 + $0x128] sm:$0xff]
        %v1095 = vld [vmem:[%s1027 + $0x130] sm:$0xff]
        %v1096 = vld [vmem:[%s1027 + $0x138] sm:$0xff]
        %v1097 = vld [vmem:[%s1027 + $0x140] sm:$0xff]
        %v1098 = vld [vmem:[%s1027 + $0x148] sm:$0xff]
        %v1099 = vld [vmem:[%s1027 + $0x150] sm:$0xff]
        %v1100 = vld [vmem:[%s1027 + $0x158] sm:$0xff]
        %v1101 = vld [vmem:[%s1027 + $0x160] sm:$0xff]
        %v1102 = vld [vmem:[%s1027 + $0x168] sm:$0xff]
        %v1103 = vld [vmem:[%s1027 + $0x170] sm:$0xff]
        %v1104 = vld [vmem:[%s1027 + $0x178] sm:$0xff]
        %v1105 = vld [vmem:[%s1027 + $0x180] sm:$0xff]
        %v1106 = vld [vmem:[%s1027 + $0x188] sm:$0xff]
        %v1107 = vld [vmem:[%s1027 + $0x190] sm:$0xff]
        %v1108 = vld [vmem:[%s1027 + $0x198] sm:$0xff]
        %v1109 = vld [vmem:[%s1027 + $0x1a0] sm:$0xff]
        %v1110 = vld [vmem:[%s1027 + $0x1a8] sm:$0xff]
        %v1111 = vld [vmem:[%s1027 + $0x1b0] sm:$0xff]
        %v1112 = vld [vmem:[%s1027 + $0x1b8] sm:$0xff]
        %v1113 = vld [vmem:[%s1027 + $0x1c0] sm:$0xff]
        %v1114 = vld [vmem:[%s1027 + $0x1c8] sm:$0xff]
        %v1115 = vld [vmem:[%s1027 + $0x1d0] sm:$0xff]
        %v1116 = vld [vmem:[%s1027 + $0x1d8] sm:$0xff]
        %v1117 = vld [vmem:[%s1027 + $0x1e0] sm:$0xff]
        %v1118 = vld [vmem:[%s1027 + $0x1e8] sm:$0xff]
        %v1119 = vld [vmem:[%s1027 + $0x1f0] sm:$0xff]
        %v1120 = vld [vmem:[%s1027 + $0x1f8] sm:$0xff]
        %v1121 = vld [vmem:[%s1027 + $0x200] sm:$0xff]
        %v1122 = vld [vmem:[%s1027 + $0x208] sm:$0xff]
        %v1123 = vld [vmem:[%s1027 + $0x210] sm:$0xff]
        %v1124 = vld [vmem:[%s1027 + $0x218] sm:$0xff]
        %v1125 = vld [vmem:[%s1027 + $0x220] sm:$0xff]
        %v1126 = vld [vmem:[%s1027 + $0x228] sm:$0xff]
        %v1127 = vld [vmem:[%s1027 + $0x230] sm:$0xff]
        %v1128 = vld [vmem:[%s1027 + $0x238] sm:$0xff]
        %v1129 = vld [vmem:[%s1027 + $0x240] sm:$0xff]
        %v1130 = vld [vmem:[%s1027 + $0x248] sm:$0xff]
        %v1131 = vld [vmem:[%s1027 + $0x250] sm:$0xff]
        %v1132 = vld [vmem:[%s1027 + $0x258] sm:$0xff]
        %v1133 = vld [vmem:[%s1027 + $0x260] sm:$0xff]
        %v1134 = vld [vmem:[%s1027 + $0x268] sm:$0xff]
        %v1135 = vld [vmem:[%s1027 + $0x270] sm:$0xff]
        %v1136 = vld [vmem:[%s1027 + $0x278] sm:$0xff]
        %v1137 = vld [vmem:[%s1027 + $0x280] sm:$0xff]
        %v1138 = vld [vmem:[%s1027 + $0x288] sm:$0xff]
        %v1139 = vld [vmem:[%s1027 + $0x290] sm:$0xff]
        %v1140 = vld [vmem:[%s1027 + $0x298] sm:$0xff]
        %v1141 = vld [vmem:[%s1027 + $0x2a0] sm:$0xff]
        %v1142 = vld [vmem:[%s1027 + $0x2a8] sm:$0xff]
        %v1143 = vld [vmem:[%s1027 + $0x2b0] sm:$0xff]
        %v1144 = vld [vmem:[%s1027 + $0x2b8] sm:$0xff]
        %v1145 = vld [vmem:[%s1027 + $0x2c0] sm:$0xff]
        %v1146 = vld [vmem:[%s1027 + $0x2c8] sm:$0xff]
        %v1147 = vld [vmem:[%s1027 + $0x2d0] sm:$0xff]
        %v1148 = vld [vmem:[%s1027 + $0x2d8] sm:$0xff]
        %v1149 = vld [vmem:[%s1027 + $0x2e0] sm:$0xff]
        %v1150 = vld [vmem:[%s1027 + $0x2e8] sm:$0xff]
        %v1151 = vld [vmem:[%s1027 + $0x2f0] sm:$0xff]
        %v1152 = vld [vmem:[%s1027 + $0x2f8] sm:$0xff]
        %v1153 = vld [vmem:[%s1027 + $0x300] sm:$0xff]
        %v1154 = vld [vmem:[%s1027 + $0x308] sm:$0xff]
        %v1155 = vld [vmem:[%s1027 + $0x310] sm:$0xff]
        %v1156 = vld [vmem:[%s1027 + $0x318] sm:$0xff]
        %v1157 = vld [vmem:[%s1027 + $0x320] sm:$0xff]
        %v1158 = vld [vmem:[%s1027 + $0x328] sm:$0xff]
        %v1159 = vld [vmem:[%s1027 + $0x330] sm:$0xff]
        %v1160 = vld [vmem:[%s1027 + $0x338] sm:$0xff]
        %v1161 = vld [vmem:[%s1027 + $0x340] sm:$0xff]
        %v1162 = vld [vmem:[%s1027 + $0x348] sm:$0xff]
        %v1163 = vld [vmem:[%s1027 + $0x350] sm:$0xff]
        %v1164 = vld [vmem:[%s1027 + $0x358] sm:$0xff]
        %v1165 = vld [vmem:[%s1027 + $0x360] sm:$0xff]
        %v1166 = vld [vmem:[%s1027 + $0x368] sm:$0xff]
        %v1167 = vld [vmem:[%s1027 + $0x370] sm:$0xff]
        %v1168 = vld [vmem:[%s1027 + $0x378] sm:$0xff]
        %v1169 = vld [vmem:[%s1027 + $0x380] sm:$0xff]
        %v1170 = vld [vmem:[%s1027 + $0x388] sm:$0xff]
        %v1171 = vld [vmem:[%s1027 + $0x390] sm:$0xff]
        %v1172 = vld [vmem:[%s1027 + $0x398] sm:$0xff]
        %v1173 = vld [vmem:[%s1027 + $0x3a0] sm:$0xff]
        %v1174 = vld [vmem:[%s1027 + $0x3a8] sm:$0xff]
        %v1175 = vld [vmem:[%s1027 + $0x3b0] sm:$0xff]
        %v1176 = vld [vmem:[%s1027 + $0x3b8] sm:$0xff]
        %v1177 = vld [vmem:[%s1027 + $0x3c0] sm:$0xff]
        %v1178 = vld [vmem:[%s1027 + $0x3c8] sm:$0xff]
        %v1179 = vld [vmem:[%s1027 + $0x3d0] sm:$0xff]
        %v1180 = vld [vmem:[%s1027 + $0x3d8] sm:$0xff]
        %v1181 = vld [vmem:[%s1027 + $0x3e0] sm:$0xff]
        %v1182 = vld [vmem:[%s1027 + $0x3e8] sm:$0xff]
        %v1183 = vld [vmem:[%s1027 + $0x3f0] sm:$0xff]
        %v1184 = vld [vmem:[%s1027 + $0x3f8] sm:$0xff]
        %v1185 = vld [vmem:[%s1027 + $0x400] sm:$0xff]
        %v1186 = vld [vmem:[%s1027 + $0x408] sm:$0xff]
        %v1187 = vld [vmem:[%s1027 + $0x410] sm:$0xff]
        %v1188 = vld [vmem:[%s1027 + $0x418] sm:$0xff]
        %v1189 = vld [vmem:[%s1027 + $0x420] sm:$0xff]
        %v1190 = vld [vmem:[%s1027 + $0x428] sm:$0xff]
        %v1191 = vld [vmem:[%s1027 + $0x430] sm:$0xff]
        %v1192 = vld [vmem:[%s1027 + $0x438] sm:$0xff]
        %v1193 = vld [vmem:[%s1027 + $0x440] sm:$0xff]
        %v1194 = vld [vmem:[%s1027 + $0x448] sm:$0xff]
        %v1195 = vld [vmem:[%s1027 + $0x450] sm:$0xff]
        %v1196 = vld [vmem:[%s1027 + $0x458] sm:$0xff]
        %v1197 = vld [vmem:[%s1027 + $0x460] sm:$0xff]
        %v1198 = vld [vmem:[%s1027 + $0x468] sm:$0xff]
        %v1199 = vld [vmem:[%s1027 + $0x470] sm:$0xff]
        %v1200 = vld [vmem:[%s1027 + $0x478] sm:$0xff]
        %v1201 = vld [vmem:[%s1027 + $0x480] sm:$0xff]
        %v1202 = vld [vmem:[%s1027 + $0x488] sm:$0xff]
        %v1203 = vld [vmem:[%s1027 + $0x490] sm:$0xff]
        %v1204 = vld [vmem:[%s1027 + $0x498] sm:$0xff]
        %v1205 = vld [vmem:[%s1027 + $0x4a0] sm:$0xff]
        %v1206 = vld [vmem:[%s1027 + $0x4a8] sm:$0xff]
        %v1207 = vld [vmem:[%s1027 + $0x4b0] sm:$0xff]
        %v1208 = vld [vmem:[%s1027 + $0x4b8] sm:$0xff]
        %v1209 = vld [vmem:[%s1027 + $0x4c0] sm:$0xff]
        %v1210 = vld [vmem:[%s1027 + $0x4c8] sm:$0xff]
        %v1211 = vld [vmem:[%s1027 + $0x4d0] sm:$0xff]
        %v1212 = vld [vmem:[%s1027 + $0x4d8] sm:$0xff]
        %v1213 = vld [vmem:[%s1027 + $0x4e0] sm:$0xff]
        %v1214 = vld [vmem:[%s1027 + $0x4e8] sm:$0xff]
        %v1215 = vld [vmem:[%s1027 + $0x4f0] sm:$0xff]
        %v1216 = vld [vmem:[%s1027 + $0x4f8] sm:$0xff]
        %v1217 = vld [vmem:[%s1027 + $0x500] sm:$0xff]
        %v1218 = vld [vmem:[%s1027 + $0x508] sm:$0xff]
        %v1219 = vld [vmem:[%s1027 + $0x510] sm:$0xff]
        %v1220 = vld [vmem:[%s1027 + $0x518] sm:$0xff]
        %v1221 = vld [vmem:[%s1027 + $0x520] sm:$0xff]
        %v1222 = vld [vmem:[%s1027 + $0x528] sm:$0xff]
        %v1223 = vld [vmem:[%s1027 + $0x530] sm:$0xff]
        %v1224 = vld [vmem:[%s1027 + $0x538] sm:$0xff]
        %v1225 = vld [vmem:[%s1027 + $0x540] sm:$0xff]
        %v1226 = vld [vmem:[%s1027 + $0x548] sm:$0xff]
        %v1227 = vld [vmem:[%s1027 + $0x550] sm:$0xff]
        %v1228 = vld [vmem:[%s1027 + $0x558] sm:$0xff]
        %v1229 = vld [vmem:[%s1027 + $0x560] sm:$0xff]
        %v1230 = vld [vmem:[%s1027 + $0x568] sm:$0xff]
        %v1231 = vld [vmem:[%s1027 + $0x570] sm:$0xff]
        %v1232 = vld [vmem:[%s1027 + $0x578] sm:$0xff]
        %v1233 = vld [vmem:[%s1027 + $0x580] sm:$0xff]
        %v1234 = vld [vmem:[%s1027 + $0x588] sm:$0xff]
        %v1235 = vld [vmem:[%s1027 + $0x590] sm:$0xff]
        %v1236 = vld [vmem:[%s1027 + $0x598] sm:$0xff]
        %v1237 = vld [vmem:[%s1027 + $0x5a0] sm:$0xff]
        %v1238 = vld [vmem:[%s1027 + $0x5a8] sm:$0xff]
        %v1239 = vld [vmem:[%s1027 + $0x5b0] sm:$0xff]
        %v1240 = vld [vmem:[%s1027 + $0x5b8] sm:$0xff]
        %v1241 = vld [vmem:[%s1027 + $0x5c0] sm:$0xff]
        %v1242 = vld [vmem:[%s1027 + $0x5c8] sm:$0xff]
        %v1243 = vld [vmem:[%s1027 + $0x5d0] sm:$0xff]
        %v1244 = vld [vmem:[%s1027 + $0x5d8] sm:$0xff]
        %v1245 = vld [vmem:[%s1027 + $0x5e0] sm:$0xff]
        %v1246 = vld [vmem:[%s1027 + $0x5e8] sm:$0xff]
        %v1247 = vld [vmem:[%s1027 + $0x5f0] sm:$0xff]
        %v1248 = vld [vmem:[%s1027 + $0x5f8] sm:$0xff]
        %v1249 = vld [vmem:[%s1027 + $0x600] sm:$0xff]
        %v1250 = vld [vmem:[%s1027 + $0x608] sm:$0xff]
        %v1251 = vld [vmem:[%s1027 + $0x610] sm:$0xff]
        %v1252 = vld [vmem:[%s1027 + $0x618] sm:$0xff]
        %v1253 = vld [vmem:[%s1027 + $0x620] sm:$0xff]
        %v1254 = vld [vmem:[%s1027 + $0x628] sm:$0xff]
        %v1255 = vld [vmem:[%s1027 + $0x630] sm:$0xff]
        %v1256 = vld [vmem:[%s1027 + $0x638] sm:$0xff]
        %v1257 = vld [vmem:[%s1027 + $0x640] sm:$0xff]
        %v1258 = vld [vmem:[%s1027 + $0x648] sm:$0xff]
        %v1259 = vld [vmem:[%s1027 + $0x650] sm:$0xff]
        %v1260 = vld [vmem:[%s1027 + $0x658] sm:$0xff]
        %v1261 = vld [vmem:[%s1027 + $0x660] sm:$0xff]
        %v1262 = vld [vmem:[%s1027 + $0x668] sm:$0xff]
        %v1263 = vld [vmem:[%s1027 + $0x670] sm:$0xff]
        %v1264 = vld [vmem:[%s1027 + $0x678] sm:$0xff]
        %v1265 = vld [vmem:[%s1027 + $0x680] sm:$0xff]
        %v1266 = vld [vmem:[%s1027 + $0x688] sm:$0xff]
        %v1267 = vld [vmem:[%s1027 + $0x690] sm:$0xff]
        %v1268 = vld [vmem:[%s1027 + $0x698] sm:$0xff]
        %v1269 = vld [vmem:[%s1027 + $0x6a0] sm:$0xff]
        %v1270 = vld [vmem:[%s1027 + $0x6a8] sm:$0xff]
        %v1271 = vld [vmem:[%s1027 + $0x6b0] sm:$0xff]
        %v1272 = vld [vmem:[%s1027 + $0x6b8] sm:$0xff]
        %v1273 = vld [vmem:[%s1027 + $0x6c0] sm:$0xff]
        %v1274 = vld [vmem:[%s1027 + $0x6c8] sm:$0xff]
        %v1275 = vld [vmem:[%s1027 + $0x6d0] sm:$0xff]
        %v1276 = vld [vmem:[%s1027 + $0x6d8] sm:$0xff]
        %v1277 = vld [vmem:[%s1027 + $0x6e0] sm:$0xff]
        %v1278 = vld [vmem:[%s1027 + $0x6e8] sm:$0xff]
        %v1279 = vld [vmem:[%s1027 + $0x6f0] sm:$0xff]
        %v1280 = vld [vmem:[%s1027 + $0x6f8] sm:$0xff]
        %v1281 = vld [vmem:[%s1027 + $0x700] sm:$0xff]
        %v1282 = vld [vmem:[%s1027 + $0x708] sm:$0xff]
        %v1283 = vld [vmem:[%s1027 + $0x710] sm:$0xff]
        %v1284 = vld [vmem:[%s1027 + $0x718] sm:$0xff]
        %v1285 = vld [vmem:[%s1027 + $0x720] sm:$0xff]
        %v1286 = vld [vmem:[%s1027 + $0x728] sm:$0xff]
        %v1287 = vld [vmem:[%s1027 + $0x730] sm:$0xff]
        %v1288 = vld [vmem:[%s1027 + $0x738] sm:$0xff]
        %v1289 = vld [vmem:[%s1027 + $0x740] sm:$0xff]
        %v1290 = vld [vmem:[%s1027 + $0x748] sm:$0xff]
        %v1291 = vld [vmem:[%s1027 + $0x750] sm:$0xff]
        %v1292 = vld [vmem:[%s1027 + $0x758] sm:$0xff]
        %v1293 = vld [vmem:[%s1027 + $0x760] sm:$0xff]
        %v1294 = vld [vmem:[%s1027 + $0x768] sm:$0xff]
        %v1295 = vld [vmem:[%s1027 + $0x770] sm:$0xff]
        %v1296 = vld [vmem:[%s1027 + $0x778] sm:$0xff]
        %v1297 = vld [vmem:[%s1027 + $0x780] sm:$0xff]
        %v1298 = vld [vmem:[%s1027 + $0x788] sm:$0xff]
        %v1299 = vld [vmem:[%s1027 + $0x790] sm:$0xff]
        %v1300 = vld [vmem:[%s1027 + $0x798] sm:$0xff]
        %v1301 = vld [vmem:[%s1027 + $0x7a0] sm:$0xff]
        %v1302 = vld [vmem:[%s1027 + $0x7a8] sm:$0xff]
        %v1303 = vld [vmem:[%s1027 + $0x7b0] sm:$0xff]
        %v1304 = vld [vmem:[%s1027 + $0x7b8] sm:$0xff]
        %v1305 = vld [vmem:[%s1027 + $0x7c0] sm:$0xff]
        %v1306 = vld [vmem:[%s1027 + $0x7c8] sm:$0xff]
        %v1307 = vld [vmem:[%s1027 + $0x7d0] sm:$0xff]
        %v1308 = vld [vmem:[%s1027 + $0x7d8] sm:$0xff]
        %v1309 = vld [vmem:[%s1027 + $0x7e0] sm:$0xff]
        %v1310 = vld [vmem:[%s1027 + $0x7e8] sm:$0xff]
        %v1311 = vld [vmem:[%s1027 + $0x7f0] sm:$0xff]
        %v1312 = vld [vmem:[%s1027 + $0x7f8] sm:$0xff]
        %v1313 = vld [vmem:[%s1027 + $0x800] sm:$0xff]
        %v1314 = vld [vmem:[%s1027 + $0x808] sm:$0xff]
        %v1315 = vld [vmem:[%s1027 + $0x810] sm:$0xff]
        %v1316 = vld [vmem:[%s1027 + $0x818] sm:$0xff]
        %v1317 = vld [vmem:[%s1027 + $0x820] sm:$0xff]
        %v1318 = vld [vmem:[%s1027 + $0x828] sm:$0xff]
        %v1319 = vld [vmem:[%s1027 + $0x830] sm:$0xff]
        %v1320 = vld [vmem:[%s1027 + $0x838] sm:$0xff]
        %v1321 = vld [vmem:[%s1027 + $0x840] sm:$0xff]
        %v1322 = vld [vmem:[%s1027 + $0x848] sm:$0xff]
        %v1323 = vld [vmem:[%s1027 + $0x850] sm:$0xff]
        %v1324 = vld [vmem:[%s1027 + $0x858] sm:$0xff]
        %v1325 = vld [vmem:[%s1027 + $0x860] sm:$0xff]
        %v1326 = vld [vmem:[%s1027 + $0x868] sm:$0xff]
        %v1327 = vld [vmem:[%s1027 + $0x870] sm:$0xff]
        %v1328 = vld [vmem:[%s1027 + $0x878] sm:$0xff]
        %v1329 = vld [vmem:[%s1027 + $0x880] sm:$0xff]
        %v1330 = vld [vmem:[%s1027 + $0x888] sm:$0xff]
        %v1331 = vld [vmem:[%s1027 + $0x890] sm:$0xff]
        %v1332 = vld [vmem:[%s1027 + $0x898] sm:$0xff]
        %v1333 = vld [vmem:[%s1027 + $0x8a0] sm:$0xff]
        %v1334 = vld [vmem:[%s1027 + $0x8a8] sm:$0xff]
        %v1335 = vld [vmem:[%s1027 + $0x8b0] sm:$0xff]
        %v1336 = vld [vmem:[%s1027 + $0x8b8] sm:$0xff]
        %v1337 = vld [vmem:[%s1027 + $0x8c0] sm:$0xff]
        %v1338 = vld [vmem:[%s1027 + $0x8c8] sm:$0xff]
        %v1339 = vld [vmem:[%s1027 + $0x8d0] sm:$0xff]
        %v1340 = vld [vmem:[%s1027 + $0x8d8] sm:$0xff]
        %v1341 = vld [vmem:[%s1027 + $0x8e0] sm:$0xff]
        %v1342 = vld [vmem:[%s1027 + $0x8e8] sm:$0xff]
        %v1343 = vld [vmem:[%s1027 + $0x8f0] sm:$0xff]
        %v1344 = vld [vmem:[%s1027 + $0x8f8] sm:$0xff]
        %v1345 = vld [vmem:[%s1027 + $0x900] sm:$0xff]
        %v1346 = vld [vmem:[%s1027 + $0x908] sm:$0xff]
        %v1347 = vld [vmem:[%s1027 + $0x910] sm:$0xff]
        %v1348 = vld [vmem:[%s1027 + $0x918] sm:$0xff]
        %v1349 = vld [vmem:[%s1027 + $0x920] sm:$0xff]
        %v1350 = vld [vmem:[%s1027 + $0x928] sm:$0xff]
        %v1351 = vld [vmem:[%s1027 + $0x930] sm:$0xff]
        %v1352 = vld [vmem:[%s1027 + $0x938] sm:$0xff]
        %v1353 = vld [vmem:[%s1027 + $0x940] sm:$0xff]
        %v1354 = vld [vmem:[%s1027 + $0x948] sm:$0xff]
        %v1355 = vld [vmem:[%s1027 + $0x950] sm:$0xff]
        %v1356 = vld [vmem:[%s1027 + $0x958] sm:$0xff]
        %v1357 = vld [vmem:[%s1027 + $0x960] sm:$0xff]
        %v1358 = vld [vmem:[%s1027 + $0x968] sm:$0xff]
        %v1359 = vld [vmem:[%s1027 + $0x970] sm:$0xff]
        %v1360 = vld [vmem:[%s1027 + $0x978] sm:$0xff]
        %v1361 = vld [vmem:[%s1027 + $0x980] sm:$0xff]
        %v1362 = vld [vmem:[%s1027 + $0x988] sm:$0xff]
        %v1363 = vld [vmem:[%s1027 + $0x990] sm:$0xff]
        %v1364 = vld [vmem:[%s1027 + $0x998] sm:$0xff]
        %v1365 = vld [vmem:[%s1027 + $0x9a0] sm:$0xff]
        %v1366 = vld [vmem:[%s1027 + $0x9a8] sm:$0xff]
        %v1367 = vld [vmem:[%s1027 + $0x9b0] sm:$0xff]
        %v1368 = vld [vmem:[%s1027 + $0x9b8] sm:$0xff]
        %v1369 = vld [vmem:[%s1027 + $0x9c0] sm:$0xff]
        %v1370 = vld [vmem:[%s1027 + $0x9c8] sm:$0xff]
        %v1371 = vld [vmem:[%s1027 + $0x9d0] sm:$0xff]
        %v1372 = vld [vmem:[%s1027 + $0x9d8] sm:$0xff]
        %v1373 = vld [vmem:[%s1027 + $0x9e0] sm:$0xff]
        %v1374 = vld [vmem:[%s1027 + $0x9e8] sm:$0xff]
        %v1375 = vld [vmem:[%s1027 + $0x9f0] sm:$0xff]
        %v1376 = vld [vmem:[%s1027 + $0x9f8] sm:$0xff]
        %v1377 = vld [vmem:[%s1027 + $0xa00] sm:$0xff]
        %v1378 = vld [vmem:[%s1027 + $0xa08] sm:$0xff]
        %v1379 = vld [vmem:[%s1027 + $0xa10] sm:$0xff]
        %v1380 = vld [vmem:[%s1027 + $0xa18] sm:$0xff]
        %v1381 = vld [vmem:[%s1027 + $0xa20] sm:$0xff]
        %v1382 = vld [vmem:[%s1027 + $0xa28] sm:$0xff]
        %v1383 = vld [vmem:[%s1027 + $0xa30] sm:$0xff]
        %v1384 = vld [vmem:[%s1027 + $0xa38] sm:$0xff]
        %v1385 = vld [vmem:[%s1027 + $0xa40] sm:$0xff]
        %v1386 = vld [vmem:[%s1027 + $0xa48] sm:$0xff]
        %v1387 = vld [vmem:[%s1027 + $0xa50] sm:$0xff]
        %v1388 = vld [vmem:[%s1027 + $0xa58] sm:$0xff]
        %v1389 = vld [vmem:[%s1027 + $0xa60] sm:$0xff]
        %v1390 = vld [vmem:[%s1027 + $0xa68] sm:$0xff]
        %v1391 = vld [vmem:[%s1027 + $0xa70] sm:$0xff]
        %v1392 = vld [vmem:[%s1027 + $0xa78] sm:$0xff]
        %v1393 = vld [vmem:[%s1027 + $0xa80] sm:$0xff]
        %v1394 = vld [vmem:[%s1027 + $0xa88] sm:$0xff]
        %v1395 = vld [vmem:[%s1027 + $0xa90] sm:$0xff]
        %v1396 = vld [vmem:[%s1027 + $0xa98] sm:$0xff]
        %v1397 = vld [vmem:[%s1027 + $0xaa0] sm:$0xff]
        %v1398 = vld [vmem:[%s1027 + $0xaa8] sm:$0xff]
        %v1399 = vld [vmem:[%s1027 + $0xab0] sm:$0xff]
        %v1400 = vld [vmem:[%s1027 + $0xab8] sm:$0xff]
        %v1401 = vld [vmem:[%s1027 + $0xac0] sm:$0xff]
        %v1402 = vld [vmem:[%s1027 + $0xac8] sm:$0xff]
        %v1403 = vld [vmem:[%s1027 + $0xad0] sm:$0xff]
        %v1404 = vld [vmem:[%s1027 + $0xad8] sm:$0xff]
        %v1405 = vld [vmem:[%s1027 + $0xae0] sm:$0xff]
        %v1406 = vld [vmem:[%s1027 + $0xae8] sm:$0xff]
        %v1407 = vld [vmem:[%s1027 + $0xaf0] sm:$0xff]
        %v1408 = vld [vmem:[%s1027 + $0xaf8] sm:$0xff]
        %v1409 = vld [vmem:[%s1027 + $0xb00] sm:$0xff]
        %v1410 = vld [vmem:[%s1027 + $0xb08] sm:$0xff]
        %v1411 = vld [vmem:[%s1027 + $0xb10] sm:$0xff]
        %v1412 = vld [vmem:[%s1027 + $0xb18] sm:$0xff]
        %v1413 = vld [vmem:[%s1027 + $0xb20] sm:$0xff]
        %v1414 = vld [vmem:[%s1027 + $0xb28] sm:$0xff]
        %v1415 = vld [vmem:[%s1027 + $0xb30] sm:$0xff]
        %v1416 = vld [vmem:[%s1027 + $0xb38] sm:$0xff]
        %v1417 = vld [vmem:[%s1027 + $0xb40] sm:$0xff]
        %v1418 = vld [vmem:[%s1027 + $0xb48] sm:$0xff]
        %v1419 = vld [vmem:[%s1027 + $0xb50] sm:$0xff]
        %v1420 = vld [vmem:[%s1027 + $0xb58] sm:$0xff]
        %v1421 = vld [vmem:[%s1027 + $0xb60] sm:$0xff]
        %v1422 = vld [vmem:[%s1027 + $0xb68] sm:$0xff]
        %v1423 = vld [vmem:[%s1027 + $0xb70] sm:$0xff]
        %v1424 = vld [vmem:[%s1027 + $0xb78] sm:$0xff]
        %v1425 = vld [vmem:[%s1027 + $0xb80] sm:$0xff]
        %v1426 = vld [vmem:[%s1027 + $0xb88] sm:$0xff]
        %v1427 = vld [vmem:[%s1027 + $0xb90] sm:$0xff]
        %v1428 = vld [vmem:[%s1027 + $0xb98] sm:$0xff]
        %v1429 = vld [vmem:[%s1027 + $0xba0] sm:$0xff]
        %v1430 = vld [vmem:[%s1027 + $0xba8] sm:$0xff]
        %v1431 = vld [vmem:[%s1027 + $0xbb0] sm:$0xff]
        %v1432 = vld [vmem:[%s1027 + $0xbb8] sm:$0xff]
        %v1433 = vld [vmem:[%s1027 + $0xbc0] sm:$0xff]
        %v1434 = vld [vmem:[%s1027 + $0xbc8] sm:$0xff]
        %v1435 = vld [vmem:[%s1027 + $0xbd0] sm:$0xff]
        %v1436 = vld [vmem:[%s1027 + $0xbd8] sm:$0xff]
        %v1437 = vld [vmem:[%s1027 + $0xbe0] sm:$0xff]
        %v1438 = vld [vmem:[%s1027 + $0xbe8] sm:$0xff]
        %v1439 = vld [vmem:[%s1027 + $0xbf0] sm:$0xff]
        %v1440 = vld [vmem:[%s1027 + $0xbf8] sm:$0xff]
        %v1441 = vld [vmem:[%s1027 + $0xc00] sm:$0xff]
        %v1442 = vld [vmem:[%s1027 + $0xc08] sm:$0xff]
        %v1443 = vld [vmem:[%s1027 + $0xc10] sm:$0xff]
        %v1444 = vld [vmem:[%s1027 + $0xc18] sm:$0xff]
        %v1445 = vld [vmem:[%s1027 + $0xc20] sm:$0xff]
        %v1446 = vld [vmem:[%s1027 + $0xc28] sm:$0xff]
        %v1447 = vld [vmem:[%s1027 + $0xc30] sm:$0xff]
        %v1448 = vld [vmem:[%s1027 + $0xc38] sm:$0xff]
        %v1449 = vld [vmem:[%s1027 + $0xc40] sm:$0xff]
        %v1450 = vld [vmem:[%s1027 + $0xc48] sm:$0xff]
        %v1451 = vld [vmem:[%s1027 + $0xc50] sm:$0xff]
        %v1452 = vld [vmem:[%s1027 + $0xc58] sm:$0xff]
        %v1453 = vld [vmem:[%s1027 + $0xc60] sm:$0xff]
        %v1454 = vld [vmem:[%s1027 + $0xc68] sm:$0xff]
        %v1455 = vld [vmem:[%s1027 + $0xc70] sm:$0xff]
        %v1456 = vld [vmem:[%s1027 + $0xc78] sm:$0xff]
        %v1457 = vld [vmem:[%s1027 + $0xc80] sm:$0xff]
        %v1458 = vld [vmem:[%s1027 + $0xc88] sm:$0xff]
        %v1459 = vld [vmem:[%s1027 + $0xc90] sm:$0xff]
        %v1460 = vld [vmem:[%s1027 + $0xc98] sm:$0xff]
        %v1461 = vld [vmem:[%s1027 + $0xca0] sm:$0xff]
        %v1462 = vld [vmem:[%s1027 + $0xca8] sm:$0xff]
        %v1463 = vld [vmem:[%s1027 + $0xcb0] sm:$0xff]
        %v1464 = vld [vmem:[%s1027 + $0xcb8] sm:$0xff]
        %v1465 = vld [vmem:[%s1027 + $0xcc0] sm:$0xff]
        %v1466 = vld [vmem:[%s1027 + $0xcc8] sm:$0xff]
        %v1467 = vld [vmem:[%s1027 + $0xcd0] sm:$0xff]
        %v1468 = vld [vmem:[%s1027 + $0xcd8] sm:$0xff]
        %v1469 = vld [vmem:[%s1027 + $0xce0] sm:$0xff]
        %v1470 = vld [vmem:[%s1027 + $0xce8] sm:$0xff]
        %v1471 = vld [vmem:[%s1027 + $0xcf0] sm:$0xff]
        %v1472 = vld [vmem:[%s1027 + $0xcf8] sm:$0xff]
        %v1473 = vld [vmem:[%s1027 + $0xd00] sm:$0xff]
        %v1474 = vld [vmem:[%s1027 + $0xd08] sm:$0xff]
        %v1475 = vld [vmem:[%s1027 + $0xd10] sm:$0xff]
        %v1476 = vld [vmem:[%s1027 + $0xd18] sm:$0xff]
        %v1477 = vld [vmem:[%s1027 + $0xd20] sm:$0xff]
        %v1478 = vld [vmem:[%s1027 + $0xd28] sm:$0xff]
        %v1479 = vld [vmem:[%s1027 + $0xd30] sm:$0xff]
        %v1480 = vld [vmem:[%s1027 + $0xd38] sm:$0xff]
        %v1481 = vld [vmem:[%s1027 + $0xd40] sm:$0xff]
        %v1482 = vld [vmem:[%s1027 + $0xd48] sm:$0xff]
        %v1483 = vld [vmem:[%s1027 + $0xd50] sm:$0xff]
        %v1484 = vld [vmem:[%s1027 + $0xd58] sm:$0xff]
        %v1485 = vld [vmem:[%s1027 + $0xd60] sm:$0xff]
        %v1486 = vld [vmem:[%s1027 + $0xd68] sm:$0xff]
        %v1487 = vld [vmem:[%s1027 + $0xd70] sm:$0xff]
        %v1488 = vld [vmem:[%s1027 + $0xd78] sm:$0xff]
        %v1489 = vld [vmem:[%s2] sm:$0x3]
        %1491 = vset.pattern.permute.xlu0 0
        %1492 = vperm.xlu0 %1491, %v1489
        %v1493 = vpop.permute.xlu0 %1492
        %v1497 = vunpack.c.l.s4 1966171168
        %v1498 = vunpack.c.0.s8 %v1497
        %v1499 = vlaneseq
        %v1500 = vshrl.u32 %v1499, 7
        %v1501 = vsub.s32 %v1498, %v1500
        %v1502 = vrot.slane %v1056, %v1501
        %v1503 = vcombine.high %v1502, %v1502
        %v1505 = vunpack.c.l.s4 1966171168
        %v1506 = vunpack.c.0.s8 %v1505
        %v1507 = vlaneseq
        %v1508 = vshrl.u32 %v1507, 7
        %v1509 = vsub.s32 %v1506, %v1508
        %v1510 = vrot.slane %v1502, %v1509
        %v1512 = vunpack.c.l.s4 1966171168
        %v1513 = vunpack.c.0.s8 %v1512
        %v1514 = vlaneseq
        %v1515 = vshrl.u32 %v1514, 7
        %v1516 = vsub.s32 %v1513, %v1515
        %v1517 = vrot.slane %v1503, %v1516
        %v1518 = vcombine.high %v1510, %v1510
        %v1519 = vcombine.high %v1517, %v1517
        %v1955 = vunpack.c.l.b16 %v1057
        %v1956 = vunpack.c.h.b16 %v1057
        %v1957 = vunpack.c.l.b16 %v1058
        %v1958 = vunpack.c.h.b16 %v1058
        %v1959 = vunpack.c.l.b16 %v1059
        %v1960 = vunpack.c.h.b16 %v1059
        %v1961 = vunpack.c.l.b16 %v1060
        %v1962 = vunpack.c.h.b16 %v1060
        %v1963 = vunpack.c.l.b16 %v1061
        %v1964 = vunpack.c.h.b16 %v1061
        %v1965 = vunpack.c.l.b16 %v1062
        %v1966 = vunpack.c.h.b16 %v1062
        %v1967 = vunpack.c.l.b16 %v1063
        %v1968 = vunpack.c.h.b16 %v1063
        %v1969 = vunpack.c.l.b16 %v1064
        %v1970 = vunpack.c.h.b16 %v1064
        %v1971 = vunpack.c.l.b16 %v1065
        %v1972 = vunpack.c.h.b16 %v1065
        %v1973 = vunpack.c.l.b16 %v1066
        %v1974 = vunpack.c.h.b16 %v1066
        %v1975 = vunpack.c.l.b16 %v1067
        %v1976 = vunpack.c.h.b16 %v1067
        %v1977 = vunpack.c.l.b16 %v1068
        %v1978 = vunpack.c.h.b16 %v1068
        %v1979 = vunpack.c.l.b16 %v1069
        %v1980 = vunpack.c.h.b16 %v1069
        %v1981 = vunpack.c.l.b16 %v1070
        %v1982 = vunpack.c.h.b16 %v1070
        %v1983 = vunpack.c.l.b16 %v1071
        %v1984 = vunpack.c.h.b16 %v1071
        %v1985 = vunpack.c.l.b16 %v1072
        %v1986 = vunpack.c.h.b16 %v1072
        %v1987 = vunpack.c.l.b16 %v1073
        %v1988 = vunpack.c.h.b16 %v1073
        %v1989 = vunpack.c.l.b16 %v1074
        %v1990 = vunpack.c.h.b16 %v1074
        %v1991 = vunpack.c.l.b16 %v1075
        %v1992 = vunpack.c.h.b16 %v1075
        %v1993 = vunpack.c.l.b16 %v1076
        %v1994 = vunpack.c.h.b16 %v1076
        %v1995 = vunpack.c.l.b16 %v1077
        %v1996 = vunpack.c.h.b16 %v1077
        %v1997 = vunpack.c.l.b16 %v1078
        %v1998 = vunpack.c.h.b16 %v1078
        %v1999 = vunpack.c.l.b16 %v1079
        %v2000 = vunpack.c.h.b16 %v1079
        %v2001 = vunpack.c.l.b16 %v1080
        %v2002 = vunpack.c.h.b16 %v1080
        %v2003 = vunpack.c.l.b16 %v1081
        %v2004 = vunpack.c.h.b16 %v1081
        %v2005 = vunpack.c.l.b16 %v1082
        %v2006 = vunpack.c.h.b16 %v1082
        %v2007 = vunpack.c.l.b16 %v1083
        %v2008 = vunpack.c.h.b16 %v1083
        %v2009 = vunpack.c.l.b16 %v1084
        %v2010 = vunpack.c.h.b16 %v1084
        %v2011 = vunpack.c.l.b16 %v1085
        %v2012 = vunpack.c.h.b16 %v1085
        %v2013 = vunpack.c.l.b16 %v1086
        %v2014 = vunpack.c.h.b16 %v1086
        %v2015 = vunpack.c.l.b16 %v1087
        %v2016 = vunpack.c.h.b16 %v1087
        %v2017 = vunpack.c.l.b16 %v1088
        %v2018 = vunpack.c.h.b16 %v1088
        %v2019 = vunpack.c.l.b16 %v1089
        %v2020 = vunpack.c.h.b16 %v1089
        %v2021 = vunpack.c.l.b16 %v1090
        %v2022 = vunpack.c.h.b16 %v1090
        %v2023 = vunpack.c.l.b16 %v1091
        %v2024 = vunpack.c.h.b16 %v1091
        %v2025 = vunpack.c.l.b16 %v1092
        %v2026 = vunpack.c.h.b16 %v1092
        %v2027 = vunpack.c.l.b16 %v1093
        %v2028 = vunpack.c.h.b16 %v1093
        %v2029 = vunpack.c.l.b16 %v1094
        %v2030 = vunpack.c.h.b16 %v1094
        %v2031 = vunpack.c.l.b16 %v1095
        %v2032 = vunpack.c.h.b16 %v1095
        %v2033 = vunpack.c.l.b16 %v1096
        %v2034 = vunpack.c.h.b16 %v1096
        %v2035 = vunpack.c.l.b16 %v1097
        %v2036 = vunpack.c.h.b16 %v1097
        %v2037 = vunpack.c.l.b16 %v1098
        %v2038 = vunpack.c.h.b16 %v1098
        %v2039 = vunpack.c.l.b16 %v1099
        %v2040 = vunpack.c.h.b16 %v1099
        %v2041 = vunpack.c.l.b16 %v1100
        %v2042 = vunpack.c.h.b16 %v1100
        %v2043 = vunpack.c.l.b16 %v1101
        %v2044 = vunpack.c.h.b16 %v1101
        %v2045 = vunpack.c.l.b16 %v1102
        %v2046 = vunpack.c.h.b16 %v1102
        %v2047 = vunpack.c.l.b16 %v1103
        %v2048 = vunpack.c.h.b16 %v1103
        %v2049 = vunpack.c.l.b16 %v1104
        %v2050 = vunpack.c.h.b16 %v1104
        %v2051 = vunpack.c.l.b16 %v1105
        %v2052 = vunpack.c.h.b16 %v1105
        %v2053 = vunpack.c.l.b16 %v1106
        %v2054 = vunpack.c.h.b16 %v1106
        %v2055 = vunpack.c.l.b16 %v1107
        %v2056 = vunpack.c.h.b16 %v1107
        %v2057 = vunpack.c.l.b16 %v1108
        %v2058 = vunpack.c.h.b16 %v1108
        %v2059 = vunpack.c.l.b16 %v1109
        %v2060 = vunpack.c.h.b16 %v1109
        %v2061 = vunpack.c.l.b16 %v1110
        %v2062 = vunpack.c.h.b16 %v1110
        %v2063 = vunpack.c.l.b16 %v1111
        %v2064 = vunpack.c.h.b16 %v1111
        %v2065 = vunpack.c.l.b16 %v1112
        %v2066 = vunpack.c.h.b16 %v1112
        %v2067 = vunpack.c.l.b16 %v1113
        %v2068 = vunpack.c.h.b16 %v1113
        %v2069 = vunpack.c.l.b16 %v1114
        %v2070 = vunpack.c.h.b16 %v1114
        %v2071 = vunpack.c.l.b16 %v1115
        %v2072 = vunpack.c.h.b16 %v1115
        %v2073 = vunpack.c.l.b16 %v1116
        %v2074 = vunpack.c.h.b16 %v1116
        %v2075 = vunpack.c.l.b16 %v1117
        %v2076 = vunpack.c.h.b16 %v1117
        %v2077 = vunpack.c.l.b16 %v1118
        %v2078 = vunpack.c.h.b16 %v1118
        %v2079 = vunpack.c.l.b16 %v1119
        %v2080 = vunpack.c.h.b16 %v1119
        %v2081 = vunpack.c.l.b16 %v1120
        %v2082 = vunpack.c.h.b16 %v1120
        %v2083 = vunpack.c.l.b16 %v1121
        %v2084 = vunpack.c.h.b16 %v1121
        %v2085 = vunpack.c.l.b16 %v1122
        %v2086 = vunpack.c.h.b16 %v1122
        %v2087 = vunpack.c.l.b16 %v1123
        %v2088 = vunpack.c.h.b16 %v1123
        %v2089 = vunpack.c.l.b16 %v1124
        %v2090 = vunpack.c.h.b16 %v1124
        %v2091 = vunpack.c.l.b16 %v1125
        %v2092 = vunpack.c.h.b16 %v1125
        %v2093 = vunpack.c.l.b16 %v1126
        %v2094 = vunpack.c.h.b16 %v1126
        %v2095 = vunpack.c.l.b16 %v1127
        %v2096 = vunpack.c.h.b16 %v1127
        %v2097 = vunpack.c.l.b16 %v1128
        %v2098 = vunpack.c.h.b16 %v1128
        %v2099 = vunpack.c.l.b16 %v1129
        %v2100 = vunpack.c.h.b16 %v1129
        %v2101 = vunpack.c.l.b16 %v1130
        %v2102 = vunpack.c.h.b16 %v1130
        %v2103 = vunpack.c.l.b16 %v1131
        %v2104 = vunpack.c.h.b16 %v1131
        %v2105 = vunpack.c.l.b16 %v1132
        %v2106 = vunpack.c.h.b16 %v1132
        %v2107 = vunpack.c.l.b16 %v1133
        %v2108 = vunpack.c.h.b16 %v1133
        %v2109 = vunpack.c.l.b16 %v1134
        %v2110 = vunpack.c.h.b16 %v1134
        %v2111 = vunpack.c.l.b16 %v1135
        %v2112 = vunpack.c.h.b16 %v1135
        %v2113 = vunpack.c.l.b16 %v1136
        %v2114 = vunpack.c.h.b16 %v1136
        %v2115 = vunpack.c.l.b16 %v1137
        %v2116 = vunpack.c.h.b16 %v1137
        %v2117 = vunpack.c.l.b16 %v1138
        %v2118 = vunpack.c.h.b16 %v1138
        %v2119 = vunpack.c.l.b16 %v1139
        %v2120 = vunpack.c.h.b16 %v1139
        %v2121 = vunpack.c.l.b16 %v1140
        %v2122 = vunpack.c.h.b16 %v1140
        %v2123 = vunpack.c.l.b16 %v1141
        %v2124 = vunpack.c.h.b16 %v1141
        %v2125 = vunpack.c.l.b16 %v1142
        %v2126 = vunpack.c.h.b16 %v1142
        %v2127 = vunpack.c.l.b16 %v1143
        %v2128 = vunpack.c.h.b16 %v1143
        %v2129 = vunpack.c.l.b16 %v1144
        %v2130 = vunpack.c.h.b16 %v1144
        %v2131 = vunpack.c.l.b16 %v1145
        %v2132 = vunpack.c.h.b16 %v1145
        %v2133 = vunpack.c.l.b16 %v1146
        %v2134 = vunpack.c.h.b16 %v1146
        %v2135 = vunpack.c.l.b16 %v1147
        %v2136 = vunpack.c.h.b16 %v1147
        %v2137 = vunpack.c.l.b16 %v1148
        %v2138 = vunpack.c.h.b16 %v1148
        %v2139 = vunpack.c.l.b16 %v1149
        %v2140 = vunpack.c.h.b16 %v1149
        %v2141 = vunpack.c.l.b16 %v1150
        %v2142 = vunpack.c.h.b16 %v1150
        %v2143 = vunpack.c.l.b16 %v1151
        %v2144 = vunpack.c.h.b16 %v1151
        %v2145 = vunpack.c.l.b16 %v1152
        %v2146 = vunpack.c.h.b16 %v1152
        %v2147 = vunpack.c.l.b16 %v1153
        %v2148 = vunpack.c.h.b16 %v1153
        %v2149 = vunpack.c.l.b16 %v1154
        %v2150 = vunpack.c.h.b16 %v1154
        %v2151 = vunpack.c.l.b16 %v1155
        %v2152 = vunpack.c.h.b16 %v1155
        %v2153 = vunpack.c.l.b16 %v1156
        %v2154 = vunpack.c.h.b16 %v1156
        %v2155 = vunpack.c.l.b16 %v1157
        %v2156 = vunpack.c.h.b16 %v1157
        %v2157 = vunpack.c.l.b16 %v1158
        %v2158 = vunpack.c.h.b16 %v1158
        %v2159 = vunpack.c.l.b16 %v1159
        %v2160 = vunpack.c.h.b16 %v1159
        %v2161 = vunpack.c.l.b16 %v1160
        %v2162 = vunpack.c.h.b16 %v1160
        %v2163 = vunpack.c.l.b16 %v1161
        %v2164 = vunpack.c.h.b16 %v1161
        %v2165 = vunpack.c.l.b16 %v1162
        %v2166 = vunpack.c.h.b16 %v1162
        %v2167 = vunpack.c.l.b16 %v1163
        %v2168 = vunpack.c.h.b16 %v1163
        %v2169 = vunpack.c.l.b16 %v1164
        %v2170 = vunpack.c.h.b16 %v1164
        %v2171 = vunpack.c.l.b16 %v1165
        %v2172 = vunpack.c.h.b16 %v1165
        %v2173 = vunpack.c.l.b16 %v1166
        %v2174 = vunpack.c.h.b16 %v1166
        %v2175 = vunpack.c.l.b16 %v1167
        %v2176 = vunpack.c.h.b16 %v1167
        %v2177 = vunpack.c.l.b16 %v1168
        %v2178 = vunpack.c.h.b16 %v1168
        %v2179 = vunpack.c.l.b16 %v1169
        %v2180 = vunpack.c.h.b16 %v1169
        %v2181 = vunpack.c.l.b16 %v1170
        %v2182 = vunpack.c.h.b16 %v1170
        %v2183 = vunpack.c.l.b16 %v1171
        %v2184 = vunpack.c.h.b16 %v1171
        %v2185 = vunpack.c.l.b16 %v1172
        %v2186 = vunpack.c.h.b16 %v1172
        %v2187 = vunpack.c.l.b16 %v1173
        %v2188 = vunpack.c.h.b16 %v1173
        %v2189 = vunpack.c.l.b16 %v1174
        %v2190 = vunpack.c.h.b16 %v1174
        %v2191 = vunpack.c.l.b16 %v1175
        %v2192 = vunpack.c.h.b16 %v1175
        %v2193 = vunpack.c.l.b16 %v1176
        %v2194 = vunpack.c.h.b16 %v1176
        %v2195 = vunpack.c.l.b16 %v1177
        %v2196 = vunpack.c.h.b16 %v1177
        %v2197 = vunpack.c.l.b16 %v1178
        %v2198 = vunpack.c.h.b16 %v1178
        %v2199 = vunpack.c.l.b16 %v1179
        %v2200 = vunpack.c.h.b16 %v1179
        %v2201 = vunpack.c.l.b16 %v1180
        %v2202 = vunpack.c.h.b16 %v1180
        %v2203 = vunpack.c.l.b16 %v1181
        %v2204 = vunpack.c.h.b16 %v1181
        %v2205 = vunpack.c.l.b16 %v1182
        %v2206 = vunpack.c.h.b16 %v1182
        %v2207 = vunpack.c.l.b16 %v1183
        %v2208 = vunpack.c.h.b16 %v1183
        %v2209 = vunpack.c.l.b16 %v1184
        %v2210 = vunpack.c.h.b16 %v1184
        %v2211 = vunpack.c.l.b16 %v1185
        %v2212 = vunpack.c.h.b16 %v1185
        %v2213 = vunpack.c.l.b16 %v1186
        %v2214 = vunpack.c.h.b16 %v1186
        %v2215 = vunpack.c.l.b16 %v1187
        %v2216 = vunpack.c.h.b16 %v1187
        %v2217 = vunpack.c.l.b16 %v1188
        %v2218 = vunpack.c.h.b16 %v1188
        %v2219 = vunpack.c.l.b16 %v1189
        %v2220 = vunpack.c.h.b16 %v1189
        %v2221 = vunpack.c.l.b16 %v1190
        %v2222 = vunpack.c.h.b16 %v1190
        %v2223 = vunpack.c.l.b16 %v1191
        %v2224 = vunpack.c.h.b16 %v1191
        %v2225 = vunpack.c.l.b16 %v1192
        %v2226 = vunpack.c.h.b16 %v1192
        %v2227 = vunpack.c.l.b16 %v1193
        %v2228 = vunpack.c.h.b16 %v1193
        %v2229 = vunpack.c.l.b16 %v1194
        %v2230 = vunpack.c.h.b16 %v1194
        %v2231 = vunpack.c.l.b16 %v1195
        %v2232 = vunpack.c.h.b16 %v1195
        %v2233 = vunpack.c.l.b16 %v1196
        %v2234 = vunpack.c.h.b16 %v1196
        %v2235 = vunpack.c.l.b16 %v1197
        %v2236 = vunpack.c.h.b16 %v1197
        %v2237 = vunpack.c.l.b16 %v1198
        %v2238 = vunpack.c.h.b16 %v1198
        %v2239 = vunpack.c.l.b16 %v1199
        %v2240 = vunpack.c.h.b16 %v1199
        %v2241 = vunpack.c.l.b16 %v1200
        %v2242 = vunpack.c.h.b16 %v1200
        %v2243 = vunpack.c.l.b16 %v1201
        %v2244 = vunpack.c.h.b16 %v1201
        %v2245 = vunpack.c.l.b16 %v1202
        %v2246 = vunpack.c.h.b16 %v1202
        %v2247 = vunpack.c.l.b16 %v1203
        %v2248 = vunpack.c.h.b16 %v1203
        %v2249 = vunpack.c.l.b16 %v1204
        %v2250 = vunpack.c.h.b16 %v1204
        %v2251 = vunpack.c.l.b16 %v1205
        %v2252 = vunpack.c.h.b16 %v1205
        %v2253 = vunpack.c.l.b16 %v1206
        %v2254 = vunpack.c.h.b16 %v1206
        %v2255 = vunpack.c.l.b16 %v1207
        %v2256 = vunpack.c.h.b16 %v1207
        %v2257 = vunpack.c.l.b16 %v1208
        %v2258 = vunpack.c.h.b16 %v1208
        %v2259 = vunpack.c.l.b16 %v1209
        %v2260 = vunpack.c.h.b16 %v1209
        %v2261 = vunpack.c.l.b16 %v1210
        %v2262 = vunpack.c.h.b16 %v1210
        %v2263 = vunpack.c.l.b16 %v1211
        %v2264 = vunpack.c.h.b16 %v1211
        %v2265 = vunpack.c.l.b16 %v1212
        %v2266 = vunpack.c.h.b16 %v1212
        %v2267 = vunpack.c.l.b16 %v1213
        %v2268 = vunpack.c.h.b16 %v1213
        %v2269 = vunpack.c.l.b16 %v1214
        %v2270 = vunpack.c.h.b16 %v1214
        %v2271 = vunpack.c.l.b16 %v1215
        %v2272 = vunpack.c.h.b16 %v1215
        %v2273 = vunpack.c.l.b16 %v1216
        %v2274 = vunpack.c.h.b16 %v1216
        %v2275 = vunpack.c.l.b16 %v1217
        %v2276 = vunpack.c.h.b16 %v1217
        %v2277 = vunpack.c.l.b16 %v1218
        %v2278 = vunpack.c.h.b16 %v1218
        %v2279 = vunpack.c.l.b16 %v1219
        %v2280 = vunpack.c.h.b16 %v1219
        %v2281 = vunpack.c.l.b16 %v1220
        %v2282 = vunpack.c.h.b16 %v1220
        %v2283 = vunpack.c.l.b16 %v1221
        %v2284 = vunpack.c.h.b16 %v1221
        %v2285 = vunpack.c.l.b16 %v1222
        %v2286 = vunpack.c.h.b16 %v1222
        %v2287 = vunpack.c.l.b16 %v1223
        %v2288 = vunpack.c.h.b16 %v1223
        %v2289 = vunpack.c.l.b16 %v1224
        %v2290 = vunpack.c.h.b16 %v1224
        %v2291 = vunpack.c.l.b16 %v1225
        %v2292 = vunpack.c.h.b16 %v1225
        %v2293 = vunpack.c.l.b16 %v1226
        %v2294 = vunpack.c.h.b16 %v1226
        %v2295 = vunpack.c.l.b16 %v1227
        %v2296 = vunpack.c.h.b16 %v1227
        %v2297 = vunpack.c.l.b16 %v1228
        %v2298 = vunpack.c.h.b16 %v1228
        %v2299 = vunpack.c.l.b16 %v1229
        %v2300 = vunpack.c.h.b16 %v1229
        %v2301 = vunpack.c.l.b16 %v1230
        %v2302 = vunpack.c.h.b16 %v1230
        %v2303 = vunpack.c.l.b16 %v1231
        %v2304 = vunpack.c.h.b16 %v1231
        %v2305 = vunpack.c.l.b16 %v1232
        %v2306 = vunpack.c.h.b16 %v1232
        %v2307 = vunpack.c.l.b16 %v1233
        %v2308 = vunpack.c.h.b16 %v1233
        %v2309 = vunpack.c.l.b16 %v1234
        %v2310 = vunpack.c.h.b16 %v1234
        %v2311 = vunpack.c.l.b16 %v1235
        %v2312 = vunpack.c.h.b16 %v1235
        %v2313 = vunpack.c.l.b16 %v1236
        %v2314 = vunpack.c.h.b16 %v1236
        %v2315 = vunpack.c.l.b16 %v1237
        %v2316 = vunpack.c.h.b16 %v1237
        %v2317 = vunpack.c.l.b16 %v1238
        %v2318 = vunpack.c.h.b16 %v1238
        %v2319 = vunpack.c.l.b16 %v1239
        %v2320 = vunpack.c.h.b16 %v1239
        %v2321 = vunpack.c.l.b16 %v1240
        %v2322 = vunpack.c.h.b16 %v1240
        %v2323 = vunpack.c.l.b16 %v1241
        %v2324 = vunpack.c.h.b16 %v1241
        %v2325 = vunpack.c.l.b16 %v1242
        %v2326 = vunpack.c.h.b16 %v1242
        %v2327 = vunpack.c.l.b16 %v1243
        %v2328 = vunpack.c.h.b16 %v1243
        %v2329 = vunpack.c.l.b16 %v1244
        %v2330 = vunpack.c.h.b16 %v1244
        %v2331 = vunpack.c.l.b16 %v1245
        %v2332 = vunpack.c.h.b16 %v1245
        %v2333 = vunpack.c.l.b16 %v1246
        %v2334 = vunpack.c.h.b16 %v1246
        %v2335 = vunpack.c.l.b16 %v1247
        %v2336 = vunpack.c.h.b16 %v1247
        %v2337 = vunpack.c.l.b16 %v1248
        %v2338 = vunpack.c.h.b16 %v1248
        %v2339 = vunpack.c.l.b16 %v1249
        %v2340 = vunpack.c.h.b16 %v1249
        %v2341 = vunpack.c.l.b16 %v1250
        %v2342 = vunpack.c.h.b16 %v1250
        %v2343 = vunpack.c.l.b16 %v1251
        %v2344 = vunpack.c.h.b16 %v1251
        %v2345 = vunpack.c.l.b16 %v1252
        %v2346 = vunpack.c.h.b16 %v1252
        %v2347 = vunpack.c.l.b16 %v1253
        %v2348 = vunpack.c.h.b16 %v1253
        %v2349 = vunpack.c.l.b16 %v1254
        %v2350 = vunpack.c.h.b16 %v1254
        %v2351 = vunpack.c.l.b16 %v1255
        %v2352 = vunpack.c.h.b16 %v1255
        %v2353 = vunpack.c.l.b16 %v1256
        %v2354 = vunpack.c.h.b16 %v1256
        %v2355 = vunpack.c.l.b16 %v1257
        %v2356 = vunpack.c.h.b16 %v1257
        %v2357 = vunpack.c.l.b16 %v1258
        %v2358 = vunpack.c.h.b16 %v1258
        %v2359 = vunpack.c.l.b16 %v1259
        %v2360 = vunpack.c.h.b16 %v1259
        %v2361 = vunpack.c.l.b16 %v1260
        %v2362 = vunpack.c.h.b16 %v1260
        %v2363 = vunpack.c.l.b16 %v1261
        %v2364 = vunpack.c.h.b16 %v1261
        %v2365 = vunpack.c.l.b16 %v1262
        %v2366 = vunpack.c.h.b16 %v1262
        %v2367 = vunpack.c.l.b16 %v1263
        %v2368 = vunpack.c.h.b16 %v1263
        %v2369 = vunpack.c.l.b16 %v1264
        %v2370 = vunpack.c.h.b16 %v1264
        %v2371 = vunpack.c.l.b16 %v1265
        %v2372 = vunpack.c.h.b16 %v1265
        %v2373 = vunpack.c.l.b16 %v1266
        %v2374 = vunpack.c.h.b16 %v1266
        %v2375 = vunpack.c.l.b16 %v1267
        %v2376 = vunpack.c.h.b16 %v1267
        %v2377 = vunpack.c.l.b16 %v1268
        %v2378 = vunpack.c.h.b16 %v1268
        %v2379 = vunpack.c.l.b16 %v1269
        %v2380 = vunpack.c.h.b16 %v1269
        %v2381 = vunpack.c.l.b16 %v1270
        %v2382 = vunpack.c.h.b16 %v1270
        %v2383 = vunpack.c.l.b16 %v1271
        %v2384 = vunpack.c.h.b16 %v1271
        %v2385 = vunpack.c.l.b16 %v1272
        %v2386 = vunpack.c.h.b16 %v1272
        %v2387 = vunpack.c.l.b16 %v1273
        %v2388 = vunpack.c.h.b16 %v1273
        %v2389 = vunpack.c.l.b16 %v1274
        %v2390 = vunpack.c.h.b16 %v1274
        %v2391 = vunpack.c.l.b16 %v1275
        %v2392 = vunpack.c.h.b16 %v1275
        %v2393 = vunpack.c.l.b16 %v1276
        %v2394 = vunpack.c.h.b16 %v1276
        %v2395 = vunpack.c.l.b16 %v1277
        %v2396 = vunpack.c.h.b16 %v1277
        %v2397 = vunpack.c.l.b16 %v1278
        %v2398 = vunpack.c.h.b16 %v1278
        %v2399 = vunpack.c.l.b16 %v1279
        %v2400 = vunpack.c.h.b16 %v1279
        %v2401 = vunpack.c.l.b16 %v1280
        %v2402 = vunpack.c.h.b16 %v1280
        %v2403 = vunpack.c.l.b16 %v1281
        %v2404 = vunpack.c.h.b16 %v1281
        %v2405 = vunpack.c.l.b16 %v1282
        %v2406 = vunpack.c.h.b16 %v1282
        %v2407 = vunpack.c.l.b16 %v1283
        %v2408 = vunpack.c.h.b16 %v1283
        %v2409 = vunpack.c.l.b16 %v1284
        %v2410 = vunpack.c.h.b16 %v1284
        %v2411 = vunpack.c.l.b16 %v1285
        %v2412 = vunpack.c.h.b16 %v1285
        %v2413 = vunpack.c.l.b16 %v1286
        %v2414 = vunpack.c.h.b16 %v1286
        %v2415 = vunpack.c.l.b16 %v1287
        %v2416 = vunpack.c.h.b16 %v1287
        %v2417 = vunpack.c.l.b16 %v1288
        %v2418 = vunpack.c.h.b16 %v1288
        %v2419 = vunpack.c.l.b16 %v1289
        %v2420 = vunpack.c.h.b16 %v1289
        %v2421 = vunpack.c.l.b16 %v1290
        %v2422 = vunpack.c.h.b16 %v1290
        %v2423 = vunpack.c.l.b16 %v1291
        %v2424 = vunpack.c.h.b16 %v1291
        %v2425 = vunpack.c.l.b16 %v1292
        %v2426 = vunpack.c.h.b16 %v1292
        %v2427 = vunpack.c.l.b16 %v1293
        %v2428 = vunpack.c.h.b16 %v1293
        %v2429 = vunpack.c.l.b16 %v1294
        %v2430 = vunpack.c.h.b16 %v1294
        %v2431 = vunpack.c.l.b16 %v1295
        %v2432 = vunpack.c.h.b16 %v1295
        %v2433 = vunpack.c.l.b16 %v1296
        %v2434 = vunpack.c.h.b16 %v1296
        %v2435 = vunpack.c.l.b16 %v1297
        %v2436 = vunpack.c.h.b16 %v1297
        %v2437 = vunpack.c.l.b16 %v1298
        %v2438 = vunpack.c.h.b16 %v1298
        %v2439 = vunpack.c.l.b16 %v1299
        %v2440 = vunpack.c.h.b16 %v1299
        %v2441 = vunpack.c.l.b16 %v1300
        %v2442 = vunpack.c.h.b16 %v1300
        %v2443 = vunpack.c.l.b16 %v1301
        %v2444 = vunpack.c.h.b16 %v1301
        %v2445 = vunpack.c.l.b16 %v1302
        %v2446 = vunpack.c.h.b16 %v1302
        %v2447 = vunpack.c.l.b16 %v1303
        %v2448 = vunpack.c.h.b16 %v1303
        %v2449 = vunpack.c.l.b16 %v1304
        %v2450 = vunpack.c.h.b16 %v1304
        %v2451 = vunpack.c.l.b16 %v1305
        %v2452 = vunpack.c.h.b16 %v1305
        %v2453 = vunpack.c.l.b16 %v1306
        %v2454 = vunpack.c.h.b16 %v1306
        %v2455 = vunpack.c.l.b16 %v1307
        %v2456 = vunpack.c.h.b16 %v1307
        %v2457 = vunpack.c.l.b16 %v1308
        %v2458 = vunpack.c.h.b16 %v1308
        %v2459 = vunpack.c.l.b16 %v1309
        %v2460 = vunpack.c.h.b16 %v1309
        %v2461 = vunpack.c.l.b16 %v1310
        %v2462 = vunpack.c.h.b16 %v1310
        %v2463 = vunpack.c.l.b16 %v1311
        %v2464 = vunpack.c.h.b16 %v1311
        %v2465 = vunpack.c.l.b16 %v1312
        %v2466 = vunpack.c.h.b16 %v1312
        %v2467 = vunpack.c.l.b16 %v1313
        %v2468 = vunpack.c.h.b16 %v1313
        %v2469 = vunpack.c.l.b16 %v1314
        %v2470 = vunpack.c.h.b16 %v1314
        %v2471 = vunpack.c.l.b16 %v1315
        %v2472 = vunpack.c.h.b16 %v1315
        %v2473 = vunpack.c.l.b16 %v1316
        %v2474 = vunpack.c.h.b16 %v1316
        %v2475 = vunpack.c.l.b16 %v1317
        %v2476 = vunpack.c.h.b16 %v1317
        %v2477 = vunpack.c.l.b16 %v1318
        %v2478 = vunpack.c.h.b16 %v1318
        %v2479 = vunpack.c.l.b16 %v1319
        %v2480 = vunpack.c.h.b16 %v1319
        %v2481 = vunpack.c.l.b16 %v1320
        %v2482 = vunpack.c.h.b16 %v1320
        %v2483 = vunpack.c.l.b16 %v1321
        %v2484 = vunpack.c.h.b16 %v1321
        %v2485 = vunpack.c.l.b16 %v1322
        %v2486 = vunpack.c.h.b16 %v1322
        %v2487 = vunpack.c.l.b16 %v1323
        %v2488 = vunpack.c.h.b16 %v1323
        %v2489 = vunpack.c.l.b16 %v1324
        %v2490 = vunpack.c.h.b16 %v1324
        %v2491 = vunpack.c.l.b16 %v1325
        %v2492 = vunpack.c.h.b16 %v1325
        %v2493 = vunpack.c.l.b16 %v1326
        %v2494 = vunpack.c.h.b16 %v1326
        %v2495 = vunpack.c.l.b16 %v1327
        %v2496 = vunpack.c.h.b16 %v1327
        %v2497 = vunpack.c.l.b16 %v1328
        %v2498 = vunpack.c.h.b16 %v1328
        %v2499 = vunpack.c.l.b16 %v1329
        %v2500 = vunpack.c.h.b16 %v1329
        %v2501 = vunpack.c.l.b16 %v1330
        %v2502 = vunpack.c.h.b16 %v1330
        %v2503 = vunpack.c.l.b16 %v1331
        %v2504 = vunpack.c.h.b16 %v1331
        %v2505 = vunpack.c.l.b16 %v1332
        %v2506 = vunpack.c.h.b16 %v1332
        %v2507 = vunpack.c.l.b16 %v1333
        %v2508 = vunpack.c.h.b16 %v1333
        %v2509 = vunpack.c.l.b16 %v1334
        %v2510 = vunpack.c.h.b16 %v1334
        %v2511 = vunpack.c.l.b16 %v1335
        %v2512 = vunpack.c.h.b16 %v1335
        %v2513 = vunpack.c.l.b16 %v1336
        %v2514 = vunpack.c.h.b16 %v1336
        %v2515 = vunpack.c.l.b16 %v1337
        %v2516 = vunpack.c.h.b16 %v1337
        %v2517 = vunpack.c.l.b16 %v1338
        %v2518 = vunpack.c.h.b16 %v1338
        %v2519 = vunpack.c.l.b16 %v1339
        %v2520 = vunpack.c.h.b16 %v1339
        %v2521 = vunpack.c.l.b16 %v1340
        %v2522 = vunpack.c.h.b16 %v1340
        %v2523 = vunpack.c.l.b16 %v1341
        %v2524 = vunpack.c.h.b16 %v1341
        %v2525 = vunpack.c.l.b16 %v1342
        %v2526 = vunpack.c.h.b16 %v1342
        %v2527 = vunpack.c.l.b16 %v1343
        %v2528 = vunpack.c.h.b16 %v1343
        %v2529 = vunpack.c.l.b16 %v1344
        %v2530 = vunpack.c.h.b16 %v1344
        %v2531 = vunpack.c.l.b16 %v1345
        %v2532 = vunpack.c.h.b16 %v1345
        %v2533 = vunpack.c.l.b16 %v1346
        %v2534 = vunpack.c.h.b16 %v1346
        %v2535 = vunpack.c.l.b16 %v1347
        %v2536 = vunpack.c.h.b16 %v1347
        %v2537 = vunpack.c.l.b16 %v1348
        %v2538 = vunpack.c.h.b16 %v1348
        %v2539 = vunpack.c.l.b16 %v1349
        %v2540 = vunpack.c.h.b16 %v1349
        %v2541 = vunpack.c.l.b16 %v1350
        %v2542 = vunpack.c.h.b16 %v1350
        %v2543 = vunpack.c.l.b16 %v1351
        %v2544 = vunpack.c.h.b16 %v1351
        %v2545 = vunpack.c.l.b16 %v1352
        %v2546 = vunpack.c.h.b16 %v1352
        %v2547 = vunpack.c.l.b16 %v1353
        %v2548 = vunpack.c.h.b16 %v1353
        %v2549 = vunpack.c.l.b16 %v1354
        %v2550 = vunpack.c.h.b16 %v1354
        %v2551 = vunpack.c.l.b16 %v1355
        %v2552 = vunpack.c.h.b16 %v1355
        %v2553 = vunpack.c.l.b16 %v1356
        %v2554 = vunpack.c.h.b16 %v1356
        %v2555 = vunpack.c.l.b16 %v1357
        %v2556 = vunpack.c.h.b16 %v1357
        %v2557 = vunpack.c.l.b16 %v1358
        %v2558 = vunpack.c.h.b16 %v1358
        %v2559 = vunpack.c.l.b16 %v1359
        %v2560 = vunpack.c.h.b16 %v1359
        %v2561 = vunpack.c.l.b16 %v1360
        %v2562 = vunpack.c.h.b16 %v1360
        %v2563 = vunpack.c.l.b16 %v1361
        %v2564 = vunpack.c.h.b16 %v1361
        %v2565 = vunpack.c.l.b16 %v1362
        %v2566 = vunpack.c.h.b16 %v1362
        %v2567 = vunpack.c.l.b16 %v1363
        %v2568 = vunpack.c.h.b16 %v1363
        %v2569 = vunpack.c.l.b16 %v1364
        %v2570 = vunpack.c.h.b16 %v1364
        %v2571 = vunpack.c.l.b16 %v1365
        %v2572 = vunpack.c.h.b16 %v1365
        %v2573 = vunpack.c.l.b16 %v1366
        %v2574 = vunpack.c.h.b16 %v1366
        %v2575 = vunpack.c.l.b16 %v1367
        %v2576 = vunpack.c.h.b16 %v1367
        %v2577 = vunpack.c.l.b16 %v1368
        %v2578 = vunpack.c.h.b16 %v1368
        %v2579 = vunpack.c.l.b16 %v1369
        %v2580 = vunpack.c.h.b16 %v1369
        %v2581 = vunpack.c.l.b16 %v1370
        %v2582 = vunpack.c.h.b16 %v1370
        %v2583 = vunpack.c.l.b16 %v1371
        %v2584 = vunpack.c.h.b16 %v1371
        %v2585 = vunpack.c.l.b16 %v1372
        %v2586 = vunpack.c.h.b16 %v1372
        %v2587 = vunpack.c.l.b16 %v1373
        %v2588 = vunpack.c.h.b16 %v1373
        %v2589 = vunpack.c.l.b16 %v1374
        %v2590 = vunpack.c.h.b16 %v1374
        %v2591 = vunpack.c.l.b16 %v1375
        %v2592 = vunpack.c.h.b16 %v1375
        %v2593 = vunpack.c.l.b16 %v1376
        %v2594 = vunpack.c.h.b16 %v1376
        %v2595 = vunpack.c.l.b16 %v1377
        %v2596 = vunpack.c.h.b16 %v1377
        %v2597 = vunpack.c.l.b16 %v1378
        %v2598 = vunpack.c.h.b16 %v1378
        %v2599 = vunpack.c.l.b16 %v1379
        %v2600 = vunpack.c.h.b16 %v1379
        %v2601 = vunpack.c.l.b16 %v1380
        %v2602 = vunpack.c.h.b16 %v1380
        %v2603 = vunpack.c.l.b16 %v1381
        %v2604 = vunpack.c.h.b16 %v1381
        %v2605 = vunpack.c.l.b16 %v1382
        %v2606 = vunpack.c.h.b16 %v1382
        %v2607 = vunpack.c.l.b16 %v1383
        %v2608 = vunpack.c.h.b16 %v1383
        %v2609 = vunpack.c.l.b16 %v1384
        %v2610 = vunpack.c.h.b16 %v1384
        %v2611 = vunpack.c.l.b16 %v1385
        %v2612 = vunpack.c.h.b16 %v1385
        %v2613 = vunpack.c.l.b16 %v1386
        %v2614 = vunpack.c.h.b16 %v1386
        %v2615 = vunpack.c.l.b16 %v1387
        %v2616 = vunpack.c.h.b16 %v1387
        %v2617 = vunpack.c.l.b16 %v1388
        %v2618 = vunpack.c.h.b16 %v1388
        %v2619 = vunpack.c.l.b16 %v1389
        %v2620 = vunpack.c.h.b16 %v1389
        %v2621 = vunpack.c.l.b16 %v1390
        %v2622 = vunpack.c.h.b16 %v1390
        %v2623 = vunpack.c.l.b16 %v1391
        %v2624 = vunpack.c.h.b16 %v1391
        %v2625 = vunpack.c.l.b16 %v1392
        %v2626 = vunpack.c.h.b16 %v1392
        %v2627 = vunpack.c.l.b16 %v1393
        %v2628 = vunpack.c.h.b16 %v1393
        %v2629 = vunpack.c.l.b16 %v1394
        %v2630 = vunpack.c.h.b16 %v1394
        %v2631 = vunpack.c.l.b16 %v1395
        %v2632 = vunpack.c.h.b16 %v1395
        %v2633 = vunpack.c.l.b16 %v1396
        %v2634 = vunpack.c.h.b16 %v1396
        %v2635 = vunpack.c.l.b16 %v1397
        %v2636 = vunpack.c.h.b16 %v1397
        %v2637 = vunpack.c.l.b16 %v1398
        %v2638 = vunpack.c.h.b16 %v1398
        %v2639 = vunpack.c.l.b16 %v1399
        %v2640 = vunpack.c.h.b16 %v1399
        %v2641 = vunpack.c.l.b16 %v1400
        %v2642 = vunpack.c.h.b16 %v1400
        %v2643 = vunpack.c.l.b16 %v1401
        %v2644 = vunpack.c.h.b16 %v1401
        %v2645 = vunpack.c.l.b16 %v1402
        %v2646 = vunpack.c.h.b16 %v1402
        %v2647 = vunpack.c.l.b16 %v1403
        %v2648 = vunpack.c.h.b16 %v1403
        %v2649 = vunpack.c.l.b16 %v1404
        %v2650 = vunpack.c.h.b16 %v1404
        %v2651 = vunpack.c.l.b16 %v1405
        %v2652 = vunpack.c.h.b16 %v1405
        %v2653 = vunpack.c.l.b16 %v1406
        %v2654 = vunpack.c.h.b16 %v1406
        %v2655 = vunpack.c.l.b16 %v1407
        %v2656 = vunpack.c.h.b16 %v1407
        %v2657 = vunpack.c.l.b16 %v1408
        %v2658 = vunpack.c.h.b16 %v1408
        %v2659 = vunpack.c.l.b16 %v1409
        %v2660 = vunpack.c.h.b16 %v1409
        %v2661 = vunpack.c.l.b16 %v1410
        %v2662 = vunpack.c.h.b16 %v1410
        %v2663 = vunpack.c.l.b16 %v1411
        %v2664 = vunpack.c.h.b16 %v1411
        %v2665 = vunpack.c.l.b16 %v1412
        %v2666 = vunpack.c.h.b16 %v1412
        %v2667 = vunpack.c.l.b16 %v1413
        %v2668 = vunpack.c.h.b16 %v1413
        %v2669 = vunpack.c.l.b16 %v1414
        %v2670 = vunpack.c.h.b16 %v1414
        %v2671 = vunpack.c.l.b16 %v1415
        %v2672 = vunpack.c.h.b16 %v1415
        %v2673 = vunpack.c.l.b16 %v1416
        %v2674 = vunpack.c.h.b16 %v1416
        %v2675 = vunpack.c.l.b16 %v1417
        %v2676 = vunpack.c.h.b16 %v1417
        %v2677 = vunpack.c.l.b16 %v1418
        %v2678 = vunpack.c.h.b16 %v1418
        %v2679 = vunpack.c.l.b16 %v1419
        %v2680 = vunpack.c.h.b16 %v1419
        %v2681 = vunpack.c.l.b16 %v1420
        %v2682 = vunpack.c.h.b16 %v1420
        %v2683 = vunpack.c.l.b16 %v1421
        %v2684 = vunpack.c.h.b16 %v1421
        %v2685 = vunpack.c.l.b16 %v1422
        %v2686 = vunpack.c.h.b16 %v1422
        %v2687 = vunpack.c.l.b16 %v1423
        %v2688 = vunpack.c.h.b16 %v1423
        %v2689 = vunpack.c.l.b16 %v1424
        %v2690 = vunpack.c.h.b16 %v1424
        %v2691 = vunpack.c.l.b16 %v1425
        %v2692 = vunpack.c.h.b16 %v1425
        %v2693 = vunpack.c.l.b16 %v1426
        %v2694 = vunpack.c.h.b16 %v1426
        %v2695 = vunpack.c.l.b16 %v1427
        %v2696 = vunpack.c.h.b16 %v1427
        %v2697 = vunpack.c.l.b16 %v1428
        %v2698 = vunpack.c.h.b16 %v1428
        %v2699 = vunpack.c.l.b16 %v1429
        %v2700 = vunpack.c.h.b16 %v1429
        %v2701 = vunpack.c.l.b16 %v1430
        %v2702 = vunpack.c.h.b16 %v1430
        %v2703 = vunpack.c.l.b16 %v1431
        %v2704 = vunpack.c.h.b16 %v1431
        %v2705 = vunpack.c.l.b16 %v1432
        %v2706 = vunpack.c.h.b16 %v1432
        %v2707 = vunpack.c.l.b16 %v1433
        %v2708 = vunpack.c.h.b16 %v1433
        %v2709 = vunpack.c.l.b16 %v1434
        %v2710 = vunpack.c.h.b16 %v1434
        %v2711 = vunpack.c.l.b16 %v1435
        %v2712 = vunpack.c.h.b16 %v1435
        %v2713 = vunpack.c.l.b16 %v1436
        %v2714 = vunpack.c.h.b16 %v1436
        %v2715 = vunpack.c.l.b16 %v1437
        %v2716 = vunpack.c.h.b16 %v1437
        %v2717 = vunpack.c.l.b16 %v1438
        %v2718 = vunpack.c.h.b16 %v1438
        %v2719 = vunpack.c.l.b16 %v1439
        %v2720 = vunpack.c.h.b16 %v1439
        %v2721 = vunpack.c.l.b16 %v1440
        %v2722 = vunpack.c.h.b16 %v1440
        %v2723 = vunpack.c.l.b16 %v1441
        %v2724 = vunpack.c.h.b16 %v1441
        %v2725 = vunpack.c.l.b16 %v1442
        %v2726 = vunpack.c.h.b16 %v1442
        %v2727 = vunpack.c.l.b16 %v1443
        %v2728 = vunpack.c.h.b16 %v1443
        %v2729 = vunpack.c.l.b16 %v1444
        %v2730 = vunpack.c.h.b16 %v1444
        %v2731 = vunpack.c.l.b16 %v1445
        %v2732 = vunpack.c.h.b16 %v1445
        %v2733 = vunpack.c.l.b16 %v1446
        %v2734 = vunpack.c.h.b16 %v1446
        %v2735 = vunpack.c.l.b16 %v1447
        %v2736 = vunpack.c.h.b16 %v1447
        %v2737 = vunpack.c.l.b16 %v1448
        %v2738 = vunpack.c.h.b16 %v1448
        %v2739 = vunpack.c.l.b16 %v1449
        %v2740 = vunpack.c.h.b16 %v1449
        %v2741 = vunpack.c.l.b16 %v1450
        %v2742 = vunpack.c.h.b16 %v1450
        %v2743 = vunpack.c.l.b16 %v1451
        %v2744 = vunpack.c.h.b16 %v1451
        %v2745 = vunpack.c.l.b16 %v1452
        %v2746 = vunpack.c.h.b16 %v1452
        %v2747 = vunpack.c.l.b16 %v1453
        %v2748 = vunpack.c.h.b16 %v1453
        %v2749 = vunpack.c.l.b16 %v1454
        %v2750 = vunpack.c.h.b16 %v1454
        %v2751 = vunpack.c.l.b16 %v1455
        %v2752 = vunpack.c.h.b16 %v1455
        %v2753 = vunpack.c.l.b16 %v1456
        %v2754 = vunpack.c.h.b16 %v1456
        %v2755 = vunpack.c.l.b16 %v1457
        %v2756 = vunpack.c.h.b16 %v1457
        %v2757 = vunpack.c.l.b16 %v1458
        %v2758 = vunpack.c.h.b16 %v1458
        %v2759 = vunpack.c.l.b16 %v1459
        %v2760 = vunpack.c.h.b16 %v1459
        %v2761 = vunpack.c.l.b16 %v1460
        %v2762 = vunpack.c.h.b16 %v1460
        %v2763 = vunpack.c.l.b16 %v1461
        %v2764 = vunpack.c.h.b16 %v1461
        %v2765 = vunpack.c.l.b16 %v1462
        %v2766 = vunpack.c.h.b16 %v1462
        %v2767 = vunpack.c.l.b16 %v1463
        %v2768 = vunpack.c.h.b16 %v1463
        %v2769 = vunpack.c.l.b16 %v1464
        %v2770 = vunpack.c.h.b16 %v1464
        %v2771 = vunpack.c.l.b16 %v1465
        %v2772 = vunpack.c.h.b16 %v1465
        %v2773 = vunpack.c.l.b16 %v1466
        %v2774 = vunpack.c.h.b16 %v1466
        %v2775 = vunpack.c.l.b16 %v1467
        %v2776 = vunpack.c.h.b16 %v1467
        %v2777 = vunpack.c.l.b16 %v1468
        %v2778 = vunpack.c.h.b16 %v1468
        %v2779 = vunpack.c.l.b16 %v1469
        %v2780 = vunpack.c.h.b16 %v1469
        %v2781 = vunpack.c.l.b16 %v1470
        %v2782 = vunpack.c.h.b16 %v1470
        %v2783 = vunpack.c.l.b16 %v1471
        %v2784 = vunpack.c.h.b16 %v1471
        %v2785 = vunpack.c.l.b16 %v1472
        %v2786 = vunpack.c.h.b16 %v1472
        %v2787 = vunpack.c.l.b16 %v1473
        %v2788 = vunpack.c.h.b16 %v1473
        %v2789 = vunpack.c.l.b16 %v1474
        %v2790 = vunpack.c.h.b16 %v1474
        %v2791 = vunpack.c.l.b16 %v1475
        %v2792 = vunpack.c.h.b16 %v1475
        %v2793 = vunpack.c.l.b16 %v1476
        %v2794 = vunpack.c.h.b16 %v1476
        %v2795 = vunpack.c.l.b16 %v1477
        %v2796 = vunpack.c.h.b16 %v1477
        %v2797 = vunpack.c.l.b16 %v1478
        %v2798 = vunpack.c.h.b16 %v1478
        %v2799 = vunpack.c.l.b16 %v1479
        %v2800 = vunpack.c.h.b16 %v1479
        %v2801 = vunpack.c.l.b16 %v1480
        %v2802 = vunpack.c.h.b16 %v1480
        %v2803 = vunpack.c.l.b16 %v1481
        %v2804 = vunpack.c.h.b16 %v1481
        %v2805 = vunpack.c.l.b16 %v1482
        %v2806 = vunpack.c.h.b16 %v1482
        %v2807 = vunpack.c.l.b16 %v1483
        %v2808 = vunpack.c.h.b16 %v1483
        %v2809 = vunpack.c.l.b16 %v1484
        %v2810 = vunpack.c.h.b16 %v1484
        %v2811 = vunpack.c.l.b16 %v1485
        %v2812 = vunpack.c.h.b16 %v1485
        %v2813 = vunpack.c.l.b16 %v1486
        %v2814 = vunpack.c.h.b16 %v1486
        %v2815 = vunpack.c.l.b16 %v1487
        %v2816 = vunpack.c.h.b16 %v1487
        %v2817 = vunpack.c.l.b16 %v1488
        %v2818 = vunpack.c.h.b16 %v1488
        %v2819 = vpack.c.b16 %v1971, %v1955
        %v2820 = vpack.c.b16 %v1972, %v1956
        %v2821 = vpack.c.b16 %v1973, %v1957
        %v2822 = vpack.c.b16 %v1974, %v1958
        %v2823 = vpack.c.b16 %v1975, %v1959
        %v2824 = vpack.c.b16 %v1976, %v1960
        %v2825 = vpack.c.b16 %v1977, %v1961
        %v2826 = vpack.c.b16 %v1978, %v1962
        %v2827 = vpack.c.b16 %v1979, %v1963
        %v2828 = vpack.c.b16 %v1980, %v1964
        %v2829 = vpack.c.b16 %v1981, %v1965
        %v2830 = vpack.c.b16 %v1982, %v1966
        %v2831 = vpack.c.b16 %v1983, %v1967
        %v2832 = vpack.c.b16 %v1984, %v1968
        %v2833 = vpack.c.b16 %v1985, %v1969
        %v2834 = vpack.c.b16 %v1986, %v1970
        %v2835 = vpack.c.b16 %v2003, %v1987
        %v2836 = vpack.c.b16 %v2004, %v1988
        %v2837 = vpack.c.b16 %v2005, %v1989
        %v2838 = vpack.c.b16 %v2006, %v1990
        %v2839 = vpack.c.b16 %v2007, %v1991
        %v2840 = vpack.c.b16 %v2008, %v1992
        %v2841 = vpack.c.b16 %v2009, %v1993
        %v2842 = vpack.c.b16 %v2010, %v1994
        %v2843 = vpack.c.b16 %v2011, %v1995
        %v2844 = vpack.c.b16 %v2012, %v1996
        %v2845 = vpack.c.b16 %v2013, %v1997
        %v2846 = vpack.c.b16 %v2014, %v1998
        %v2847 = vpack.c.b16 %v2015, %v1999
        %v2848 = vpack.c.b16 %v2016, %v2000
        %v2849 = vpack.c.b16 %v2017, %v2001
        %v2850 = vpack.c.b16 %v2018, %v2002
        %v2851 = vpack.c.b16 %v2035, %v2019
        %v2852 = vpack.c.b16 %v2036, %v2020
        %v2853 = vpack.c.b16 %v2037, %v2021
        %v2854 = vpack.c.b16 %v2038, %v2022
        %v2855 = vpack.c.b16 %v2039, %v2023
        %v2856 = vpack.c.b16 %v2040, %v2024
        %v2857 = vpack.c.b16 %v2041, %v2025
        %v2858 = vpack.c.b16 %v2042, %v2026
        %v2859 = vpack.c.b16 %v2043, %v2027
        %v2860 = vpack.c.b16 %v2044, %v2028
        %v2861 = vpack.c.b16 %v2045, %v2029
        %v2862 = vpack.c.b16 %v2046, %v2030
        %v2863 = vpack.c.b16 %v2047, %v2031
        %v2864 = vpack.c.b16 %v2048, %v2032
        %v2865 = vpack.c.b16 %v2049, %v2033
        %v2866 = vpack.c.b16 %v2050, %v2034
        %v2867 = vpack.c.b16 %v2067, %v2051
        %v2868 = vpack.c.b16 %v2068, %v2052
        %v2869 = vpack.c.b16 %v2069, %v2053
        %v2870 = vpack.c.b16 %v2070, %v2054
        %v2871 = vpack.c.b16 %v2071, %v2055
        %v2872 = vpack.c.b16 %v2072, %v2056
        %v2873 = vpack.c.b16 %v2073, %v2057
        %v2874 = vpack.c.b16 %v2074, %v2058
        %v2875 = vpack.c.b16 %v2075, %v2059
        %v2876 = vpack.c.b16 %v2076, %v2060
        %v2877 = vpack.c.b16 %v2077, %v2061
        %v2878 = vpack.c.b16 %v2078, %v2062
        %v2879 = vpack.c.b16 %v2079, %v2063
        %v2880 = vpack.c.b16 %v2080, %v2064
        %v2881 = vpack.c.b16 %v2081, %v2065
        %v2882 = vpack.c.b16 %v2082, %v2066
        %v2883 = vpack.c.b16 %v2099, %v2083
        %v2884 = vpack.c.b16 %v2100, %v2084
        %v2885 = vpack.c.b16 %v2101, %v2085
        %v2886 = vpack.c.b16 %v2102, %v2086
        %v2887 = vpack.c.b16 %v2103, %v2087
        %v2888 = vpack.c.b16 %v2104, %v2088
        %v2889 = vpack.c.b16 %v2105, %v2089
        %v2890 = vpack.c.b16 %v2106, %v2090
        %v2891 = vpack.c.b16 %v2107, %v2091
        %v2892 = vpack.c.b16 %v2108, %v2092
        %v2893 = vpack.c.b16 %v2109, %v2093
        %v2894 = vpack.c.b16 %v2110, %v2094
        %v2895 = vpack.c.b16 %v2111, %v2095
        %v2896 = vpack.c.b16 %v2112, %v2096
        %v2897 = vpack.c.b16 %v2113, %v2097
        %v2898 = vpack.c.b16 %v2114, %v2098
        %v2899 = vpack.c.b16 %v2131, %v2115
        %v2900 = vpack.c.b16 %v2132, %v2116
        %v2901 = vpack.c.b16 %v2133, %v2117
        %v2902 = vpack.c.b16 %v2134, %v2118
        %v2903 = vpack.c.b16 %v2135, %v2119
        %v2904 = vpack.c.b16 %v2136, %v2120
        %v2905 = vpack.c.b16 %v2137, %v2121
        %v2906 = vpack.c.b16 %v2138, %v2122
        %v2907 = vpack.c.b16 %v2139, %v2123
        %v2908 = vpack.c.b16 %v2140, %v2124
        %v2909 = vpack.c.b16 %v2141, %v2125
        %v2910 = vpack.c.b16 %v2142, %v2126
        %v2911 = vpack.c.b16 %v2143, %v2127
        %v2912 = vpack.c.b16 %v2144, %v2128
        %v2913 = vpack.c.b16 %v2145, %v2129
        %v2914 = vpack.c.b16 %v2146, %v2130
        %v2915 = vpack.c.b16 %v2163, %v2147
        %v2916 = vpack.c.b16 %v2164, %v2148
        %v2917 = vpack.c.b16 %v2165, %v2149
        %v2918 = vpack.c.b16 %v2166, %v2150
        %v2919 = vpack.c.b16 %v2167, %v2151
        %v2920 = vpack.c.b16 %v2168, %v2152
        %v2921 = vpack.c.b16 %v2169, %v2153
        %v2922 = vpack.c.b16 %v2170, %v2154
        %v2923 = vpack.c.b16 %v2171, %v2155
        %v2924 = vpack.c.b16 %v2172, %v2156
        %v2925 = vpack.c.b16 %v2173, %v2157
        %v2926 = vpack.c.b16 %v2174, %v2158
        %v2927 = vpack.c.b16 %v2175, %v2159
        %v2928 = vpack.c.b16 %v2176, %v2160
        %v2929 = vpack.c.b16 %v2177, %v2161
        %v2930 = vpack.c.b16 %v2178, %v2162
        %v2931 = vpack.c.b16 %v2195, %v2179
        %v2932 = vpack.c.b16 %v2196, %v2180
        %v2933 = vpack.c.b16 %v2197, %v2181
        %v2934 = vpack.c.b16 %v2198, %v2182
        %v2935 = vpack.c.b16 %v2199, %v2183
        %v2936 = vpack.c.b16 %v2200, %v2184
        %v2937 = vpack.c.b16 %v2201, %v2185
        %v2938 = vpack.c.b16 %v2202, %v2186
        %v2939 = vpack.c.b16 %v2203, %v2187
        %v2940 = vpack.c.b16 %v2204, %v2188
        %v2941 = vpack.c.b16 %v2205, %v2189
        %v2942 = vpack.c.b16 %v2206, %v2190
        %v2943 = vpack.c.b16 %v2207, %v2191
        %v2944 = vpack.c.b16 %v2208, %v2192
        %v2945 = vpack.c.b16 %v2209, %v2193
        %v2946 = vpack.c.b16 %v2210, %v2194
        %v2947 = vpack.c.b16 %v2227, %v2211
        %v2948 = vpack.c.b16 %v2228, %v2212
        %v2949 = vpack.c.b16 %v2229, %v2213
        %v2950 = vpack.c.b16 %v2230, %v2214
        %v2951 = vpack.c.b16 %v2231, %v2215
        %v2952 = vpack.c.b16 %v2232, %v2216
        %v2953 = vpack.c.b16 %v2233, %v2217
        %v2954 = vpack.c.b16 %v2234, %v2218
        %v2955 = vpack.c.b16 %v2235, %v2219
        %v2956 = vpack.c.b16 %v2236, %v2220
        %v2957 = vpack.c.b16 %v2237, %v2221
        %v2958 = vpack.c.b16 %v2238, %v2222
        %v2959 = vpack.c.b16 %v2239, %v2223
        %v2960 = vpack.c.b16 %v2240, %v2224
        %v2961 = vpack.c.b16 %v2241, %v2225
        %v2962 = vpack.c.b16 %v2242, %v2226
        %v2963 = vpack.c.b16 %v2259, %v2243
        %v2964 = vpack.c.b16 %v2260, %v2244
        %v2965 = vpack.c.b16 %v2261, %v2245
        %v2966 = vpack.c.b16 %v2262, %v2246
        %v2967 = vpack.c.b16 %v2263, %v2247
        %v2968 = vpack.c.b16 %v2264, %v2248
        %v2969 = vpack.c.b16 %v2265, %v2249
        %v2970 = vpack.c.b16 %v2266, %v2250
        %v2971 = vpack.c.b16 %v2267, %v2251
        %v2972 = vpack.c.b16 %v2268, %v2252
        %v2973 = vpack.c.b16 %v2269, %v2253
        %v2974 = vpack.c.b16 %v2270, %v2254
        %v2975 = vpack.c.b16 %v2271, %v2255
        %v2976 = vpack.c.b16 %v2272, %v2256
        %v2977 = vpack.c.b16 %v2273, %v2257
        %v2978 = vpack.c.b16 %v2274, %v2258
        %v2979 = vpack.c.b16 %v2291, %v2275
        %v2980 = vpack.c.b16 %v2292, %v2276
        %v2981 = vpack.c.b16 %v2293, %v2277
        %v2982 = vpack.c.b16 %v2294, %v2278
        %v2983 = vpack.c.b16 %v2295, %v2279
        %v2984 = vpack.c.b16 %v2296, %v2280
        %v2985 = vpack.c.b16 %v2297, %v2281
        %v2986 = vpack.c.b16 %v2298, %v2282
        %v2987 = vpack.c.b16 %v2299, %v2283
        %v2988 = vpack.c.b16 %v2300, %v2284
        %v2989 = vpack.c.b16 %v2301, %v2285
        %v2990 = vpack.c.b16 %v2302, %v2286
        %v2991 = vpack.c.b16 %v2303, %v2287
        %v2992 = vpack.c.b16 %v2304, %v2288
        %v2993 = vpack.c.b16 %v2305, %v2289
        %v2994 = vpack.c.b16 %v2306, %v2290
        %v2995 = vpack.c.b16 %v2323, %v2307
        %v2996 = vpack.c.b16 %v2324, %v2308
        %v2997 = vpack.c.b16 %v2325, %v2309
        %v2998 = vpack.c.b16 %v2326, %v2310
        %v2999 = vpack.c.b16 %v2327, %v2311
        %v3000 = vpack.c.b16 %v2328, %v2312
        %v3001 = vpack.c.b16 %v2329, %v2313
        %v3002 = vpack.c.b16 %v2330, %v2314
        %v3003 = vpack.c.b16 %v2331, %v2315
        %v3004 = vpack.c.b16 %v2332, %v2316
        %v3005 = vpack.c.b16 %v2333, %v2317
        %v3006 = vpack.c.b16 %v2334, %v2318
        %v3007 = vpack.c.b16 %v2335, %v2319
        %v3008 = vpack.c.b16 %v2336, %v2320
        %v3009 = vpack.c.b16 %v2337, %v2321
        %v3010 = vpack.c.b16 %v2338, %v2322
        %v3011 = vpack.c.b16 %v2355, %v2339
        %v3012 = vpack.c.b16 %v2356, %v2340
        %v3013 = vpack.c.b16 %v2357, %v2341
        %v3014 = vpack.c.b16 %v2358, %v2342
        %v3015 = vpack.c.b16 %v2359, %v2343
        %v3016 = vpack.c.b16 %v2360, %v2344
        %v3017 = vpack.c.b16 %v2361, %v2345
        %v3018 = vpack.c.b16 %v2362, %v2346
        %v3019 = vpack.c.b16 %v2363, %v2347
        %v3020 = vpack.c.b16 %v2364, %v2348
        %v3021 = vpack.c.b16 %v2365, %v2349
        %v3022 = vpack.c.b16 %v2366, %v2350
        %v3023 = vpack.c.b16 %v2367, %v2351
        %v3024 = vpack.c.b16 %v2368, %v2352
        %v3025 = vpack.c.b16 %v2369, %v2353
        %v3026 = vpack.c.b16 %v2370, %v2354
        %v3027 = vpack.c.b16 %v2387, %v2371
        %v3028 = vpack.c.b16 %v2388, %v2372
        %v3029 = vpack.c.b16 %v2389, %v2373
        %v3030 = vpack.c.b16 %v2390, %v2374
        %v3031 = vpack.c.b16 %v2391, %v2375
        %v3032 = vpack.c.b16 %v2392, %v2376
        %v3033 = vpack.c.b16 %v2393, %v2377
        %v3034 = vpack.c.b16 %v2394, %v2378
        %v3035 = vpack.c.b16 %v2395, %v2379
        %v3036 = vpack.c.b16 %v2396, %v2380
        %v3037 = vpack.c.b16 %v2397, %v2381
        %v3038 = vpack.c.b16 %v2398, %v2382
        %v3039 = vpack.c.b16 %v2399, %v2383
        %v3040 = vpack.c.b16 %v2400, %v2384
        %v3041 = vpack.c.b16 %v2401, %v2385
        %v3042 = vpack.c.b16 %v2402, %v2386
        %v3043 = vpack.c.b16 %v2419, %v2403
        %v3044 = vpack.c.b16 %v2420, %v2404
        %v3045 = vpack.c.b16 %v2421, %v2405
        %v3046 = vpack.c.b16 %v2422, %v2406
        %v3047 = vpack.c.b16 %v2423, %v2407
        %v3048 = vpack.c.b16 %v2424, %v2408
        %v3049 = vpack.c.b16 %v2425, %v2409
        %v3050 = vpack.c.b16 %v2426, %v2410
        %v3051 = vpack.c.b16 %v2427, %v2411
        %v3052 = vpack.c.b16 %v2428, %v2412
        %v3053 = vpack.c.b16 %v2429, %v2413
        %v3054 = vpack.c.b16 %v2430, %v2414
        %v3055 = vpack.c.b16 %v2431, %v2415
        %v3056 = vpack.c.b16 %v2432, %v2416
        %v3057 = vpack.c.b16 %v2433, %v2417
        %v3058 = vpack.c.b16 %v2434, %v2418
        %v3059 = vpack.c.b16 %v2451, %v2435
        %v3060 = vpack.c.b16 %v2452, %v2436
        %v3061 = vpack.c.b16 %v2453, %v2437
        %v3062 = vpack.c.b16 %v2454, %v2438
        %v3063 = vpack.c.b16 %v2455, %v2439
        %v3064 = vpack.c.b16 %v2456, %v2440
        %v3065 = vpack.c.b16 %v2457, %v2441
        %v3066 = vpack.c.b16 %v2458, %v2442
        %v3067 = vpack.c.b16 %v2459, %v2443
        %v3068 = vpack.c.b16 %v2460, %v2444
        %v3069 = vpack.c.b16 %v2461, %v2445
        %v3070 = vpack.c.b16 %v2462, %v2446
        %v3071 = vpack.c.b16 %v2463, %v2447
        %v3072 = vpack.c.b16 %v2464, %v2448
        %v3073 = vpack.c.b16 %v2465, %v2449
        %v3074 = vpack.c.b16 %v2466, %v2450
        %v3075 = vpack.c.b16 %v2483, %v2467
        %v3076 = vpack.c.b16 %v2484, %v2468
        %v3077 = vpack.c.b16 %v2485, %v2469
        %v3078 = vpack.c.b16 %v2486, %v2470
        %v3079 = vpack.c.b16 %v2487, %v2471
        %v3080 = vpack.c.b16 %v2488, %v2472
        %v3081 = vpack.c.b16 %v2489, %v2473
        %v3082 = vpack.c.b16 %v2490, %v2474
        %v3083 = vpack.c.b16 %v2491, %v2475
        %v3084 = vpack.c.b16 %v2492, %v2476
        %v3085 = vpack.c.b16 %v2493, %v2477
        %v3086 = vpack.c.b16 %v2494, %v2478
        %v3087 = vpack.c.b16 %v2495, %v2479
        %v3088 = vpack.c.b16 %v2496, %v2480
        %v3089 = vpack.c.b16 %v2497, %v2481
        %v3090 = vpack.c.b16 %v2498, %v2482
        %v3091 = vpack.c.b16 %v2515, %v2499
        %v3092 = vpack.c.b16 %v2516, %v2500
        %v3093 = vpack.c.b16 %v2517, %v2501
        %v3094 = vpack.c.b16 %v2518, %v2502
        %v3095 = vpack.c.b16 %v2519, %v2503
        %v3096 = vpack.c.b16 %v2520, %v2504
        %v3097 = vpack.c.b16 %v2521, %v2505
        %v3098 = vpack.c.b16 %v2522, %v2506
        %v3099 = vpack.c.b16 %v2523, %v2507
        %v3100 = vpack.c.b16 %v2524, %v2508
        %v3101 = vpack.c.b16 %v2525, %v2509
        %v3102 = vpack.c.b16 %v2526, %v2510
        %v3103 = vpack.c.b16 %v2527, %v2511
        %v3104 = vpack.c.b16 %v2528, %v2512
        %v3105 = vpack.c.b16 %v2529, %v2513
        %v3106 = vpack.c.b16 %v2530, %v2514
        %v3107 = vpack.c.b16 %v2547, %v2531
        %v3108 = vpack.c.b16 %v2548, %v2532
        %v3109 = vpack.c.b16 %v2549, %v2533
        %v3110 = vpack.c.b16 %v2550, %v2534
        %v3111 = vpack.c.b16 %v2551, %v2535
        %v3112 = vpack.c.b16 %v2552, %v2536
        %v3113 = vpack.c.b16 %v2553, %v2537
        %v3114 = vpack.c.b16 %v2554, %v2538
        %v3115 = vpack.c.b16 %v2555, %v2539
        %v3116 = vpack.c.b16 %v2556, %v2540
        %v3117 = vpack.c.b16 %v2557, %v2541
        %v3118 = vpack.c.b16 %v2558, %v2542
        %v3119 = vpack.c.b16 %v2559, %v2543
        %v3120 = vpack.c.b16 %v2560, %v2544
        %v3121 = vpack.c.b16 %v2561, %v2545
        %v3122 = vpack.c.b16 %v2562, %v2546
        %v3123 = vpack.c.b16 %v2579, %v2563
        %v3124 = vpack.c.b16 %v2580, %v2564
        %v3125 = vpack.c.b16 %v2581, %v2565
        %v3126 = vpack.c.b16 %v2582, %v2566
        %v3127 = vpack.c.b16 %v2583, %v2567
        %v3128 = vpack.c.b16 %v2584, %v2568
        %v3129 = vpack.c.b16 %v2585, %v2569
        %v3130 = vpack.c.b16 %v2586, %v2570
        %v3131 = vpack.c.b16 %v2587, %v2571
        %v3132 = vpack.c.b16 %v2588, %v2572
        %v3133 = vpack.c.b16 %v2589, %v2573
        %v3134 = vpack.c.b16 %v2590, %v2574
        %v3135 = vpack.c.b16 %v2591, %v2575
        %v3136 = vpack.c.b16 %v2592, %v2576
        %v3137 = vpack.c.b16 %v2593, %v2577
        %v3138 = vpack.c.b16 %v2594, %v2578
        %v3139 = vpack.c.b16 %v2611, %v2595
        %v3140 = vpack.c.b16 %v2612, %v2596
        %v3141 = vpack.c.b16 %v2613, %v2597
        %v3142 = vpack.c.b16 %v2614, %v2598
        %v3143 = vpack.c.b16 %v2615, %v2599
        %v3144 = vpack.c.b16 %v2616, %v2600
        %v3145 = vpack.c.b16 %v2617, %v2601
        %v3146 = vpack.c.b16 %v2618, %v2602
        %v3147 = vpack.c.b16 %v2619, %v2603
        %v3148 = vpack.c.b16 %v2620, %v2604
        %v3149 = vpack.c.b16 %v2621, %v2605
        %v3150 = vpack.c.b16 %v2622, %v2606
        %v3151 = vpack.c.b16 %v2623, %v2607
        %v3152 = vpack.c.b16 %v2624, %v2608
        %v3153 = vpack.c.b16 %v2625, %v2609
        %v3154 = vpack.c.b16 %v2626, %v2610
        %v3155 = vpack.c.b16 %v2643, %v2627
        %v3156 = vpack.c.b16 %v2644, %v2628
        %v3157 = vpack.c.b16 %v2645, %v2629
        %v3158 = vpack.c.b16 %v2646, %v2630
        %v3159 = vpack.c.b16 %v2647, %v2631
        %v3160 = vpack.c.b16 %v2648, %v2632
        %v3161 = vpack.c.b16 %v2649, %v2633
        %v3162 = vpack.c.b16 %v2650, %v2634
        %v3163 = vpack.c.b16 %v2651, %v2635
        %v3164 = vpack.c.b16 %v2652, %v2636
        %v3165 = vpack.c.b16 %v2653, %v2637
        %v3166 = vpack.c.b16 %v2654, %v2638
        %v3167 = vpack.c.b16 %v2655, %v2639
        %v3168 = vpack.c.b16 %v2656, %v2640
        %v3169 = vpack.c.b16 %v2657, %v2641
        %v3170 = vpack.c.b16 %v2658, %v2642
        %v3171 = vpack.c.b16 %v2675, %v2659
        %v3172 = vpack.c.b16 %v2676, %v2660
        %v3173 = vpack.c.b16 %v2677, %v2661
        %v3174 = vpack.c.b16 %v2678, %v2662
        %v3175 = vpack.c.b16 %v2679, %v2663
        %v3176 = vpack.c.b16 %v2680, %v2664
        %v3177 = vpack.c.b16 %v2681, %v2665
        %v3178 = vpack.c.b16 %v2682, %v2666
        %v3179 = vpack.c.b16 %v2683, %v2667
        %v3180 = vpack.c.b16 %v2684, %v2668
        %v3181 = vpack.c.b16 %v2685, %v2669
        %v3182 = vpack.c.b16 %v2686, %v2670
        %v3183 = vpack.c.b16 %v2687, %v2671
        %v3184 = vpack.c.b16 %v2688, %v2672
        %v3185 = vpack.c.b16 %v2689, %v2673
        %v3186 = vpack.c.b16 %v2690, %v2674
        %v3187 = vpack.c.b16 %v2707, %v2691
        %v3188 = vpack.c.b16 %v2708, %v2692
        %v3189 = vpack.c.b16 %v2709, %v2693
        %v3190 = vpack.c.b16 %v2710, %v2694
        %v3191 = vpack.c.b16 %v2711, %v2695
        %v3192 = vpack.c.b16 %v2712, %v2696
        %v3193 = vpack.c.b16 %v2713, %v2697
        %v3194 = vpack.c.b16 %v2714, %v2698
        %v3195 = vpack.c.b16 %v2715, %v2699
        %v3196 = vpack.c.b16 %v2716, %v2700
        %v3197 = vpack.c.b16 %v2717, %v2701
        %v3198 = vpack.c.b16 %v2718, %v2702
        %v3199 = vpack.c.b16 %v2719, %v2703
        %v3200 = vpack.c.b16 %v2720, %v2704
        %v3201 = vpack.c.b16 %v2721, %v2705
        %v3202 = vpack.c.b16 %v2722, %v2706
        %v3203 = vpack.c.b16 %v2739, %v2723
        %v3204 = vpack.c.b16 %v2740, %v2724
        %v3205 = vpack.c.b16 %v2741, %v2725
        %v3206 = vpack.c.b16 %v2742, %v2726
        %v3207 = vpack.c.b16 %v2743, %v2727
        %v3208 = vpack.c.b16 %v2744, %v2728
        %v3209 = vpack.c.b16 %v2745, %v2729
        %v3210 = vpack.c.b16 %v2746, %v2730
        %v3211 = vpack.c.b16 %v2747, %v2731
        %v3212 = vpack.c.b16 %v2748, %v2732
        %v3213 = vpack.c.b16 %v2749, %v2733
        %v3214 = vpack.c.b16 %v2750, %v2734
        %v3215 = vpack.c.b16 %v2751, %v2735
        %v3216 = vpack.c.b16 %v2752, %v2736
        %v3217 = vpack.c.b16 %v2753, %v2737
        %v3218 = vpack.c.b16 %v2754, %v2738
        %v3219 = vpack.c.b16 %v2771, %v2755
        %v3220 = vpack.c.b16 %v2772, %v2756
        %v3221 = vpack.c.b16 %v2773, %v2757
        %v3222 = vpack.c.b16 %v2774, %v2758
        %v3223 = vpack.c.b16 %v2775, %v2759
        %v3224 = vpack.c.b16 %v2776, %v2760
        %v3225 = vpack.c.b16 %v2777, %v2761
        %v3226 = vpack.c.b16 %v2778, %v2762
        %v3227 = vpack.c.b16 %v2779, %v2763
        %v3228 = vpack.c.b16 %v2780, %v2764
        %v3229 = vpack.c.b16 %v2781, %v2765
        %v3230 = vpack.c.b16 %v2782, %v2766
        %v3231 = vpack.c.b16 %v2783, %v2767
        %v3232 = vpack.c.b16 %v2784, %v2768
        %v3233 = vpack.c.b16 %v2785, %v2769
        %v3234 = vpack.c.b16 %v2786, %v2770
        %v3235 = vpack.c.b16 %v2803, %v2787
        %v3236 = vpack.c.b16 %v2804, %v2788
        %v3237 = vpack.c.b16 %v2805, %v2789
        %v3238 = vpack.c.b16 %v2806, %v2790
        %v3239 = vpack.c.b16 %v2807, %v2791
        %v3240 = vpack.c.b16 %v2808, %v2792
        %v3241 = vpack.c.b16 %v2809, %v2793
        %v3242 = vpack.c.b16 %v2810, %v2794
        %v3243 = vpack.c.b16 %v2811, %v2795
        %v3244 = vpack.c.b16 %v2812, %v2796
        %v3245 = vpack.c.b16 %v2813, %v2797
        %v3246 = vpack.c.b16 %v2814, %v2798
        %v3247 = vpack.c.b16 %v2815, %v2799
        %v3248 = vpack.c.b16 %v2816, %v2800
        %v3249 = vpack.c.b16 %v2817, %v2801
        %v3250 = vpack.c.b16 %v2818, %v2802
        %vm3683 = vcmask 392192
        %v3685 = vsel %vm3683, %v1519, 0
        %3687 = vmatprep.subr.bf16.mxu0 %v2820
        %3688 = vmatpush1.bf16.msra.mxu0 %v2819
        %3689 = vmatprep.subr.bf16.mxu0 %v2836
        %3690 = vmatpush1.bf16.msra.mxu0 %v2835
        %3691 = vmatprep.subr.bf16.mxu0 %v2852
        %3692 = vmatpush1.bf16.msra.mxu0 %v2851
        %3693 = vmatprep.subr.bf16.mxu0 %v2868
        %3694 = vmatpush1.bf16.msra.mxu0 %v2867
        %3695 = vmatprep.subr.bf16.mxu0 %v2884
        %3696 = vmatpush1.bf16.msra.mxu0 %v2883
        %3697 = vmatprep.subr.bf16.mxu0 %v2900
        %3698 = vmatpush1.bf16.msra.mxu0 %v2899
        %3699 = vmatprep.subr.bf16.mxu0 %v2916
        %3700 = vmatpush1.bf16.msra.mxu0 %v2915
        %3701 = vmatprep.subr.bf16.mxu0 %v2932
        %3702 = vmatpush1.bf16.msra.mxu0 %v2931
        %3703 = vmatprep.subr.bf16.mxu0 %v2948
        %3704 = vmatpush1.bf16.msra.mxu0 %v2947
        %3705 = vmatprep.subr.bf16.mxu0 %v2964
        %3706 = vmatpush1.bf16.msra.mxu0 %v2963
        %3707 = vmatprep.subr.bf16.mxu0 %v2980
        %3708 = vmatpush1.bf16.msra.mxu0 %v2979
        %3709 = vmatprep.subr.bf16.mxu0 %v2996
        %3710 = vmatpush1.bf16.msra.mxu0 %v2995
        %3711 = vmatprep.subr.bf16.mxu0 %v3012
        %3712 = vmatpush1.bf16.msra.mxu0 %v3011
        %3713 = vmatprep.subr.bf16.mxu0 %v3028
        %3714 = vmatpush1.bf16.msra.mxu0 %v3027
        %3715 = vmatprep.subr.bf16.mxu0 %v3044
        %3716 = vmatpush1.bf16.msra.mxu0 %v3043
        %3717 = vmatprep.subr.bf16.mxu0 %v3060
        %3718 = vmatpush1.bf16.msra.mxu0 %v3059
        %3719 = vmatprep.mubr.bf16.mxu0 %v1517
        %3720 = vmatmul.mubr.bf16.gmra.mrb[0].mxu0 %v1510
        %v3721 = vpop.f32.mrb[0].mxu0
        %v3722 = vadd.f32 %v1493, %v3721
        %v3723 = vpop.f32.mrb[0].mxu0
        %v3724 = vadd.f32 %v1493, %v3723
        %v3725 = vpop.f32.mrb[0].mxu0
        %v3726 = vpop.f32.mrb[0].mxu0
        %3727 = vdwg.mxu0
        %3728 = vmatprep.subr.bf16.mxu0 %v3076
        %3729 = vmatpush1.bf16.msra.mxu0 %v3075
        %3730 = vmatprep.subr.bf16.mxu0 %v3092
        %3731 = vmatpush1.bf16.msra.mxu0 %v3091
        %3732 = vmatprep.subr.bf16.mxu0 %v3108
        %3733 = vmatpush1.bf16.msra.mxu0 %v3107
        %3734 = vmatprep.subr.bf16.mxu0 %v3124
        %3735 = vmatpush1.bf16.msra.mxu0 %v3123
        %3736 = vmatprep.subr.bf16.mxu0 %v3140
        %3737 = vmatpush1.bf16.msra.mxu0 %v3139
        %3738 = vmatprep.subr.bf16.mxu0 %v3156
        %3739 = vmatpush1.bf16.msra.mxu0 %v3155
        %3740 = vmatprep.subr.bf16.mxu0 %v3172
        %3741 = vmatpush1.bf16.msra.mxu0 %v3171
        %3742 = vmatprep.subr.bf16.mxu0 %v3188
        %3743 = vmatpush1.bf16.msra.mxu0 %v3187
        %3744 = vmatprep.subr.bf16.mxu0 %v3204
        %3745 = vmatpush1.bf16.msra.mxu0 %v3203
        %3746 = vmatprep.subr.bf16.mxu0 %v3220
        %3747 = vmatpush1.bf16.msra.mxu0 %v3219
        %3748 = vmatprep.subr.bf16.mxu0 %v3236
        %3749 = vmatpush1.bf16.msra.mxu0 %v3235
        %3750 = vmatprep.subr.bf16.mxu0 0
        %3751 = vmatpush1.bf16.msra.mxu0 0
        %3752 = vmatprep.subr.bf16.mxu0 0
        %3753 = vmatpush1.bf16.msra.mxu0 0
        %3754 = vmatprep.subr.bf16.mxu0 0
        %3755 = vmatpush1.bf16.msra.mxu0 0
        %3756 = vmatprep.subr.bf16.mxu0 0
        %3757 = vmatpush1.bf16.msra.mxu0 0
        %3758 = vmatprep.subr.bf16.mxu0 0
        %3759 = vmatpush1.bf16.msra.mxu0 0
        %3760 = vmatprep.mubr.bf16.mxu0 %v3685
        %3761 = vmatmul.mubr.bf16.gmra.mrb[0].mxu0 %v1518
        %v3762 = vpop.f32.mrb[0].mxu0
        %v3763 = vadd.f32 %v3722, %v3762
        %v3764 = vpop.f32.mrb[0].mxu0
        %v3765 = vadd.f32 %v3724, %v3764
        %v3766 = vpop.f32.mrb[0].mxu0
        %v3767 = vpop.f32.mrb[0].mxu0
        %3768 = vdwg.mxu0
        %3769 = vmatprep.subr.bf16.mxu0 %v2822
        %3770 = vmatpush1.bf16.msra.mxu0 %v2821
        %3771 = vmatprep.subr.bf16.mxu0 %v2838
        %3772 = vmatpush1.bf16.msra.mxu0 %v2837
        %3773 = vmatprep.subr.bf16.mxu0 %v2854
        %3774 = vmatpush1.bf16.msra.mxu0 %v2853
        %3775 = vmatprep.subr.bf16.mxu0 %v2870
        %3776 = vmatpush1.bf16.msra.mxu0 %v2869
        %3777 = vmatprep.subr.bf16.mxu0 %v2886
        %3778 = vmatpush1.bf16.msra.mxu0 %v2885
        %3779 = vmatprep.subr.bf16.mxu0 %v2902
        %3780 = vmatpush1.bf16.msra.mxu0 %v2901
        %3781 = vmatprep.subr.bf16.mxu0 %v2918
        %3782 = vmatpush1.bf16.msra.mxu0 %v2917
        %3783 = vmatprep.subr.bf16.mxu0 %v2934
        %3784 = vmatpush1.bf16.msra.mxu0 %v2933
        %3785 = vmatprep.subr.bf16.mxu0 %v2950
        %3786 = vmatpush1.bf16.msra.mxu0 %v2949
        %3787 = vmatprep.subr.bf16.mxu0 %v2966
        %3788 = vmatpush1.bf16.msra.mxu0 %v2965
        %3789 = vmatprep.subr.bf16.mxu0 %v2982
        %3790 = vmatpush1.bf16.msra.mxu0 %v2981
        %3791 = vmatprep.subr.bf16.mxu0 %v2998
        %3792 = vmatpush1.bf16.msra.mxu0 %v2997
        %3793 = vmatprep.subr.bf16.mxu0 %v3014
        %3794 = vmatpush1.bf16.msra.mxu0 %v3013
        %3795 = vmatprep.subr.bf16.mxu0 %v3030
        %3796 = vmatpush1.bf16.msra.mxu0 %v3029
        %3797 = vmatprep.subr.bf16.mxu0 %v3046
        %3798 = vmatpush1.bf16.msra.mxu0 %v3045
        %3799 = vmatprep.subr.bf16.mxu0 %v3062
        %3800 = vmatpush1.bf16.msra.mxu0 %v3061
        %3801 = vmatprep.mubr.bf16.mxu0 %v1517
        %3802 = vmatmul.mubr.bf16.gmra.mrb[0].mxu0 %v1510
        %v3803 = vpop.f32.mrb[0].mxu0
        %v3804 = vadd.f32 %v1493, %v3803
        %v3805 = vpop.f32.mrb[0].mxu0
        %v3806 = vadd.f32 %v1493, %v3805
        %v3807 = vpop.f32.mrb[0].mxu0
        %v3808 = vpop.f32.mrb[0].mxu0
        %3809 = vdwg.mxu0
        %3810 = vmatprep.subr.bf16.mxu0 %v3078
        %3811 = vmatpush1.bf16.msra.mxu0 %v3077
        %3812 = vmatprep.subr.bf16.mxu0 %v3094
        %3813 = vmatpush1.bf16.msra.mxu0 %v3093
        %3814 = vmatprep.subr.bf16.mxu0 %v3110
        %3815 = vmatpush1.bf16.msra.mxu0 %v3109
        %3816 = vmatprep.subr.bf16.mxu0 %v3126
        %3817 = vmatpush1.bf16.msra.mxu0 %v3125
        %3818 = vmatprep.subr.bf16.mxu0 %v3142
        %3819 = vmatpush1.bf16.msra.mxu0 %v3141
        %3820 = vmatprep.subr.bf16.mxu0 %v3158
        %3821 = vmatpush1.bf16.msra.mxu0 %v3157
        %3822 = vmatprep.subr.bf16.mxu0 %v3174
        %3823 = vmatpush1.bf16.msra.mxu0 %v3173
        %3824 = vmatprep.subr.bf16.mxu0 %v3190
        %3825 = vmatpush1.bf16.msra.mxu0 %v3189
        %3826 = vmatprep.subr.bf16.mxu0 %v3206
        %3827 = vmatpush1.bf16.msra.mxu0 %v3205
        %3828 = vmatprep.subr.bf16.mxu0 %v3222
        %3829 = vmatpush1.bf16.msra.mxu0 %v3221
        %3830 = vmatprep.subr.bf16.mxu0 %v3238
        %3831 = vmatpush1.bf16.msra.mxu0 %v3237
        %3832 = vmatprep.subr.bf16.mxu0 0
        %3833 = vmatpush1.bf16.msra.mxu0 0
        %3834 = vmatprep.subr.bf16.mxu0 0
        %3835 = vmatpush1.bf16.msra.mxu0 0
        %3836 = vmatprep.subr.bf16.mxu0 0
        %3837 = vmatpush1.bf16.msra.mxu0 0
        %3838 = vmatprep.subr.bf16.mxu0 0
        %3839 = vmatpush1.bf16.msra.mxu0 0
        %3840 = vmatprep.subr.bf16.mxu0 0
        %3841 = vmatpush1.bf16.msra.mxu0 0
        %3842 = vmatprep.mubr.bf16.mxu0 %v3685
        %3843 = vmatmul.mubr.bf16.gmra.mrb[0].mxu0 %v1518
        %v3844 = vpop.f32.mrb[0].mxu0
        %v3845 = vadd.f32 %v3804, %v3844
        %v3846 = vpop.f32.mrb[0].mxu0
        %v3847 = vadd.f32 %v3806, %v3846
        %v3848 = vpop.f32.mrb[0].mxu0
        %v3849 = vpop.f32.mrb[0].mxu0
        %3850 = vdwg.mxu0
        %3851 = vmatprep.subr.bf16.mxu0 %v2824
        %3852 = vmatpush1.bf16.msra.mxu0 %v2823
        %3853 = vmatprep.subr.bf16.mxu0 %v2840
        %3854 = vmatpush1.bf16.msra.mxu0 %v2839
        %3855 = vmatprep.subr.bf16.mxu0 %v2856
        %3856 = vmatpush1.bf16.msra.mxu0 %v2855
        %3857 = vmatprep.subr.bf16.mxu0 %v2872
        %3858 = vmatpush1.bf16.msra.mxu0 %v2871
        %3859 = vmatprep.subr.bf16.mxu0 %v2888
        %3860 = vmatpush1.bf16.msra.mxu0 %v2887
        %3861 = vmatprep.subr.bf16.mxu0 %v2904
        %3862 = vmatpush1.bf16.msra.mxu0 %v2903
        %3863 = vmatprep.subr.bf16.mxu0 %v2920
        %3864 = vmatpush1.bf16.msra.mxu0 %v2919
        %3865 = vmatprep.subr.bf16.mxu0 %v2936
        %3866 = vmatpush1.bf16.msra.mxu0 %v2935
        %3867 = vmatprep.subr.bf16.mxu0 %v2952
        %3868 = vmatpush1.bf16.msra.mxu0 %v2951
        %3869 = vmatprep.subr.bf16.mxu0 %v2968
        %3870 = vmatpush1.bf16.msra.mxu0 %v2967
        %3871 = vmatprep.subr.bf16.mxu0 %v2984
        %3872 = vmatpush1.bf16.msra.mxu0 %v2983
        %3873 = vmatprep.subr.bf16.mxu0 %v3000
        %3874 = vmatpush1.bf16.msra.mxu0 %v2999
        %3875 = vmatprep.subr.bf16.mxu0 %v3016
        %3876 = vmatpush1.bf16.msra.mxu0 %v3015
        %3877 = vmatprep.subr.bf16.mxu0 %v3032
        %3878 = vmatpush1.bf16.msra.mxu0 %v3031
        %3879 = vmatprep.subr.bf16.mxu0 %v3048
        %3880 = vmatpush1.bf16.msra.mxu0 %v3047
        %3881 = vmatprep.subr.bf16.mxu0 %v3064
        %3882 = vmatpush1.bf16.msra.mxu0 %v3063
        %3883 = vmatprep.mubr.bf16.mxu0 %v1517
        %3884 = vmatmul.mubr.bf16.gmra.mrb[0].mxu0 %v1510
        %v3885 = vpop.f32.mrb[0].mxu0
        %v3886 = vadd.f32 %v1493, %v3885
        %v3887 = vpop.f32.mrb[0].mxu0
        %v3888 = vadd.f32 %v1493, %v3887
        %v3889 = vpop.f32.mrb[0].mxu0
        %v3890 = vpop.f32.mrb[0].mxu0
        %3891 = vdwg.mxu0
        %3892 = vmatprep.subr.bf16.mxu0 %v3080
        %3893 = vmatpush1.bf16.msra.mxu0 %v3079
        %3894 = vmatprep.subr.bf16.mxu0 %v3096
        %3895 = vmatpush1.bf16.msra.mxu0 %v3095
        %3896 = vmatprep.subr.bf16.mxu0 %v3112
        %3897 = vmatpush1.bf16.msra.mxu0 %v3111
        %3898 = vmatprep.subr.bf16.mxu0 %v3128
        %3899 = vmatpush1.bf16.msra.mxu0 %v3127
        %3900 = vmatprep.subr.bf16.mxu0 %v3144
        %3901 = vmatpush1.bf16.msra.mxu0 %v3143
        %3902 = vmatprep.subr.bf16.mxu0 %v3160
        %3903 = vmatpush1.bf16.msra.mxu0 %v3159
        %3904 = vmatprep.subr.bf16.mxu0 %v3176
        %3905 = vmatpush1.bf16.msra.mxu0 %v3175
        %3906 = vmatprep.subr.bf16.mxu0 %v3192
        %3907 = vmatpush1.bf16.msra.mxu0 %v3191
        %3908 = vmatprep.subr.bf16.mxu0 %v3208
        %3909 = vmatpush1.bf16.msra.mxu0 %v3207
        %3910 = vmatprep.subr.bf16.mxu0 %v3224
        %3911 = vmatpush1.bf16.msra.mxu0 %v3223
        %3912 = vmatprep.subr.bf16.mxu0 %v3240
        %3913 = vmatpush1.bf16.msra.mxu0 %v3239
        %3914 = vmatprep.subr.bf16.mxu0 0
        %3915 = vmatpush1.bf16.msra.mxu0 0
        %3916 = vmatprep.subr.bf16.mxu0 0
        %3917 = vmatpush1.bf16.msra.mxu0 0
        %3918 = vmatprep.subr.bf16.mxu0 0
        %3919 = vmatpush1.bf16.msra.mxu0 0
        %3920 = vmatprep.subr.bf16.mxu0 0
        %3921 = vmatpush1.bf16.msra.mxu0 0
        %3922 = vmatprep.subr.bf16.mxu0 0
        %3923 = vmatpush1.bf16.msra.mxu0 0
        %3924 = vmatprep.mubr.bf16.mxu0 %v3685
        %3925 = vmatmul.mubr.bf16.gmra.mrb[0].mxu0 %v1518
        %v3926 = vpop.f32.mrb[0].mxu0
        %v3927 = vadd.f32 %v3886, %v3926
        %v3928 = vpop.f32.mrb[0].mxu0
        %v3929 = vadd.f32 %v3888, %v3928
        %v3930 = vpop.f32.mrb[0].mxu0
        %v3931 = vpop.f32.mrb[0].mxu0
        %3932 = vdwg.mxu0
        %3933 = vmatprep.subr.bf16.mxu0 %v2826
        %3934 = vmatpush1.bf16.msra.mxu0 %v2825
        %3935 = vmatprep.subr.bf16.mxu0 %v2842
        %3936 = vmatpush1.bf16.msra.mxu0 %v2841
        %3937 = vmatprep.subr.bf16.mxu0 %v2858
        %3938 = vmatpush1.bf16.msra.mxu0 %v2857
        %3939 = vmatprep.subr.bf16.mxu0 %v2874
        %3940 = vmatpush1.bf16.msra.mxu0 %v2873
        %3941 = vmatprep.subr.bf16.mxu0 %v2890
        %3942 = vmatpush1.bf16.msra.mxu0 %v2889
        %3943 = vmatprep.subr.bf16.mxu0 %v2906
        %3944 = vmatpush1.bf16.msra.mxu0 %v2905
        %3945 = vmatprep.subr.bf16.mxu0 %v2922
        %3946 = vmatpush1.bf16.msra.mxu0 %v2921
        %3947 = vmatprep.subr.bf16.mxu0 %v2938
        %3948 = vmatpush1.bf16.msra.mxu0 %v2937
        %3949 = vmatprep.subr.bf16.mxu0 %v2954
        %3950 = vmatpush1.bf16.msra.mxu0 %v2953
        %3951 = vmatprep.subr.bf16.mxu0 %v2970
        %3952 = vmatpush1.bf16.msra.mxu0 %v2969
        %3953 = vmatprep.subr.bf16.mxu0 %v2986
        %3954 = vmatpush1.bf16.msra.mxu0 %v2985
        %3955 = vmatprep.subr.bf16.mxu0 %v3002
        %3956 = vmatpush1.bf16.msra.mxu0 %v3001
        %3957 = vmatprep.subr.bf16.mxu0 %v3018
        %3958 = vmatpush1.bf16.msra.mxu0 %v3017
        %3959 = vmatprep.subr.bf16.mxu0 %v3034
        %3960 = vmatpush1.bf16.msra.mxu0 %v3033
        %3961 = vmatprep.subr.bf16.mxu0 %v3050
        %3962 = vmatpush1.bf16.msra.mxu0 %v3049
        %3963 = vmatprep.subr.bf16.mxu0 %v3066
        %3964 = vmatpush1.bf16.msra.mxu0 %v3065
        %3965 = vmatprep.mubr.bf16.mxu0 %v1517
        %3966 = vmatmul.mubr.bf16.gmra.mrb[0].mxu0 %v1510
        %v3967 = vpop.f32.mrb[0].mxu0
        %v3968 = vadd.f32 %v1493, %v3967
        %v3969 = vpop.f32.mrb[0].mxu0
        %v3970 = vadd.f32 %v1493, %v3969
        %v3971 = vpop.f32.mrb[0].mxu0
        %v3972 = vpop.f32.mrb[0].mxu0
        %3973 = vdwg.mxu0
        %3974 = vmatprep.subr.bf16.mxu0 %v3082
        %3975 = vmatpush1.bf16.msra.mxu0 %v3081
        %3976 = vmatprep.subr.bf16.mxu0 %v3098
        %3977 = vmatpush1.bf16.msra.mxu0 %v3097
        %3978 = vmatprep.subr.bf16.mxu0 %v3114
        %3979 = vmatpush1.bf16.msra.mxu0 %v3113
        %3980 = vmatprep.subr.bf16.mxu0 %v3130
        %3981 = vmatpush1.bf16.msra.mxu0 %v3129
        %3982 = vmatprep.subr.bf16.mxu0 %v3146
        %3983 = vmatpush1.bf16.msra.mxu0 %v3145
        %3984 = vmatprep.subr.bf16.mxu0 %v3162
        %3985 = vmatpush1.bf16.msra.mxu0 %v3161
        %3986 = vmatprep.subr.bf16.mxu0 %v3178
        %3987 = vmatpush1.bf16.msra.mxu0 %v3177
        %3988 = vmatprep.subr.bf16.mxu0 %v3194
        %3989 = vmatpush1.bf16.msra.mxu0 %v3193
        %3990 = vmatprep.subr.bf16.mxu0 %v3210
        %3991 = vmatpush1.bf16.msra.mxu0 %v3209
        %3992 = vmatprep.subr.bf16.mxu0 %v3226
        %3993 = vmatpush1.bf16.msra.mxu0 %v3225
        %3994 = vmatprep.subr.bf16.mxu0 %v3242
        %3995 = vmatpush1.bf16.msra.mxu0 %v3241
        %3996 = vmatprep.subr.bf16.mxu0 0
        %3997 = vmatpush1.bf16.msra.mxu0 0
        %3998 = vmatprep.subr.bf16.mxu0 0
        %3999 = vmatpush1.bf16.msra.mxu0 0
        %4000 = vmatprep.subr.bf16.mxu0 0
        %4001 = vmatpush1.bf16.msra.mxu0 0
        %4002 = vmatprep.subr.bf16.mxu0 0
        %4003 = vmatpush1.bf16.msra.mxu0 0
        %4004 = vmatprep.subr.bf16.mxu0 0
        %4005 = vmatpush1.bf16.msra.mxu0 0
        %4006 = vmatprep.mubr.bf16.mxu0 %v3685
        %4007 = vmatmul.mubr.bf16.gmra.mrb[0].mxu0 %v1518
        %v4008 = vpop.f32.mrb[0].mxu0
        %v4009 = vadd.f32 %v3968, %v4008
        %v4010 = vpop.f32.mrb[0].mxu0
        %v4011 = vadd.f32 %v3970, %v4010
        %v4012 = vpop.f32.mrb[0].mxu0
        %v4013 = vpop.f32.mrb[0].mxu0
        %4014 = vdwg.mxu0
        %4015 = vmatprep.subr.bf16.mxu0 %v2828
        %4016 = vmatpush1.bf16.msra.mxu0 %v2827
        %4017 = vmatprep.subr.bf16.mxu0 %v2844
        %4018 = vmatpush1.bf16.msra.mxu0 %v2843
        %4019 = vmatprep.subr.bf16.mxu0 %v2860
        %4020 = vmatpush1.bf16.msra.mxu0 %v2859
        %4021 = vmatprep.subr.bf16.mxu0 %v2876
        %4022 = vmatpush1.bf16.msra.mxu0 %v2875
        %4023 = vmatprep.subr.bf16.mxu0 %v2892
        %4024 = vmatpush1.bf16.msra.mxu0 %v2891
        %4025 = vmatprep.subr.bf16.mxu0 %v2908
        %4026 = vmatpush1.bf16.msra.mxu0 %v2907
        %4027 = vmatprep.subr.bf16.mxu0 %v2924
        %4028 = vmatpush1.bf16.msra.mxu0 %v2923
        %4029 = vmatprep.subr.bf16.mxu0 %v2940
        %4030 = vmatpush1.bf16.msra.mxu0 %v2939
        %4031 = vmatprep.subr.bf16.mxu0 %v2956
        %4032 = vmatpush1.bf16.msra.mxu0 %v2955
        %4033 = vmatprep.subr.bf16.mxu0 %v2972
        %4034 = vmatpush1.bf16.msra.mxu0 %v2971
        %4035 = vmatprep.subr.bf16.mxu0 %v2988
        %4036 = vmatpush1.bf16.msra.mxu0 %v2987
        %4037 = vmatprep.subr.bf16.mxu0 %v3004
        %4038 = vmatpush1.bf16.msra.mxu0 %v3003
        %4039 = vmatprep.subr.bf16.mxu0 %v3020
        %4040 = vmatpush1.bf16.msra.mxu0 %v3019
        %4041 = vmatprep.subr.bf16.mxu0 %v3036
        %4042 = vmatpush1.bf16.msra.mxu0 %v3035
        %4043 = vmatprep.subr.bf16.mxu0 %v3052
        %4044 = vmatpush1.bf16.msra.mxu0 %v3051
        %4045 = vmatprep.subr.bf16.mxu0 %v3068
        %4046 = vmatpush1.bf16.msra.mxu0 %v3067
        %4047 = vmatprep.mubr.bf16.mxu0 %v1517
        %4048 = vmatmul.mubr.bf16.gmra.mrb[0].mxu0 %v1510
        %v4049 = vpop.f32.mrb[0].mxu0
        %v4050 = vadd.f32 %v1493, %v4049
        %v4051 = vpop.f32.mrb[0].mxu0
        %v4052 = vadd.f32 %v1493, %v4051
        %v4053 = vpop.f32.mrb[0].mxu0
        %v4054 = vpop.f32.mrb[0].mxu0
        %4055 = vdwg.mxu0
        %4056 = vmatprep.subr.bf16.mxu0 %v3084
        %4057 = vmatpush1.bf16.msra.mxu0 %v3083
        %4058 = vmatprep.subr.bf16.mxu0 %v3100
        %4059 = vmatpush1.bf16.msra.mxu0 %v3099
        %4060 = vmatprep.subr.bf16.mxu0 %v3116
        %4061 = vmatpush1.bf16.msra.mxu0 %v3115
        %4062 = vmatprep.subr.bf16.mxu0 %v3132
        %4063 = vmatpush1.bf16.msra.mxu0 %v3131
        %4064 = vmatprep.subr.bf16.mxu0 %v3148
        %4065 = vmatpush1.bf16.msra.mxu0 %v3147
        %4066 = vmatprep.subr.bf16.mxu0 %v3164
        %4067 = vmatpush1.bf16.msra.mxu0 %v3163
        %4068 = vmatprep.subr.bf16.mxu0 %v3180
        %4069 = vmatpush1.bf16.msra.mxu0 %v3179
        %4070 = vmatprep.subr.bf16.mxu0 %v3196
        %4071 = vmatpush1.bf16.msra.mxu0 %v3195
        %4072 = vmatprep.subr.bf16.mxu0 %v3212
        %4073 = vmatpush1.bf16.msra.mxu0 %v3211
        %4074 = vmatprep.subr.bf16.mxu0 %v3228
        %4075 = vmatpush1.bf16.msra.mxu0 %v3227
        %4076 = vmatprep.subr.bf16.mxu0 %v3244
        %4077 = vmatpush1.bf16.msra.mxu0 %v3243
        %4078 = vmatprep.subr.bf16.mxu0 0
        %4079 = vmatpush1.bf16.msra.mxu0 0
        %4080 = vmatprep.subr.bf16.mxu0 0
        %4081 = vmatpush1.bf16.msra.mxu0 0
        %4082 = vmatprep.subr.bf16.mxu0 0
        %4083 = vmatpush1.bf16.msra.mxu0 0
        %4084 = vmatprep.subr.bf16.mxu0 0
        %4085 = vmatpush1.bf16.msra.mxu0 0
        %4086 = vmatprep.subr.bf16.mxu0 0
        %4087 = vmatpush1.bf16.msra.mxu0 0
        %4088 = vmatprep.mubr.bf16.mxu0 %v3685
        %4089 = vmatmul.mubr.bf16.gmra.mrb[0].mxu0 %v1518
        %v4090 = vpop.f32.mrb[0].mxu0
        %v4091 = vadd.f32 %v4050, %v4090
        %v4092 = vpop.f32.mrb[0].mxu0
        %v4093 = vadd.f32 %v4052, %v4092
        %v4094 = vpop.f32.mrb[0].mxu0
        %v4095 = vpop.f32.mrb[0].mxu0
        %4096 = vdwg.mxu0
        %4097 = vmatprep.subr.bf16.mxu0 %v2830
        %4098 = vmatpush1.bf16.msra.mxu0 %v2829
        %4099 = vmatprep.subr.bf16.mxu0 %v2846
        %4100 = vmatpush1.bf16.msra.mxu0 %v2845
        %4101 = vmatprep.subr.bf16.mxu0 %v2862
        %4102 = vmatpush1.bf16.msra.mxu0 %v2861
        %4103 = vmatprep.subr.bf16.mxu0 %v2878
        %4104 = vmatpush1.bf16.msra.mxu0 %v2877
        %4105 = vmatprep.subr.bf16.mxu0 %v2894
        %4106 = vmatpush1.bf16.msra.mxu0 %v2893
        %4107 = vmatprep.subr.bf16.mxu0 %v2910
        %4108 = vmatpush1.bf16.msra.mxu0 %v2909
        %4109 = vmatprep.subr.bf16.mxu0 %v2926
        %4110 = vmatpush1.bf16.msra.mxu0 %v2925
        %4111 = vmatprep.subr.bf16.mxu0 %v2942
        %4112 = vmatpush1.bf16.msra.mxu0 %v2941
        %4113 = vmatprep.subr.bf16.mxu0 %v2958
        %4114 = vmatpush1.bf16.msra.mxu0 %v2957
        %4115 = vmatprep.subr.bf16.mxu0 %v2974
        %4116 = vmatpush1.bf16.msra.mxu0 %v2973
        %4117 = vmatprep.subr.bf16.mxu0 %v2990
        %4118 = vmatpush1.bf16.msra.mxu0 %v2989
        %4119 = vmatprep.subr.bf16.mxu0 %v3006
        %4120 = vmatpush1.bf16.msra.mxu0 %v3005
        %4121 = vmatprep.subr.bf16.mxu0 %v3022
        %4122 = vmatpush1.bf16.msra.mxu0 %v3021
        %4123 = vmatprep.subr.bf16.mxu0 %v3038
        %4124 = vmatpush1.bf16.msra.mxu0 %v3037
        %4125 = vmatprep.subr.bf16.mxu0 %v3054
        %4126 = vmatpush1.bf16.msra.mxu0 %v3053
        %4127 = vmatprep.subr.bf16.mxu0 %v3070
        %4128 = vmatpush1.bf16.msra.mxu0 %v3069
        %4129 = vmatprep.mubr.bf16.mxu0 %v1517
        %4130 = vmatmul.mubr.bf16.gmra.mrb[0].mxu0 %v1510
        %v4131 = vpop.f32.mrb[0].mxu0
        %v4132 = vadd.f32 %v1493, %v4131
        %v4133 = vpop.f32.mrb[0].mxu0
        %v4134 = vadd.f32 %v1493, %v4133
        %v4135 = vpop.f32.mrb[0].mxu0
        %v4136 = vpop.f32.mrb[0].mxu0
        %4137 = vdwg.mxu0
        %4138 = vmatprep.subr.bf16.mxu0 %v3086
        %4139 = vmatpush1.bf16.msra.mxu0 %v3085
        %4140 = vmatprep.subr.bf16.mxu0 %v3102
        %4141 = vmatpush1.bf16.msra.mxu0 %v3101
        %4142 = vmatprep.subr.bf16.mxu0 %v3118
        %4143 = vmatpush1.bf16.msra.mxu0 %v3117
        %4144 = vmatprep.subr.bf16.mxu0 %v3134
        %4145 = vmatpush1.bf16.msra.mxu0 %v3133
        %4146 = vmatprep.subr.bf16.mxu0 %v3150
        %4147 = vmatpush1.bf16.msra.mxu0 %v3149
        %4148 = vmatprep.subr.bf16.mxu0 %v3166
        %4149 = vmatpush1.bf16.msra.mxu0 %v3165
        %4150 = vmatprep.subr.bf16.mxu0 %v3182
        %4151 = vmatpush1.bf16.msra.mxu0 %v3181
        %4152 = vmatprep.subr.bf16.mxu0 %v3198
        %4153 = vmatpush1.bf16.msra.mxu0 %v3197
        %4154 = vmatprep.subr.bf16.mxu0 %v3214
        %4155 = vmatpush1.bf16.msra.mxu0 %v3213
        %4156 = vmatprep.subr.bf16.mxu0 %v3230
        %4157 = vmatpush1.bf16.msra.mxu0 %v3229
        %4158 = vmatprep.subr.bf16.mxu0 %v3246
        %4159 = vmatpush1.bf16.msra.mxu0 %v3245
        %4160 = vmatprep.subr.bf16.mxu0 0
        %4161 = vmatpush1.bf16.msra.mxu0 0
        %4162 = vmatprep.subr.bf16.mxu0 0
        %4163 = vmatpush1.bf16.msra.mxu0 0
        %4164 = vmatprep.subr.bf16.mxu0 0
        %4165 = vmatpush1.bf16.msra.mxu0 0
        %4166 = vmatprep.subr.bf16.mxu0 0
        %4167 = vmatpush1.bf16.msra.mxu0 0
        %4168 = vmatprep.subr.bf16.mxu0 0
        %4169 = vmatpush1.bf16.msra.mxu0 0
        %4170 = vmatprep.mubr.bf16.mxu0 %v3685
        %4171 = vmatmul.mubr.bf16.gmra.mrb[0].mxu0 %v1518
        %v4172 = vpop.f32.mrb[0].mxu0
        %v4173 = vadd.f32 %v4132, %v4172
        %v4174 = vpop.f32.mrb[0].mxu0
        %v4175 = vadd.f32 %v4134, %v4174
        %v4176 = vpop.f32.mrb[0].mxu0
        %v4177 = vpop.f32.mrb[0].mxu0
        %4178 = vdwg.mxu0
        %4179 = vmatprep.subr.bf16.mxu0 %v2832
        %4180 = vmatpush1.bf16.msra.mxu0 %v2831
        %4181 = vmatprep.subr.bf16.mxu0 %v2848
        %4182 = vmatpush1.bf16.msra.mxu0 %v2847
        %4183 = vmatprep.subr.bf16.mxu0 %v2864
        %4184 = vmatpush1.bf16.msra.mxu0 %v2863
        %4185 = vmatprep.subr.bf16.mxu0 %v2880
        %4186 = vmatpush1.bf16.msra.mxu0 %v2879
        %4187 = vmatprep.subr.bf16.mxu0 %v2896
        %4188 = vmatpush1.bf16.msra.mxu0 %v2895
        %4189 = vmatprep.subr.bf16.mxu0 %v2912
        %4190 = vmatpush1.bf16.msra.mxu0 %v2911
        %4191 = vmatprep.subr.bf16.mxu0 %v2928
        %4192 = vmatpush1.bf16.msra.mxu0 %v2927
        %4193 = vmatprep.subr.bf16.mxu0 %v2944
        %4194 = vmatpush1.bf16.msra.mxu0 %v2943
        %4195 = vmatprep.subr.bf16.mxu0 %v2960
        %4196 = vmatpush1.bf16.msra.mxu0 %v2959
        %4197 = vmatprep.subr.bf16.mxu0 %v2976
        %4198 = vmatpush1.bf16.msra.mxu0 %v2975
        %4199 = vmatprep.subr.bf16.mxu0 %v2992
        %4200 = vmatpush1.bf16.msra.mxu0 %v2991
        %4201 = vmatprep.subr.bf16.mxu0 %v3008
        %4202 = vmatpush1.bf16.msra.mxu0 %v3007
        %4203 = vmatprep.subr.bf16.mxu0 %v3024
        %4204 = vmatpush1.bf16.msra.mxu0 %v3023
        %4205 = vmatprep.subr.bf16.mxu0 %v3040
        %4206 = vmatpush1.bf16.msra.mxu0 %v3039
        %4207 = vmatprep.subr.bf16.mxu0 %v3056
        %4208 = vmatpush1.bf16.msra.mxu0 %v3055
        %4209 = vmatprep.subr.bf16.mxu0 %v3072
        %4210 = vmatpush1.bf16.msra.mxu0 %v3071
        %4211 = vmatprep.mubr.bf16.mxu0 %v1517
        %4212 = vmatmul.mubr.bf16.gmra.mrb[0].mxu0 %v1510
        %v4213 = vpop.f32.mrb[0].mxu0
        %v4214 = vadd.f32 %v1493, %v4213
        %v4215 = vpop.f32.mrb[0].mxu0
        %v4216 = vadd.f32 %v1493, %v4215
        %v4217 = vpop.f32.mrb[0].mxu0
        %v4218 = vpop.f32.mrb[0].mxu0
        %4219 = vdwg.mxu0
        %4220 = vmatprep.subr.bf16.mxu0 %v3088
        %4221 = vmatpush1.bf16.msra.mxu0 %v3087
        %4222 = vmatprep.subr.bf16.mxu0 %v3104
        %4223 = vmatpush1.bf16.msra.mxu0 %v3103
        %4224 = vmatprep.subr.bf16.mxu0 %v3120
        %4225 = vmatpush1.bf16.msra.mxu0 %v3119
        %4226 = vmatprep.subr.bf16.mxu0 %v3136
        %4227 = vmatpush1.bf16.msra.mxu0 %v3135
        %4228 = vmatprep.subr.bf16.mxu0 %v3152
        %4229 = vmatpush1.bf16.msra.mxu0 %v3151
        %4230 = vmatprep.subr.bf16.mxu0 %v3168
        %4231 = vmatpush1.bf16.msra.mxu0 %v3167
        %4232 = vmatprep.subr.bf16.mxu0 %v3184
        %4233 = vmatpush1.bf16.msra.mxu0 %v3183
        %4234 = vmatprep.subr.bf16.mxu0 %v3200
        %4235 = vmatpush1.bf16.msra.mxu0 %v3199
        %4236 = vmatprep.subr.bf16.mxu0 %v3216
        %4237 = vmatpush1.bf16.msra.mxu0 %v3215
        %4238 = vmatprep.subr.bf16.mxu0 %v3232
        %4239 = vmatpush1.bf16.msra.mxu0 %v3231
        %4240 = vmatprep.subr.bf16.mxu0 %v3248
        %4241 = vmatpush1.bf16.msra.mxu0 %v3247
        %4242 = vmatprep.subr.bf16.mxu0 0
        %4243 = vmatpush1.bf16.msra.mxu0 0
        %4244 = vmatprep.subr.bf16.mxu0 0
        %4245 = vmatpush1.bf16.msra.mxu0 0
        %4246 = vmatprep.subr.bf16.mxu0 0
        %4247 = vmatpush1.bf16.msra.mxu0 0
        %4248 = vmatprep.subr.bf16.mxu0 0
        %4249 = vmatpush1.bf16.msra.mxu0 0
        %4250 = vmatprep.subr.bf16.mxu0 0
        %4251 = vmatpush1.bf16.msra.mxu0 0
        %4252 = vmatprep.mubr.bf16.mxu0 %v3685
        %4253 = vmatmul.mubr.bf16.gmra.mrb[0].mxu0 %v1518
        %v4254 = vpop.f32.mrb[0].mxu0
        %v4255 = vadd.f32 %v4214, %v4254
        %v4256 = vpop.f32.mrb[0].mxu0
        %v4257 = vadd.f32 %v4216, %v4256
        %v4258 = vpop.f32.mrb[0].mxu0
        %v4259 = vpop.f32.mrb[0].mxu0
        %4260 = vdwg.mxu0
        %4261 = vmatprep.subr.bf16.mxu0 %v2834
        %4262 = vmatpush1.bf16.msra.mxu0 %v2833
        %4263 = vmatprep.subr.bf16.mxu0 %v2850
        %4264 = vmatpush1.bf16.msra.mxu0 %v2849
        %4265 = vmatprep.subr.bf16.mxu0 %v2866
        %4266 = vmatpush1.bf16.msra.mxu0 %v2865
        %4267 = vmatprep.subr.bf16.mxu0 %v2882
        %4268 = vmatpush1.bf16.msra.mxu0 %v2881
        %4269 = vmatprep.subr.bf16.mxu0 %v2898
        %4270 = vmatpush1.bf16.msra.mxu0 %v2897
        %4271 = vmatprep.subr.bf16.mxu0 %v2914
        %4272 = vmatpush1.bf16.msra.mxu0 %v2913
        %4273 = vmatprep.subr.bf16.mxu0 %v2930
        %4274 = vmatpush1.bf16.msra.mxu0 %v2929
        %4275 = vmatprep.subr.bf16.mxu0 %v2946
        %4276 = vmatpush1.bf16.msra.mxu0 %v2945
        %4277 = vmatprep.subr.bf16.mxu0 %v2962
        %4278 = vmatpush1.bf16.msra.mxu0 %v2961
        %4279 = vmatprep.subr.bf16.mxu0 %v2978
        %4280 = vmatpush1.bf16.msra.mxu0 %v2977
        %4281 = vmatprep.subr.bf16.mxu0 %v2994
        %4282 = vmatpush1.bf16.msra.mxu0 %v2993
        %4283 = vmatprep.subr.bf16.mxu0 %v3010
        %4284 = vmatpush1.bf16.msra.mxu0 %v3009
        %4285 = vmatprep.subr.bf16.mxu0 %v3026
        %4286 = vmatpush1.bf16.msra.mxu0 %v3025
        %4287 = vmatprep.subr.bf16.mxu0 %v3042
        %4288 = vmatpush1.bf16.msra.mxu0 %v3041
        %4289 = vmatprep.subr.bf16.mxu0 %v3058
        %4290 = vmatpush1.bf16.msra.mxu0 %v3057
        %4291 = vmatprep.subr.bf16.mxu0 %v3074
        %4292 = vmatpush1.bf16.msra.mxu0 %v3073
        %4293 = vmatprep.mubr.bf16.mxu0 %v1517
        %4294 = vmatmul.mubr.bf16.gmra.mrb[0].mxu0 %v1510
        %v4295 = vpop.f32.mrb[0].mxu0
        %v4296 = vadd.f32 %v1493, %v4295
        %v4297 = vpop.f32.mrb[0].mxu0
        %v4298 = vadd.f32 %v1493, %v4297
        %v4299 = vpop.f32.mrb[0].mxu0
        %v4300 = vpop.f32.mrb[0].mxu0
        %4301 = vdwg.mxu0
        %4302 = vmatprep.subr.bf16.mxu0 %v3090
        %4303 = vmatpush1.bf16.msra.mxu0 %v3089
        %4304 = vmatprep.subr.bf16.mxu0 %v3106
        %4305 = vmatpush1.bf16.msra.mxu0 %v3105
        %4306 = vmatprep.subr.bf16.mxu0 %v3122
        %4307 = vmatpush1.bf16.msra.mxu0 %v3121
        %4308 = vmatprep.subr.bf16.mxu0 %v3138
        %4309 = vmatpush1.bf16.msra.mxu0 %v3137
        %4310 = vmatprep.subr.bf16.mxu0 %v3154
        %4311 = vmatpush1.bf16.msra.mxu0 %v3153
        %4312 = vmatprep.subr.bf16.mxu0 %v3170
        %4313 = vmatpush1.bf16.msra.mxu0 %v3169
        %4314 = vmatprep.subr.bf16.mxu0 %v3186
        %4315 = vmatpush1.bf16.msra.mxu0 %v3185
        %4316 = vmatprep.subr.bf16.mxu0 %v3202
        %4317 = vmatpush1.bf16.msra.mxu0 %v3201
        %4318 = vmatprep.subr.bf16.mxu0 %v3218
        %4319 = vmatpush1.bf16.msra.mxu0 %v3217
        %4320 = vmatprep.subr.bf16.mxu0 %v3234
        %4321 = vmatpush1.bf16.msra.mxu0 %v3233
        %4322 = vmatprep.subr.bf16.mxu0 %v3250
        %4323 = vmatpush1.bf16.msra.mxu0 %v3249
        %4324 = vmatprep.subr.bf16.mxu0 0
        %4325 = vmatpush1.bf16.msra.mxu0 0
        %4326 = vmatprep.subr.bf16.mxu0 0
        %4327 = vmatpush1.bf16.msra.mxu0 0
        %4328 = vmatprep.subr.bf16.mxu0 0
        %4329 = vmatpush1.bf16.msra.mxu0 0
        %4330 = vmatprep.subr.bf16.mxu0 0
        %4331 = vmatpush1.bf16.msra.mxu0 0
        %4332 = vmatprep.subr.bf16.mxu0 0
        %4333 = vmatpush1.bf16.msra.mxu0 0
        %4334 = vmatprep.mubr.bf16.mxu0 %v3685
        %4335 = vmatmul.mubr.bf16.gmra.mrb[0].mxu0 %v1518
        %v4336 = vpop.f32.mrb[0].mxu0
        %v4337 = vadd.f32 %v4296, %v4336
        %v4338 = vpop.f32.mrb[0].mxu0
        %v4339 = vadd.f32 %v4298, %v4338
        %v4340 = vpop.f32.mrb[0].mxu0
        %v4341 = vpop.f32.mrb[0].mxu0
        %4342 = vdwg.mxu0
        %v4343 = vlaneseq
        %v4344 = vshrl.u32 %v4343, 7
        %vm4345 = vcmp.eq.s32.totalorder %v4344, 0
        %v4346 = vsel %vm4345, 0.0, -1.0
        %v4347 = vmax.f32 %v4346, %v3763
        %v4348 = vmax.f32 %v4346, %v3765
        %v4349 = vmax.f32 %v4346, %v3845
        %v4350 = vmax.f32 %v4346, %v3847
        %v4351 = vmax.f32 %v4346, %v3927
        %v4352 = vmax.f32 %v4346, %v3929
        %v4353 = vmax.f32 %v4346, %v4009
        %v4354 = vmax.f32 %v4346, %v4011
        %v4355 = vmax.f32 %v4346, %v4091
        %v4356 = vmax.f32 %v4346, %v4093
        %v4357 = vmax.f32 %v4346, %v4173
        %v4358 = vmax.f32 %v4346, %v4175
        %v4359 = vmax.f32 %v4346, %v4255
        %v4360 = vmax.f32 %v4346, %v4257
        %v4361 = vmax.f32 %v4346, %v4337
        %v4362 = vmax.f32 %v4346, %v4339
        %v4363 = vmin.f32 %v4347, 1.0
        %v4364 = vmin.f32 %v4348, 1.0
        %v4365 = vmin.f32 %v4349, 1.0
        %v4366 = vmin.f32 %v4350, 1.0
        %v4367 = vmin.f32 %v4351, 1.0
        %v4368 = vmin.f32 %v4352, 1.0
        %v4369 = vmin.f32 %v4353, 1.0
        %v4370 = vmin.f32 %v4354, 1.0
        %v4371 = vmin.f32 %v4355, 1.0
        %v4372 = vmin.f32 %v4356, 1.0
        %v4373 = vmin.f32 %v4357, 1.0
        %v4374 = vmin.f32 %v4358, 1.0
        %v4375 = vmin.f32 %v4359, 1.0
        %v4376 = vmin.f32 %v4360, 1.0
        %v4377 = vmin.f32 %v4361, 1.0
        %v4378 = vmin.f32 %v4362, 1.0
        %v4395 = vcombine.low %v4363, %v4364
        %v4396 = vcombine.low %v4365, %v4366
        %v4398 = vunpack.c.l.s4 1983009808
        %v4399 = vunpack.c.0.s8 %v4398
        %v4400 = vlaneseq
        %v4401 = vshrl.u32 %v4400, 7
        %v4402 = vsub.s32 %v4399, %v4401
        %v4403 = vrot.slane %v4395, %v4402
        %v4405 = vunpack.c.l.s4 1983009808
        %v4406 = vunpack.c.0.s8 %v4405
        %v4407 = vlaneseq
        %v4408 = vshrl.u32 %v4407, 7
        %v4409 = vsub.s32 %v4406, %v4408
        %v4410 = vrot.slane %v4396, %v4409
        %v4411 = vcombine.low %v4403, %v4410
        %v4412 = vcombine.low %v4367, %v4368
        %v4413 = vcombine.low %v4369, %v4370
        %v4415 = vunpack.c.l.s4 1983009808
        %v4416 = vunpack.c.0.s8 %v4415
        %v4417 = vlaneseq
        %v4418 = vshrl.u32 %v4417, 7
        %v4419 = vsub.s32 %v4416, %v4418
        %v4420 = vrot.slane %v4412, %v4419
        %v4422 = vunpack.c.l.s4 1983009808
        %v4423 = vunpack.c.0.s8 %v4422
        %v4424 = vlaneseq
        %v4425 = vshrl.u32 %v4424, 7
        %v4426 = vsub.s32 %v4423, %v4425
        %v4427 = vrot.slane %v4413, %v4426
        %v4428 = vcombine.low %v4420, %v4427
        %v4429 = vcombine.low %v4371, %v4372
        %v4430 = vcombine.low %v4373, %v4374
        %v4432 = vunpack.c.l.s4 1983009808
        %v4433 = vunpack.c.0.s8 %v4432
        %v4434 = vlaneseq
        %v4435 = vshrl.u32 %v4434, 7
        %v4436 = vsub.s32 %v4433, %v4435
        %v4437 = vrot.slane %v4429, %v4436
        %v4439 = vunpack.c.l.s4 1983009808
        %v4440 = vunpack.c.0.s8 %v4439
        %v4441 = vlaneseq
        %v4442 = vshrl.u32 %v4441, 7
        %v4443 = vsub.s32 %v4440, %v4442
        %v4444 = vrot.slane %v4430, %v4443
        %v4445 = vcombine.low %v4437, %v4444
        %v4446 = vcombine.low %v4375, %v4376
        %v4447 = vcombine.low %v4377, %v4378
        %v4449 = vunpack.c.l.s4 1983009808
        %v4450 = vunpack.c.0.s8 %v4449
        %v4451 = vlaneseq
        %v4452 = vshrl.u32 %v4451, 7
        %v4453 = vsub.s32 %v4450, %v4452
        %v4454 = vrot.slane %v4446, %v4453
        %v4456 = vunpack.c.l.s4 1983009808
        %v4457 = vunpack.c.0.s8 %v4456
        %v4458 = vlaneseq
        %v4459 = vshrl.u32 %v4458, 7
        %v4460 = vsub.s32 %v4457, %v4459
        %v4461 = vrot.slane %v4447, %v4460
        %v4462 = vcombine.low %v4454, %v4461
        %4467 = vst [vmem:[%s1053] sm:$0xff] %v4411
        %4468 = vst [vmem:[%s1053 + $0x8] sm:$0xff] %v4428
        %4469 = vst [vmem:[%s1053 + $0x10] sm:$0xff] %v4445
        %4470 = vst [vmem:[%s1053 + $0x18] sm:$0xff] %v4462
        %s4471 = smul.u32 16, %s14
        %p4472 = scmp.lt.s32.totalorder %s4471, 63
        %s4473 = scalar_select %p4472, %s4471, 63
        %s4474 = smul.addr %s4473, 2
        %s4475 = scalar_lea.vmem %s3, %s4474
        // Predicated region
        $region56: #{forward.17} parent=50 // pred_check
          %p4476 = pneg %p100
        $region57: #{forward.17} parent=50 // pred_check_branch
          %4478 = sbr.rel (%p4476) target = $region59
        $region58: #{forward.17} parent=50 // pred_region
          %s4479 = smul.u32 16, %s14
        $region59: #{forward.17} parent=50 // pred_fallthru
          _
      $region51: #{forward.17} parent=5 // pred_fallthru
        _
      %p4480 = scmp.le.s32.totalorder 2, %s9
      // Predicated region
      $region60: #{forward.17} parent=5 // pred_check
        %p4481 = pneg %p4480
      $region61: #{forward.17} parent=5 // pred_check_branch
        %4483 = sbr.rel (%p4481) target = $region63
      $region62: #{forward.17} parent=5 // pred_region
        %s4484 = ssub.s32 %s9, 2
        // Predicated region
        $region64: #{forward.17} parent=62 // pred_check
          %p4485 = pneg %p106
        $region65: #{forward.17} parent=62 // pred_check_branch
          %4487 = sbr.rel (%p4485) target = $region67
        $region66: #{forward.17} parent=62 // pred_region
          %s4488 = smul.u32 16, %s15
          %p4489 = scmp.lt.s32.totalorder %s4488, 63
          %s4490 = scalar_select %p4489, %s4488, 63
          %s4491 = smul.addr %s4490, 2
          %s4492 = scalar_lea.vmem %s3, %s4491
        $region67: #{forward.17} parent=62 // pred_fallthru
          _
      $region63: #{forward.17} parent=5 // pred_fallthru
        _
    $region6: #{forward.17} parent=1 // loop_footer
      %s13 = sadd.s32 1, %s9
    $region7: #{forward.17} parent=1 // loop_footer_branch
      %8 = sbr.rel target = $region3
    $region8: #{forward.17} parent=1 // loop_exit
      _

</llo_original>
